<compile_context>
chip_gen: v7x
topology: tpu7x:2x2x1
jax: 0.10.0
libtpu: 0.0.40
codegen_flags: <defaults>
</compile_context>

<pallas_src>
import jax
import jax.numpy as jnp
from jax import lax
from jax.experimental import pallas as pl
from jax.experimental.pallas import tpu as pltpu

HIDDEN_SIZE = 64
INPUT_SIZE = 1
OUTPUT_SIZE = 1
NUM_LAYERS = 3

HP = 128            # hidden size padded to one 128-lane tile
DP = 128            # per-layer input feature dim padded to one lane tile
G3 = 3 * HP         # r|z|n gate blocks, each in its own 128-lane tile
SUBLANE = 8         # batch padded to a multiple of 8 sublanes


def fused_gru_fc_kernel(x_ref, w_ih_ref, w_hh_ref, bias_pre_ref, bias_n_ref,
                        w_fc_ref, b_fc_ref, out_ref, seq_ref, gi_ref):
    """3-layer GRU + fc fused in one kernel.

    x_ref        : (T, BP, DP)       layer-0 inputs (features padded to DP)
    w_ih_ref     : (L, DP, G3)       input->hidden weights, per-gate 128-lane blocks
    w_hh_ref     : (L, HP, G3)       hidden->hidden weights, per-gate 128-lane blocks
    bias_pre_ref : (L, 1, G3)        b_ih (all gates) + b_hh (r,z gates), pre-folded
    bias_n_ref   : (L, 1, HP)        b_hh for the n gate (added inside the loop)
    w_fc_ref     : (HP, HP)          fc weight, padded (rows>=H and cols>=O are zero)
    b_fc_ref     : (1, HP)           fc bias, padded
    out_ref      : (BP, HP)          fc output; only [:B, :OUTPUT_SIZE] is valid
    seq_ref      : VMEM (T, BP, HP)  inter-layer hidden sequence (scratch)
    gi_ref       : VMEM (T, BP, G3)  hoisted input->hidden gate pre-activations
    """
    T, bp, dp = x_ref.shape
    n_layers = w_ih_ref.shape[0]

    h_last = jnp.zeros((bp, HP), jnp.float32)
    for layer in range(n_layers):
        w_ih = w_ih_ref[layer]          # (DP, G3)  static layer index
        w_hh = w_hh_ref[layer]          # (HP, G3)
        bias_pre = bias_pre_ref[layer]  # (1, G3)
        bias_n = bias_n_ref[layer]      # (1, HP)

        # Hoist the input->hidden matmul out of the recurrence: one
        # (T*BP, DP) x (DP, G3) matmul instead of T tiny ones on the
        # serial critical path. Biases for r/z (and b_ih for n) are folded in.
        seq_in = x_ref[...] if layer == 0 else seq_ref[...]
        gi_all = jnp.dot(seq_in.reshape(T * bp, dp), w_ih,
                         preferred_element_type=jnp.float32) + bias_pre
        gi_ref[...] = gi_all.reshape(T, bp, G3)

        write_seq = layer < n_layers - 1   # last layer: only hT is consumed by fc

        def step(t, h, write_seq=write_seq, w_hh=w_hh, bias_n=bias_n):
            gi_t = gi_ref[t]                                            # (BP, G3)
            gh = jnp.dot(h, w_hh, preferred_element_type=jnp.float32)   # (BP, G3)
            # All gate slices are 128-lane aligned (free sub-views).
            rz = jax.nn.sigmoid(gi_t[:, :2 * HP] + gh[:, :2 * HP])
            r = rz[:, :HP]
            z = rz[:, HP:]
            n = jnp.tanh(gi_t[:, 2 * HP:] + r * (gh[:, 2 * HP:] + bias_n))
            h_new = n + z * (h - n)        # == (1 - z) * n + z * h
            if write_seq:
                seq_ref[t] = h_new
            return h_new

        h_last = lax.fori_loop(0, T, step,
                               jnp.zeros((bp, HP), jnp.float32),
                               unroll=True)

    out_ref[...] = jnp.dot(h_last, w_fc_ref[...],
                           preferred_element_type=jnp.float32) + b_fc_ref[...]


def _pad_gate_mat(w, d_in):
    """PyTorch-layout (3H, d_in) weight -> (DP, G3) transposed, per-gate 128-lane blocks."""
    out = jnp.zeros((DP, G3), jnp.float32)
    for g in range(3):
        blk = w[g * HIDDEN_SIZE:(g + 1) * HIDDEN_SIZE, :].T        # (d_in, H)
        out = out.at[:d_in, g * HP:g * HP + HIDDEN_SIZE].set(blk)
    return out


def _pad_gate_vec(b):
    """(3H,) bias -> (1, G3) per-gate 128-lane blocks."""
    out = jnp.zeros((1, G3), jnp.float32)
    for g in range(3):
        out = out.at[0, g * HP:g * HP + HIDDEN_SIZE].set(
            b[g * HIDDEN_SIZE:(g + 1) * HIDDEN_SIZE])
    return out


def _prepare_padded_params(params):
    w_ih_l, w_hh_l, bias_pre_l, bias_n_l = [], [], [], []
    for layer in range(NUM_LAYERS):
        w_ih, w_hh, b_ih, b_hh = params[f"l{layer}"]
        d_in = w_ih.shape[1]
        w_ih_l.append(_pad_gate_mat(w_ih, d_in))
        w_hh_l.append(_pad_gate_mat(w_hh, HIDDEN_SIZE))
        b_ih_p = _pad_gate_vec(b_ih)
        b_hh_p = _pad_gate_vec(b_hh)
        # Fold b_ih (all gates) + b_hh (r,z gates) into the hoisted precompute.
        bias_pre_l.append(b_ih_p + b_hh_p.at[0, 2 * HP:].set(0.0))
        bias_n_l.append(b_hh_p[:, 2 * HP:3 * HP])                  # (1, HP)
    w_fc, b_fc = params["fc"]
    w_fc_p = jnp.zeros((HP, HP), jnp.float32).at[:HIDDEN_SIZE, :OUTPUT_SIZE].set(w_fc.T)
    b_fc_p = jnp.zeros((1, HP), jnp.float32).at[0, :OUTPUT_SIZE].set(b_fc)
    return (jnp.stack(w_ih_l), jnp.stack(w_hh_l),
            jnp.stack(bias_pre_l), jnp.stack(bias_n_l), w_fc_p, b_fc_p)


def init_params(key, input_size=INPUT_SIZE, hidden_size=HIDDEN_SIZE,
                output_size=OUTPUT_SIZE, num_layers=NUM_LAYERS):
    """Deterministic init mimicking PyTorch's uniform(-1/sqrt(H), 1/sqrt(H))."""
    params = {}
    bound = 1.0 / jnp.sqrt(jnp.float32(hidden_size))
    keys = jax.random.split(key, num_layers * 4 + 2)
    ki = 0
    for layer in range(num_layers):
        d_in = input_size if layer == 0 else hidden_size
        w_ih = jax.random.uniform(keys[ki], (3 * hidden_size, d_in),
                                  jnp.float32, -bound, bound); ki += 1
        w_hh = jax.random.uniform(keys[ki], (3 * hidden_size, hidden_size),
                                  jnp.float32, -bound, bound); ki += 1
        b_ih = jax.random.uniform(keys[ki], (3 * hidden_size,),
                                  jnp.float32, -bound, bound); ki += 1
        b_hh = jax.random.uniform(keys[ki], (3 * hidden_size,),
                                  jnp.float32, -bound, bound); ki += 1
        params[f"l{layer}"] = (w_ih, w_hh, b_ih, b_hh)
    w_fc = jax.random.uniform(keys[ki], (output_size, hidden_size),
                              jnp.float32, -bound, bound); ki += 1
    b_fc = jax.random.uniform(keys[ki], (output_size,),
                              jnp.float32, -bound, bound)
    params["fc"] = (w_fc, b_fc)
    return params


@jax.jit
def gru_model_forward(x, params):
    """Equivalent of GRUModel.forward (eval mode): 3-layer GRU, then fc(h[-1])."""
    B, T, d_in = x.shape
    bp = ((B + SUBLANE - 1) // SUBLANE) * SUBLANE     # batch padded to 8 sublanes

    (w_ih_all, w_hh_all, bias_pre_all, bias_n_all,
     w_fc_p, b_fc_p) = _prepare_padded_params(params)

    # Time-major, batch padded to sublane tile, features padded to a lane tile.
    x_tm = jnp.transpose(x, (1, 0, 2)).astype(jnp.float32)          # (T, B, d_in)
    x_pad = jnp.zeros((T, bp, DP), jnp.float32).at[:, :B, :d_in].set(x_tm)

    # TODO(synk): for long sequences / large batches, grid over T chunks (h
    # carried in VMEM scratch) and over batch ("parallel" for v7x's 2 TCs)
    # instead of holding the whole (T, BP, *) sequence in VMEM at once.
    out_pad = pl.pallas_call(
        fused_gru_fc_kernel,
        out_shape=jax.ShapeDtypeStruct((bp, HP), jnp.float32),
        scratch_shapes=[
            pltpu.VMEM((T, bp, HP), jnp.float32),   # inter-layer hidden sequence
            pltpu.VMEM((T, bp, G3), jnp.float32),   # hoisted gi_all per layer
        ],
    )(x_pad, w_ih_all, w_hh_all, bias_pre_all, bias_n_all, w_fc_p, b_fc_p)

    return out_pad[:B, :OUTPUT_SIZE]


if __name__ == "__main__":
    key = jax.random.PRNGKey(0)
    k_params, k_x = jax.random.split(key)

    params = init_params(k_params)

    batch, seq_len = 2, 8
    x = jax.random.normal(k_x, (batch, seq_len, INPUT_SIZE), jnp.float32)

    out = gru_model_forward(x, params)
    out = jax.block_until_ready(out)

    assert out.shape == (batch, OUTPUT_SIZE)
    assert jnp.all(jnp.isfinite(out))
    print("KERNEL_OK")
</pallas_src>

<mosaic_0001>
module attributes {stable_mosaic.version = 11 : i64} {
  func.func @fused_gru_fc_kernel(%arg0: memref<8x8x128xf32, #tpu.memory_space<vmem>>, %arg1: memref<3x128x384xf32, #tpu.memory_space<vmem>>, %arg2: memref<3x128x384xf32, #tpu.memory_space<vmem>>, %arg3: memref<3x1x384xf32, #tpu.memory_space<vmem>>, %arg4: memref<3x1x128xf32, #tpu.memory_space<vmem>>, %arg5: memref<128x128xf32, #tpu.memory_space<vmem>>, %arg6: memref<1x128xf32, #tpu.memory_space<vmem>>, %arg7: memref<8x128xf32, #tpu.memory_space<vmem>>, %arg8: memref<8x8x128xf32, #tpu.memory_space<vmem>>, %arg9: memref<8x8x384xf32, #tpu.memory_space<vmem>>) attributes {dimension_semantics = [], scalar_prefetch = 0 : i64, scratch_operands = 2 : i64, tpu.core_type = #tpu.core_type<tc>} {
    %c0 = arith.constant 0 : index
    %c0_0 = arith.constant 0 : index
    %c0_1 = arith.constant 0 : index
    %0 = vector.load %arg1[%c0, %c0_0, %c0_1] : memref<3x128x384xf32, #tpu.memory_space<vmem>>, vector<1x128x384xf32>
    %1 = vector.shape_cast %0 : vector<1x128x384xf32> to vector<128x384xf32>
    %c0_2 = arith.constant 0 : index
    %c0_3 = arith.constant 0 : index
    %c0_4 = arith.constant 0 : index
    %2 = vector.load %arg2[%c0_2, %c0_3, %c0_4] : memref<3x128x384xf32, #tpu.memory_space<vmem>>, vector<1x128x384xf32>
    %3 = vector.shape_cast %2 : vector<1x128x384xf32> to vector<128x384xf32>
    %c0_5 = arith.constant 0 : index
    %c0_6 = arith.constant 0 : index
    %c0_7 = arith.constant 0 : index
    %4 = vector.load %arg3[%c0_5, %c0_6, %c0_7] : memref<3x1x384xf32, #tpu.memory_space<vmem>>, vector<1x1x384xf32>
    %5 = vector.shape_cast %4 : vector<1x1x384xf32> to vector<1x384xf32>
    %c0_8 = arith.constant 0 : index
    %c0_9 = arith.constant 0 : index
    %c0_10 = arith.constant 0 : index
    %6 = vector.load %arg4[%c0_8, %c0_9, %c0_10] : memref<3x1x128xf32, #tpu.memory_space<vmem>>, vector<1x1x128xf32>
    %7 = vector.shape_cast %6 : vector<1x1x128xf32> to vector<1x128xf32>
    %c0_11 = arith.constant 0 : index
    %c0_12 = arith.constant 0 : index
    %c0_13 = arith.constant 0 : index
    %8 = vector.load %arg0[%c0_11, %c0_12, %c0_13] : memref<8x8x128xf32, #tpu.memory_space<vmem>>, vector<8x8x128xf32>
    %9 = vector.shape_cast %8 : vector<8x8x128xf32> to vector<64x128xf32>
    %cst = arith.constant dense<0.000000e+00> : vector<64x384xf32>
    %10 = tpu.matmul %9, %1, %cst {dimension_numbers = #tpu.dot_dimension_numbers<[1], [0], [0], [1], [0, 0, 1, 1], [], []>} : vector<64x128xf32>, vector<128x384xf32>, vector<64x384xf32> -> vector<64x384xf32>
    %11 = vector.broadcast %5 : vector<1x384xf32> to vector<64x384xf32>
    %12 = arith.addf %10, %11 : vector<64x384xf32>
    %13 = vector.shape_cast %12 : vector<64x384xf32> to vector<8x8x384xf32>
    %c0_14 = arith.constant 0 : index
    %c0_15 = arith.constant 0 : index
    %c0_16 = arith.constant 0 : index
    %14 = vector.load %arg9[%c0_14, %c0_15, %c0_16] : memref<8x8x384xf32, #tpu.memory_space<vmem>>, vector<8x8x384xf32>
    tpu.vector_store %arg9[%c0_14, %c0_15, %c0_16], %13 {strides = array<i32>} : memref<8x8x384xf32, #tpu.memory_space<vmem>>, vector<8x8x384xf32>,
    %cst_17 = arith.constant 0.000000e+00 : f32
    %15 = vector.broadcast %cst_17 : f32 to vector<8x128xf32>
    %c0_i32 = arith.constant 0 : i32
    %16 = arith.index_cast %c0_i32 : i32 to index
    %c0_18 = arith.constant 0 : index
    %c0_19 = arith.constant 0 : index
    %17 = vector.load %arg9[%16, %c0_18, %c0_19] : memref<8x8x384xf32, #tpu.memory_space<vmem>>, vector<1x8x384xf32>
    %18 = vector.shape_cast %17 : vector<1x8x384xf32> to vector<8x384xf32>
    %cst_20 = arith.constant dense<0.000000e+00> : vector<8x384xf32>
    %19 = tpu.matmul %15, %3, %cst_20 {dimension_numbers = #tpu.dot_dimension_numbers<[1], [0], [0], [1], [0, 0, 1, 1], [], []>} : vector<8x128xf32>, vector<128x384xf32>, vector<8x384xf32> -> vector<8x384xf32>
    %20 = vector.extract_strided_slice %18 {offsets = [0, 0], sizes = [8, 256], strides = [1, 1]} : vector<8x384xf32> to vector<8x256xf32>
    %21 = vector.extract_strided_slice %19 {offsets = [0, 0], sizes = [8, 256], strides = [1, 1]} : vector<8x384xf32> to vector<8x256xf32>
    %22 = arith.addf %20, %21 : vector<8x256xf32>
    %23 = arith.negf %22 : vector<8x256xf32>
    %24 = math.exp %23 : vector<8x256xf32>
    %cst_21 = arith.constant 1.000000e+00 : f32
    %25 = vector.broadcast %cst_21 : f32 to vector<8x256xf32>
    %26 = arith.addf %25, %24 : vector<8x256xf32>
    %27 = arith.divf %25, %26 : vector<8x256xf32>
    %28 = vector.extract_strided_slice %27 {offsets = [0, 0], sizes = [8, 128], strides = [1, 1]} : vector<8x256xf32> to vector<8x128xf32>
    %29 = vector.extract_strided_slice %27 {offsets = [0, 128], sizes = [8, 128], strides = [1, 1]} : vector<8x256xf32> to vector<8x128xf32>
    %30 = vector.extract_strided_slice %18 {offsets = [0, 256], sizes = [8, 128], strides = [1, 1]} : vector<8x384xf32> to vector<8x128xf32>
    %31 = vector.extract_strided_slice %19 {offsets = [0, 256], sizes = [8, 128], strides = [1, 1]} : vector<8x384xf32> to vector<8x128xf32>
    %32 = vector.broadcast %7 : vector<1x128xf32> to vector<8x128xf32>
    %33 = arith.addf %31, %32 : vector<8x128xf32>
    %34 = arith.mulf %28, %33 : vector<8x128xf32>
    %35 = arith.addf %30, %34 : vector<8x128xf32>
    %36 = math.tanh %35 : vector<8x128xf32>
    %37 = arith.subf %15, %36 : vector<8x128xf32>
    %38 = arith.mulf %29, %37 : vector<8x128xf32>
    %39 = arith.addf %36, %38 : vector<8x128xf32>
    %40 = arith.index_cast %c0_i32 : i32 to index
    %c0_22 = arith.constant 0 : index
    %c0_23 = arith.constant 0 : index
    %41 = vector.load %arg8[%40, %c0_22, %c0_23] : memref<8x8x128xf32, #tpu.memory_space<vmem>>, vector<1x8x128xf32>
    %42 = vector.shape_cast %41 : vector<1x8x128xf32> to vector<8x128xf32>
    %43 = vector.shape_cast %39 : vector<8x128xf32> to vector<1x8x128xf32>
    tpu.vector_store %arg8[%40, %c0_22, %c0_23], %43 {strides = array<i32>} : memref<8x8x128xf32, #tpu.memory_space<vmem>>, vector<1x8x128xf32>,
    %c1_i32 = arith.constant 1 : i32
    %44 = arith.index_cast %c1_i32 : i32 to index
    %c0_24 = arith.constant 0 : index
    %c0_25 = arith.constant 0 : index
    %45 = vector.load %arg9[%44, %c0_24, %c0_25] : memref<8x8x384xf32, #tpu.memory_space<vmem>>, vector<1x8x384xf32>
    %46 = vector.shape_cast %45 : vector<1x8x384xf32> to vector<8x384xf32>
    %cst_26 = arith.constant dense<0.000000e+00> : vector<8x384xf32>
    %47 = tpu.matmul %39, %3, %cst_26 {dimension_numbers = #tpu.dot_dimension_numbers<[1], [0], [0], [1], [0, 0, 1, 1], [], []>} : vector<8x128xf32>, vector<128x384xf32>, vector<8x384xf32> -> vector<8x384xf32>
    %48 = vector.extract_strided_slice %46 {offsets = [0, 0], sizes = [8, 256], strides = [1, 1]} : vector<8x384xf32> to vector<8x256xf32>
    %49 = vector.extract_strided_slice %47 {offsets = [0, 0], sizes = [8, 256], strides = [1, 1]} : vector<8x384xf32> to vector<8x256xf32>
    %50 = arith.addf %48, %49 : vector<8x256xf32>
    %51 = arith.negf %50 : vector<8x256xf32>
    %52 = math.exp %51 : vector<8x256xf32>
    %cst_27 = arith.constant 1.000000e+00 : f32
    %53 = vector.broadcast %cst_27 : f32 to vector<8x256xf32>
    %54 = arith.addf %53, %52 : vector<8x256xf32>
    %55 = arith.divf %53, %54 : vector<8x256xf32>
    %56 = vector.extract_strided_slice %55 {offsets = [0, 0], sizes = [8, 128], strides = [1, 1]} : vector<8x256xf32> to vector<8x128xf32>
    %57 = vector.extract_strided_slice %55 {offsets = [0, 128], sizes = [8, 128], strides = [1, 1]} : vector<8x256xf32> to vector<8x128xf32>
    %58 = vector.extract_strided_slice %46 {offsets = [0, 256], sizes = [8, 128], strides = [1, 1]} : vector<8x384xf32> to vector<8x128xf32>
    %59 = vector.extract_strided_slice %47 {offsets = [0, 256], sizes = [8, 128], strides = [1, 1]} : vector<8x384xf32> to vector<8x128xf32>
    %60 = vector.broadcast %7 : vector<1x128xf32> to vector<8x128xf32>
    %61 = arith.addf %59, %60 : vector<8x128xf32>
    %62 = arith.mulf %56, %61 : vector<8x128xf32>
    %63 = arith.addf %58, %62 : vector<8x128xf32>
    %64 = math.tanh %63 : vector<8x128xf32>
    %65 = arith.subf %39, %64 : vector<8x128xf32>
    %66 = arith.mulf %57, %65 : vector<8x128xf32>
    %67 = arith.addf %64, %66 : vector<8x128xf32>
    %68 = arith.index_cast %c1_i32 : i32 to index
    %c0_28 = arith.constant 0 : index
    %c0_29 = arith.constant 0 : index
    %69 = vector.load %arg8[%68, %c0_28, %c0_29] : memref<8x8x128xf32, #tpu.memory_space<vmem>>, vector<1x8x128xf32>
    %70 = vector.shape_cast %69 : vector<1x8x128xf32> to vector<8x128xf32>
    %71 = vector.shape_cast %67 : vector<8x128xf32> to vector<1x8x128xf32>
    tpu.vector_store %arg8[%68, %c0_28, %c0_29], %71 {strides = array<i32>} : memref<8x8x128xf32, #tpu.memory_space<vmem>>, vector<1x8x128xf32>,
    %c2_i32 = arith.constant 2 : i32
    %72 = arith.index_cast %c2_i32 : i32 to index
    %c0_30 = arith.constant 0 : index
    %c0_31 = arith.constant 0 : index
    %73 = vector.load %arg9[%72, %c0_30, %c0_31] : memref<8x8x384xf32, #tpu.memory_space<vmem>>, vector<1x8x384xf32>
    %74 = vector.shape_cast %73 : vector<1x8x384xf32> to vector<8x384xf32>
    %cst_32 = arith.constant dense<0.000000e+00> : vector<8x384xf32>
    %75 = tpu.matmul %67, %3, %cst_32 {dimension_numbers = #tpu.dot_dimension_numbers<[1], [0], [0], [1], [0, 0, 1, 1], [], []>} : vector<8x128xf32>, vector<128x384xf32>, vector<8x384xf32> -> vector<8x384xf32>
    %76 = vector.extract_strided_slice %74 {offsets = [0, 0], sizes = [8, 256], strides = [1, 1]} : vector<8x384xf32> to vector<8x256xf32>
    %77 = vector.extract_strided_slice %75 {offsets = [0, 0], sizes = [8, 256], strides = [1, 1]} : vector<8x384xf32> to vector<8x256xf32>
    %78 = arith.addf %76, %77 : vector<8x256xf32>
    %79 = arith.negf %78 : vector<8x256xf32>
    %80 = math.exp %79 : vector<8x256xf32>
    %cst_33 = arith.constant 1.000000e+00 : f32
    %81 = vector.broadcast %cst_33 : f32 to vector<8x256xf32>
    %82 = arith.addf %81, %80 : vector<8x256xf32>
    %83 = arith.divf %81, %82 : vector<8x256xf32>
    %84 = vector.extract_strided_slice %83 {offsets = [0, 0], sizes = [8, 128], strides = [1, 1]} : vector<8x256xf32> to vector<8x128xf32>
    %85 = vector.extract_strided_slice %83 {offsets = [0, 128], sizes = [8, 128], strides = [1, 1]} : vector<8x256xf32> to vector<8x128xf32>
    %86 = vector.extract_strided_slice %74 {offsets = [0, 256], sizes = [8, 128], strides = [1, 1]} : vector<8x384xf32> to vector<8x128xf32>
    %87 = vector.extract_strided_slice %75 {offsets = [0, 256], sizes = [8, 128], strides = [1, 1]} : vector<8x384xf32> to vector<8x128xf32>
    %88 = vector.broadcast %7 : vector<1x128xf32> to vector<8x128xf32>
    %89 = arith.addf %87, %88 : vector<8x128xf32>
    %90 = arith.mulf %84, %89 : vector<8x128xf32>
    %91 = arith.addf %86, %90 : vector<8x128xf32>
    %92 = math.tanh %91 : vector<8x128xf32>
    %93 = arith.subf %67, %92 : vector<8x128xf32>
    %94 = arith.mulf %85, %93 : vector<8x128xf32>
    %95 = arith.addf %92, %94 : vector<8x128xf32>
    %96 = arith.index_cast %c2_i32 : i32 to index
    %c0_34 = arith.constant 0 : index
    %c0_35 = arith.constant 0 : index
    %97 = vector.load %arg8[%96, %c0_34, %c0_35] : memref<8x8x128xf32, #tpu.memory_space<vmem>>, vector<1x8x128xf32>
    %98 = vector.shape_cast %97 : vector<1x8x128xf32> to vector<8x128xf32>
    %99 = vector.shape_cast %95 : vector<8x128xf32> to vector<1x8x128xf32>
    tpu.vector_store %arg8[%96, %c0_34, %c0_35], %99 {strides = array<i32>} : memref<8x8x128xf32, #tpu.memory_space<vmem>>, vector<1x8x128xf32>,
    %c3_i32 = arith.constant 3 : i32
    %100 = arith.index_cast %c3_i32 : i32 to index
    %c0_36 = arith.constant 0 : index
    %c0_37 = arith.constant 0 : index
    %101 = vector.load %arg9[%100, %c0_36, %c0_37] : memref<8x8x384xf32, #tpu.memory_space<vmem>>, vector<1x8x384xf32>
    %102 = vector.shape_cast %101 : vector<1x8x384xf32> to vector<8x384xf32>
    %cst_38 = arith.constant dense<0.000000e+00> : vector<8x384xf32>
    %103 = tpu.matmul %95, %3, %cst_38 {dimension_numbers = #tpu.dot_dimension_numbers<[1], [0], [0], [1], [0, 0, 1, 1], [], []>} : vector<8x128xf32>, vector<128x384xf32>, vector<8x384xf32> -> vector<8x384xf32>
    %104 = vector.extract_strided_slice %102 {offsets = [0, 0], sizes = [8, 256], strides = [1, 1]} : vector<8x384xf32> to vector<8x256xf32>
    %105 = vector.extract_strided_slice %103 {offsets = [0, 0], sizes = [8, 256], strides = [1, 1]} : vector<8x384xf32> to vector<8x256xf32>
    %106 = arith.addf %104, %105 : vector<8x256xf32>
    %107 = arith.negf %106 : vector<8x256xf32>
    %108 = math.exp %107 : vector<8x256xf32>
    %cst_39 = arith.constant 1.000000e+00 : f32
    %109 = vector.broadcast %cst_39 : f32 to vector<8x256xf32>
    %110 = arith.addf %109, %108 : vector<8x256xf32>
    %111 = arith.divf %109, %110 : vector<8x256xf32>
    %112 = vector.extract_strided_slice %111 {offsets = [0, 0], sizes = [8, 128], strides = [1, 1]} : vector<8x256xf32> to vector<8x128xf32>
    %113 = vector.extract_strided_slice %111 {offsets = [0, 128], sizes = [8, 128], strides = [1, 1]} : vector<8x256xf32> to vector<8x128xf32>
    %114 = vector.extract_strided_slice %102 {offsets = [0, 256], sizes = [8, 128], strides = [1, 1]} : vector<8x384xf32> to vector<8x128xf32>
    %115 = vector.extract_strided_slice %103 {offsets = [0, 256], sizes = [8, 128], strides = [1, 1]} : vector<8x384xf32> to vector<8x128xf32>
    %116 = vector.broadcast %7 : vector<1x128xf32> to vector<8x128xf32>
    %117 = arith.addf %115, %116 : vector<8x128xf32>
    %118 = arith.mulf %112, %117 : vector<8x128xf32>
    %119 = arith.addf %114, %118 : vector<8x128xf32>
    %120 = math.tanh %119 : vector<8x128xf32>
    %121 = arith.subf %95, %120 : vector<8x128xf32>
    %122 = arith.mulf %113, %121 : vector<8x128xf32>
    %123 = arith.addf %120, %122 : vector<8x128xf32>
    %124 = arith.index_cast %c3_i32 : i32 to index
    %c0_40 = arith.constant 0 : index
    %c0_41 = arith.constant 0 : index
    %125 = vector.load %arg8[%124, %c0_40, %c0_41] : memref<8x8x128xf32, #tpu.memory_space<vmem>>, vector<1x8x128xf32>
    %126 = vector.shape_cast %125 : vector<1x8x128xf32> to vector<8x128xf32>
    %127 = vector.shape_cast %123 : vector<8x128xf32> to vector<1x8x128xf32>
    tpu.vector_store %arg8[%124, %c0_40, %c0_41], %127 {strides = array<i32>} : memref<8x8x128xf32, #tpu.memory_space<vmem>>, vector<1x8x128xf32>,
    %c4_i32 = arith.constant 4 : i32
    %128 = arith.index_cast %c4_i32 : i32 to index
    %c0_42 = arith.constant 0 : index
    %c0_43 = arith.constant 0 : index
    %129 = vector.load %arg9[%128, %c0_42, %c0_43] : memref<8x8x384xf32, #tpu.memory_space<vmem>>, vector<1x8x384xf32>
    %130 = vector.shape_cast %129 : vector<1x8x384xf32> to vector<8x384xf32>
    %cst_44 = arith.constant dense<0.000000e+00> : vector<8x384xf32>
    %131 = tpu.matmul %123, %3, %cst_44 {dimension_numbers = #tpu.dot_dimension_numbers<[1], [0], [0], [1], [0, 0, 1, 1], [], []>} : vector<8x128xf32>, vector<128x384xf32>, vector<8x384xf32> -> vector<8x384xf32>
    %132 = vector.extract_strided_slice %130 {offsets = [0, 0], sizes = [8, 256], strides = [1, 1]} : vector<8x384xf32> to vector<8x256xf32>
    %133 = vector.extract_strided_slice %131 {offsets = [0, 0], sizes = [8, 256], strides = [1, 1]} : vector<8x384xf32> to vector<8x256xf32>
    %134 = arith.addf %132, %133 : vector<8x256xf32>
    %135 = arith.negf %134 : vector<8x256xf32>
    %136 = math.exp %135 : vector<8x256xf32>
    %cst_45 = arith.constant 1.000000e+00 : f32
    %137 = vector.broadcast %cst_45 : f32 to vector<8x256xf32>
    %138 = arith.addf %137, %136 : vector<8x256xf32>
    %139 = arith.divf %137, %138 : vector<8x256xf32>
    %140 = vector.extract_strided_slice %139 {offsets = [0, 0], sizes = [8, 128], strides = [1, 1]} : vector<8x256xf32> to vector<8x128xf32>
    %141 = vector.extract_strided_slice %139 {offsets = [0, 128], sizes = [8, 128], strides = [1, 1]} : vector<8x256xf32> to vector<8x128xf32>
    %142 = vector.extract_strided_slice %130 {offsets = [0, 256], sizes = [8, 128], strides = [1, 1]} : vector<8x384xf32> to vector<8x128xf32>
    %143 = vector.extract_strided_slice %131 {offsets = [0, 256], sizes = [8, 128], strides = [1, 1]} : vector<8x384xf32> to vector<8x128xf32>
    %144 = vector.broadcast %7 : vector<1x128xf32> to vector<8x128xf32>
    %145 = arith.addf %143, %144 : vector<8x128xf32>
    %146 = arith.mulf %140, %145 : vector<8x128xf32>
    %147 = arith.addf %142, %146 : vector<8x128xf32>
    %148 = math.tanh %147 : vector<8x128xf32>
    %149 = arith.subf %123, %148 : vector<8x128xf32>
    %150 = arith.mulf %141, %149 : vector<8x128xf32>
    %151 = arith.addf %148, %150 : vector<8x128xf32>
    %152 = arith.index_cast %c4_i32 : i32 to index
    %c0_46 = arith.constant 0 : index
    %c0_47 = arith.constant 0 : index
    %153 = vector.load %arg8[%152, %c0_46, %c0_47] : memref<8x8x128xf32, #tpu.memory_space<vmem>>, vector<1x8x128xf32>
    %154 = vector.shape_cast %153 : vector<1x8x128xf32> to vector<8x128xf32>
    %155 = vector.shape_cast %151 : vector<8x128xf32> to vector<1x8x128xf32>
    tpu.vector_store %arg8[%152, %c0_46, %c0_47], %155 {strides = array<i32>} : memref<8x8x128xf32, #tpu.memory_space<vmem>>, vector<1x8x128xf32>,
    %c5_i32 = arith.constant 5 : i32
    %156 = arith.index_cast %c5_i32 : i32 to index
    %c0_48 = arith.constant 0 : index
    %c0_49 = arith.constant 0 : index
    %157 = vector.load %arg9[%156, %c0_48, %c0_49] : memref<8x8x384xf32, #tpu.memory_space<vmem>>, vector<1x8x384xf32>
    %158 = vector.shape_cast %157 : vector<1x8x384xf32> to vector<8x384xf32>
    %cst_50 = arith.constant dense<0.000000e+00> : vector<8x384xf32>
    %159 = tpu.matmul %151, %3, %cst_50 {dimension_numbers = #tpu.dot_dimension_numbers<[1], [0], [0], [1], [0, 0, 1, 1], [], []>} : vector<8x128xf32>, vector<128x384xf32>, vector<8x384xf32> -> vector<8x384xf32>
    %160 = vector.extract_strided_slice %158 {offsets = [0, 0], sizes = [8, 256], strides = [1, 1]} : vector<8x384xf32> to vector<8x256xf32>
    %161 = vector.extract_strided_slice %159 {offsets = [0, 0], sizes = [8, 256], strides = [1, 1]} : vector<8x384xf32> to vector<8x256xf32>
    %162 = arith.addf %160, %161 : vector<8x256xf32>
    %163 = arith.negf %162 : vector<8x256xf32>
    %164 = math.exp %163 : vector<8x256xf32>
    %cst_51 = arith.constant 1.000000e+00 : f32
    %165 = vector.broadcast %cst_51 : f32 to vector<8x256xf32>
    %166 = arith.addf %165, %164 : vector<8x256xf32>
    %167 = arith.divf %165, %166 : vector<8x256xf32>
    %168 = vector.extract_strided_slice %167 {offsets = [0, 0], sizes = [8, 128], strides = [1, 1]} : vector<8x256xf32> to vector<8x128xf32>
    %169 = vector.extract_strided_slice %167 {offsets = [0, 128], sizes = [8, 128], strides = [1, 1]} : vector<8x256xf32> to vector<8x128xf32>
    %170 = vector.extract_strided_slice %158 {offsets = [0, 256], sizes = [8, 128], strides = [1, 1]} : vector<8x384xf32> to vector<8x128xf32>
    %171 = vector.extract_strided_slice %159 {offsets = [0, 256], sizes = [8, 128], strides = [1, 1]} : vector<8x384xf32> to vector<8x128xf32>
    %172 = vector.broadcast %7 : vector<1x128xf32> to vector<8x128xf32>
    %173 = arith.addf %171, %172 : vector<8x128xf32>
    %174 = arith.mulf %168, %173 : vector<8x128xf32>
    %175 = arith.addf %170, %174 : vector<8x128xf32>
    %176 = math.tanh %175 : vector<8x128xf32>
    %177 = arith.subf %151, %176 : vector<8x128xf32>
    %178 = arith.mulf %169, %177 : vector<8x128xf32>
    %179 = arith.addf %176, %178 : vector<8x128xf32>
    %180 = arith.index_cast %c5_i32 : i32 to index
    %c0_52 = arith.constant 0 : index
    %c0_53 = arith.constant 0 : index
    %181 = vector.load %arg8[%180, %c0_52, %c0_53] : memref<8x8x128xf32, #tpu.memory_space<vmem>>, vector<1x8x128xf32>
    %182 = vector.shape_cast %181 : vector<1x8x128xf32> to vector<8x128xf32>
    %183 = vector.shape_cast %179 : vector<8x128xf32> to vector<1x8x128xf32>
    tpu.vector_store %arg8[%180, %c0_52, %c0_53], %183 {strides = array<i32>} : memref<8x8x128xf32, #tpu.memory_space<vmem>>, vector<1x8x128xf32>,
    %c6_i32 = arith.constant 6 : i32
    %184 = arith.index_cast %c6_i32 : i32 to index
    %c0_54 = arith.constant 0 : index
    %c0_55 = arith.constant 0 : index
    %185 = vector.load %arg9[%184, %c0_54, %c0_55] : memref<8x8x384xf32, #tpu.memory_space<vmem>>, vector<1x8x384xf32>
    %186 = vector.shape_cast %185 : vector<1x8x384xf32> to vector<8x384xf32>
    %cst_56 = arith.constant dense<0.000000e+00> : vector<8x384xf32>
    %187 = tpu.matmul %179, %3, %cst_56 {dimension_numbers = #tpu.dot_dimension_numbers<[1], [0], [0], [1], [0, 0, 1, 1], [], []>} : vector<8x128xf32>, vector<128x384xf32>, vector<8x384xf32> -> vector<8x384xf32>
    %188 = vector.extract_strided_slice %186 {offsets = [0, 0], sizes = [8, 256], strides = [1, 1]} : vector<8x384xf32> to vector<8x256xf32>
    %189 = vector.extract_strided_slice %187 {offsets = [0, 0], sizes = [8, 256], strides = [1, 1]} : vector<8x384xf32> to vector<8x256xf32>
    %190 = arith.addf %188, %189 : vector<8x256xf32>
    %191 = arith.negf %190 : vector<8x256xf32>
    %192 = math.exp %191 : vector<8x256xf32>
    %cst_57 = arith.constant 1.000000e+00 : f32
    %193 = vector.broadcast %cst_57 : f32 to vector<8x256xf32>
    %194 = arith.addf %193, %192 : vector<8x256xf32>
    %195 = arith.divf %193, %194 : vector<8x256xf32>
    %196 = vector.extract_strided_slice %195 {offsets = [0, 0], sizes = [8, 128], strides = [1, 1]} : vector<8x256xf32> to vector<8x128xf32>
    %197 = vector.extract_strided_slice %195 {offsets = [0, 128], sizes = [8, 128], strides = [1, 1]} : vector<8x256xf32> to vector<8x128xf32>
    %198 = vector.extract_strided_slice %186 {offsets = [0, 256], sizes = [8, 128], strides = [1, 1]} : vector<8x384xf32> to vector<8x128xf32>
    %199 = vector.extract_strided_slice %187 {offsets = [0, 256], sizes = [8, 128], strides = [1, 1]} : vector<8x384xf32> to vector<8x128xf32>
    %200 = vector.broadcast %7 : vector<1x128xf32> to vector<8x128xf32>
    %201 = arith.addf %199, %200 : vector<8x128xf32>
    %202 = arith.mulf %196, %201 : vector<8x128xf32>
    %203 = arith.addf %198, %202 : vector<8x128xf32>
    %204 = math.tanh %203 : vector<8x128xf32>
    %205 = arith.subf %179, %204 : vector<8x128xf32>
    %206 = arith.mulf %197, %205 : vector<8x128xf32>
    %207 = arith.addf %204, %206 : vector<8x128xf32>
    %208 = arith.index_cast %c6_i32 : i32 to index
    %c0_58 = arith.constant 0 : index
    %c0_59 = arith.constant 0 : index
    %209 = vector.load %arg8[%208, %c0_58, %c0_59] : memref<8x8x128xf32, #tpu.memory_space<vmem>>, vector<1x8x128xf32>
    %210 = vector.shape_cast %209 : vector<1x8x128xf32> to vector<8x128xf32>
    %211 = vector.shape_cast %207 : vector<8x128xf32> to vector<1x8x128xf32>
    tpu.vector_store %arg8[%208, %c0_58, %c0_59], %211 {strides = array<i32>} : memref<8x8x128xf32, #tpu.memory_space<vmem>>, vector<1x8x128xf32>,
    %c7_i32 = arith.constant 7 : i32
    %212 = arith.index_cast %c7_i32 : i32 to index
    %c0_60 = arith.constant 0 : index
    %c0_61 = arith.constant 0 : index
    %213 = vector.load %arg9[%212, %c0_60, %c0_61] : memref<8x8x384xf32, #tpu.memory_space<vmem>>, vector<1x8x384xf32>
    %214 = vector.shape_cast %213 : vector<1x8x384xf32> to vector<8x384xf32>
    %cst_62 = arith.constant dense<0.000000e+00> : vector<8x384xf32>
    %215 = tpu.matmul %207, %3, %cst_62 {dimension_numbers = #tpu.dot_dimension_numbers<[1], [0], [0], [1], [0, 0, 1, 1], [], []>} : vector<8x128xf32>, vector<128x384xf32>, vector<8x384xf32> -> vector<8x384xf32>
    %216 = vector.extract_strided_slice %214 {offsets = [0, 0], sizes = [8, 256], strides = [1, 1]} : vector<8x384xf32> to vector<8x256xf32>
    %217 = vector.extract_strided_slice %215 {offsets = [0, 0], sizes = [8, 256], strides = [1, 1]} : vector<8x384xf32> to vector<8x256xf32>
    %218 = arith.addf %216, %217 : vector<8x256xf32>
    %219 = arith.negf %218 : vector<8x256xf32>
    %220 = math.exp %219 : vector<8x256xf32>
    %cst_63 = arith.constant 1.000000e+00 : f32
    %221 = vector.broadcast %cst_63 : f32 to vector<8x256xf32>
    %222 = arith.addf %221, %220 : vector<8x256xf32>
    %223 = arith.divf %221, %222 : vector<8x256xf32>
    %224 = vector.extract_strided_slice %223 {offsets = [0, 0], sizes = [8, 128], strides = [1, 1]} : vector<8x256xf32> to vector<8x128xf32>
    %225 = vector.extract_strided_slice %223 {offsets = [0, 128], sizes = [8, 128], strides = [1, 1]} : vector<8x256xf32> to vector<8x128xf32>
    %226 = vector.extract_strided_slice %214 {offsets = [0, 256], sizes = [8, 128], strides = [1, 1]} : vector<8x384xf32> to vector<8x128xf32>
    %227 = vector.extract_strided_slice %215 {offsets = [0, 256], sizes = [8, 128], strides = [1, 1]} : vector<8x384xf32> to vector<8x128xf32>
    %228 = vector.broadcast %7 : vector<1x128xf32> to vector<8x128xf32>
    %229 = arith.addf %227, %228 : vector<8x128xf32>
    %230 = arith.mulf %224, %229 : vector<8x128xf32>
    %231 = arith.addf %226, %230 : vector<8x128xf32>
    %232 = math.tanh %231 : vector<8x128xf32>
    %233 = arith.subf %207, %232 : vector<8x128xf32>
    %234 = arith.mulf %225, %233 : vector<8x128xf32>
    %235 = arith.addf %232, %234 : vector<8x128xf32>
    %236 = arith.index_cast %c7_i32 : i32 to index
    %c0_64 = arith.constant 0 : index
    %c0_65 = arith.constant 0 : index
    %237 = vector.load %arg8[%236, %c0_64, %c0_65] : memref<8x8x128xf32, #tpu.memory_space<vmem>>, vector<1x8x128xf32>
    %238 = vector.shape_cast %237 : vector<1x8x128xf32> to vector<8x128xf32>
    %239 = vector.shape_cast %235 : vector<8x128xf32> to vector<1x8x128xf32>
    tpu.vector_store %arg8[%236, %c0_64, %c0_65], %239 {strides = array<i32>} : memref<8x8x128xf32, #tpu.memory_space<vmem>>, vector<1x8x128xf32>,
    %c8_i32 = arith.constant 8 : i32
    %c1 = arith.constant 1 : index
    %c0_66 = arith.constant 0 : index
    %c0_67 = arith.constant 0 : index
    %240 = vector.load %arg1[%c1, %c0_66, %c0_67] : memref<3x128x384xf32, #tpu.memory_space<vmem>>, vector<1x128x384xf32>
    %241 = vector.shape_cast %240 : vector<1x128x384xf32> to vector<128x384xf32>
    %c1_68 = arith.constant 1 : index
    %c0_69 = arith.constant 0 : index
    %c0_70 = arith.constant 0 : index
    %242 = vector.load %arg2[%c1_68, %c0_69, %c0_70] : memref<3x128x384xf32, #tpu.memory_space<vmem>>, vector<1x128x384xf32>
    %243 = vector.shape_cast %242 : vector<1x128x384xf32> to vector<128x384xf32>
    %c1_71 = arith.constant 1 : index
    %c0_72 = arith.constant 0 : index
    %c0_73 = arith.constant 0 : index
    %244 = vector.load %arg3[%c1_71, %c0_72, %c0_73] : memref<3x1x384xf32, #tpu.memory_space<vmem>>, vector<1x1x384xf32>
    %245 = vector.shape_cast %244 : vector<1x1x384xf32> to vector<1x384xf32>
    %c1_74 = arith.constant 1 : index
    %c0_75 = arith.constant 0 : index
    %c0_76 = arith.constant 0 : index
    %246 = vector.load %arg4[%c1_74, %c0_75, %c0_76] : memref<3x1x128xf32, #tpu.memory_space<vmem>>, vector<1x1x128xf32>
    %247 = vector.shape_cast %246 : vector<1x1x128xf32> to vector<1x128xf32>
    %c0_77 = arith.constant 0 : index
    %c0_78 = arith.constant 0 : index
    %c0_79 = arith.constant 0 : index
    %248 = vector.load %arg8[%c0_77, %c0_78, %c0_79] : memref<8x8x128xf32, #tpu.memory_space<vmem>>, vector<8x8x128xf32>
    %249 = vector.shape_cast %248 : vector<8x8x128xf32> to vector<64x128xf32>
    %cst_80 = arith.constant dense<0.000000e+00> : vector<64x384xf32>
    %250 = tpu.matmul %249, %241, %cst_80 {dimension_numbers = #tpu.dot_dimension_numbers<[1], [0], [0], [1], [0, 0, 1, 1], [], []>} : vector<64x128xf32>, vector<128x384xf32>, vector<64x384xf32> -> vector<64x384xf32>
    %251 = vector.broadcast %245 : vector<1x384xf32> to vector<64x384xf32>
    %252 = arith.addf %250, %251 : vector<64x384xf32>
    %253 = vector.shape_cast %252 : vector<64x384xf32> to vector<8x8x384xf32>
    %c0_81 = arith.constant 0 : index
    %c0_82 = arith.constant 0 : index
    %c0_83 = arith.constant 0 : index
    %254 = vector.load %arg9[%c0_81, %c0_82, %c0_83] : memref<8x8x384xf32, #tpu.memory_space<vmem>>, vector<8x8x384xf32>
    tpu.vector_store %arg9[%c0_81, %c0_82, %c0_83], %253 {strides = array<i32>} : memref<8x8x384xf32, #tpu.memory_space<vmem>>, vector<8x8x384xf32>,
    %cst_84 = arith.constant 0.000000e+00 : f32
    %255 = vector.broadcast %cst_84 : f32 to vector<8x128xf32>
    %c0_i32_85 = arith.constant 0 : i32
    %256 = arith.index_cast %c0_i32_85 : i32 to index
    %c0_86 = arith.constant 0 : index
    %c0_87 = arith.constant 0 : index
    %257 = vector.load %arg9[%256, %c0_86, %c0_87] : memref<8x8x384xf32, #tpu.memory_space<vmem>>, vector<1x8x384xf32>
    %258 = vector.shape_cast %257 : vector<1x8x384xf32> to vector<8x384xf32>
    %cst_88 = arith.constant dense<0.000000e+00> : vector<8x384xf32>
    %259 = tpu.matmul %255, %243, %cst_88 {dimension_numbers = #tpu.dot_dimension_numbers<[1], [0], [0], [1], [0, 0, 1, 1], [], []>} : vector<8x128xf32>, vector<128x384xf32>, vector<8x384xf32> -> vector<8x384xf32>
    %260 = vector.extract_strided_slice %258 {offsets = [0, 0], sizes = [8, 256], strides = [1, 1]} : vector<8x384xf32> to vector<8x256xf32>
    %261 = vector.extract_strided_slice %259 {offsets = [0, 0], sizes = [8, 256], strides = [1, 1]} : vector<8x384xf32> to vector<8x256xf32>
    %262 = arith.addf %260, %261 : vector<8x256xf32>
    %263 = arith.negf %262 : vector<8x256xf32>
    %264 = math.exp %263 : vector<8x256xf32>
    %cst_89 = arith.constant 1.000000e+00 : f32
    %265 = vector.broadcast %cst_89 : f32 to vector<8x256xf32>
    %266 = arith.addf %265, %264 : vector<8x256xf32>
    %267 = arith.divf %265, %266 : vector<8x256xf32>
    %268 = vector.extract_strided_slice %267 {offsets = [0, 0], sizes = [8, 128], strides = [1, 1]} : vector<8x256xf32> to vector<8x128xf32>
    %269 = vector.extract_strided_slice %267 {offsets = [0, 128], sizes = [8, 128], strides = [1, 1]} : vector<8x256xf32> to vector<8x128xf32>
    %270 = vector.extract_strided_slice %258 {offsets = [0, 256], sizes = [8, 128], strides = [1, 1]} : vector<8x384xf32> to vector<8x128xf32>
    %271 = vector.extract_strided_slice %259 {offsets = [0, 256], sizes = [8, 128], strides = [1, 1]} : vector<8x384xf32> to vector<8x128xf32>
    %272 = vector.broadcast %247 : vector<1x128xf32> to vector<8x128xf32>
    %273 = arith.addf %271, %272 : vector<8x128xf32>
    %274 = arith.mulf %268, %273 : vector<8x128xf32>
    %275 = arith.addf %270, %274 : vector<8x128xf32>
    %276 = math.tanh %275 : vector<8x128xf32>
    %277 = arith.subf %255, %276 : vector<8x128xf32>
    %278 = arith.mulf %269, %277 : vector<8x128xf32>
    %279 = arith.addf %276, %278 : vector<8x128xf32>
    %280 = arith.index_cast %c0_i32_85 : i32 to index
    %c0_90 = arith.constant 0 : index
    %c0_91 = arith.constant 0 : index
    %281 = vector.load %arg8[%280, %c0_90, %c0_91] : memref<8x8x128xf32, #tpu.memory_space<vmem>>, vector<1x8x128xf32>
    %282 = vector.shape_cast %281 : vector<1x8x128xf32> to vector<8x128xf32>
    %283 = vector.shape_cast %279 : vector<8x128xf32> to vector<1x8x128xf32>
    tpu.vector_store %arg8[%280, %c0_90, %c0_91], %283 {strides = array<i32>} : memref<8x8x128xf32, #tpu.memory_space<vmem>>, vector<1x8x128xf32>,
    %c1_i32_92 = arith.constant 1 : i32
    %284 = arith.index_cast %c1_i32_92 : i32 to index
    %c0_93 = arith.constant 0 : index
    %c0_94 = arith.constant 0 : index
    %285 = vector.load %arg9[%284, %c0_93, %c0_94] : memref<8x8x384xf32, #tpu.memory_space<vmem>>, vector<1x8x384xf32>
    %286 = vector.shape_cast %285 : vector<1x8x384xf32> to vector<8x384xf32>
    %cst_95 = arith.constant dense<0.000000e+00> : vector<8x384xf32>
    %287 = tpu.matmul %279, %243, %cst_95 {dimension_numbers = #tpu.dot_dimension_numbers<[1], [0], [0], [1], [0, 0, 1, 1], [], []>} : vector<8x128xf32>, vector<128x384xf32>, vector<8x384xf32> -> vector<8x384xf32>
    %288 = vector.extract_strided_slice %286 {offsets = [0, 0], sizes = [8, 256], strides = [1, 1]} : vector<8x384xf32> to vector<8x256xf32>
    %289 = vector.extract_strided_slice %287 {offsets = [0, 0], sizes = [8, 256], strides = [1, 1]} : vector<8x384xf32> to vector<8x256xf32>
    %290 = arith.addf %288, %289 : vector<8x256xf32>
    %291 = arith.negf %290 : vector<8x256xf32>
    %292 = math.exp %291 : vector<8x256xf32>
    %cst_96 = arith.constant 1.000000e+00 : f32
    %293 = vector.broadcast %cst_96 : f32 to vector<8x256xf32>
    %294 = arith.addf %293, %292 : vector<8x256xf32>
    %295 = arith.divf %293, %294 : vector<8x256xf32>
    %296 = vector.extract_strided_slice %295 {offsets = [0, 0], sizes = [8, 128], strides = [1, 1]} : vector<8x256xf32> to vector<8x128xf32>
    %297 = vector.extract_strided_slice %295 {offsets = [0, 128], sizes = [8, 128], strides = [1, 1]} : vector<8x256xf32> to vector<8x128xf32>
    %298 = vector.extract_strided_slice %286 {offsets = [0, 256], sizes = [8, 128], strides = [1, 1]} : vector<8x384xf32> to vector<8x128xf32>
    %299 = vector.extract_strided_slice %287 {offsets = [0, 256], sizes = [8, 128], strides = [1, 1]} : vector<8x384xf32> to vector<8x128xf32>
    %300 = vector.broadcast %247 : vector<1x128xf32> to vector<8x128xf32>
    %301 = arith.addf %299, %300 : vector<8x128xf32>
    %302 = arith.mulf %296, %301 : vector<8x128xf32>
    %303 = arith.addf %298, %302 : vector<8x128xf32>
    %304 = math.tanh %303 : vector<8x128xf32>
    %305 = arith.subf %279, %304 : vector<8x128xf32>
    %306 = arith.mulf %297, %305 : vector<8x128xf32>
    %307 = arith.addf %304, %306 : vector<8x128xf32>
    %308 = arith.index_cast %c1_i32_92 : i32 to index
    %c0_97 = arith.constant 0 : index
    %c0_98 = arith.constant 0 : index
    %309 = vector.load %arg8[%308, %c0_97, %c0_98] : memref<8x8x128xf32, #tpu.memory_space<vmem>>, vector<1x8x128xf32>
    %310 = vector.shape_cast %309 : vector<1x8x128xf32> to vector<8x128xf32>
    %311 = vector.shape_cast %307 : vector<8x128xf32> to vector<1x8x128xf32>
    tpu.vector_store %arg8[%308, %c0_97, %c0_98], %311 {strides = array<i32>} : memref<8x8x128xf32, #tpu.memory_space<vmem>>, vector<1x8x128xf32>,
    %c2_i32_99 = arith.constant 2 : i32
    %312 = arith.index_cast %c2_i32_99 : i32 to index
    %c0_100 = arith.constant 0 : index
    %c0_101 = arith.constant 0 : index
    %313 = vector.load %arg9[%312, %c0_100, %c0_101] : memref<8x8x384xf32, #tpu.memory_space<vmem>>, vector<1x8x384xf32>
    %314 = vector.shape_cast %313 : vector<1x8x384xf32> to vector<8x384xf32>
    %cst_102 = arith.constant dense<0.000000e+00> : vector<8x384xf32>
    %315 = tpu.matmul %307, %243, %cst_102 {dimension_numbers = #tpu.dot_dimension_numbers<[1], [0], [0], [1], [0, 0, 1, 1], [], []>} : vector<8x128xf32>, vector<128x384xf32>, vector<8x384xf32> -> vector<8x384xf32>
    %316 = vector.extract_strided_slice %314 {offsets = [0, 0], sizes = [8, 256], strides = [1, 1]} : vector<8x384xf32> to vector<8x256xf32>
    %317 = vector.extract_strided_slice %315 {offsets = [0, 0], sizes = [8, 256], strides = [1, 1]} : vector<8x384xf32> to vector<8x256xf32>
    %318 = arith.addf %316, %317 : vector<8x256xf32>
    %319 = arith.negf %318 : vector<8x256xf32>
    %320 = math.exp %319 : vector<8x256xf32>
    %cst_103 = arith.constant 1.000000e+00 : f32
    %321 = vector.broadcast %cst_103 : f32 to vector<8x256xf32>
    %322 = arith.addf %321, %320 : vector<8x256xf32>
    %323 = arith.divf %321, %322 : vector<8x256xf32>
    %324 = vector.extract_strided_slice %323 {offsets = [0, 0], sizes = [8, 128], strides = [1, 1]} : vector<8x256xf32> to vector<8x128xf32>
    %325 = vector.extract_strided_slice %323 {offsets = [0, 128], sizes = [8, 128], strides = [1, 1]} : vector<8x256xf32> to vector<8x128xf32>
    %326 = vector.extract_strided_slice %314 {offsets = [0, 256], sizes = [8, 128], strides = [1, 1]} : vector<8x384xf32> to vector<8x128xf32>
    %327 = vector.extract_strided_slice %315 {offsets = [0, 256], sizes = [8, 128], strides = [1, 1]} : vector<8x384xf32> to vector<8x128xf32>
    %328 = vector.broadcast %247 : vector<1x128xf32> to vector<8x128xf32>
    %329 = arith.addf %327, %328 : vector<8x128xf32>
    %330 = arith.mulf %324, %329 : vector<8x128xf32>
    %331 = arith.addf %326, %330 : vector<8x128xf32>
    %332 = math.tanh %331 : vector<8x128xf32>
    %333 = arith.subf %307, %332 : vector<8x128xf32>
    %334 = arith.mulf %325, %333 : vector<8x128xf32>
    %335 = arith.addf %332, %334 : vector<8x128xf32>
    %336 = arith.index_cast %c2_i32_99 : i32 to index
    %c0_104 = arith.constant 0 : index
    %c0_105 = arith.constant 0 : index
    %337 = vector.load %arg8[%336, %c0_104, %c0_105] : memref<8x8x128xf32, #tpu.memory_space<vmem>>, vector<1x8x128xf32>
    %338 = vector.shape_cast %337 : vector<1x8x128xf32> to vector<8x128xf32>
    %339 = vector.shape_cast %335 : vector<8x128xf32> to vector<1x8x128xf32>
    tpu.vector_store %arg8[%336, %c0_104, %c0_105], %339 {strides = array<i32>} : memref<8x8x128xf32, #tpu.memory_space<vmem>>, vector<1x8x128xf32>,
    %c3_i32_106 = arith.constant 3 : i32
    %340 = arith.index_cast %c3_i32_106 : i32 to index
    %c0_107 = arith.constant 0 : index
    %c0_108 = arith.constant 0 : index
    %341 = vector.load %arg9[%340, %c0_107, %c0_108] : memref<8x8x384xf32, #tpu.memory_space<vmem>>, vector<1x8x384xf32>
    %342 = vector.shape_cast %341 : vector<1x8x384xf32> to vector<8x384xf32>
    %cst_109 = arith.constant dense<0.000000e+00> : vector<8x384xf32>
    %343 = tpu.matmul %335, %243, %cst_109 {dimension_numbers = #tpu.dot_dimension_numbers<[1], [0], [0], [1], [0, 0, 1, 1], [], []>} : vector<8x128xf32>, vector<128x384xf32>, vector<8x384xf32> -> vector<8x384xf32>
    %344 = vector.extract_strided_slice %342 {offsets = [0, 0], sizes = [8, 256], strides = [1, 1]} : vector<8x384xf32> to vector<8x256xf32>
    %345 = vector.extract_strided_slice %343 {offsets = [0, 0], sizes = [8, 256], strides = [1, 1]} : vector<8x384xf32> to vector<8x256xf32>
    %346 = arith.addf %344, %345 : vector<8x256xf32>
    %347 = arith.negf %346 : vector<8x256xf32>
    %348 = math.exp %347 : vector<8x256xf32>
    %cst_110 = arith.constant 1.000000e+00 : f32
    %349 = vector.broadcast %cst_110 : f32 to vector<8x256xf32>
    %350 = arith.addf %349, %348 : vector<8x256xf32>
    %351 = arith.divf %349, %350 : vector<8x256xf32>
    %352 = vector.extract_strided_slice %351 {offsets = [0, 0], sizes = [8, 128], strides = [1, 1]} : vector<8x256xf32> to vector<8x128xf32>
    %353 = vector.extract_strided_slice %351 {offsets = [0, 128], sizes = [8, 128], strides = [1, 1]} : vector<8x256xf32> to vector<8x128xf32>
    %354 = vector.extract_strided_slice %342 {offsets = [0, 256], sizes = [8, 128], strides = [1, 1]} : vector<8x384xf32> to vector<8x128xf32>
    %355 = vector.extract_strided_slice %343 {offsets = [0, 256], sizes = [8, 128], strides = [1, 1]} : vector<8x384xf32> to vector<8x128xf32>
    %356 = vector.broadcast %247 : vector<1x128xf32> to vector<8x128xf32>
    %357 = arith.addf %355, %356 : vector<8x128xf32>
    %358 = arith.mulf %352, %357 : vector<8x128xf32>
    %359 = arith.addf %354, %358 : vector<8x128xf32>
    %360 = math.tanh %359 : vector<8x128xf32>
    %361 = arith.subf %335, %360 : vector<8x128xf32>
    %362 = arith.mulf %353, %361 : vector<8x128xf32>
    %363 = arith.addf %360, %362 : vector<8x128xf32>
    %364 = arith.index_cast %c3_i32_106 : i32 to index
    %c0_111 = arith.constant 0 : index
    %c0_112 = arith.constant 0 : index
    %365 = vector.load %arg8[%364, %c0_111, %c0_112] : memref<8x8x128xf32, #tpu.memory_space<vmem>>, vector<1x8x128xf32>
    %366 = vector.shape_cast %365 : vector<1x8x128xf32> to vector<8x128xf32>
    %367 = vector.shape_cast %363 : vector<8x128xf32> to vector<1x8x128xf32>
    tpu.vector_store %arg8[%364, %c0_111, %c0_112], %367 {strides = array<i32>} : memref<8x8x128xf32, #tpu.memory_space<vmem>>, vector<1x8x128xf32>,
    %c4_i32_113 = arith.constant 4 : i32
    %368 = arith.index_cast %c4_i32_113 : i32 to index
    %c0_114 = arith.constant 0 : index
    %c0_115 = arith.constant 0 : index
    %369 = vector.load %arg9[%368, %c0_114, %c0_115] : memref<8x8x384xf32, #tpu.memory_space<vmem>>, vector<1x8x384xf32>
    %370 = vector.shape_cast %369 : vector<1x8x384xf32> to vector<8x384xf32>
    %cst_116 = arith.constant dense<0.000000e+00> : vector<8x384xf32>
    %371 = tpu.matmul %363, %243, %cst_116 {dimension_numbers = #tpu.dot_dimension_numbers<[1], [0], [0], [1], [0, 0, 1, 1], [], []>} : vector<8x128xf32>, vector<128x384xf32>, vector<8x384xf32> -> vector<8x384xf32>
    %372 = vector.extract_strided_slice %370 {offsets = [0, 0], sizes = [8, 256], strides = [1, 1]} : vector<8x384xf32> to vector<8x256xf32>
    %373 = vector.extract_strided_slice %371 {offsets = [0, 0], sizes = [8, 256], strides = [1, 1]} : vector<8x384xf32> to vector<8x256xf32>
    %374 = arith.addf %372, %373 : vector<8x256xf32>
    %375 = arith.negf %374 : vector<8x256xf32>
    %376 = math.exp %375 : vector<8x256xf32>
    %cst_117 = arith.constant 1.000000e+00 : f32
    %377 = vector.broadcast %cst_117 : f32 to vector<8x256xf32>
    %378 = arith.addf %377, %376 : vector<8x256xf32>
    %379 = arith.divf %377, %378 : vector<8x256xf32>
    %380 = vector.extract_strided_slice %379 {offsets = [0, 0], sizes = [8, 128], strides = [1, 1]} : vector<8x256xf32> to vector<8x128xf32>
    %381 = vector.extract_strided_slice %379 {offsets = [0, 128], sizes = [8, 128], strides = [1, 1]} : vector<8x256xf32> to vector<8x128xf32>
    %382 = vector.extract_strided_slice %370 {offsets = [0, 256], sizes = [8, 128], strides = [1, 1]} : vector<8x384xf32> to vector<8x128xf32>
    %383 = vector.extract_strided_slice %371 {offsets = [0, 256], sizes = [8, 128], strides = [1, 1]} : vector<8x384xf32> to vector<8x128xf32>
    %384 = vector.broadcast %247 : vector<1x128xf32> to vector<8x128xf32>
    %385 = arith.addf %383, %384 : vector<8x128xf32>
    %386 = arith.mulf %380, %385 : vector<8x128xf32>
    %387 = arith.addf %382, %386 : vector<8x128xf32>
    %388 = math.tanh %387 : vector<8x128xf32>
    %389 = arith.subf %363, %388 : vector<8x128xf32>
    %390 = arith.mulf %381, %389 : vector<8x128xf32>
    %391 = arith.addf %388, %390 : vector<8x128xf32>
    %392 = arith.index_cast %c4_i32_113 : i32 to index
    %c0_118 = arith.constant 0 : index
    %c0_119 = arith.constant 0 : index
    %393 = vector.load %arg8[%392, %c0_118, %c0_119] : memref<8x8x128xf32, #tpu.memory_space<vmem>>, vector<1x8x128xf32>
    %394 = vector.shape_cast %393 : vector<1x8x128xf32> to vector<8x128xf32>
    %395 = vector.shape_cast %391 : vector<8x128xf32> to vector<1x8x128xf32>
    tpu.vector_store %arg8[%392, %c0_118, %c0_119], %395 {strides = array<i32>} : memref<8x8x128xf32, #tpu.memory_space<vmem>>, vector<1x8x128xf32>,
    %c5_i32_120 = arith.constant 5 : i32
    %396 = arith.index_cast %c5_i32_120 : i32 to index
    %c0_121 = arith.constant 0 : index
    %c0_122 = arith.constant 0 : index
    %397 = vector.load %arg9[%396, %c0_121, %c0_122] : memref<8x8x384xf32, #tpu.memory_space<vmem>>, vector<1x8x384xf32>
    %398 = vector.shape_cast %397 : vector<1x8x384xf32> to vector<8x384xf32>
    %cst_123 = arith.constant dense<0.000000e+00> : vector<8x384xf32>
    %399 = tpu.matmul %391, %243, %cst_123 {dimension_numbers = #tpu.dot_dimension_numbers<[1], [0], [0], [1], [0, 0, 1, 1], [], []>} : vector<8x128xf32>, vector<128x384xf32>, vector<8x384xf32> -> vector<8x384xf32>
    %400 = vector.extract_strided_slice %398 {offsets = [0, 0], sizes = [8, 256], strides = [1, 1]} : vector<8x384xf32> to vector<8x256xf32>
    %401 = vector.extract_strided_slice %399 {offsets = [0, 0], sizes = [8, 256], strides = [1, 1]} : vector<8x384xf32> to vector<8x256xf32>
    %402 = arith.addf %400, %401 : vector<8x256xf32>
    %403 = arith.negf %402 : vector<8x256xf32>
    %404 = math.exp %403 : vector<8x256xf32>
    %cst_124 = arith.constant 1.000000e+00 : f32
    %405 = vector.broadcast %cst_124 : f32 to vector<8x256xf32>
    %406 = arith.addf %405, %404 : vector<8x256xf32>
    %407 = arith.divf %405, %406 : vector<8x256xf32>
    %408 = vector.extract_strided_slice %407 {offsets = [0, 0], sizes = [8, 128], strides = [1, 1]} : vector<8x256xf32> to vector<8x128xf32>
    %409 = vector.extract_strided_slice %407 {offsets = [0, 128], sizes = [8, 128], strides = [1, 1]} : vector<8x256xf32> to vector<8x128xf32>
    %410 = vector.extract_strided_slice %398 {offsets = [0, 256], sizes = [8, 128], strides = [1, 1]} : vector<8x384xf32> to vector<8x128xf32>
    %411 = vector.extract_strided_slice %399 {offsets = [0, 256], sizes = [8, 128], strides = [1, 1]} : vector<8x384xf32> to vector<8x128xf32>
    %412 = vector.broadcast %247 : vector<1x128xf32> to vector<8x128xf32>
    %413 = arith.addf %411, %412 : vector<8x128xf32>
    %414 = arith.mulf %408, %413 : vector<8x128xf32>
    %415 = arith.addf %410, %414 : vector<8x128xf32>
    %416 = math.tanh %415 : vector<8x128xf32>
    %417 = arith.subf %391, %416 : vector<8x128xf32>
    %418 = arith.mulf %409, %417 : vector<8x128xf32>
    %419 = arith.addf %416, %418 : vector<8x128xf32>
    %420 = arith.index_cast %c5_i32_120 : i32 to index
    %c0_125 = arith.constant 0 : index
    %c0_126 = arith.constant 0 : index
    %421 = vector.load %arg8[%420, %c0_125, %c0_126] : memref<8x8x128xf32, #tpu.memory_space<vmem>>, vector<1x8x128xf32>
    %422 = vector.shape_cast %421 : vector<1x8x128xf32> to vector<8x128xf32>
    %423 = vector.shape_cast %419 : vector<8x128xf32> to vector<1x8x128xf32>
    tpu.vector_store %arg8[%420, %c0_125, %c0_126], %423 {strides = array<i32>} : memref<8x8x128xf32, #tpu.memory_space<vmem>>, vector<1x8x128xf32>,
    %c6_i32_127 = arith.constant 6 : i32
    %424 = arith.index_cast %c6_i32_127 : i32 to index
    %c0_128 = arith.constant 0 : index
    %c0_129 = arith.constant 0 : index
    %425 = vector.load %arg9[%424, %c0_128, %c0_129] : memref<8x8x384xf32, #tpu.memory_space<vmem>>, vector<1x8x384xf32>
    %426 = vector.shape_cast %425 : vector<1x8x384xf32> to vector<8x384xf32>
    %cst_130 = arith.constant dense<0.000000e+00> : vector<8x384xf32>
    %427 = tpu.matmul %419, %243, %cst_130 {dimension_numbers = #tpu.dot_dimension_numbers<[1], [0], [0], [1], [0, 0, 1, 1], [], []>} : vector<8x128xf32>, vector<128x384xf32>, vector<8x384xf32> -> vector<8x384xf32>
    %428 = vector.extract_strided_slice %426 {offsets = [0, 0], sizes = [8, 256], strides = [1, 1]} : vector<8x384xf32> to vector<8x256xf32>
    %429 = vector.extract_strided_slice %427 {offsets = [0, 0], sizes = [8, 256], strides = [1, 1]} : vector<8x384xf32> to vector<8x256xf32>
    %430 = arith.addf %428, %429 : vector<8x256xf32>
    %431 = arith.negf %430 : vector<8x256xf32>
    %432 = math.exp %431 : vector<8x256xf32>
    %cst_131 = arith.constant 1.000000e+00 : f32
    %433 = vector.broadcast %cst_131 : f32 to vector<8x256xf32>
    %434 = arith.addf %433, %432 : vector<8x256xf32>
    %435 = arith.divf %433, %434 : vector<8x256xf32>
    %436 = vector.extract_strided_slice %435 {offsets = [0, 0], sizes = [8, 128], strides = [1, 1]} : vector<8x256xf32> to vector<8x128xf32>
    %437 = vector.extract_strided_slice %435 {offsets = [0, 128], sizes = [8, 128], strides = [1, 1]} : vector<8x256xf32> to vector<8x128xf32>
    %438 = vector.extract_strided_slice %426 {offsets = [0, 256], sizes = [8, 128], strides = [1, 1]} : vector<8x384xf32> to vector<8x128xf32>
    %439 = vector.extract_strided_slice %427 {offsets = [0, 256], sizes = [8, 128], strides = [1, 1]} : vector<8x384xf32> to vector<8x128xf32>
    %440 = vector.broadcast %247 : vector<1x128xf32> to vector<8x128xf32>
    %441 = arith.addf %439, %440 : vector<8x128xf32>
    %442 = arith.mulf %436, %441 : vector<8x128xf32>
    %443 = arith.addf %438, %442 : vector<8x128xf32>
    %444 = math.tanh %443 : vector<8x128xf32>
    %445 = arith.subf %419, %444 : vector<8x128xf32>
    %446 = arith.mulf %437, %445 : vector<8x128xf32>
    %447 = arith.addf %444, %446 : vector<8x128xf32>
    %448 = arith.index_cast %c6_i32_127 : i32 to index
    %c0_132 = arith.constant 0 : index
    %c0_133 = arith.constant 0 : index
    %449 = vector.load %arg8[%448, %c0_132, %c0_133] : memref<8x8x128xf32, #tpu.memory_space<vmem>>, vector<1x8x128xf32>
    %450 = vector.shape_cast %449 : vector<1x8x128xf32> to vector<8x128xf32>
    %451 = vector.shape_cast %447 : vector<8x128xf32> to vector<1x8x128xf32>
    tpu.vector_store %arg8[%448, %c0_132, %c0_133], %451 {strides = array<i32>} : memref<8x8x128xf32, #tpu.memory_space<vmem>>, vector<1x8x128xf32>,
    %c7_i32_134 = arith.constant 7 : i32
    %452 = arith.index_cast %c7_i32_134 : i32 to index
    %c0_135 = arith.constant 0 : index
    %c0_136 = arith.constant 0 : index
    %453 = vector.load %arg9[%452, %c0_135, %c0_136] : memref<8x8x384xf32, #tpu.memory_space<vmem>>, vector<1x8x384xf32>
    %454 = vector.shape_cast %453 : vector<1x8x384xf32> to vector<8x384xf32>
    %cst_137 = arith.constant dense<0.000000e+00> : vector<8x384xf32>
    %455 = tpu.matmul %447, %243, %cst_137 {dimension_numbers = #tpu.dot_dimension_numbers<[1], [0], [0], [1], [0, 0, 1, 1], [], []>} : vector<8x128xf32>, vector<128x384xf32>, vector<8x384xf32> -> vector<8x384xf32>
    %456 = vector.extract_strided_slice %454 {offsets = [0, 0], sizes = [8, 256], strides = [1, 1]} : vector<8x384xf32> to vector<8x256xf32>
    %457 = vector.extract_strided_slice %455 {offsets = [0, 0], sizes = [8, 256], strides = [1, 1]} : vector<8x384xf32> to vector<8x256xf32>
    %458 = arith.addf %456, %457 : vector<8x256xf32>
    %459 = arith.negf %458 : vector<8x256xf32>
    %460 = math.exp %459 : vector<8x256xf32>
    %cst_138 = arith.constant 1.000000e+00 : f32
    %461 = vector.broadcast %cst_138 : f32 to vector<8x256xf32>
    %462 = arith.addf %461, %460 : vector<8x256xf32>
    %463 = arith.divf %461, %462 : vector<8x256xf32>
    %464 = vector.extract_strided_slice %463 {offsets = [0, 0], sizes = [8, 128], strides = [1, 1]} : vector<8x256xf32> to vector<8x128xf32>
    %465 = vector.extract_strided_slice %463 {offsets = [0, 128], sizes = [8, 128], strides = [1, 1]} : vector<8x256xf32> to vector<8x128xf32>
    %466 = vector.extract_strided_slice %454 {offsets = [0, 256], sizes = [8, 128], strides = [1, 1]} : vector<8x384xf32> to vector<8x128xf32>
    %467 = vector.extract_strided_slice %455 {offsets = [0, 256], sizes = [8, 128], strides = [1, 1]} : vector<8x384xf32> to vector<8x128xf32>
    %468 = vector.broadcast %247 : vector<1x128xf32> to vector<8x128xf32>
    %469 = arith.addf %467, %468 : vector<8x128xf32>
    %470 = arith.mulf %464, %469 : vector<8x128xf32>
    %471 = arith.addf %466, %470 : vector<8x128xf32>
    %472 = math.tanh %471 : vector<8x128xf32>
    %473 = arith.subf %447, %472 : vector<8x128xf32>
    %474 = arith.mulf %465, %473 : vector<8x128xf32>
    %475 = arith.addf %472, %474 : vector<8x128xf32>
    %476 = arith.index_cast %c7_i32_134 : i32 to index
    %c0_139 = arith.constant 0 : index
    %c0_140 = arith.constant 0 : index
    %477 = vector.load %arg8[%476, %c0_139, %c0_140] : memref<8x8x128xf32, #tpu.memory_space<vmem>>, vector<1x8x128xf32>
    %478 = vector.shape_cast %477 : vector<1x8x128xf32> to vector<8x128xf32>
    %479 = vector.shape_cast %475 : vector<8x128xf32> to vector<1x8x128xf32>
    tpu.vector_store %arg8[%476, %c0_139, %c0_140], %479 {strides = array<i32>} : memref<8x8x128xf32, #tpu.memory_space<vmem>>, vector<1x8x128xf32>,
    %c8_i32_141 = arith.constant 8 : i32
    %c2 = arith.constant 2 : index
    %c0_142 = arith.constant 0 : index
    %c0_143 = arith.constant 0 : index
    %480 = vector.load %arg1[%c2, %c0_142, %c0_143] : memref<3x128x384xf32, #tpu.memory_space<vmem>>, vector<1x128x384xf32>
    %481 = vector.shape_cast %480 : vector<1x128x384xf32> to vector<128x384xf32>
    %c2_144 = arith.constant 2 : index
    %c0_145 = arith.constant 0 : index
    %c0_146 = arith.constant 0 : index
    %482 = vector.load %arg2[%c2_144, %c0_145, %c0_146] : memref<3x128x384xf32, #tpu.memory_space<vmem>>, vector<1x128x384xf32>
    %483 = vector.shape_cast %482 : vector<1x128x384xf32> to vector<128x384xf32>
    %c2_147 = arith.constant 2 : index
    %c0_148 = arith.constant 0 : index
    %c0_149 = arith.constant 0 : index
    %484 = vector.load %arg3[%c2_147, %c0_148, %c0_149] : memref<3x1x384xf32, #tpu.memory_space<vmem>>, vector<1x1x384xf32>
    %485 = vector.shape_cast %484 : vector<1x1x384xf32> to vector<1x384xf32>
    %c2_150 = arith.constant 2 : index
    %c0_151 = arith.constant 0 : index
    %c0_152 = arith.constant 0 : index
    %486 = vector.load %arg4[%c2_150, %c0_151, %c0_152] : memref<3x1x128xf32, #tpu.memory_space<vmem>>, vector<1x1x128xf32>
    %487 = vector.shape_cast %486 : vector<1x1x128xf32> to vector<1x128xf32>
    %c0_153 = arith.constant 0 : index
    %c0_154 = arith.constant 0 : index
    %c0_155 = arith.constant 0 : index
    %488 = vector.load %arg8[%c0_153, %c0_154, %c0_155] : memref<8x8x128xf32, #tpu.memory_space<vmem>>, vector<8x8x128xf32>
    %489 = vector.shape_cast %488 : vector<8x8x128xf32> to vector<64x128xf32>
    %cst_156 = arith.constant dense<0.000000e+00> : vector<64x384xf32>
    %490 = tpu.matmul %489, %481, %cst_156 {dimension_numbers = #tpu.dot_dimension_numbers<[1], [0], [0], [1], [0, 0, 1, 1], [], []>} : vector<64x128xf32>, vector<128x384xf32>, vector<64x384xf32> -> vector<64x384xf32>
    %491 = vector.broadcast %485 : vector<1x384xf32> to vector<64x384xf32>
    %492 = arith.addf %490, %491 : vector<64x384xf32>
    %493 = vector.shape_cast %492 : vector<64x384xf32> to vector<8x8x384xf32>
    %c0_157 = arith.constant 0 : index
    %c0_158 = arith.constant 0 : index
    %c0_159 = arith.constant 0 : index
    %494 = vector.load %arg9[%c0_157, %c0_158, %c0_159] : memref<8x8x384xf32, #tpu.memory_space<vmem>>, vector<8x8x384xf32>
    tpu.vector_store %arg9[%c0_157, %c0_158, %c0_159], %493 {strides = array<i32>} : memref<8x8x384xf32, #tpu.memory_space<vmem>>, vector<8x8x384xf32>,
    %cst_160 = arith.constant 0.000000e+00 : f32
    %495 = vector.broadcast %cst_160 : f32 to vector<8x128xf32>
    %c0_i32_161 = arith.constant 0 : i32
    %496 = arith.index_cast %c0_i32_161 : i32 to index
    %c0_162 = arith.constant 0 : index
    %c0_163 = arith.constant 0 : index
    %497 = vector.load %arg9[%496, %c0_162, %c0_163] : memref<8x8x384xf32, #tpu.memory_space<vmem>>, vector<1x8x384xf32>
    %498 = vector.shape_cast %497 : vector<1x8x384xf32> to vector<8x384xf32>
    %cst_164 = arith.constant dense<0.000000e+00> : vector<8x384xf32>
    %499 = tpu.matmul %495, %483, %cst_164 {dimension_numbers = #tpu.dot_dimension_numbers<[1], [0], [0], [1], [0, 0, 1, 1], [], []>} : vector<8x128xf32>, vector<128x384xf32>, vector<8x384xf32> -> vector<8x384xf32>
    %500 = vector.extract_strided_slice %498 {offsets = [0, 0], sizes = [8, 256], strides = [1, 1]} : vector<8x384xf32> to vector<8x256xf32>
    %501 = vector.extract_strided_slice %499 {offsets = [0, 0], sizes = [8, 256], strides = [1, 1]} : vector<8x384xf32> to vector<8x256xf32>
    %502 = arith.addf %500, %501 : vector<8x256xf32>
    %503 = arith.negf %502 : vector<8x256xf32>
    %504 = math.exp %503 : vector<8x256xf32>
    %cst_165 = arith.constant 1.000000e+00 : f32
    %505 = vector.broadcast %cst_165 : f32 to vector<8x256xf32>
    %506 = arith.addf %505, %504 : vector<8x256xf32>
    %507 = arith.divf %505, %506 : vector<8x256xf32>
    %508 = vector.extract_strided_slice %507 {offsets = [0, 0], sizes = [8, 128], strides = [1, 1]} : vector<8x256xf32> to vector<8x128xf32>
    %509 = vector.extract_strided_slice %507 {offsets = [0, 128], sizes = [8, 128], strides = [1, 1]} : vector<8x256xf32> to vector<8x128xf32>
    %510 = vector.extract_strided_slice %498 {offsets = [0, 256], sizes = [8, 128], strides = [1, 1]} : vector<8x384xf32> to vector<8x128xf32>
    %511 = vector.extract_strided_slice %499 {offsets = [0, 256], sizes = [8, 128], strides = [1, 1]} : vector<8x384xf32> to vector<8x128xf32>
    %512 = vector.broadcast %487 : vector<1x128xf32> to vector<8x128xf32>
    %513 = arith.addf %511, %512 : vector<8x128xf32>
    %514 = arith.mulf %508, %513 : vector<8x128xf32>
    %515 = arith.addf %510, %514 : vector<8x128xf32>
    %516 = math.tanh %515 : vector<8x128xf32>
    %517 = arith.subf %495, %516 : vector<8x128xf32>
    %518 = arith.mulf %509, %517 : vector<8x128xf32>
    %519 = arith.addf %516, %518 : vector<8x128xf32>
    %c1_i32_166 = arith.constant 1 : i32
    %520 = arith.index_cast %c1_i32_166 : i32 to index
    %c0_167 = arith.constant 0 : index
    %c0_168 = arith.constant 0 : index
    %521 = vector.load %arg9[%520, %c0_167, %c0_168] : memref<8x8x384xf32, #tpu.memory_space<vmem>>, vector<1x8x384xf32>
    %522 = vector.shape_cast %521 : vector<1x8x384xf32> to vector<8x384xf32>
    %cst_169 = arith.constant dense<0.000000e+00> : vector<8x384xf32>
    %523 = tpu.matmul %519, %483, %cst_169 {dimension_numbers = #tpu.dot_dimension_numbers<[1], [0], [0], [1], [0, 0, 1, 1], [], []>} : vector<8x128xf32>, vector<128x384xf32>, vector<8x384xf32> -> vector<8x384xf32>
    %524 = vector.extract_strided_slice %522 {offsets = [0, 0], sizes = [8, 256], strides = [1, 1]} : vector<8x384xf32> to vector<8x256xf32>
    %525 = vector.extract_strided_slice %523 {offsets = [0, 0], sizes = [8, 256], strides = [1, 1]} : vector<8x384xf32> to vector<8x256xf32>
    %526 = arith.addf %524, %525 : vector<8x256xf32>
    %527 = arith.negf %526 : vector<8x256xf32>
    %528 = math.exp %527 : vector<8x256xf32>
    %cst_170 = arith.constant 1.000000e+00 : f32
    %529 = vector.broadcast %cst_170 : f32 to vector<8x256xf32>
    %530 = arith.addf %529, %528 : vector<8x256xf32>
    %531 = arith.divf %529, %530 : vector<8x256xf32>
    %532 = vector.extract_strided_slice %531 {offsets = [0, 0], sizes = [8, 128], strides = [1, 1]} : vector<8x256xf32> to vector<8x128xf32>
    %533 = vector.extract_strided_slice %531 {offsets = [0, 128], sizes = [8, 128], strides = [1, 1]} : vector<8x256xf32> to vector<8x128xf32>
    %534 = vector.extract_strided_slice %522 {offsets = [0, 256], sizes = [8, 128], strides = [1, 1]} : vector<8x384xf32> to vector<8x128xf32>
    %535 = vector.extract_strided_slice %523 {offsets = [0, 256], sizes = [8, 128], strides = [1, 1]} : vector<8x384xf32> to vector<8x128xf32>
    %536 = vector.broadcast %487 : vector<1x128xf32> to vector<8x128xf32>
    %537 = arith.addf %535, %536 : vector<8x128xf32>
    %538 = arith.mulf %532, %537 : vector<8x128xf32>
    %539 = arith.addf %534, %538 : vector<8x128xf32>
    %540 = math.tanh %539 : vector<8x128xf32>
    %541 = arith.subf %519, %540 : vector<8x128xf32>
    %542 = arith.mulf %533, %541 : vector<8x128xf32>
    %543 = arith.addf %540, %542 : vector<8x128xf32>
    %c2_i32_171 = arith.constant 2 : i32
    %544 = arith.index_cast %c2_i32_171 : i32 to index
    %c0_172 = arith.constant 0 : index
    %c0_173 = arith.constant 0 : index
    %545 = vector.load %arg9[%544, %c0_172, %c0_173] : memref<8x8x384xf32, #tpu.memory_space<vmem>>, vector<1x8x384xf32>
    %546 = vector.shape_cast %545 : vector<1x8x384xf32> to vector<8x384xf32>
    %cst_174 = arith.constant dense<0.000000e+00> : vector<8x384xf32>
    %547 = tpu.matmul %543, %483, %cst_174 {dimension_numbers = #tpu.dot_dimension_numbers<[1], [0], [0], [1], [0, 0, 1, 1], [], []>} : vector<8x128xf32>, vector<128x384xf32>, vector<8x384xf32> -> vector<8x384xf32>
    %548 = vector.extract_strided_slice %546 {offsets = [0, 0], sizes = [8, 256], strides = [1, 1]} : vector<8x384xf32> to vector<8x256xf32>
    %549 = vector.extract_strided_slice %547 {offsets = [0, 0], sizes = [8, 256], strides = [1, 1]} : vector<8x384xf32> to vector<8x256xf32>
    %550 = arith.addf %548, %549 : vector<8x256xf32>
    %551 = arith.negf %550 : vector<8x256xf32>
    %552 = math.exp %551 : vector<8x256xf32>
    %cst_175 = arith.constant 1.000000e+00 : f32
    %553 = vector.broadcast %cst_175 : f32 to vector<8x256xf32>
    %554 = arith.addf %553, %552 : vector<8x256xf32>
    %555 = arith.divf %553, %554 : vector<8x256xf32>
    %556 = vector.extract_strided_slice %555 {offsets = [0, 0], sizes = [8, 128], strides = [1, 1]} : vector<8x256xf32> to vector<8x128xf32>
    %557 = vector.extract_strided_slice %555 {offsets = [0, 128], sizes = [8, 128], strides = [1, 1]} : vector<8x256xf32> to vector<8x128xf32>
    %558 = vector.extract_strided_slice %546 {offsets = [0, 256], sizes = [8, 128], strides = [1, 1]} : vector<8x384xf32> to vector<8x128xf32>
    %559 = vector.extract_strided_slice %547 {offsets = [0, 256], sizes = [8, 128], strides = [1, 1]} : vector<8x384xf32> to vector<8x128xf32>
    %560 = vector.broadcast %487 : vector<1x128xf32> to vector<8x128xf32>
    %561 = arith.addf %559, %560 : vector<8x128xf32>
    %562 = arith.mulf %556, %561 : vector<8x128xf32>
    %563 = arith.addf %558, %562 : vector<8x128xf32>
    %564 = math.tanh %563 : vector<8x128xf32>
    %565 = arith.subf %543, %564 : vector<8x128xf32>
    %566 = arith.mulf %557, %565 : vector<8x128xf32>
    %567 = arith.addf %564, %566 : vector<8x128xf32>
    %c3_i32_176 = arith.constant 3 : i32
    %568 = arith.index_cast %c3_i32_176 : i32 to index
    %c0_177 = arith.constant 0 : index
    %c0_178 = arith.constant 0 : index
    %569 = vector.load %arg9[%568, %c0_177, %c0_178] : memref<8x8x384xf32, #tpu.memory_space<vmem>>, vector<1x8x384xf32>
    %570 = vector.shape_cast %569 : vector<1x8x384xf32> to vector<8x384xf32>
    %cst_179 = arith.constant dense<0.000000e+00> : vector<8x384xf32>
    %571 = tpu.matmul %567, %483, %cst_179 {dimension_numbers = #tpu.dot_dimension_numbers<[1], [0], [0], [1], [0, 0, 1, 1], [], []>} : vector<8x128xf32>, vector<128x384xf32>, vector<8x384xf32> -> vector<8x384xf32>
    %572 = vector.extract_strided_slice %570 {offsets = [0, 0], sizes = [8, 256], strides = [1, 1]} : vector<8x384xf32> to vector<8x256xf32>
    %573 = vector.extract_strided_slice %571 {offsets = [0, 0], sizes = [8, 256], strides = [1, 1]} : vector<8x384xf32> to vector<8x256xf32>
    %574 = arith.addf %572, %573 : vector<8x256xf32>
    %575 = arith.negf %574 : vector<8x256xf32>
    %576 = math.exp %575 : vector<8x256xf32>
    %cst_180 = arith.constant 1.000000e+00 : f32
    %577 = vector.broadcast %cst_180 : f32 to vector<8x256xf32>
    %578 = arith.addf %577, %576 : vector<8x256xf32>
    %579 = arith.divf %577, %578 : vector<8x256xf32>
    %580 = vector.extract_strided_slice %579 {offsets = [0, 0], sizes = [8, 128], strides = [1, 1]} : vector<8x256xf32> to vector<8x128xf32>
    %581 = vector.extract_strided_slice %579 {offsets = [0, 128], sizes = [8, 128], strides = [1, 1]} : vector<8x256xf32> to vector<8x128xf32>
    %582 = vector.extract_strided_slice %570 {offsets = [0, 256], sizes = [8, 128], strides = [1, 1]} : vector<8x384xf32> to vector<8x128xf32>
    %583 = vector.extract_strided_slice %571 {offsets = [0, 256], sizes = [8, 128], strides = [1, 1]} : vector<8x384xf32> to vector<8x128xf32>
    %584 = vector.broadcast %487 : vector<1x128xf32> to vector<8x128xf32>
    %585 = arith.addf %583, %584 : vector<8x128xf32>
    %586 = arith.mulf %580, %585 : vector<8x128xf32>
    %587 = arith.addf %582, %586 : vector<8x128xf32>
    %588 = math.tanh %587 : vector<8x128xf32>
    %589 = arith.subf %567, %588 : vector<8x128xf32>
    %590 = arith.mulf %581, %589 : vector<8x128xf32>
    %591 = arith.addf %588, %590 : vector<8x128xf32>
    %c4_i32_181 = arith.constant 4 : i32
    %592 = arith.index_cast %c4_i32_181 : i32 to index
    %c0_182 = arith.constant 0 : index
    %c0_183 = arith.constant 0 : index
    %593 = vector.load %arg9[%592, %c0_182, %c0_183] : memref<8x8x384xf32, #tpu.memory_space<vmem>>, vector<1x8x384xf32>
    %594 = vector.shape_cast %593 : vector<1x8x384xf32> to vector<8x384xf32>
    %cst_184 = arith.constant dense<0.000000e+00> : vector<8x384xf32>
    %595 = tpu.matmul %591, %483, %cst_184 {dimension_numbers = #tpu.dot_dimension_numbers<[1], [0], [0], [1], [0, 0, 1, 1], [], []>} : vector<8x128xf32>, vector<128x384xf32>, vector<8x384xf32> -> vector<8x384xf32>
    %596 = vector.extract_strided_slice %594 {offsets = [0, 0], sizes = [8, 256], strides = [1, 1]} : vector<8x384xf32> to vector<8x256xf32>
    %597 = vector.extract_strided_slice %595 {offsets = [0, 0], sizes = [8, 256], strides = [1, 1]} : vector<8x384xf32> to vector<8x256xf32>
    %598 = arith.addf %596, %597 : vector<8x256xf32>
    %599 = arith.negf %598 : vector<8x256xf32>
    %600 = math.exp %599 : vector<8x256xf32>
    %cst_185 = arith.constant 1.000000e+00 : f32
    %601 = vector.broadcast %cst_185 : f32 to vector<8x256xf32>
    %602 = arith.addf %601, %600 : vector<8x256xf32>
    %603 = arith.divf %601, %602 : vector<8x256xf32>
    %604 = vector.extract_strided_slice %603 {offsets = [0, 0], sizes = [8, 128], strides = [1, 1]} : vector<8x256xf32> to vector<8x128xf32>
    %605 = vector.extract_strided_slice %603 {offsets = [0, 128], sizes = [8, 128], strides = [1, 1]} : vector<8x256xf32> to vector<8x128xf32>
    %606 = vector.extract_strided_slice %594 {offsets = [0, 256], sizes = [8, 128], strides = [1, 1]} : vector<8x384xf32> to vector<8x128xf32>
    %607 = vector.extract_strided_slice %595 {offsets = [0, 256], sizes = [8, 128], strides = [1, 1]} : vector<8x384xf32> to vector<8x128xf32>
    %608 = vector.broadcast %487 : vector<1x128xf32> to vector<8x128xf32>
    %609 = arith.addf %607, %608 : vector<8x128xf32>
    %610 = arith.mulf %604, %609 : vector<8x128xf32>
    %611 = arith.addf %606, %610 : vector<8x128xf32>
    %612 = math.tanh %611 : vector<8x128xf32>
    %613 = arith.subf %591, %612 : vector<8x128xf32>
    %614 = arith.mulf %605, %613 : vector<8x128xf32>
    %615 = arith.addf %612, %614 : vector<8x128xf32>
    %c5_i32_186 = arith.constant 5 : i32
    %616 = arith.index_cast %c5_i32_186 : i32 to index
    %c0_187 = arith.constant 0 : index
    %c0_188 = arith.constant 0 : index
    %617 = vector.load %arg9[%616, %c0_187, %c0_188] : memref<8x8x384xf32, #tpu.memory_space<vmem>>, vector<1x8x384xf32>
    %618 = vector.shape_cast %617 : vector<1x8x384xf32> to vector<8x384xf32>
    %cst_189 = arith.constant dense<0.000000e+00> : vector<8x384xf32>
    %619 = tpu.matmul %615, %483, %cst_189 {dimension_numbers = #tpu.dot_dimension_numbers<[1], [0], [0], [1], [0, 0, 1, 1], [], []>} : vector<8x128xf32>, vector<128x384xf32>, vector<8x384xf32> -> vector<8x384xf32>
    %620 = vector.extract_strided_slice %618 {offsets = [0, 0], sizes = [8, 256], strides = [1, 1]} : vector<8x384xf32> to vector<8x256xf32>
    %621 = vector.extract_strided_slice %619 {offsets = [0, 0], sizes = [8, 256], strides = [1, 1]} : vector<8x384xf32> to vector<8x256xf32>
    %622 = arith.addf %620, %621 : vector<8x256xf32>
    %623 = arith.negf %622 : vector<8x256xf32>
    %624 = math.exp %623 : vector<8x256xf32>
    %cst_190 = arith.constant 1.000000e+00 : f32
    %625 = vector.broadcast %cst_190 : f32 to vector<8x256xf32>
    %626 = arith.addf %625, %624 : vector<8x256xf32>
    %627 = arith.divf %625, %626 : vector<8x256xf32>
    %628 = vector.extract_strided_slice %627 {offsets = [0, 0], sizes = [8, 128], strides = [1, 1]} : vector<8x256xf32> to vector<8x128xf32>
    %629 = vector.extract_strided_slice %627 {offsets = [0, 128], sizes = [8, 128], strides = [1, 1]} : vector<8x256xf32> to vector<8x128xf32>
    %630 = vector.extract_strided_slice %618 {offsets = [0, 256], sizes = [8, 128], strides = [1, 1]} : vector<8x384xf32> to vector<8x128xf32>
    %631 = vector.extract_strided_slice %619 {offsets = [0, 256], sizes = [8, 128], strides = [1, 1]} : vector<8x384xf32> to vector<8x128xf32>
    %632 = vector.broadcast %487 : vector<1x128xf32> to vector<8x128xf32>
    %633 = arith.addf %631, %632 : vector<8x128xf32>
    %634 = arith.mulf %628, %633 : vector<8x128xf32>
    %635 = arith.addf %630, %634 : vector<8x128xf32>
    %636 = math.tanh %635 : vector<8x128xf32>
    %637 = arith.subf %615, %636 : vector<8x128xf32>
    %638 = arith.mulf %629, %637 : vector<8x128xf32>
    %639 = arith.addf %636, %638 : vector<8x128xf32>
    %c6_i32_191 = arith.constant 6 : i32
    %640 = arith.index_cast %c6_i32_191 : i32 to index
    %c0_192 = arith.constant 0 : index
    %c0_193 = arith.constant 0 : index
    %641 = vector.load %arg9[%640, %c0_192, %c0_193] : memref<8x8x384xf32, #tpu.memory_space<vmem>>, vector<1x8x384xf32>
    %642 = vector.shape_cast %641 : vector<1x8x384xf32> to vector<8x384xf32>
    %cst_194 = arith.constant dense<0.000000e+00> : vector<8x384xf32>
    %643 = tpu.matmul %639, %483, %cst_194 {dimension_numbers = #tpu.dot_dimension_numbers<[1], [0], [0], [1], [0, 0, 1, 1], [], []>} : vector<8x128xf32>, vector<128x384xf32>, vector<8x384xf32> -> vector<8x384xf32>
    %644 = vector.extract_strided_slice %642 {offsets = [0, 0], sizes = [8, 256], strides = [1, 1]} : vector<8x384xf32> to vector<8x256xf32>
    %645 = vector.extract_strided_slice %643 {offsets = [0, 0], sizes = [8, 256], strides = [1, 1]} : vector<8x384xf32> to vector<8x256xf32>
    %646 = arith.addf %644, %645 : vector<8x256xf32>
    %647 = arith.negf %646 : vector<8x256xf32>
    %648 = math.exp %647 : vector<8x256xf32>
    %cst_195 = arith.constant 1.000000e+00 : f32
    %649 = vector.broadcast %cst_195 : f32 to vector<8x256xf32>
    %650 = arith.addf %649, %648 : vector<8x256xf32>
    %651 = arith.divf %649, %650 : vector<8x256xf32>
    %652 = vector.extract_strided_slice %651 {offsets = [0, 0], sizes = [8, 128], strides = [1, 1]} : vector<8x256xf32> to vector<8x128xf32>
    %653 = vector.extract_strided_slice %651 {offsets = [0, 128], sizes = [8, 128], strides = [1, 1]} : vector<8x256xf32> to vector<8x128xf32>
    %654 = vector.extract_strided_slice %642 {offsets = [0, 256], sizes = [8, 128], strides = [1, 1]} : vector<8x384xf32> to vector<8x128xf32>
    %655 = vector.extract_strided_slice %643 {offsets = [0, 256], sizes = [8, 128], strides = [1, 1]} : vector<8x384xf32> to vector<8x128xf32>
    %656 = vector.broadcast %487 : vector<1x128xf32> to vector<8x128xf32>
    %657 = arith.addf %655, %656 : vector<8x128xf32>
    %658 = arith.mulf %652, %657 : vector<8x128xf32>
    %659 = arith.addf %654, %658 : vector<8x128xf32>
    %660 = math.tanh %659 : vector<8x128xf32>
    %661 = arith.subf %639, %660 : vector<8x128xf32>
    %662 = arith.mulf %653, %661 : vector<8x128xf32>
    %663 = arith.addf %660, %662 : vector<8x128xf32>
    %c7_i32_196 = arith.constant 7 : i32
    %664 = arith.index_cast %c7_i32_196 : i32 to index
    %c0_197 = arith.constant 0 : index
    %c0_198 = arith.constant 0 : index
    %665 = vector.load %arg9[%664, %c0_197, %c0_198] : memref<8x8x384xf32, #tpu.memory_space<vmem>>, vector<1x8x384xf32>
    %666 = vector.shape_cast %665 : vector<1x8x384xf32> to vector<8x384xf32>
    %cst_199 = arith.constant dense<0.000000e+00> : vector<8x384xf32>
    %667 = tpu.matmul %663, %483, %cst_199 {dimension_numbers = #tpu.dot_dimension_numbers<[1], [0], [0], [1], [0, 0, 1, 1], [], []>} : vector<8x128xf32>, vector<128x384xf32>, vector<8x384xf32> -> vector<8x384xf32>
    %668 = vector.extract_strided_slice %666 {offsets = [0, 0], sizes = [8, 256], strides = [1, 1]} : vector<8x384xf32> to vector<8x256xf32>
    %669 = vector.extract_strided_slice %667 {offsets = [0, 0], sizes = [8, 256], strides = [1, 1]} : vector<8x384xf32> to vector<8x256xf32>
    %670 = arith.addf %668, %669 : vector<8x256xf32>
    %671 = arith.negf %670 : vector<8x256xf32>
    %672 = math.exp %671 : vector<8x256xf32>
    %cst_200 = arith.constant 1.000000e+00 : f32
    %673 = vector.broadcast %cst_200 : f32 to vector<8x256xf32>
    %674 = arith.addf %673, %672 : vector<8x256xf32>
    %675 = arith.divf %673, %674 : vector<8x256xf32>
    %676 = vector.extract_strided_slice %675 {offsets = [0, 0], sizes = [8, 128], strides = [1, 1]} : vector<8x256xf32> to vector<8x128xf32>
    %677 = vector.extract_strided_slice %675 {offsets = [0, 128], sizes = [8, 128], strides = [1, 1]} : vector<8x256xf32> to vector<8x128xf32>
    %678 = vector.extract_strided_slice %666 {offsets = [0, 256], sizes = [8, 128], strides = [1, 1]} : vector<8x384xf32> to vector<8x128xf32>
    %679 = vector.extract_strided_slice %667 {offsets = [0, 256], sizes = [8, 128], strides = [1, 1]} : vector<8x384xf32> to vector<8x128xf32>
    %680 = vector.broadcast %487 : vector<1x128xf32> to vector<8x128xf32>
    %681 = arith.addf %679, %680 : vector<8x128xf32>
    %682 = arith.mulf %676, %681 : vector<8x128xf32>
    %683 = arith.addf %678, %682 : vector<8x128xf32>
    %684 = math.tanh %683 : vector<8x128xf32>
    %685 = arith.subf %663, %684 : vector<8x128xf32>
    %686 = arith.mulf %677, %685 : vector<8x128xf32>
    %687 = arith.addf %684, %686 : vector<8x128xf32>
    %c8_i32_201 = arith.constant 8 : i32
    %c0_202 = arith.constant 0 : index
    %c0_203 = arith.constant 0 : index
    %688 = vector.load %arg5[%c0_202, %c0_203] : memref<128x128xf32, #tpu.memory_space<vmem>>, vector<128x128xf32>
    %cst_204 = arith.constant dense<0.000000e+00> : vector<8x128xf32>
    %689 = tpu.matmul %687, %688, %cst_204 {dimension_numbers = #tpu.dot_dimension_numbers<[1], [0], [0], [1], [0, 0, 1, 1], [], []>} : vector<8x128xf32>, vector<128x128xf32>, vector<8x128xf32> -> vector<8x128xf32>
    %c0_205 = arith.constant 0 : index
    %c0_206 = arith.constant 0 : index
    %690 = vector.load %arg6[%c0_205, %c0_206] : memref<1x128xf32, #tpu.memory_space<vmem>>, vector<1x128xf32>
    %691 = vector.broadcast %690 : vector<1x128xf32> to vector<8x128xf32>
    %692 = arith.addf %689, %691 : vector<8x128xf32>
    %c0_207 = arith.constant 0 : index
    %c0_208 = arith.constant 0 : index
    %693 = vector.load %arg7[%c0_207, %c0_208] : memref<8x128xf32, #tpu.memory_space<vmem>>, vector<8x128xf32>
    tpu.vector_store %arg7[%c0_207, %c0_208], %692 {strides = array<i32>} : memref<8x128xf32, #tpu.memory_space<vmem>>, vector<8x128xf32>,
    return
  }
}

</mosaic_0001>

<llo_original>
// kernel: gru_model_forward.1
$region0: #{gru_model_forward.1}
  #allocation0 [shape = 'u32[]', space=smem, size = 0x4, offset = 0x4, fixed_abs, tag = 'smem constant byte address 0x4 - core index']
  #allocation1 [shape = 'u32[144,128]{1,0:T(1,128)}', space=vmem, size = 0x12000, scoped, tag = 'internal scratch']
  #allocation2 [shape = 'f32[8,8,128]{2,1,0:T(8,128)}', space=vmem, size = 0x8000, scoped, tag = 'scratch operand']
  #allocation3 [shape = 'f32[8,8,384]{2,1,0:T(8,128)}', space=vmem, size = 0x18000, scoped, tag = 'scratch operand']
  %s0 = inlined_call_operand.vmem [shape: f32[8,8,128], index: 0, kind: input, shape index: {}]
  %s1 = inlined_call_operand.vmem [shape: f32[3,128,384], index: 1, kind: input, shape index: {}]
  %s2 = inlined_call_operand.vmem [shape: f32[3,128,384], index: 2, kind: input, shape index: {}]
  %s3 = inlined_call_operand.vmem [shape: f32[3,1,384], index: 3, kind: input, shape index: {}]
  %s4 = inlined_call_operand.vmem [shape: f32[3,1,128], index: 4, kind: input, shape index: {}]
  %s5 = inlined_call_operand.vmem [shape: f32[128,128], index: 5, kind: input, shape index: {}]
  %s6 = inlined_call_operand.vmem [shape: f32[1,128], index: 6, kind: input, shape index: {}]
  %s7 = inlined_call_operand.vmem [shape: f32[8,128], index: 7, kind: output, shape index: {}]
  %s8 = sld [smem:[#allocation0]]
  $region38: #{gru_model_forward.1} parent=0
    _
  %s10 = ssub.s32 1, %s8
  %s11 = scalar_select 0, %s10, %s8
  // Predicated region
  $region2: #{gru_model_forward.1} parent=0 // pred_check
    _
  $region3: #{gru_model_forward.1} parent=0 // pred_check_branch
    %13 = sbr.rel (0) target = $region5
  $region4: #{gru_model_forward.1} parent=0 // pred_region
    _
  $region5: #{gru_model_forward.1} parent=0 // pred_fallthru
    _
  // Predicated region
  $region6: #{gru_model_forward.1} parent=0 // pred_check
    _
  $region7: #{gru_model_forward.1} parent=0 // pred_check_branch
    %15 = sbr.rel (0) target = $region9
  $region8: #{gru_model_forward.1} parent=0 // pred_region
    _
  $region9: #{gru_model_forward.1} parent=0 // pred_fallthru
    _
  // Predicated region
  $region10: #{gru_model_forward.1} parent=0 // pred_check
    _
  $region11: #{gru_model_forward.1} parent=0 // pred_check_branch
    %17 = sbr.rel (0) target = $region13
  $region12: #{gru_model_forward.1} parent=0 // pred_region
    _
  $region13: #{gru_model_forward.1} parent=0 // pred_fallthru
    _
  // Predicated region
  $region14: #{gru_model_forward.1} parent=0 // pred_check
    _
  $region15: #{gru_model_forward.1} parent=0 // pred_check_branch
    %19 = sbr.rel (0) target = $region17
  $region16: #{gru_model_forward.1} parent=0 // pred_region
    _
  $region17: #{gru_model_forward.1} parent=0 // pred_fallthru
    _
  // Predicated region
  $region18: #{gru_model_forward.1} parent=0 // pred_check
    _
  $region19: #{gru_model_forward.1} parent=0 // pred_check_branch
    %21 = sbr.rel (0) target = $region21
  $region20: #{gru_model_forward.1} parent=0 // pred_region
    _
  $region21: #{gru_model_forward.1} parent=0 // pred_fallthru
    _
  // Predicated region
  $region22: #{gru_model_forward.1} parent=0 // pred_check
    _
  $region23: #{gru_model_forward.1} parent=0 // pred_check_branch
    %23 = sbr.rel (0) target = $region25
  $region24: #{gru_model_forward.1} parent=0 // pred_region
    _
  $region25: #{gru_model_forward.1} parent=0 // pred_fallthru
    _
  // Predicated region
  $region26: #{gru_model_forward.1} parent=0 // pred_check
    _
  $region27: #{gru_model_forward.1} parent=0 // pred_check_branch
    %25 = sbr.rel (0) target = $region29
  $region28: #{gru_model_forward.1} parent=0 // pred_region
    _
  $region29: #{gru_model_forward.1} parent=0 // pred_fallthru
    _
  %v26 = vld [vmem:[%s1] sm:$0xff]
  %v27 = vld [vmem:[%s1 + $0x8] sm:$0xff]
  %v28 = vld [vmem:[%s1 + $0x10] sm:$0xff]
  %v29 = vld [vmem:[%s1 + $0x18] sm:$0xff]
  %v30 = vld [vmem:[%s1 + $0x20] sm:$0xff]
  %v31 = vld [vmem:[%s1 + $0x28] sm:$0xff]
  %v32 = vld [vmem:[%s1 + $0x30] sm:$0xff]
  %v33 = vld [vmem:[%s1 + $0x38] sm:$0xff]
  %v34 = vld [vmem:[%s1 + $0x40] sm:$0xff]
  %v35 = vld [vmem:[%s1 + $0x48] sm:$0xff]
  %v36 = vld [vmem:[%s1 + $0x50] sm:$0xff]
  %v37 = vld [vmem:[%s1 + $0x58] sm:$0xff]
  %v38 = vld [vmem:[%s1 + $0x60] sm:$0xff]
  %v39 = vld [vmem:[%s1 + $0x68] sm:$0xff]
  %v40 = vld [vmem:[%s1 + $0x70] sm:$0xff]
  %v41 = vld [vmem:[%s1 + $0x78] sm:$0xff]
  %v42 = vld [vmem:[%s1 + $0x80] sm:$0xff]
  %v43 = vld [vmem:[%s1 + $0x88] sm:$0xff]
  %v44 = vld [vmem:[%s1 + $0x90] sm:$0xff]
  %v45 = vld [vmem:[%s1 + $0x98] sm:$0xff]
  %v46 = vld [vmem:[%s1 + $0xa0] sm:$0xff]
  %v47 = vld [vmem:[%s1 + $0xa8] sm:$0xff]
  %v48 = vld [vmem:[%s1 + $0xb0] sm:$0xff]
  %v49 = vld [vmem:[%s1 + $0xb8] sm:$0xff]
  %v50 = vld [vmem:[%s1 + $0xc0] sm:$0xff]
  %v51 = vld [vmem:[%s1 + $0xc8] sm:$0xff]
  %v52 = vld [vmem:[%s1 + $0xd0] sm:$0xff]
  %v53 = vld [vmem:[%s1 + $0xd8] sm:$0xff]
  %v54 = vld [vmem:[%s1 + $0xe0] sm:$0xff]
  %v55 = vld [vmem:[%s1 + $0xe8] sm:$0xff]
  %v56 = vld [vmem:[%s1 + $0xf0] sm:$0xff]
  %v57 = vld [vmem:[%s1 + $0xf8] sm:$0xff]
  %v58 = vld [vmem:[%s1 + $0x100] sm:$0xff]
  %v59 = vld [vmem:[%s1 + $0x108] sm:$0xff]
  %v60 = vld [vmem:[%s1 + $0x110] sm:$0xff]
  %v61 = vld [vmem:[%s1 + $0x118] sm:$0xff]
  %v62 = vld [vmem:[%s1 + $0x120] sm:$0xff]
  %v63 = vld [vmem:[%s1 + $0x128] sm:$0xff]
  %v64 = vld [vmem:[%s1 + $0x130] sm:$0xff]
  %v65 = vld [vmem:[%s1 + $0x138] sm:$0xff]
  %v66 = vld [vmem:[%s1 + $0x140] sm:$0xff]
  %v67 = vld [vmem:[%s1 + $0x148] sm:$0xff]
  %v68 = vld [vmem:[%s1 + $0x150] sm:$0xff]
  %v69 = vld [vmem:[%s1 + $0x158] sm:$0xff]
  %v70 = vld [vmem:[%s1 + $0x160] sm:$0xff]
  %v71 = vld [vmem:[%s1 + $0x168] sm:$0xff]
  %v72 = vld [vmem:[%s1 + $0x170] sm:$0xff]
  %v73 = vld [vmem:[%s1 + $0x178] sm:$0xff]
  %v74 = vld [vmem:[%s2] sm:$0xff]
  %v75 = vld [vmem:[%s2 + $0x8] sm:$0xff]
  %v76 = vld [vmem:[%s2 + $0x10] sm:$0xff]
  %v77 = vld [vmem:[%s2 + $0x18] sm:$0xff]
  %v78 = vld [vmem:[%s2 + $0x20] sm:$0xff]
  %v79 = vld [vmem:[%s2 + $0x28] sm:$0xff]
  %v80 = vld [vmem:[%s2 + $0x30] sm:$0xff]
  %v81 = vld [vmem:[%s2 + $0x38] sm:$0xff]
  %v82 = vld [vmem:[%s2 + $0x40] sm:$0xff]
  %v83 = vld [vmem:[%s2 + $0x48] sm:$0xff]
  %v84 = vld [vmem:[%s2 + $0x50] sm:$0xff]
  %v85 = vld [vmem:[%s2 + $0x58] sm:$0xff]
  %v86 = vld [vmem:[%s2 + $0x60] sm:$0xff]
  %v87 = vld [vmem:[%s2 + $0x68] sm:$0xff]
  %v88 = vld [vmem:[%s2 + $0x70] sm:$0xff]
  %v89 = vld [vmem:[%s2 + $0x78] sm:$0xff]
  %v90 = vld [vmem:[%s2 + $0x80] sm:$0xff]
  %v91 = vld [vmem:[%s2 + $0x88] sm:$0xff]
  %v92 = vld [vmem:[%s2 + $0x90] sm:$0xff]
  %v93 = vld [vmem:[%s2 + $0x98] sm:$0xff]
  %v94 = vld [vmem:[%s2 + $0xa0] sm:$0xff]
  %v95 = vld [vmem:[%s2 + $0xa8] sm:$0xff]
  %v96 = vld [vmem:[%s2 + $0xb0] sm:$0xff]
  %v97 = vld [vmem:[%s2 + $0xb8] sm:$0xff]
  %v98 = vld [vmem:[%s2 + $0xc0] sm:$0xff]
  %v99 = vld [vmem:[%s2 + $0xc8] sm:$0xff]
  %v100 = vld [vmem:[%s2 + $0xd0] sm:$0xff]
  %v101 = vld [vmem:[%s2 + $0xd8] sm:$0xff]
  %v102 = vld [vmem:[%s2 + $0xe0] sm:$0xff]
  %v103 = vld [vmem:[%s2 + $0xe8] sm:$0xff]
  %v104 = vld [vmem:[%s2 + $0xf0] sm:$0xff]
  %v105 = vld [vmem:[%s2 + $0xf8] sm:$0xff]
  %v106 = vld [vmem:[%s2 + $0x100] sm:$0xff]
  %v107 = vld [vmem:[%s2 + $0x108] sm:$0xff]
  %v108 = vld [vmem:[%s2 + $0x110] sm:$0xff]
  %v109 = vld [vmem:[%s2 + $0x118] sm:$0xff]
  %v110 = vld [vmem:[%s2 + $0x120] sm:$0xff]
  %v111 = vld [vmem:[%s2 + $0x128] sm:$0xff]
  %v112 = vld [vmem:[%s2 + $0x130] sm:$0xff]
  %v113 = vld [vmem:[%s2 + $0x138] sm:$0xff]
  %v114 = vld [vmem:[%s2 + $0x140] sm:$0xff]
  %v115 = vld [vmem:[%s2 + $0x148] sm:$0xff]
  %v116 = vld [vmem:[%s2 + $0x150] sm:$0xff]
  %v117 = vld [vmem:[%s2 + $0x158] sm:$0xff]
  %v118 = vld [vmem:[%s2 + $0x160] sm:$0xff]
  %v119 = vld [vmem:[%s2 + $0x168] sm:$0xff]
  %v120 = vld [vmem:[%s2 + $0x170] sm:$0xff]
  %v121 = vld [vmem:[%s2 + $0x178] sm:$0xff]
  %v122 = vld [vmem:[%s3] sm:$0x7]
  %v123 = vld [vmem:[%s4] sm:$0x1]
  %v124 = vld [vmem:[%s0] sm:$0xff]
  %v125 = vld [vmem:[%s0 + $0x8] sm:$0xff]
  %v126 = vld [vmem:[%s0 + $0x10] sm:$0xff]
  %v127 = vld [vmem:[%s0 + $0x18] sm:$0xff]
  %v128 = vld [vmem:[%s0 + $0x20] sm:$0xff]
  %v129 = vld [vmem:[%s0 + $0x28] sm:$0xff]
  %v130 = vld [vmem:[%s0 + $0x30] sm:$0xff]
  %v131 = vld [vmem:[%s0 + $0x38] sm:$0xff]
  %v133 = vlaneseq
  %v134 = vshrl.u32 %v133, 7
  %v135 = vsub.s32 0, %v134
  %v136 = vrot.slane %v122, %v135
  %v137 = vlaneseq
  %v138 = vshrl.u32 %v137, 7
  %v139 = vsub.s32 1, %v138
  %v140 = vrot.slane %v122, %v139
  %v141 = vlaneseq
  %v142 = vshrl.u32 %v141, 7
  %v143 = vsub.s32 2, %v142
  %v144 = vrot.slane %v122, %v143
  %148 = vmatprep.subr.mxu0 %v27
  %149 = vmatpush1.msra.mxu0 %v26
  %150 = vmatprep.subr.mxu0 %v30
  %151 = vmatpush1.msra.mxu0 %v29
  %152 = vmatprep.subr.mxu0 %v33
  %153 = vmatpush1.msra.mxu0 %v32
  %154 = vmatprep.subr.mxu0 %v36
  %155 = vmatpush1.msra.mxu0 %v35
  %156 = vmatprep.subr.mxu0 %v39
  %157 = vmatpush1.msra.mxu0 %v38
  %158 = vmatprep.subr.mxu0 %v42
  %159 = vmatpush1.msra.mxu0 %v41
  %160 = vmatprep.subr.mxu0 %v45
  %161 = vmatpush1.msra.mxu0 %v44
  %162 = vmatprep.subr.mxu0 %v48
  %163 = vmatpush1.msra.mxu0 %v47
  %164 = vmatprep.subr.mxu0 %v51
  %165 = vmatpush1.msra.mxu0 %v50
  %166 = vmatprep.subr.mxu0 %v54
  %167 = vmatpush1.msra.mxu0 %v53
  %168 = vmatprep.subr.mxu0 %v57
  %169 = vmatpush1.msra.mxu0 %v56
  %170 = vmatprep.subr.mxu0 %v60
  %171 = vmatpush1.msra.mxu0 %v59
  %172 = vmatprep.subr.mxu0 %v63
  %173 = vmatpush1.msra.mxu0 %v62
  %174 = vmatprep.subr.mxu0 %v66
  %175 = vmatpush1.msra.mxu0 %v65
  %176 = vmatprep.subr.mxu0 %v69
  %177 = vmatpush1.msra.mxu0 %v68
  %178 = vmatprep.subr.mxu0 %v72
  %179 = vmatpush1.msra.mxu0 %v71
  %180 = vmatprep.subr.mxu0 0.0
  %181 = vmatpush1.msra.mxu0 0.0
  %182 = vmatprep.subr.mxu0 0.0
  %183 = vmatpush1.msra.mxu0 0.0
  %184 = vmatprep.subr.mxu0 0.0
  %185 = vmatpush1.msra.mxu0 0.0
  %186 = vmatprep.subr.mxu0 0.0
  %187 = vmatpush1.msra.mxu0 0.0
  %188 = vmatprep.subr.mxu0 0.0
  %189 = vmatpush1.msra.mxu0 0.0
  %190 = vmatprep.subr.mxu0 0.0
  %191 = vmatpush1.msra.mxu0 0.0
  %192 = vmatprep.subr.mxu0 0.0
  %193 = vmatpush1.msra.mxu0 0.0
  %194 = vmatprep.subr.mxu0 0.0
  %195 = vmatpush1.msra.mxu0 0.0
  %196 = vmatprep.subr.mxu0 0.0
  %197 = vmatpush1.msra.mxu0 0.0
  %198 = vmatprep.subr.mxu0 0.0
  %199 = vmatpush1.msra.mxu0 0.0
  %200 = vmatprep.subr.mxu0 0.0
  %201 = vmatpush1.msra.mxu0 0.0
  %202 = vmatprep.subr.mxu0 0.0
  %203 = vmatpush1.msra.mxu0 0.0
  %204 = vmatprep.subr.mxu0 0.0
  %205 = vmatpush1.msra.mxu0 0.0
  %206 = vmatprep.subr.mxu0 0.0
  %207 = vmatpush1.msra.mxu0 0.0
  %208 = vmatprep.subr.mxu0 0.0
  %209 = vmatpush1.msra.mxu0 0.0
  %210 = vmatprep.subr.mxu0 0.0
  %211 = vmatpush1.msra.mxu0 0.0
  %212 = vmatprep.mubr.f32.mxu0 0.0
  %213 = vmatmul.mubr.f32.gmra.mrb[0].mxu0 %v124
  %v214 = vpop.f32.mrb[0].mxu0
  %v215 = vadd.f32 %v136, %v214
  %v216 = vpop.f32.mrb[0].mxu0
  %v217 = vadd.f32 %v140, %v216
  %218 = vmatprep.mubr.f32.mxu0 0.0
  %219 = vmatmul.mubr.f32.gmra.mrb[0].mxu0 %v125
  %v220 = vpop.f32.mrb[0].mxu0
  %v221 = vadd.f32 %v136, %v220
  %v222 = vpop.f32.mrb[0].mxu0
  %v223 = vadd.f32 %v140, %v222
  %224 = vmatprep.mubr.f32.mxu0 0.0
  %225 = vmatmul.mubr.f32.gmra.mrb[0].mxu0 %v126
  %v226 = vpop.f32.mrb[0].mxu0
  %v227 = vadd.f32 %v136, %v226
  %v228 = vpop.f32.mrb[0].mxu0
  %v229 = vadd.f32 %v140, %v228
  %230 = vmatprep.mubr.f32.mxu0 0.0
  %231 = vmatmul.mubr.f32.gmra.mrb[0].mxu0 %v127
  %v232 = vpop.f32.mrb[0].mxu0
  %v233 = vadd.f32 %v136, %v232
  %v234 = vpop.f32.mrb[0].mxu0
  %v235 = vadd.f32 %v140, %v234
  %236 = vmatprep.mubr.f32.mxu0 0.0
  %237 = vmatmul.mubr.f32.gmra.mrb[0].mxu0 %v128
  %v238 = vpop.f32.mrb[0].mxu0
  %v239 = vadd.f32 %v136, %v238
  %v240 = vpop.f32.mrb[0].mxu0
  %v241 = vadd.f32 %v140, %v240
  %242 = vmatprep.mubr.f32.mxu0 0.0
  %243 = vmatmul.mubr.f32.gmra.mrb[0].mxu0 %v129
  %v244 = vpop.f32.mrb[0].mxu0
  %v245 = vadd.f32 %v136, %v244
  %v246 = vpop.f32.mrb[0].mxu0
  %v247 = vadd.f32 %v140, %v246
  %248 = vmatprep.mubr.f32.mxu0 0.0
  %249 = vmatmul.mubr.f32.gmra.mrb[0].mxu0 %v130
  %v250 = vpop.f32.mrb[0].mxu0
  %v251 = vadd.f32 %v136, %v250
  %v252 = vpop.f32.mrb[0].mxu0
  %v253 = vadd.f32 %v140, %v252
  %254 = vmatprep.mubr.f32.mxu0 0.0
  %255 = vmatmul.mubr.f32.gmra.mrb[0].mxu0 %v131
  %v256 = vpop.f32.mrb[0].mxu0
  %v257 = vadd.f32 %v136, %v256
  %v258 = vpop.f32.mrb[0].mxu0
  %v259 = vadd.f32 %v140, %v258
  %260 = vdwg.mxu0
  %261 = vmatprep.subr.mxu0 0.0
  %262 = vmatpush1.msra.mxu0 %v28
  %263 = vmatprep.subr.mxu0 0.0
  %264 = vmatpush1.msra.mxu0 %v31
  %265 = vmatprep.subr.mxu0 0.0
  %266 = vmatpush1.msra.mxu0 %v34
  %267 = vmatprep.subr.mxu0 0.0
  %268 = vmatpush1.msra.mxu0 %v37
  %269 = vmatprep.subr.mxu0 0.0
  %270 = vmatpush1.msra.mxu0 %v40
  %271 = vmatprep.subr.mxu0 0.0
  %272 = vmatpush1.msra.mxu0 %v43
  %273 = vmatprep.subr.mxu0 0.0
  %274 = vmatpush1.msra.mxu0 %v46
  %275 = vmatprep.subr.mxu0 0.0
  %276 = vmatpush1.msra.mxu0 %v49
  %277 = vmatprep.subr.mxu0 0.0
  %278 = vmatpush1.msra.mxu0 %v52
  %279 = vmatprep.subr.mxu0 0.0
  %280 = vmatpush1.msra.mxu0 %v55
  %281 = vmatprep.subr.mxu0 0.0
  %282 = vmatpush1.msra.mxu0 %v58
  %283 = vmatprep.subr.mxu0 0.0
  %284 = vmatpush1.msra.mxu0 %v61
  %285 = vmatprep.subr.mxu0 0.0
  %286 = vmatpush1.msra.mxu0 %v64
  %287 = vmatprep.subr.mxu0 0.0
  %288 = vmatpush1.msra.mxu0 %v67
  %289 = vmatprep.subr.mxu0 0.0
  %290 = vmatpush1.msra.mxu0 %v70
  %291 = vmatprep.subr.mxu0 0.0
  %292 = vmatpush1.msra.mxu0 %v73
  %293 = vmatprep.subr.mxu0 0.0
  %294 = vmatpush1.msra.mxu0 0.0
  %295 = vmatprep.subr.mxu0 0.0
  %296 = vmatpush1.msra.mxu0 0.0
  %297 = vmatprep.subr.mxu0 0.0
  %298 = vmatpush1.msra.mxu0 0.0
  %299 = vmatprep.subr.mxu0 0.0
  %300 = vmatpush1.msra.mxu0 0.0
  %301 = vmatprep.subr.mxu0 0.0
  %302 = vmatpush1.msra.mxu0 0.0
  %303 = vmatprep.subr.mxu0 0.0
  %304 = vmatpush1.msra.mxu0 0.0
  %305 = vmatprep.subr.mxu0 0.0
  %306 = vmatpush1.msra.mxu0 0.0
  %307 = vmatprep.subr.mxu0 0.0
  %308 = vmatpush1.msra.mxu0 0.0
  %309 = vmatprep.subr.mxu0 0.0
  %310 = vmatpush1.msra.mxu0 0.0
  %311 = vmatprep.subr.mxu0 0.0
  %312 = vmatpush1.msra.mxu0 0.0
  %313 = vmatprep.subr.mxu0 0.0
  %314 = vmatpush1.msra.mxu0 0.0
  %315 = vmatprep.subr.mxu0 0.0
  %316 = vmatpush1.msra.mxu0 0.0
  %317 = vmatprep.subr.mxu0 0.0
  %318 = vmatpush1.msra.mxu0 0.0
  %319 = vmatprep.subr.mxu0 0.0
  %320 = vmatpush1.msra.mxu0 0.0
  %321 = vmatprep.subr.mxu0 0.0
  %322 = vmatpush1.msra.mxu0 0.0
  %323 = vmatprep.subr.mxu0 0.0
  %324 = vmatpush1.msra.mxu0 0.0
  %325 = vmatprep.mubr.f32.mxu0 0.0
  %326 = vmatmul.mubr.f32.gmra.mrb[0].mxu0 %v124
  %v327 = vpop.f32.mrb[0].mxu0
  %v328 = vadd.f32 %v144, %v327
  %v329 = vpop.f32.mrb[0].mxu0
  %330 = vmatprep.mubr.f32.mxu0 0.0
  %331 = vmatmul.mubr.f32.gmra.mrb[0].mxu0 %v125
  %v332 = vpop.f32.mrb[0].mxu0
  %v333 = vadd.f32 %v144, %v332
  %v334 = vpop.f32.mrb[0].mxu0
  %335 = vmatprep.mubr.f32.mxu0 0.0
  %336 = vmatmul.mubr.f32.gmra.mrb[0].mxu0 %v126
  %v337 = vpop.f32.mrb[0].mxu0
  %v338 = vadd.f32 %v144, %v337
  %v339 = vpop.f32.mrb[0].mxu0
  %340 = vmatprep.mubr.f32.mxu0 0.0
  %341 = vmatmul.mubr.f32.gmra.mrb[0].mxu0 %v127
  %v342 = vpop.f32.mrb[0].mxu0
  %v343 = vadd.f32 %v144, %v342
  %v344 = vpop.f32.mrb[0].mxu0
  %345 = vmatprep.mubr.f32.mxu0 0.0
  %346 = vmatmul.mubr.f32.gmra.mrb[0].mxu0 %v128
  %v347 = vpop.f32.mrb[0].mxu0
  %v348 = vadd.f32 %v144, %v347
  %v349 = vpop.f32.mrb[0].mxu0
  %350 = vmatprep.mubr.f32.mxu0 0.0
  %351 = vmatmul.mubr.f32.gmra.mrb[0].mxu0 %v129
  %v352 = vpop.f32.mrb[0].mxu0
  %v353 = vadd.f32 %v144, %v352
  %v354 = vpop.f32.mrb[0].mxu0
  %355 = vmatprep.mubr.f32.mxu0 0.0
  %356 = vmatmul.mubr.f32.gmra.mrb[0].mxu0 %v130
  %v357 = vpop.f32.mrb[0].mxu0
  %v358 = vadd.f32 %v144, %v357
  %v359 = vpop.f32.mrb[0].mxu0
  %360 = vmatprep.mubr.f32.mxu0 0.0
  %361 = vmatmul.mubr.f32.gmra.mrb[0].mxu0 %v131
  %v362 = vpop.f32.mrb[0].mxu0
  %v363 = vadd.f32 %v144, %v362
  %v364 = vpop.f32.mrb[0].mxu0
  %365 = vdwg.mxu0
  %366 = vst [vmem:[#allocation3] sm:$0xff] %v215
  %367 = vst [vmem:[#allocation3 + $0x8] sm:$0xff] %v217
  %368 = vst [vmem:[#allocation3 + $0x10] sm:$0xff] %v328
  %369 = vst [vmem:[#allocation3 + $0x18] sm:$0xff] %v221
  %370 = vst [vmem:[#allocation3 + $0x20] sm:$0xff] %v223
  %371 = vst [vmem:[#allocation3 + $0x28] sm:$0xff] %v333
  %372 = vst [vmem:[#allocation3 + $0x30] sm:$0xff] %v227
  %373 = vst [vmem:[#allocation3 + $0x38] sm:$0xff] %v229
  %374 = vst [vmem:[#allocation3 + $0x40] sm:$0xff] %v338
  %375 = vst [vmem:[#allocation3 + $0x48] sm:$0xff] %v233
  %376 = vst [vmem:[#allocation3 + $0x50] sm:$0xff] %v235
  %377 = vst [vmem:[#allocation3 + $0x58] sm:$0xff] %v343
  %378 = vst [vmem:[#allocation3 + $0x60] sm:$0xff] %v239
  %379 = vst [vmem:[#allocation3 + $0x68] sm:$0xff] %v241
  %380 = vst [vmem:[#allocation3 + $0x70] sm:$0xff] %v348
  %381 = vst [vmem:[#allocation3 + $0x78] sm:$0xff] %v245
  %382 = vst [vmem:[#allocation3 + $0x80] sm:$0xff] %v247
  %383 = vst [vmem:[#allocation3 + $0x88] sm:$0xff] %v353
  %384 = vst [vmem:[#allocation3 + $0x90] sm:$0xff] %v251
  %385 = vst [vmem:[#allocation3 + $0x98] sm:$0xff] %v253
  %386 = vst [vmem:[#allocation3 + $0xa0] sm:$0xff] %v358
  %387 = vst [vmem:[#allocation3 + $0xa8] sm:$0xff] %v257
  %388 = vst [vmem:[#allocation3 + $0xb0] sm:$0xff] %v259
  %389 = vst [vmem:[#allocation3 + $0xb8] sm:$0xff] %v363
  %v390 = vld [vmem:[#allocation3] sm:$0xff]
  %v391 = vld [vmem:[#allocation3 + $0x8] sm:$0xff]
  %v392 = vld [vmem:[#allocation3 + $0x10] sm:$0xff]
  %393 = vmatprep.subr.mxu0 %v75
  %394 = vmatpush1.msra.mxu0 %v74
  %395 = vmatprep.subr.mxu0 %v78
  %396 = vmatpush1.msra.mxu0 %v77
  %397 = vmatprep.subr.mxu0 %v81
  %398 = vmatpush1.msra.mxu0 %v80
  %399 = vmatprep.subr.mxu0 %v84
  %400 = vmatpush1.msra.mxu0 %v83
  %401 = vmatprep.subr.mxu0 %v87
  %402 = vmatpush1.msra.mxu0 %v86
  %403 = vmatprep.subr.mxu0 %v90
  %404 = vmatpush1.msra.mxu0 %v89
  %405 = vmatprep.subr.mxu0 %v93
  %406 = vmatpush1.msra.mxu0 %v92
  %407 = vmatprep.subr.mxu0 %v96
  %408 = vmatpush1.msra.mxu0 %v95
  %409 = vmatprep.subr.mxu0 %v99
  %410 = vmatpush1.msra.mxu0 %v98
  %411 = vmatprep.subr.mxu0 %v102
  %412 = vmatpush1.msra.mxu0 %v101
  %413 = vmatprep.subr.mxu0 %v105
  %414 = vmatpush1.msra.mxu0 %v104
  %415 = vmatprep.subr.mxu0 %v108
  %416 = vmatpush1.msra.mxu0 %v107
  %417 = vmatprep.subr.mxu0 %v111
  %418 = vmatpush1.msra.mxu0 %v110
  %419 = vmatprep.subr.mxu0 %v114
  %420 = vmatpush1.msra.mxu0 %v113
  %421 = vmatprep.subr.mxu0 %v117
  %422 = vmatpush1.msra.mxu0 %v116
  %423 = vmatprep.subr.mxu0 %v120
  %424 = vmatpush1.msra.mxu0 %v119
  %425 = vmatprep.subr.mxu0 0.0
  %426 = vmatpush1.msra.mxu0 0.0
  %427 = vmatprep.subr.mxu0 0.0
  %428 = vmatpush1.msra.mxu0 0.0
  %429 = vmatprep.subr.mxu0 0.0
  %430 = vmatpush1.msra.mxu0 0.0
  %431 = vmatprep.subr.mxu0 0.0
  %432 = vmatpush1.msra.mxu0 0.0
  %433 = vmatprep.subr.mxu0 0.0
  %434 = vmatpush1.msra.mxu0 0.0
  %435 = vmatprep.subr.mxu0 0.0
  %436 = vmatpush1.msra.mxu0 0.0
  %437 = vmatprep.subr.mxu0 0.0
  %438 = vmatpush1.msra.mxu0 0.0
  %439 = vmatprep.subr.mxu0 0.0
  %440 = vmatpush1.msra.mxu0 0.0
  %441 = vmatprep.subr.mxu0 0.0
  %442 = vmatpush1.msra.mxu0 0.0
  %443 = vmatprep.subr.mxu0 0.0
  %444 = vmatpush1.msra.mxu0 0.0
  %445 = vmatprep.subr.mxu0 0.0
  %446 = vmatpush1.msra.mxu0 0.0
  %447 = vmatprep.subr.mxu0 0.0
  %448 = vmatpush1.msra.mxu0 0.0
  %449 = vmatprep.subr.mxu0 0.0
  %450 = vmatpush1.msra.mxu0 0.0
  %451 = vmatprep.subr.mxu0 0.0
  %452 = vmatpush1.msra.mxu0 0.0
  %453 = vmatprep.subr.mxu0 0.0
  %454 = vmatpush1.msra.mxu0 0.0
  %455 = vmatprep.subr.mxu0 0.0
  %456 = vmatpush1.msra.mxu0 0.0
  %457 = vmatprep.mubr.f32.mxu0 0.0
  %458 = vmatmul.mubr.f32.gmra.mrb[0].mxu0 0.0
  %v459 = vpop.f32.mrb[0].mxu0
  %v460 = vadd.f32 0.0, %v459
  %v461 = vpop.f32.mrb[0].mxu0
  %v462 = vadd.f32 0.0, %v461
  %463 = vdwg.mxu0
  %464 = vmatprep.subr.mxu0 0.0
  %465 = vmatpush1.msra.mxu0 %v76
  %466 = vmatprep.subr.mxu0 0.0
  %467 = vmatpush1.msra.mxu0 %v79
  %468 = vmatprep.subr.mxu0 0.0
  %469 = vmatpush1.msra.mxu0 %v82
  %470 = vmatprep.subr.mxu0 0.0
  %471 = vmatpush1.msra.mxu0 %v85
  %472 = vmatprep.subr.mxu0 0.0
  %473 = vmatpush1.msra.mxu0 %v88
  %474 = vmatprep.subr.mxu0 0.0
  %475 = vmatpush1.msra.mxu0 %v91
  %476 = vmatprep.subr.mxu0 0.0
  %477 = vmatpush1.msra.mxu0 %v94
  %478 = vmatprep.subr.mxu0 0.0
  %479 = vmatpush1.msra.mxu0 %v97
  %480 = vmatprep.subr.mxu0 0.0
  %481 = vmatpush1.msra.mxu0 %v100
  %482 = vmatprep.subr.mxu0 0.0
  %483 = vmatpush1.msra.mxu0 %v103
  %484 = vmatprep.subr.mxu0 0.0
  %485 = vmatpush1.msra.mxu0 %v106
  %486 = vmatprep.subr.mxu0 0.0
  %487 = vmatpush1.msra.mxu0 %v109
  %488 = vmatprep.subr.mxu0 0.0
  %489 = vmatpush1.msra.mxu0 %v112
  %490 = vmatprep.subr.mxu0 0.0
  %491 = vmatpush1.msra.mxu0 %v115
  %492 = vmatprep.subr.mxu0 0.0
  %493 = vmatpush1.msra.mxu0 %v118
  %494 = vmatprep.subr.mxu0 0.0
  %495 = vmatpush1.msra.mxu0 %v121
  %496 = vmatprep.subr.mxu0 0.0
  %497 = vmatpush1.msra.mxu0 0.0
  %498 = vmatprep.subr.mxu0 0.0
  %499 = vmatpush1.msra.mxu0 0.0
  %500 = vmatprep.subr.mxu0 0.0
  %501 = vmatpush1.msra.mxu0 0.0
  %502 = vmatprep.subr.mxu0 0.0
  %503 = vmatpush1.msra.mxu0 0.0
  %504 = vmatprep.subr.mxu0 0.0
  %505 = vmatpush1.msra.mxu0 0.0
  %506 = vmatprep.subr.mxu0 0.0
  %507 = vmatpush1.msra.mxu0 0.0
  %508 = vmatprep.subr.mxu0 0.0
  %509 = vmatpush1.msra.mxu0 0.0
  %510 = vmatprep.subr.mxu0 0.0
  %511 = vmatpush1.msra.mxu0 0.0
  %512 = vmatprep.subr.mxu0 0.0
  %513 = vmatpush1.msra.mxu0 0.0
  %514 = vmatprep.subr.mxu0 0.0
  %515 = vmatpush1.msra.mxu0 0.0
  %516 = vmatprep.subr.mxu0 0.0
  %517 = vmatpush1.msra.mxu0 0.0
  %518 = vmatprep.subr.mxu0 0.0
  %519 = vmatpush1.msra.mxu0 0.0
  %520 = vmatprep.subr.mxu0 0.0
  %521 = vmatpush1.msra.mxu0 0.0
  %522 = vmatprep.subr.mxu0 0.0
  %523 = vmatpush1.msra.mxu0 0.0
  %524 = vmatprep.subr.mxu0 0.0
  %525 = vmatpush1.msra.mxu0 0.0
  %526 = vmatprep.subr.mxu0 0.0
  %527 = vmatpush1.msra.mxu0 0.0
  %528 = vmatprep.mubr.f32.mxu0 0.0
  %529 = vmatmul.mubr.f32.gmra.mrb[0].mxu0 0.0
  %v530 = vpop.f32.mrb[0].mxu0
  %v531 = vadd.f32 0.0, %v530
  %v532 = vpop.f32.mrb[0].mxu0
  %533 = vdwg.mxu0
  %v534 = vadd.f32 %v390, %v460
  %v535 = vadd.f32 %v391, %v462
  %v536 = vxor.u32 %v534, 2147483648
  %v537 = vxor.u32 %v535, 2147483648
  %v538 = vmul.f32 %v536, 1.442695
  %v539 = vpow.pop %v538
  %v540 = vmul.f32 %v537, 1.442695
  %v541 = vpow.pop %v540
  %v542 = vadd.f32 %v539, 1.0
  %v543 = vadd.f32 %v541, 1.0
  %v544 = vrcp.pop %v542
  %v545 = vmul.f32 1.0, %v544
  %v546 = vrcp.pop %v543
  %v547 = vmul.f32 1.0, %v546
  %v549 = vlaneseq
  %v550 = vshrl.u32 %v549, 7
  %v551 = vsub.s32 0, %v550
  %v552 = vrot.slane %v123, %v551
  %v554 = vadd.f32 %v531, %v552
  %v555 = vmul.f32 %v545, %v554
  %v556 = vadd.f32 %v392, %v555
  %v557 = vtanh.pop %v556
  %v558 = vsub.f32 0.0, %v557
  %v559 = vmul.f32 %v547, %v558
  %v560 = vadd.f32 %v557, %v559
  %561 = vst [vmem:[#allocation2] sm:$0xff] %v560
  %s562 = scalar_lea.vmem [#allocation3], 24
  %v563 = vld [vmem:[%s562] sm:$0xff]
  %v564 = vld [vmem:[%s562 + $0x8] sm:$0xff]
  %v565 = vld [vmem:[%s562 + $0x10] sm:$0xff]
  %566 = vmatprep.subr.mxu0 %v75
  %567 = vmatpush1.msra.mxu0 %v74
  %568 = vmatprep.subr.mxu0 %v78
  %569 = vmatpush1.msra.mxu0 %v77
  %570 = vmatprep.subr.mxu0 %v81
  %571 = vmatpush1.msra.mxu0 %v80
  %572 = vmatprep.subr.mxu0 %v84
  %573 = vmatpush1.msra.mxu0 %v83
  %574 = vmatprep.subr.mxu0 %v87
  %575 = vmatpush1.msra.mxu0 %v86
  %576 = vmatprep.subr.mxu0 %v90
  %577 = vmatpush1.msra.mxu0 %v89
  %578 = vmatprep.subr.mxu0 %v93
  %579 = vmatpush1.msra.mxu0 %v92
  %580 = vmatprep.subr.mxu0 %v96
  %581 = vmatpush1.msra.mxu0 %v95
  %582 = vmatprep.subr.mxu0 %v99
  %583 = vmatpush1.msra.mxu0 %v98
  %584 = vmatprep.subr.mxu0 %v102
  %585 = vmatpush1.msra.mxu0 %v101
  %586 = vmatprep.subr.mxu0 %v105
  %587 = vmatpush1.msra.mxu0 %v104
  %588 = vmatprep.subr.mxu0 %v108
  %589 = vmatpush1.msra.mxu0 %v107
  %590 = vmatprep.subr.mxu0 %v111
  %591 = vmatpush1.msra.mxu0 %v110
  %592 = vmatprep.subr.mxu0 %v114
  %593 = vmatpush1.msra.mxu0 %v113
  %594 = vmatprep.subr.mxu0 %v117
  %595 = vmatpush1.msra.mxu0 %v116
  %596 = vmatprep.subr.mxu0 %v120
  %597 = vmatpush1.msra.mxu0 %v119
  %598 = vmatprep.subr.mxu0 0.0
  %599 = vmatpush1.msra.mxu0 0.0
  %600 = vmatprep.subr.mxu0 0.0
  %601 = vmatpush1.msra.mxu0 0.0
  %602 = vmatprep.subr.mxu0 0.0
  %603 = vmatpush1.msra.mxu0 0.0
  %604 = vmatprep.subr.mxu0 0.0
  %605 = vmatpush1.msra.mxu0 0.0
  %606 = vmatprep.subr.mxu0 0.0
  %607 = vmatpush1.msra.mxu0 0.0
  %608 = vmatprep.subr.mxu0 0.0
  %609 = vmatpush1.msra.mxu0 0.0
  %610 = vmatprep.subr.mxu0 0.0
  %611 = vmatpush1.msra.mxu0 0.0
  %612 = vmatprep.subr.mxu0 0.0
  %613 = vmatpush1.msra.mxu0 0.0
  %614 = vmatprep.subr.mxu0 0.0
  %615 = vmatpush1.msra.mxu0 0.0
  %616 = vmatprep.subr.mxu0 0.0
  %617 = vmatpush1.msra.mxu0 0.0
  %618 = vmatprep.subr.mxu0 0.0
  %619 = vmatpush1.msra.mxu0 0.0
  %620 = vmatprep.subr.mxu0 0.0
  %621 = vmatpush1.msra.mxu0 0.0
  %622 = vmatprep.subr.mxu0 0.0
  %623 = vmatpush1.msra.mxu0 0.0
  %624 = vmatprep.subr.mxu0 0.0
  %625 = vmatpush1.msra.mxu0 0.0
  %626 = vmatprep.subr.mxu0 0.0
  %627 = vmatpush1.msra.mxu0 0.0
  %628 = vmatprep.subr.mxu0 0.0
  %629 = vmatpush1.msra.mxu0 0.0
  %630 = vmatprep.mubr.f32.mxu0 0.0
  %631 = vmatmul.mubr.f32.gmra.mrb[0].mxu0 %v560
  %v632 = vpop.f32.mrb[0].mxu0
  %v633 = vadd.f32 0.0, %v632
  %v634 = vpop.f32.mrb[0].mxu0
  %v635 = vadd.f32 0.0, %v634
  %636 = vdwg.mxu0
  %637 = vmatprep.subr.mxu0 0.0
  %638 = vmatpush1.msra.mxu0 %v76
  %639 = vmatprep.subr.mxu0 0.0
  %640 = vmatpush1.msra.mxu0 %v79
  %641 = vmatprep.subr.mxu0 0.0
  %642 = vmatpush1.msra.mxu0 %v82
  %643 = vmatprep.subr.mxu0 0.0
  %644 = vmatpush1.msra.mxu0 %v85
  %645 = vmatprep.subr.mxu0 0.0
  %646 = vmatpush1.msra.mxu0 %v88
  %647 = vmatprep.subr.mxu0 0.0
  %648 = vmatpush1.msra.mxu0 %v91
  %649 = vmatprep.subr.mxu0 0.0
  %650 = vmatpush1.msra.mxu0 %v94
  %651 = vmatprep.subr.mxu0 0.0
  %652 = vmatpush1.msra.mxu0 %v97
  %653 = vmatprep.subr.mxu0 0.0
  %654 = vmatpush1.msra.mxu0 %v100
  %655 = vmatprep.subr.mxu0 0.0
  %656 = vmatpush1.msra.mxu0 %v103
  %657 = vmatprep.subr.mxu0 0.0
  %658 = vmatpush1.msra.mxu0 %v106
  %659 = vmatprep.subr.mxu0 0.0
  %660 = vmatpush1.msra.mxu0 %v109
  %661 = vmatprep.subr.mxu0 0.0
  %662 = vmatpush1.msra.mxu0 %v112
  %663 = vmatprep.subr.mxu0 0.0
  %664 = vmatpush1.msra.mxu0 %v115
  %665 = vmatprep.subr.mxu0 0.0
  %666 = vmatpush1.msra.mxu0 %v118
  %667 = vmatprep.subr.mxu0 0.0
  %668 = vmatpush1.msra.mxu0 %v121
  %669 = vmatprep.subr.mxu0 0.0
  %670 = vmatpush1.msra.mxu0 0.0
  %671 = vmatprep.subr.mxu0 0.0
  %672 = vmatpush1.msra.mxu0 0.0
  %673 = vmatprep.subr.mxu0 0.0
  %674 = vmatpush1.msra.mxu0 0.0
  %675 = vmatprep.subr.mxu0 0.0
  %676 = vmatpush1.msra.mxu0 0.0
  %677 = vmatprep.subr.mxu0 0.0
  %678 = vmatpush1.msra.mxu0 0.0
  %679 = vmatprep.subr.mxu0 0.0
  %680 = vmatpush1.msra.mxu0 0.0
  %681 = vmatprep.subr.mxu0 0.0
  %682 = vmatpush1.msra.mxu0 0.0
  %683 = vmatprep.subr.mxu0 0.0
  %684 = vmatpush1.msra.mxu0 0.0
  %685 = vmatprep.subr.mxu0 0.0
  %686 = vmatpush1.msra.mxu0 0.0
  %687 = vmatprep.subr.mxu0 0.0
  %688 = vmatpush1.msra.mxu0 0.0
  %689 = vmatprep.subr.mxu0 0.0
  %690 = vmatpush1.msra.mxu0 0.0
  %691 = vmatprep.subr.mxu0 0.0
  %692 = vmatpush1.msra.mxu0 0.0
  %693 = vmatprep.subr.mxu0 0.0
  %694 = vmatpush1.msra.mxu0 0.0
  %695 = vmatprep.subr.mxu0 0.0
  %696 = vmatpush1.msra.mxu0 0.0
  %697 = vmatprep.subr.mxu0 0.0
  %698 = vmatpush1.msra.mxu0 0.0
  %699 = vmatprep.subr.mxu0 0.0
  %700 = vmatpush1.msra.mxu0 0.0
  %701 = vmatprep.mubr.f32.mxu0 0.0
  %702 = vmatmul.mubr.f32.gmra.mrb[0].mxu0 %v560
  %v703 = vpop.f32.mrb[0].mxu0
  %v704 = vadd.f32 0.0, %v703
  %v705 = vpop.f32.mrb[0].mxu0
  %706 = vdwg.mxu0
  %v707 = vadd.f32 %v563, %v633
  %v708 = vadd.f32 %v564, %v635
  %v709 = vxor.u32 %v707, 2147483648
  %v710 = vxor.u32 %v708, 2147483648
  %v711 = vmul.f32 %v709, 1.442695
  %v712 = vpow.pop %v711
  %v713 = vmul.f32 %v710, 1.442695
  %v714 = vpow.pop %v713
  %v715 = vadd.f32 %v712, 1.0
  %v716 = vadd.f32 %v714, 1.0
  %v717 = vrcp.pop %v715
  %v718 = vmul.f32 1.0, %v717
  %v719 = vrcp.pop %v716
  %v720 = vmul.f32 1.0, %v719
  %v721 = vadd.f32 %v704, %v552
  %v722 = vmul.f32 %v718, %v721
  %v723 = vadd.f32 %v565, %v722
  %v724 = vtanh.pop %v723
  %v725 = vsub.f32 %v560, %v724
  %v726 = vmul.f32 %v720, %v725
  %v727 = vadd.f32 %v724, %v726
  %s728 = scalar_lea.vmem [#allocation2], 8
  %729 = vst [vmem:[%s728] sm:$0xff] %v727
  %s730 = scalar_lea.vmem [#allocation3], 48
  %v731 = vld [vmem:[%s730] sm:$0xff]
  %v732 = vld [vmem:[%s730 + $0x8] sm:$0xff]
  %v733 = vld [vmem:[%s730 + $0x10] sm:$0xff]
  %734 = vmatprep.subr.mxu0 %v75
  %735 = vmatpush1.msra.mxu0 %v74
  %736 = vmatprep.subr.mxu0 %v78
  %737 = vmatpush1.msra.mxu0 %v77
  %738 = vmatprep.subr.mxu0 %v81
  %739 = vmatpush1.msra.mxu0 %v80
  %740 = vmatprep.subr.mxu0 %v84
  %741 = vmatpush1.msra.mxu0 %v83
  %742 = vmatprep.subr.mxu0 %v87
  %743 = vmatpush1.msra.mxu0 %v86
  %744 = vmatprep.subr.mxu0 %v90
  %745 = vmatpush1.msra.mxu0 %v89
  %746 = vmatprep.subr.mxu0 %v93
  %747 = vmatpush1.msra.mxu0 %v92
  %748 = vmatprep.subr.mxu0 %v96
  %749 = vmatpush1.msra.mxu0 %v95
  %750 = vmatprep.subr.mxu0 %v99
  %751 = vmatpush1.msra.mxu0 %v98
  %752 = vmatprep.subr.mxu0 %v102
  %753 = vmatpush1.msra.mxu0 %v101
  %754 = vmatprep.subr.mxu0 %v105
  %755 = vmatpush1.msra.mxu0 %v104
  %756 = vmatprep.subr.mxu0 %v108
  %757 = vmatpush1.msra.mxu0 %v107
  %758 = vmatprep.subr.mxu0 %v111
  %759 = vmatpush1.msra.mxu0 %v110
  %760 = vmatprep.subr.mxu0 %v114
  %761 = vmatpush1.msra.mxu0 %v113
  %762 = vmatprep.subr.mxu0 %v117
  %763 = vmatpush1.msra.mxu0 %v116
  %764 = vmatprep.subr.mxu0 %v120
  %765 = vmatpush1.msra.mxu0 %v119
  %766 = vmatprep.subr.mxu0 0.0
  %767 = vmatpush1.msra.mxu0 0.0
  %768 = vmatprep.subr.mxu0 0.0
  %769 = vmatpush1.msra.mxu0 0.0
  %770 = vmatprep.subr.mxu0 0.0
  %771 = vmatpush1.msra.mxu0 0.0
  %772 = vmatprep.subr.mxu0 0.0
  %773 = vmatpush1.msra.mxu0 0.0
  %774 = vmatprep.subr.mxu0 0.0
  %775 = vmatpush1.msra.mxu0 0.0
  %776 = vmatprep.subr.mxu0 0.0
  %777 = vmatpush1.msra.mxu0 0.0
  %778 = vmatprep.subr.mxu0 0.0
  %779 = vmatpush1.msra.mxu0 0.0
  %780 = vmatprep.subr.mxu0 0.0
  %781 = vmatpush1.msra.mxu0 0.0
  %782 = vmatprep.subr.mxu0 0.0
  %783 = vmatpush1.msra.mxu0 0.0
  %784 = vmatprep.subr.mxu0 0.0
  %785 = vmatpush1.msra.mxu0 0.0
  %786 = vmatprep.subr.mxu0 0.0
  %787 = vmatpush1.msra.mxu0 0.0
  %788 = vmatprep.subr.mxu0 0.0
  %789 = vmatpush1.msra.mxu0 0.0
  %790 = vmatprep.subr.mxu0 0.0
  %791 = vmatpush1.msra.mxu0 0.0
  %792 = vmatprep.subr.mxu0 0.0
  %793 = vmatpush1.msra.mxu0 0.0
  %794 = vmatprep.subr.mxu0 0.0
  %795 = vmatpush1.msra.mxu0 0.0
  %796 = vmatprep.subr.mxu0 0.0
  %797 = vmatpush1.msra.mxu0 0.0
  %798 = vmatprep.mubr.f32.mxu0 0.0
  %799 = vmatmul.mubr.f32.gmra.mrb[0].mxu0 %v727
  %v800 = vpop.f32.mrb[0].mxu0
  %v801 = vadd.f32 0.0, %v800
  %v802 = vpop.f32.mrb[0].mxu0
  %v803 = vadd.f32 0.0, %v802
  %804 = vdwg.mxu0
  %805 = vmatprep.subr.mxu0 0.0
  %806 = vmatpush1.msra.mxu0 %v76
  %807 = vmatprep.subr.mxu0 0.0
  %808 = vmatpush1.msra.mxu0 %v79
  %809 = vmatprep.subr.mxu0 0.0
  %810 = vmatpush1.msra.mxu0 %v82
  %811 = vmatprep.subr.mxu0 0.0
  %812 = vmatpush1.msra.mxu0 %v85
  %813 = vmatprep.subr.mxu0 0.0
  %814 = vmatpush1.msra.mxu0 %v88
  %815 = vmatprep.subr.mxu0 0.0
  %816 = vmatpush1.msra.mxu0 %v91
  %817 = vmatprep.subr.mxu0 0.0
  %818 = vmatpush1.msra.mxu0 %v94
  %819 = vmatprep.subr.mxu0 0.0
  %820 = vmatpush1.msra.mxu0 %v97
  %821 = vmatprep.subr.mxu0 0.0
  %822 = vmatpush1.msra.mxu0 %v100
  %823 = vmatprep.subr.mxu0 0.0
  %824 = vmatpush1.msra.mxu0 %v103
  %825 = vmatprep.subr.mxu0 0.0
  %826 = vmatpush1.msra.mxu0 %v106
  %827 = vmatprep.subr.mxu0 0.0
  %828 = vmatpush1.msra.mxu0 %v109
  %829 = vmatprep.subr.mxu0 0.0
  %830 = vmatpush1.msra.mxu0 %v112
  %831 = vmatprep.subr.mxu0 0.0
  %832 = vmatpush1.msra.mxu0 %v115
  %833 = vmatprep.subr.mxu0 0.0
  %834 = vmatpush1.msra.mxu0 %v118
  %835 = vmatprep.subr.mxu0 0.0
  %836 = vmatpush1.msra.mxu0 %v121
  %837 = vmatprep.subr.mxu0 0.0
  %838 = vmatpush1.msra.mxu0 0.0
  %839 = vmatprep.subr.mxu0 0.0
  %840 = vmatpush1.msra.mxu0 0.0
  %841 = vmatprep.subr.mxu0 0.0
  %842 = vmatpush1.msra.mxu0 0.0
  %843 = vmatprep.subr.mxu0 0.0
  %844 = vmatpush1.msra.mxu0 0.0
  %845 = vmatprep.subr.mxu0 0.0
  %846 = vmatpush1.msra.mxu0 0.0
  %847 = vmatprep.subr.mxu0 0.0
  %848 = vmatpush1.msra.mxu0 0.0
  %849 = vmatprep.subr.mxu0 0.0
  %850 = vmatpush1.msra.mxu0 0.0
  %851 = vmatprep.subr.mxu0 0.0
  %852 = vmatpush1.msra.mxu0 0.0
  %853 = vmatprep.subr.mxu0 0.0
  %854 = vmatpush1.msra.mxu0 0.0
  %855 = vmatprep.subr.mxu0 0.0
  %856 = vmatpush1.msra.mxu0 0.0
  %857 = vmatprep.subr.mxu0 0.0
  %858 = vmatpush1.msra.mxu0 0.0
  %859 = vmatprep.subr.mxu0 0.0
  %860 = vmatpush1.msra.mxu0 0.0
  %861 = vmatprep.subr.mxu0 0.0
  %862 = vmatpush1.msra.mxu0 0.0
  %863 = vmatprep.subr.mxu0 0.0
  %864 = vmatpush1.msra.mxu0 0.0
  %865 = vmatprep.subr.mxu0 0.0
  %866 = vmatpush1.msra.mxu0 0.0
  %867 = vmatprep.subr.mxu0 0.0
  %868 = vmatpush1.msra.mxu0 0.0
  %869 = vmatprep.mubr.f32.mxu0 0.0
  %870 = vmatmul.mubr.f32.gmra.mrb[0].mxu0 %v727
  %v871 = vpop.f32.mrb[0].mxu0
  %v872 = vadd.f32 0.0, %v871
  %v873 = vpop.f32.mrb[0].mxu0
  %874 = vdwg.mxu0
  %v875 = vadd.f32 %v731, %v801
  %v876 = vadd.f32 %v732, %v803
  %v877 = vxor.u32 %v875, 2147483648
  %v878 = vxor.u32 %v876, 2147483648
  %v879 = vmul.f32 %v877, 1.442695
  %v880 = vpow.pop %v879
  %v881 = vmul.f32 %v878, 1.442695
  %v882 = vpow.pop %v881
  %v883 = vadd.f32 %v880, 1.0
  %v884 = vadd.f32 %v882, 1.0
  %v885 = vrcp.pop %v883
  %v886 = vmul.f32 1.0, %v885
  %v887 = vrcp.pop %v884
  %v888 = vmul.f32 1.0, %v887
  %v889 = vadd.f32 %v872, %v552
  %v890 = vmul.f32 %v886, %v889
  %v891 = vadd.f32 %v733, %v890
  %v892 = vtanh.pop %v891
  %v893 = vsub.f32 %v727, %v892
  %v894 = vmul.f32 %v888, %v893
  %v895 = vadd.f32 %v892, %v894
  %s896 = scalar_lea.vmem [#allocation2], 16
  %897 = vst [vmem:[%s896] sm:$0xff] %v895
  %s898 = scalar_lea.vmem [#allocation3], 72
  %v899 = vld [vmem:[%s898] sm:$0xff]
  %v900 = vld [vmem:[%s898 + $0x8] sm:$0xff]
  %v901 = vld [vmem:[%s898 + $0x10] sm:$0xff]
  %902 = vmatprep.subr.mxu0 %v75
  %903 = vmatpush1.msra.mxu0 %v74
  %904 = vmatprep.subr.mxu0 %v78
  %905 = vmatpush1.msra.mxu0 %v77
  %906 = vmatprep.subr.mxu0 %v81
  %907 = vmatpush1.msra.mxu0 %v80
  %908 = vmatprep.subr.mxu0 %v84
  %909 = vmatpush1.msra.mxu0 %v83
  %910 = vmatprep.subr.mxu0 %v87
  %911 = vmatpush1.msra.mxu0 %v86
  %912 = vmatprep.subr.mxu0 %v90
  %913 = vmatpush1.msra.mxu0 %v89
  %914 = vmatprep.subr.mxu0 %v93
  %915 = vmatpush1.msra.mxu0 %v92
  %916 = vmatprep.subr.mxu0 %v96
  %917 = vmatpush1.msra.mxu0 %v95
  %918 = vmatprep.subr.mxu0 %v99
  %919 = vmatpush1.msra.mxu0 %v98
  %920 = vmatprep.subr.mxu0 %v102
  %921 = vmatpush1.msra.mxu0 %v101
  %922 = vmatprep.subr.mxu0 %v105
  %923 = vmatpush1.msra.mxu0 %v104
  %924 = vmatprep.subr.mxu0 %v108
  %925 = vmatpush1.msra.mxu0 %v107
  %926 = vmatprep.subr.mxu0 %v111
  %927 = vmatpush1.msra.mxu0 %v110
  %928 = vmatprep.subr.mxu0 %v114
  %929 = vmatpush1.msra.mxu0 %v113
  %930 = vmatprep.subr.mxu0 %v117
  %931 = vmatpush1.msra.mxu0 %v116
  %932 = vmatprep.subr.mxu0 %v120
  %933 = vmatpush1.msra.mxu0 %v119
  %934 = vmatprep.subr.mxu0 0.0
  %935 = vmatpush1.msra.mxu0 0.0
  %936 = vmatprep.subr.mxu0 0.0
  %937 = vmatpush1.msra.mxu0 0.0
  %938 = vmatprep.subr.mxu0 0.0
  %939 = vmatpush1.msra.mxu0 0.0
  %940 = vmatprep.subr.mxu0 0.0
  %941 = vmatpush1.msra.mxu0 0.0
  %942 = vmatprep.subr.mxu0 0.0
  %943 = vmatpush1.msra.mxu0 0.0
  %944 = vmatprep.subr.mxu0 0.0
  %945 = vmatpush1.msra.mxu0 0.0
  %946 = vmatprep.subr.mxu0 0.0
  %947 = vmatpush1.msra.mxu0 0.0
  %948 = vmatprep.subr.mxu0 0.0
  %949 = vmatpush1.msra.mxu0 0.0
  %950 = vmatprep.subr.mxu0 0.0
  %951 = vmatpush1.msra.mxu0 0.0
  %952 = vmatprep.subr.mxu0 0.0
  %953 = vmatpush1.msra.mxu0 0.0
  %954 = vmatprep.subr.mxu0 0.0
  %955 = vmatpush1.msra.mxu0 0.0
  %956 = vmatprep.subr.mxu0 0.0
  %957 = vmatpush1.msra.mxu0 0.0
  %958 = vmatprep.subr.mxu0 0.0
  %959 = vmatpush1.msra.mxu0 0.0
  %960 = vmatprep.subr.mxu0 0.0
  %961 = vmatpush1.msra.mxu0 0.0
  %962 = vmatprep.subr.mxu0 0.0
  %963 = vmatpush1.msra.mxu0 0.0
  %964 = vmatprep.subr.mxu0 0.0
  %965 = vmatpush1.msra.mxu0 0.0
  %966 = vmatprep.mubr.f32.mxu0 0.0
  %967 = vmatmul.mubr.f32.gmra.mrb[0].mxu0 %v895
  %v968 = vpop.f32.mrb[0].mxu0
  %v969 = vadd.f32 0.0, %v968
  %v970 = vpop.f32.mrb[0].mxu0
  %v971 = vadd.f32 0.0, %v970
  %972 = vdwg.mxu0
  %973 = vmatprep.subr.mxu0 0.0
  %974 = vmatpush1.msra.mxu0 %v76
  %975 = vmatprep.subr.mxu0 0.0
  %976 = vmatpush1.msra.mxu0 %v79
  %977 = vmatprep.subr.mxu0 0.0
  %978 = vmatpush1.msra.mxu0 %v82
  %979 = vmatprep.subr.mxu0 0.0
  %980 = vmatpush1.msra.mxu0 %v85
  %981 = vmatprep.subr.mxu0 0.0
  %982 = vmatpush1.msra.mxu0 %v88
  %983 = vmatprep.subr.mxu0 0.0
  %984 = vmatpush1.msra.mxu0 %v91
  %985 = vmatprep.subr.mxu0 0.0
  %986 = vmatpush1.msra.mxu0 %v94
  %987 = vmatprep.subr.mxu0 0.0
  %988 = vmatpush1.msra.mxu0 %v97
  %989 = vmatprep.subr.mxu0 0.0
  %990 = vmatpush1.msra.mxu0 %v100
  %991 = vmatprep.subr.mxu0 0.0
  %992 = vmatpush1.msra.mxu0 %v103
  %993 = vmatprep.subr.mxu0 0.0
  %994 = vmatpush1.msra.mxu0 %v106
  %995 = vmatprep.subr.mxu0 0.0
  %996 = vmatpush1.msra.mxu0 %v109
  %997 = vmatprep.subr.mxu0 0.0
  %998 = vmatpush1.msra.mxu0 %v112
  %999 = vmatprep.subr.mxu0 0.0
  %1000 = vmatpush1.msra.mxu0 %v115
  %1001 = vmatprep.subr.mxu0 0.0
  %1002 = vmatpush1.msra.mxu0 %v118
  %1003 = vmatprep.subr.mxu0 0.0
  %1004 = vmatpush1.msra.mxu0 %v121
  %1005 = vmatprep.subr.mxu0 0.0
  %1006 = vmatpush1.msra.mxu0 0.0
  %1007 = vmatprep.subr.mxu0 0.0
  %1008 = vmatpush1.msra.mxu0 0.0
  %1009 = vmatprep.subr.mxu0 0.0
  %1010 = vmatpush1.msra.mxu0 0.0
  %1011 = vmatprep.subr.mxu0 0.0
  %1012 = vmatpush1.msra.mxu0 0.0
  %1013 = vmatprep.subr.mxu0 0.0
  %1014 = vmatpush1.msra.mxu0 0.0
  %1015 = vmatprep.subr.mxu0 0.0
  %1016 = vmatpush1.msra.mxu0 0.0
  %1017 = vmatprep.subr.mxu0 0.0
  %1018 = vmatpush1.msra.mxu0 0.0
  %1019 = vmatprep.subr.mxu0 0.0
  %1020 = vmatpush1.msra.mxu0 0.0
  %1021 = vmatprep.subr.mxu0 0.0
  %1022 = vmatpush1.msra.mxu0 0.0
  %1023 = vmatprep.subr.mxu0 0.0
  %1024 = vmatpush1.msra.mxu0 0.0
  %1025 = vmatprep.subr.mxu0 0.0
  %1026 = vmatpush1.msra.mxu0 0.0
  %1027 = vmatprep.subr.mxu0 0.0
  %1028 = vmatpush1.msra.mxu0 0.0
  %1029 = vmatprep.subr.mxu0 0.0
  %1030 = vmatpush1.msra.mxu0 0.0
  %1031 = vmatprep.subr.mxu0 0.0
  %1032 = vmatpush1.msra.mxu0 0.0
  %1033 = vmatprep.subr.mxu0 0.0
  %1034 = vmatpush1.msra.mxu0 0.0
  %1035 = vmatprep.subr.mxu0 0.0
  %1036 = vmatpush1.msra.mxu0 0.0
  %1037 = vmatprep.mubr.f32.mxu0 0.0
  %1038 = vmatmul.mubr.f32.gmra.mrb[0].mxu0 %v895
  %v1039 = vpop.f32.mrb[0].mxu0
  %v1040 = vadd.f32 0.0, %v1039
  %v1041 = vpop.f32.mrb[0].mxu0
  %1042 = vdwg.mxu0
  %v1043 = vadd.f32 %v899, %v969
  %v1044 = vadd.f32 %v900, %v971
  %v1045 = vxor.u32 %v1043, 2147483648
  %v1046 = vxor.u32 %v1044, 2147483648
  %v1047 = vmul.f32 %v1045, 1.442695
  %v1048 = vpow.pop %v1047
  %v1049 = vmul.f32 %v1046, 1.442695
  %v1050 = vpow.pop %v1049
  %v1051 = vadd.f32 %v1048, 1.0
  %v1052 = vadd.f32 %v1050, 1.0
  %v1053 = vrcp.pop %v1051
  %v1054 = vmul.f32 1.0, %v1053
  %v1055 = vrcp.pop %v1052
  %v1056 = vmul.f32 1.0, %v1055
  %v1057 = vadd.f32 %v1040, %v552
  %v1058 = vmul.f32 %v1054, %v1057
  %v1059 = vadd.f32 %v901, %v1058
  %v1060 = vtanh.pop %v1059
  %v1061 = vsub.f32 %v895, %v1060
  %v1062 = vmul.f32 %v1056, %v1061
  %v1063 = vadd.f32 %v1060, %v1062
  %s1064 = scalar_lea.vmem [#allocation2], 24
  %1065 = vst [vmem:[%s1064] sm:$0xff] %v1063
  %s1066 = scalar_lea.vmem [#allocation3], 96
  %v1067 = vld [vmem:[%s1066] sm:$0xff]
  %v1068 = vld [vmem:[%s1066 + $0x8] sm:$0xff]
  %v1069 = vld [vmem:[%s1066 + $0x10] sm:$0xff]
  %1070 = vmatprep.subr.mxu0 %v75
  %1071 = vmatpush1.msra.mxu0 %v74
  %1072 = vmatprep.subr.mxu0 %v78
  %1073 = vmatpush1.msra.mxu0 %v77
  %1074 = vmatprep.subr.mxu0 %v81
  %1075 = vmatpush1.msra.mxu0 %v80
  %1076 = vmatprep.subr.mxu0 %v84
  %1077 = vmatpush1.msra.mxu0 %v83
  %1078 = vmatprep.subr.mxu0 %v87
  %1079 = vmatpush1.msra.mxu0 %v86
  %1080 = vmatprep.subr.mxu0 %v90
  %1081 = vmatpush1.msra.mxu0 %v89
  %1082 = vmatprep.subr.mxu0 %v93
  %1083 = vmatpush1.msra.mxu0 %v92
  %1084 = vmatprep.subr.mxu0 %v96
  %1085 = vmatpush1.msra.mxu0 %v95
  %1086 = vmatprep.subr.mxu0 %v99
  %1087 = vmatpush1.msra.mxu0 %v98
  %1088 = vmatprep.subr.mxu0 %v102
  %1089 = vmatpush1.msra.mxu0 %v101
  %1090 = vmatprep.subr.mxu0 %v105
  %1091 = vmatpush1.msra.mxu0 %v104
  %1092 = vmatprep.subr.mxu0 %v108
  %1093 = vmatpush1.msra.mxu0 %v107
  %1094 = vmatprep.subr.mxu0 %v111
  %1095 = vmatpush1.msra.mxu0 %v110
  %1096 = vmatprep.subr.mxu0 %v114
  %1097 = vmatpush1.msra.mxu0 %v113
  %1098 = vmatprep.subr.mxu0 %v117
  %1099 = vmatpush1.msra.mxu0 %v116
  %1100 = vmatprep.subr.mxu0 %v120
  %1101 = vmatpush1.msra.mxu0 %v119
  %1102 = vmatprep.subr.mxu0 0.0
  %1103 = vmatpush1.msra.mxu0 0.0
  %1104 = vmatprep.subr.mxu0 0.0
  %1105 = vmatpush1.msra.mxu0 0.0
  %1106 = vmatprep.subr.mxu0 0.0
  %1107 = vmatpush1.msra.mxu0 0.0
  %1108 = vmatprep.subr.mxu0 0.0
  %1109 = vmatpush1.msra.mxu0 0.0
  %1110 = vmatprep.subr.mxu0 0.0
  %1111 = vmatpush1.msra.mxu0 0.0
  %1112 = vmatprep.subr.mxu0 0.0
  %1113 = vmatpush1.msra.mxu0 0.0
  %1114 = vmatprep.subr.mxu0 0.0
  %1115 = vmatpush1.msra.mxu0 0.0
  %1116 = vmatprep.subr.mxu0 0.0
  %1117 = vmatpush1.msra.mxu0 0.0
  %1118 = vmatprep.subr.mxu0 0.0
  %1119 = vmatpush1.msra.mxu0 0.0
  %1120 = vmatprep.subr.mxu0 0.0
  %1121 = vmatpush1.msra.mxu0 0.0
  %1122 = vmatprep.subr.mxu0 0.0
  %1123 = vmatpush1.msra.mxu0 0.0
  %1124 = vmatprep.subr.mxu0 0.0
  %1125 = vmatpush1.msra.mxu0 0.0
  %1126 = vmatprep.subr.mxu0 0.0
  %1127 = vmatpush1.msra.mxu0 0.0
  %1128 = vmatprep.subr.mxu0 0.0
  %1129 = vmatpush1.msra.mxu0 0.0
  %1130 = vmatprep.subr.mxu0 0.0
  %1131 = vmatpush1.msra.mxu0 0.0
  %1132 = vmatprep.subr.mxu0 0.0
  %1133 = vmatpush1.msra.mxu0 0.0
  %1134 = vmatprep.mubr.f32.mxu0 0.0
  %1135 = vmatmul.mubr.f32.gmra.mrb[0].mxu0 %v1063
  %v1136 = vpop.f32.mrb[0].mxu0
  %v1137 = vadd.f32 0.0, %v1136
  %v1138 = vpop.f32.mrb[0].mxu0
  %v1139 = vadd.f32 0.0, %v1138
  %1140 = vdwg.mxu0
  %1141 = vmatprep.subr.mxu0 0.0
  %1142 = vmatpush1.msra.mxu0 %v76
  %1143 = vmatprep.subr.mxu0 0.0
  %1144 = vmatpush1.msra.mxu0 %v79
  %1145 = vmatprep.subr.mxu0 0.0
  %1146 = vmatpush1.msra.mxu0 %v82
  %1147 = vmatprep.subr.mxu0 0.0
  %1148 = vmatpush1.msra.mxu0 %v85
  %1149 = vmatprep.subr.mxu0 0.0
  %1150 = vmatpush1.msra.mxu0 %v88
  %1151 = vmatprep.subr.mxu0 0.0
  %1152 = vmatpush1.msra.mxu0 %v91
  %1153 = vmatprep.subr.mxu0 0.0
  %1154 = vmatpush1.msra.mxu0 %v94
  %1155 = vmatprep.subr.mxu0 0.0
  %1156 = vmatpush1.msra.mxu0 %v97
  %1157 = vmatprep.subr.mxu0 0.0
  %1158 = vmatpush1.msra.mxu0 %v100
  %1159 = vmatprep.subr.mxu0 0.0
  %1160 = vmatpush1.msra.mxu0 %v103
  %1161 = vmatprep.subr.mxu0 0.0
  %1162 = vmatpush1.msra.mxu0 %v106
  %1163 = vmatprep.subr.mxu0 0.0
  %1164 = vmatpush1.msra.mxu0 %v109
  %1165 = vmatprep.subr.mxu0 0.0
  %1166 = vmatpush1.msra.mxu0 %v112
  %1167 = vmatprep.subr.mxu0 0.0
  %1168 = vmatpush1.msra.mxu0 %v115
  %1169 = vmatprep.subr.mxu0 0.0
  %1170 = vmatpush1.msra.mxu0 %v118
  %1171 = vmatprep.subr.mxu0 0.0
  %1172 = vmatpush1.msra.mxu0 %v121
  %1173 = vmatprep.subr.mxu0 0.0
  %1174 = vmatpush1.msra.mxu0 0.0
  %1175 = vmatprep.subr.mxu0 0.0
  %1176 = vmatpush1.msra.mxu0 0.0
  %1177 = vmatprep.subr.mxu0 0.0
  %1178 = vmatpush1.msra.mxu0 0.0
  %1179 = vmatprep.subr.mxu0 0.0
  %1180 = vmatpush1.msra.mxu0 0.0
  %1181 = vmatprep.subr.mxu0 0.0
  %1182 = vmatpush1.msra.mxu0 0.0
  %1183 = vmatprep.subr.mxu0 0.0
  %1184 = vmatpush1.msra.mxu0 0.0
  %1185 = vmatprep.subr.mxu0 0.0
  %1186 = vmatpush1.msra.mxu0 0.0
  %1187 = vmatprep.subr.mxu0 0.0
  %1188 = vmatpush1.msra.mxu0 0.0
  %1189 = vmatprep.subr.mxu0 0.0
  %1190 = vmatpush1.msra.mxu0 0.0
  %1191 = vmatprep.subr.mxu0 0.0
  %1192 = vmatpush1.msra.mxu0 0.0
  %1193 = vmatprep.subr.mxu0 0.0
  %1194 = vmatpush1.msra.mxu0 0.0
  %1195 = vmatprep.subr.mxu0 0.0
  %1196 = vmatpush1.msra.mxu0 0.0
  %1197 = vmatprep.subr.mxu0 0.0
  %1198 = vmatpush1.msra.mxu0 0.0
  %1199 = vmatprep.subr.mxu0 0.0
  %1200 = vmatpush1.msra.mxu0 0.0
  %1201 = vmatprep.subr.mxu0 0.0
  %1202 = vmatpush1.msra.mxu0 0.0
  %1203 = vmatprep.subr.mxu0 0.0
  %1204 = vmatpush1.msra.mxu0 0.0
  %1205 = vmatprep.mubr.f32.mxu0 0.0
  %1206 = vmatmul.mubr.f32.gmra.mrb[0].mxu0 %v1063
  %v1207 = vpop.f32.mrb[0].mxu0
  %v1208 = vadd.f32 0.0, %v1207
  %v1209 = vpop.f32.mrb[0].mxu0
  %1210 = vdwg.mxu0
  %v1211 = vadd.f32 %v1067, %v1137
  %v1212 = vadd.f32 %v1068, %v1139
  %v1213 = vxor.u32 %v1211, 2147483648
  %v1214 = vxor.u32 %v1212, 2147483648
  %v1215 = vmul.f32 %v1213, 1.442695
  %v1216 = vpow.pop %v1215
  %v1217 = vmul.f32 %v1214, 1.442695
  %v1218 = vpow.pop %v1217
  %v1219 = vadd.f32 %v1216, 1.0
  %v1220 = vadd.f32 %v1218, 1.0
  %v1221 = vrcp.pop %v1219
  %v1222 = vmul.f32 1.0, %v1221
  %v1223 = vrcp.pop %v1220
  %v1224 = vmul.f32 1.0, %v1223
  %v1225 = vadd.f32 %v1208, %v552
  %v1226 = vmul.f32 %v1222, %v1225
  %v1227 = vadd.f32 %v1069, %v1226
  %v1228 = vtanh.pop %v1227
  %v1229 = vsub.f32 %v1063, %v1228
  %v1230 = vmul.f32 %v1224, %v1229
  %v1231 = vadd.f32 %v1228, %v1230
  %s1232 = scalar_lea.vmem [#allocation2], 32
  %1233 = vst [vmem:[%s1232] sm:$0xff] %v1231
  %s1234 = scalar_lea.vmem [#allocation3], 120
  %v1235 = vld [vmem:[%s1234] sm:$0xff]
  %v1236 = vld [vmem:[%s1234 + $0x8] sm:$0xff]
  %v1237 = vld [vmem:[%s1234 + $0x10] sm:$0xff]
  %1238 = vmatprep.subr.mxu0 %v75
  %1239 = vmatpush1.msra.mxu0 %v74
  %1240 = vmatprep.subr.mxu0 %v78
  %1241 = vmatpush1.msra.mxu0 %v77
  %1242 = vmatprep.subr.mxu0 %v81
  %1243 = vmatpush1.msra.mxu0 %v80
  %1244 = vmatprep.subr.mxu0 %v84
  %1245 = vmatpush1.msra.mxu0 %v83
  %1246 = vmatprep.subr.mxu0 %v87
  %1247 = vmatpush1.msra.mxu0 %v86
  %1248 = vmatprep.subr.mxu0 %v90
  %1249 = vmatpush1.msra.mxu0 %v89
  %1250 = vmatprep.subr.mxu0 %v93
  %1251 = vmatpush1.msra.mxu0 %v92
  %1252 = vmatprep.subr.mxu0 %v96
  %1253 = vmatpush1.msra.mxu0 %v95
  %1254 = vmatprep.subr.mxu0 %v99
  %1255 = vmatpush1.msra.mxu0 %v98
  %1256 = vmatprep.subr.mxu0 %v102
  %1257 = vmatpush1.msra.mxu0 %v101
  %1258 = vmatprep.subr.mxu0 %v105
  %1259 = vmatpush1.msra.mxu0 %v104
  %1260 = vmatprep.subr.mxu0 %v108
  %1261 = vmatpush1.msra.mxu0 %v107
  %1262 = vmatprep.subr.mxu0 %v111
  %1263 = vmatpush1.msra.mxu0 %v110
  %1264 = vmatprep.subr.mxu0 %v114
  %1265 = vmatpush1.msra.mxu0 %v113
  %1266 = vmatprep.subr.mxu0 %v117
  %1267 = vmatpush1.msra.mxu0 %v116
  %1268 = vmatprep.subr.mxu0 %v120
  %1269 = vmatpush1.msra.mxu0 %v119
  %1270 = vmatprep.subr.mxu0 0.0
  %1271 = vmatpush1.msra.mxu0 0.0
  %1272 = vmatprep.subr.mxu0 0.0
  %1273 = vmatpush1.msra.mxu0 0.0
  %1274 = vmatprep.subr.mxu0 0.0
  %1275 = vmatpush1.msra.mxu0 0.0
  %1276 = vmatprep.subr.mxu0 0.0
  %1277 = vmatpush1.msra.mxu0 0.0
  %1278 = vmatprep.subr.mxu0 0.0
  %1279 = vmatpush1.msra.mxu0 0.0
  %1280 = vmatprep.subr.mxu0 0.0
  %1281 = vmatpush1.msra.mxu0 0.0
  %1282 = vmatprep.subr.mxu0 0.0
  %1283 = vmatpush1.msra.mxu0 0.0
  %1284 = vmatprep.subr.mxu0 0.0
  %1285 = vmatpush1.msra.mxu0 0.0
  %1286 = vmatprep.subr.mxu0 0.0
  %1287 = vmatpush1.msra.mxu0 0.0
  %1288 = vmatprep.subr.mxu0 0.0
  %1289 = vmatpush1.msra.mxu0 0.0
  %1290 = vmatprep.subr.mxu0 0.0
  %1291 = vmatpush1.msra.mxu0 0.0
  %1292 = vmatprep.subr.mxu0 0.0
  %1293 = vmatpush1.msra.mxu0 0.0
  %1294 = vmatprep.subr.mxu0 0.0
  %1295 = vmatpush1.msra.mxu0 0.0
  %1296 = vmatprep.subr.mxu0 0.0
  %1297 = vmatpush1.msra.mxu0 0.0
  %1298 = vmatprep.subr.mxu0 0.0
  %1299 = vmatpush1.msra.mxu0 0.0
  %1300 = vmatprep.subr.mxu0 0.0
  %1301 = vmatpush1.msra.mxu0 0.0
  %1302 = vmatprep.mubr.f32.mxu0 0.0
  %1303 = vmatmul.mubr.f32.gmra.mrb[0].mxu0 %v1231
  %v1304 = vpop.f32.mrb[0].mxu0
  %v1305 = vadd.f32 0.0, %v1304
  %v1306 = vpop.f32.mrb[0].mxu0
  %v1307 = vadd.f32 0.0, %v1306
  %1308 = vdwg.mxu0
  %1309 = vmatprep.subr.mxu0 0.0
  %1310 = vmatpush1.msra.mxu0 %v76
  %1311 = vmatprep.subr.mxu0 0.0
  %1312 = vmatpush1.msra.mxu0 %v79
  %1313 = vmatprep.subr.mxu0 0.0
  %1314 = vmatpush1.msra.mxu0 %v82
  %1315 = vmatprep.subr.mxu0 0.0
  %1316 = vmatpush1.msra.mxu0 %v85
  %1317 = vmatprep.subr.mxu0 0.0
  %1318 = vmatpush1.msra.mxu0 %v88
  %1319 = vmatprep.subr.mxu0 0.0
  %1320 = vmatpush1.msra.mxu0 %v91
  %1321 = vmatprep.subr.mxu0 0.0
  %1322 = vmatpush1.msra.mxu0 %v94
  %1323 = vmatprep.subr.mxu0 0.0
  %1324 = vmatpush1.msra.mxu0 %v97
  %1325 = vmatprep.subr.mxu0 0.0
  %1326 = vmatpush1.msra.mxu0 %v100
  %1327 = vmatprep.subr.mxu0 0.0
  %1328 = vmatpush1.msra.mxu0 %v103
  %1329 = vmatprep.subr.mxu0 0.0
  %1330 = vmatpush1.msra.mxu0 %v106
  %1331 = vmatprep.subr.mxu0 0.0
  %1332 = vmatpush1.msra.mxu0 %v109
  %1333 = vmatprep.subr.mxu0 0.0
  %1334 = vmatpush1.msra.mxu0 %v112
  %1335 = vmatprep.subr.mxu0 0.0
  %1336 = vmatpush1.msra.mxu0 %v115
  %1337 = vmatprep.subr.mxu0 0.0
  %1338 = vmatpush1.msra.mxu0 %v118
  %1339 = vmatprep.subr.mxu0 0.0
  %1340 = vmatpush1.msra.mxu0 %v121
  %1341 = vmatprep.subr.mxu0 0.0
  %1342 = vmatpush1.msra.mxu0 0.0
  %1343 = vmatprep.subr.mxu0 0.0
  %1344 = vmatpush1.msra.mxu0 0.0
  %1345 = vmatprep.subr.mxu0 0.0
  %1346 = vmatpush1.msra.mxu0 0.0
  %1347 = vmatprep.subr.mxu0 0.0
  %1348 = vmatpush1.msra.mxu0 0.0
  %1349 = vmatprep.subr.mxu0 0.0
  %1350 = vmatpush1.msra.mxu0 0.0
  %1351 = vmatprep.subr.mxu0 0.0
  %1352 = vmatpush1.msra.mxu0 0.0
  %1353 = vmatprep.subr.mxu0 0.0
  %1354 = vmatpush1.msra.mxu0 0.0
  %1355 = vmatprep.subr.mxu0 0.0
  %1356 = vmatpush1.msra.mxu0 0.0
  %1357 = vmatprep.subr.mxu0 0.0
  %1358 = vmatpush1.msra.mxu0 0.0
  %1359 = vmatprep.subr.mxu0 0.0
  %1360 = vmatpush1.msra.mxu0 0.0
  %1361 = vmatprep.subr.mxu0 0.0
  %1362 = vmatpush1.msra.mxu0 0.0
  %1363 = vmatprep.subr.mxu0 0.0
  %1364 = vmatpush1.msra.mxu0 0.0
  %1365 = vmatprep.subr.mxu0 0.0
  %1366 = vmatpush1.msra.mxu0 0.0
  %1367 = vmatprep.subr.mxu0 0.0
  %1368 = vmatpush1.msra.mxu0 0.0
  %1369 = vmatprep.subr.mxu0 0.0
  %1370 = vmatpush1.msra.mxu0 0.0
  %1371 = vmatprep.subr.mxu0 0.0
  %1372 = vmatpush1.msra.mxu0 0.0
  %1373 = vmatprep.mubr.f32.mxu0 0.0
  %1374 = vmatmul.mubr.f32.gmra.mrb[0].mxu0 %v1231
  %v1375 = vpop.f32.mrb[0].mxu0
  %v1376 = vadd.f32 0.0, %v1375
  %v1377 = vpop.f32.mrb[0].mxu0
  %1378 = vdwg.mxu0
  %v1379 = vadd.f32 %v1235, %v1305
  %v1380 = vadd.f32 %v1236, %v1307
  %v1381 = vxor.u32 %v1379, 2147483648
  %v1382 = vxor.u32 %v1380, 2147483648
  %v1383 = vmul.f32 %v1381, 1.442695
  %v1384 = vpow.pop %v1383
  %v1385 = vmul.f32 %v1382, 1.442695
  %v1386 = vpow.pop %v1385
  %v1387 = vadd.f32 %v1384, 1.0
  %v1388 = vadd.f32 %v1386, 1.0
  %v1389 = vrcp.pop %v1387
  %v1390 = vmul.f32 1.0, %v1389
  %v1391 = vrcp.pop %v1388
  %v1392 = vmul.f32 1.0, %v1391
  %v1393 = vadd.f32 %v1376, %v552
  %v1394 = vmul.f32 %v1390, %v1393
  %v1395 = vadd.f32 %v1237, %v1394
  %v1396 = vtanh.pop %v1395
  %v1397 = vsub.f32 %v1231, %v1396
  %v1398 = vmul.f32 %v1392, %v1397
  %v1399 = vadd.f32 %v1396, %v1398
  %s1400 = scalar_lea.vmem [#allocation2], 40
  %1401 = vst [vmem:[%s1400] sm:$0xff] %v1399
  %s1402 = scalar_lea.vmem [#allocation3], 144
  %v1403 = vld [vmem:[%s1402] sm:$0xff]
  %v1404 = vld [vmem:[%s1402 + $0x8] sm:$0xff]
  %v1405 = vld [vmem:[%s1402 + $0x10] sm:$0xff]
  %1406 = vmatprep.subr.mxu0 %v75
  %1407 = vmatpush1.msra.mxu0 %v74
  %1408 = vmatprep.subr.mxu0 %v78
  %1409 = vmatpush1.msra.mxu0 %v77
  %1410 = vmatprep.subr.mxu0 %v81
  %1411 = vmatpush1.msra.mxu0 %v80
  %1412 = vmatprep.subr.mxu0 %v84
  %1413 = vmatpush1.msra.mxu0 %v83
  %1414 = vmatprep.subr.mxu0 %v87
  %1415 = vmatpush1.msra.mxu0 %v86
  %1416 = vmatprep.subr.mxu0 %v90
  %1417 = vmatpush1.msra.mxu0 %v89
  %1418 = vmatprep.subr.mxu0 %v93
  %1419 = vmatpush1.msra.mxu0 %v92
  %1420 = vmatprep.subr.mxu0 %v96
  %1421 = vmatpush1.msra.mxu0 %v95
  %1422 = vmatprep.subr.mxu0 %v99
  %1423 = vmatpush1.msra.mxu0 %v98
  %1424 = vmatprep.subr.mxu0 %v102
  %1425 = vmatpush1.msra.mxu0 %v101
  %1426 = vmatprep.subr.mxu0 %v105
  %1427 = vmatpush1.msra.mxu0 %v104
  %1428 = vmatprep.subr.mxu0 %v108
  %1429 = vmatpush1.msra.mxu0 %v107
  %1430 = vmatprep.subr.mxu0 %v111
  %1431 = vmatpush1.msra.mxu0 %v110
  %1432 = vmatprep.subr.mxu0 %v114
  %1433 = vmatpush1.msra.mxu0 %v113
  %1434 = vmatprep.subr.mxu0 %v117
  %1435 = vmatpush1.msra.mxu0 %v116
  %1436 = vmatprep.subr.mxu0 %v120
  %1437 = vmatpush1.msra.mxu0 %v119
  %1438 = vmatprep.subr.mxu0 0.0
  %1439 = vmatpush1.msra.mxu0 0.0
  %1440 = vmatprep.subr.mxu0 0.0
  %1441 = vmatpush1.msra.mxu0 0.0
  %1442 = vmatprep.subr.mxu0 0.0
  %1443 = vmatpush1.msra.mxu0 0.0
  %1444 = vmatprep.subr.mxu0 0.0
  %1445 = vmatpush1.msra.mxu0 0.0
  %1446 = vmatprep.subr.mxu0 0.0
  %1447 = vmatpush1.msra.mxu0 0.0
  %1448 = vmatprep.subr.mxu0 0.0
  %1449 = vmatpush1.msra.mxu0 0.0
  %1450 = vmatprep.subr.mxu0 0.0
  %1451 = vmatpush1.msra.mxu0 0.0
  %1452 = vmatprep.subr.mxu0 0.0
  %1453 = vmatpush1.msra.mxu0 0.0
  %1454 = vmatprep.subr.mxu0 0.0
  %1455 = vmatpush1.msra.mxu0 0.0
  %1456 = vmatprep.subr.mxu0 0.0
  %1457 = vmatpush1.msra.mxu0 0.0
  %1458 = vmatprep.subr.mxu0 0.0
  %1459 = vmatpush1.msra.mxu0 0.0
  %1460 = vmatprep.subr.mxu0 0.0
  %1461 = vmatpush1.msra.mxu0 0.0
  %1462 = vmatprep.subr.mxu0 0.0
  %1463 = vmatpush1.msra.mxu0 0.0
  %1464 = vmatprep.subr.mxu0 0.0
  %1465 = vmatpush1.msra.mxu0 0.0
  %1466 = vmatprep.subr.mxu0 0.0
  %1467 = vmatpush1.msra.mxu0 0.0
  %1468 = vmatprep.subr.mxu0 0.0
  %1469 = vmatpush1.msra.mxu0 0.0
  %1470 = vmatprep.mubr.f32.mxu0 0.0
  %1471 = vmatmul.mubr.f32.gmra.mrb[0].mxu0 %v1399
  %v1472 = vpop.f32.mrb[0].mxu0
  %v1473 = vadd.f32 0.0, %v1472
  %v1474 = vpop.f32.mrb[0].mxu0
  %v1475 = vadd.f32 0.0, %v1474
  %1476 = vdwg.mxu0
  %1477 = vmatprep.subr.mxu0 0.0
  %1478 = vmatpush1.msra.mxu0 %v76
  %1479 = vmatprep.subr.mxu0 0.0
  %1480 = vmatpush1.msra.mxu0 %v79
  %1481 = vmatprep.subr.mxu0 0.0
  %1482 = vmatpush1.msra.mxu0 %v82
  %1483 = vmatprep.subr.mxu0 0.0
  %1484 = vmatpush1.msra.mxu0 %v85
  %1485 = vmatprep.subr.mxu0 0.0
  %1486 = vmatpush1.msra.mxu0 %v88
  %1487 = vmatprep.subr.mxu0 0.0
  %1488 = vmatpush1.msra.mxu0 %v91
  %1489 = vmatprep.subr.mxu0 0.0
  %1490 = vmatpush1.msra.mxu0 %v94
  %1491 = vmatprep.subr.mxu0 0.0
  %1492 = vmatpush1.msra.mxu0 %v97
  %1493 = vmatprep.subr.mxu0 0.0
  %1494 = vmatpush1.msra.mxu0 %v100
  %1495 = vmatprep.subr.mxu0 0.0
  %1496 = vmatpush1.msra.mxu0 %v103
  %1497 = vmatprep.subr.mxu0 0.0
  %1498 = vmatpush1.msra.mxu0 %v106
  %1499 = vmatprep.subr.mxu0 0.0
  %1500 = vmatpush1.msra.mxu0 %v109
  %1501 = vmatprep.subr.mxu0 0.0
  %1502 = vmatpush1.msra.mxu0 %v112
  %1503 = vmatprep.subr.mxu0 0.0
  %1504 = vmatpush1.msra.mxu0 %v115
  %1505 = vmatprep.subr.mxu0 0.0
  %1506 = vmatpush1.msra.mxu0 %v118
  %1507 = vmatprep.subr.mxu0 0.0
  %1508 = vmatpush1.msra.mxu0 %v121
  %1509 = vmatprep.subr.mxu0 0.0
  %1510 = vmatpush1.msra.mxu0 0.0
  %1511 = vmatprep.subr.mxu0 0.0
  %1512 = vmatpush1.msra.mxu0 0.0
  %1513 = vmatprep.subr.mxu0 0.0
  %1514 = vmatpush1.msra.mxu0 0.0
  %1515 = vmatprep.subr.mxu0 0.0
  %1516 = vmatpush1.msra.mxu0 0.0
  %1517 = vmatprep.subr.mxu0 0.0
  %1518 = vmatpush1.msra.mxu0 0.0
  %1519 = vmatprep.subr.mxu0 0.0
  %1520 = vmatpush1.msra.mxu0 0.0
  %1521 = vmatprep.subr.mxu0 0.0
  %1522 = vmatpush1.msra.mxu0 0.0
  %1523 = vmatprep.subr.mxu0 0.0
  %1524 = vmatpush1.msra.mxu0 0.0
  %1525 = vmatprep.subr.mxu0 0.0
  %1526 = vmatpush1.msra.mxu0 0.0
  %1527 = vmatprep.subr.mxu0 0.0
  %1528 = vmatpush1.msra.mxu0 0.0
  %1529 = vmatprep.subr.mxu0 0.0
  %1530 = vmatpush1.msra.mxu0 0.0
  %1531 = vmatprep.subr.mxu0 0.0
  %1532 = vmatpush1.msra.mxu0 0.0
  %1533 = vmatprep.subr.mxu0 0.0
  %1534 = vmatpush1.msra.mxu0 0.0
  %1535 = vmatprep.subr.mxu0 0.0
  %1536 = vmatpush1.msra.mxu0 0.0
  %1537 = vmatprep.subr.mxu0 0.0
  %1538 = vmatpush1.msra.mxu0 0.0
  %1539 = vmatprep.subr.mxu0 0.0
  %1540 = vmatpush1.msra.mxu0 0.0
  %1541 = vmatprep.mubr.f32.mxu0 0.0
  %1542 = vmatmul.mubr.f32.gmra.mrb[0].mxu0 %v1399
  %v1543 = vpop.f32.mrb[0].mxu0
  %v1544 = vadd.f32 0.0, %v1543
  %v1545 = vpop.f32.mrb[0].mxu0
  %1546 = vdwg.mxu0
  %v1547 = vadd.f32 %v1403, %v1473
  %v1548 = vadd.f32 %v1404, %v1475
  %v1549 = vxor.u32 %v1547, 2147483648
  %v1550 = vxor.u32 %v1548, 2147483648
  %v1551 = vmul.f32 %v1549, 1.442695
  %v1552 = vpow.pop %v1551
  %v1553 = vmul.f32 %v1550, 1.442695
  %v1554 = vpow.pop %v1553
  %v1555 = vadd.f32 %v1552, 1.0
  %v1556 = vadd.f32 %v1554, 1.0
  %v1557 = vrcp.pop %v1555
  %v1558 = vmul.f32 1.0, %v1557
  %v1559 = vrcp.pop %v1556
  %v1560 = vmul.f32 1.0, %v1559
  %v1561 = vadd.f32 %v1544, %v552
  %v1562 = vmul.f32 %v1558, %v1561
  %v1563 = vadd.f32 %v1405, %v1562
  %v1564 = vtanh.pop %v1563
  %v1565 = vsub.f32 %v1399, %v1564
  %v1566 = vmul.f32 %v1560, %v1565
  %v1567 = vadd.f32 %v1564, %v1566
  %s1568 = scalar_lea.vmem [#allocation2], 48
  %1569 = vst [vmem:[%s1568] sm:$0xff] %v1567
  %s1570 = scalar_lea.vmem [#allocation3], 168
  %v1571 = vld [vmem:[%s1570] sm:$0xff]
  %v1572 = vld [vmem:[%s1570 + $0x8] sm:$0xff]
  %v1573 = vld [vmem:[%s1570 + $0x10] sm:$0xff]
  %1574 = vmatprep.subr.mxu0 %v75
  %1575 = vmatpush1.msra.mxu0 %v74
  %1576 = vmatprep.subr.mxu0 %v78
  %1577 = vmatpush1.msra.mxu0 %v77
  %1578 = vmatprep.subr.mxu0 %v81
  %1579 = vmatpush1.msra.mxu0 %v80
  %1580 = vmatprep.subr.mxu0 %v84
  %1581 = vmatpush1.msra.mxu0 %v83
  %1582 = vmatprep.subr.mxu0 %v87
  %1583 = vmatpush1.msra.mxu0 %v86
  %1584 = vmatprep.subr.mxu0 %v90
  %1585 = vmatpush1.msra.mxu0 %v89
  %1586 = vmatprep.subr.mxu0 %v93
  %1587 = vmatpush1.msra.mxu0 %v92
  %1588 = vmatprep.subr.mxu0 %v96
  %1589 = vmatpush1.msra.mxu0 %v95
  %1590 = vmatprep.subr.mxu0 %v99
  %1591 = vmatpush1.msra.mxu0 %v98
  %1592 = vmatprep.subr.mxu0 %v102
  %1593 = vmatpush1.msra.mxu0 %v101
  %1594 = vmatprep.subr.mxu0 %v105
  %1595 = vmatpush1.msra.mxu0 %v104
  %1596 = vmatprep.subr.mxu0 %v108
  %1597 = vmatpush1.msra.mxu0 %v107
  %1598 = vmatprep.subr.mxu0 %v111
  %1599 = vmatpush1.msra.mxu0 %v110
  %1600 = vmatprep.subr.mxu0 %v114
  %1601 = vmatpush1.msra.mxu0 %v113
  %1602 = vmatprep.subr.mxu0 %v117
  %1603 = vmatpush1.msra.mxu0 %v116
  %1604 = vmatprep.subr.mxu0 %v120
  %1605 = vmatpush1.msra.mxu0 %v119
  %1606 = vmatprep.subr.mxu0 0.0
  %1607 = vmatpush1.msra.mxu0 0.0
  %1608 = vmatprep.subr.mxu0 0.0
  %1609 = vmatpush1.msra.mxu0 0.0
  %1610 = vmatprep.subr.mxu0 0.0
  %1611 = vmatpush1.msra.mxu0 0.0
  %1612 = vmatprep.subr.mxu0 0.0
  %1613 = vmatpush1.msra.mxu0 0.0
  %1614 = vmatprep.subr.mxu0 0.0
  %1615 = vmatpush1.msra.mxu0 0.0
  %1616 = vmatprep.subr.mxu0 0.0
  %1617 = vmatpush1.msra.mxu0 0.0
  %1618 = vmatprep.subr.mxu0 0.0
  %1619 = vmatpush1.msra.mxu0 0.0
  %1620 = vmatprep.subr.mxu0 0.0
  %1621 = vmatpush1.msra.mxu0 0.0
  %1622 = vmatprep.subr.mxu0 0.0
  %1623 = vmatpush1.msra.mxu0 0.0
  %1624 = vmatprep.subr.mxu0 0.0
  %1625 = vmatpush1.msra.mxu0 0.0
  %1626 = vmatprep.subr.mxu0 0.0
  %1627 = vmatpush1.msra.mxu0 0.0
  %1628 = vmatprep.subr.mxu0 0.0
  %1629 = vmatpush1.msra.mxu0 0.0
  %1630 = vmatprep.subr.mxu0 0.0
  %1631 = vmatpush1.msra.mxu0 0.0
  %1632 = vmatprep.subr.mxu0 0.0
  %1633 = vmatpush1.msra.mxu0 0.0
  %1634 = vmatprep.subr.mxu0 0.0
  %1635 = vmatpush1.msra.mxu0 0.0
  %1636 = vmatprep.subr.mxu0 0.0
  %1637 = vmatpush1.msra.mxu0 0.0
  %1638 = vmatprep.mubr.f32.mxu0 0.0
  %1639 = vmatmul.mubr.f32.gmra.mrb[0].mxu0 %v1567
  %v1640 = vpop.f32.mrb[0].mxu0
  %v1641 = vadd.f32 0.0, %v1640
  %v1642 = vpop.f32.mrb[0].mxu0
  %v1643 = vadd.f32 0.0, %v1642
  %1644 = vdwg.mxu0
  %1645 = vmatprep.subr.mxu0 0.0
  %1646 = vmatpush1.msra.mxu0 %v76
  %1647 = vmatprep.subr.mxu0 0.0
  %1648 = vmatpush1.msra.mxu0 %v79
  %1649 = vmatprep.subr.mxu0 0.0
  %1650 = vmatpush1.msra.mxu0 %v82
  %1651 = vmatprep.subr.mxu0 0.0
  %1652 = vmatpush1.msra.mxu0 %v85
  %1653 = vmatprep.subr.mxu0 0.0
  %1654 = vmatpush1.msra.mxu0 %v88
  %1655 = vmatprep.subr.mxu0 0.0
  %1656 = vmatpush1.msra.mxu0 %v91
  %1657 = vmatprep.subr.mxu0 0.0
  %1658 = vmatpush1.msra.mxu0 %v94
  %1659 = vmatprep.subr.mxu0 0.0
  %1660 = vmatpush1.msra.mxu0 %v97
  %1661 = vmatprep.subr.mxu0 0.0
  %1662 = vmatpush1.msra.mxu0 %v100
  %1663 = vmatprep.subr.mxu0 0.0
  %1664 = vmatpush1.msra.mxu0 %v103
  %1665 = vmatprep.subr.mxu0 0.0
  %1666 = vmatpush1.msra.mxu0 %v106
  %1667 = vmatprep.subr.mxu0 0.0
  %1668 = vmatpush1.msra.mxu0 %v109
  %1669 = vmatprep.subr.mxu0 0.0
  %1670 = vmatpush1.msra.mxu0 %v112
  %1671 = vmatprep.subr.mxu0 0.0
  %1672 = vmatpush1.msra.mxu0 %v115
  %1673 = vmatprep.subr.mxu0 0.0
  %1674 = vmatpush1.msra.mxu0 %v118
  %1675 = vmatprep.subr.mxu0 0.0
  %1676 = vmatpush1.msra.mxu0 %v121
  %1677 = vmatprep.subr.mxu0 0.0
  %1678 = vmatpush1.msra.mxu0 0.0
  %1679 = vmatprep.subr.mxu0 0.0
  %1680 = vmatpush1.msra.mxu0 0.0
  %1681 = vmatprep.subr.mxu0 0.0
  %1682 = vmatpush1.msra.mxu0 0.0
  %1683 = vmatprep.subr.mxu0 0.0
  %1684 = vmatpush1.msra.mxu0 0.0
  %1685 = vmatprep.subr.mxu0 0.0
  %1686 = vmatpush1.msra.mxu0 0.0
  %1687 = vmatprep.subr.mxu0 0.0
  %1688 = vmatpush1.msra.mxu0 0.0
  %1689 = vmatprep.subr.mxu0 0.0
  %1690 = vmatpush1.msra.mxu0 0.0
  %1691 = vmatprep.subr.mxu0 0.0
  %1692 = vmatpush1.msra.mxu0 0.0
  %1693 = vmatprep.subr.mxu0 0.0
  %1694 = vmatpush1.msra.mxu0 0.0
  %1695 = vmatprep.subr.mxu0 0.0
  %1696 = vmatpush1.msra.mxu0 0.0
  %1697 = vmatprep.subr.mxu0 0.0
  %1698 = vmatpush1.msra.mxu0 0.0
  %1699 = vmatprep.subr.mxu0 0.0
  %1700 = vmatpush1.msra.mxu0 0.0
  %1701 = vmatprep.subr.mxu0 0.0
  %1702 = vmatpush1.msra.mxu0 0.0
  %1703 = vmatprep.subr.mxu0 0.0
  %1704 = vmatpush1.msra.mxu0 0.0
  %1705 = vmatprep.subr.mxu0 0.0
  %1706 = vmatpush1.msra.mxu0 0.0
  %1707 = vmatprep.subr.mxu0 0.0
  %1708 = vmatpush1.msra.mxu0 0.0
  %1709 = vmatprep.mubr.f32.mxu0 0.0
  %1710 = vmatmul.mubr.f32.gmra.mrb[0].mxu0 %v1567
  %v1711 = vpop.f32.mrb[0].mxu0
  %v1712 = vadd.f32 0.0, %v1711
  %v1713 = vpop.f32.mrb[0].mxu0
  %1714 = vdwg.mxu0
  %v1715 = vadd.f32 %v1571, %v1641
  %v1716 = vadd.f32 %v1572, %v1643
  %v1717 = vxor.u32 %v1715, 2147483648
  %v1718 = vxor.u32 %v1716, 2147483648
  %v1719 = vmul.f32 %v1717, 1.442695
  %v1720 = vpow.pop %v1719
  %v1721 = vmul.f32 %v1718, 1.442695
  %v1722 = vpow.pop %v1721
  %v1723 = vadd.f32 %v1720, 1.0
  %v1724 = vadd.f32 %v1722, 1.0
  %v1725 = vrcp.pop %v1723
  %v1726 = vmul.f32 1.0, %v1725
  %v1727 = vrcp.pop %v1724
  %v1728 = vmul.f32 1.0, %v1727
  %v1729 = vadd.f32 %v1712, %v552
  %v1730 = vmul.f32 %v1726, %v1729
  %v1731 = vadd.f32 %v1573, %v1730
  %v1732 = vtanh.pop %v1731
  %v1733 = vsub.f32 %v1567, %v1732
  %v1734 = vmul.f32 %v1728, %v1733
  %v1735 = vadd.f32 %v1732, %v1734
  %s1736 = scalar_lea.vmem [#allocation2], 56
  %1737 = vst [vmem:[%s1736] sm:$0xff] %v1735
  %s1738 = scalar_lea.vmem %s1, 384
  %v1739 = vld [vmem:[%s1738] sm:$0xff]
  %v1740 = vld [vmem:[%s1738 + $0x8] sm:$0xff]
  %v1741 = vld [vmem:[%s1738 + $0x10] sm:$0xff]
  %v1742 = vld [vmem:[%s1738 + $0x18] sm:$0xff]
  %v1743 = vld [vmem:[%s1738 + $0x20] sm:$0xff]
  %v1744 = vld [vmem:[%s1738 + $0x28] sm:$0xff]
  %v1745 = vld [vmem:[%s1738 + $0x30] sm:$0xff]
  %v1746 = vld [vmem:[%s1738 + $0x38] sm:$0xff]
  %v1747 = vld [vmem:[%s1738 + $0x40] sm:$0xff]
  %v1748 = vld [vmem:[%s1738 + $0x48] sm:$0xff]
  %v1749 = vld [vmem:[%s1738 + $0x50] sm:$0xff]
  %v1750 = vld [vmem:[%s1738 + $0x58] sm:$0xff]
  %v1751 = vld [vmem:[%s1738 + $0x60] sm:$0xff]
  %v1752 = vld [vmem:[%s1738 + $0x68] sm:$0xff]
  %v1753 = vld [vmem:[%s1738 + $0x70] sm:$0xff]
  %v1754 = vld [vmem:[%s1738 + $0x78] sm:$0xff]
  %v1755 = vld [vmem:[%s1738 + $0x80] sm:$0xff]
  %v1756 = vld [vmem:[%s1738 + $0x88] sm:$0xff]
  %v1757 = vld [vmem:[%s1738 + $0x90] sm:$0xff]
  %v1758 = vld [vmem:[%s1738 + $0x98] sm:$0xff]
  %v1759 = vld [vmem:[%s1738 + $0xa0] sm:$0xff]
  %v1760 = vld [vmem:[%s1738 + $0xa8] sm:$0xff]
  %v1761 = vld [vmem:[%s1738 + $0xb0] sm:$0xff]
  %v1762 = vld [vmem:[%s1738 + $0xb8] sm:$0xff]
  %v1763 = vld [vmem:[%s1738 + $0xc0] sm:$0xff]
  %v1764 = vld [vmem:[%s1738 + $0xc8] sm:$0xff]
  %v1765 = vld [vmem:[%s1738 + $0xd0] sm:$0xff]
  %v1766 = vld [vmem:[%s1738 + $0xd8] sm:$0xff]
  %v1767 = vld [vmem:[%s1738 + $0xe0] sm:$0xff]
  %v1768 = vld [vmem:[%s1738 + $0xe8] sm:$0xff]
  %v1769 = vld [vmem:[%s1738 + $0xf0] sm:$0xff]
  %v1770 = vld [vmem:[%s1738 + $0xf8] sm:$0xff]
  %v1771 = vld [vmem:[%s1738 + $0x100] sm:$0xff]
  %v1772 = vld [vmem:[%s1738 + $0x108] sm:$0xff]
  %v1773 = vld [vmem:[%s1738 + $0x110] sm:$0xff]
  %v1774 = vld [vmem:[%s1738 + $0x118] sm:$0xff]
  %v1775 = vld [vmem:[%s1738 + $0x120] sm:$0xff]
  %v1776 = vld [vmem:[%s1738 + $0x128] sm:$0xff]
  %v1777 = vld [vmem:[%s1738 + $0x130] sm:$0xff]
  %v1778 = vld [vmem:[%s1738 + $0x138] sm:$0xff]
  %v1779 = vld [vmem:[%s1738 + $0x140] sm:$0xff]
  %v1780 = vld [vmem:[%s1738 + $0x148] sm:$0xff]
  %v1781 = vld [vmem:[%s1738 + $0x150] sm:$0xff]
  %v1782 = vld [vmem:[%s1738 + $0x158] sm:$0xff]
  %v1783 = vld [vmem:[%s1738 + $0x160] sm:$0xff]
  %v1784 = vld [vmem:[%s1738 + $0x168] sm:$0xff]
  %v1785 = vld [vmem:[%s1738 + $0x170] sm:$0xff]
  %v1786 = vld [vmem:[%s1738 + $0x178] sm:$0xff]
  %s1787 = scalar_lea.vmem %s2, 384
  %v1788 = vld [vmem:[%s1787] sm:$0xff]
  %v1789 = vld [vmem:[%s1787 + $0x8] sm:$0xff]
  %v1790 = vld [vmem:[%s1787 + $0x10] sm:$0xff]
  %v1791 = vld [vmem:[%s1787 + $0x18] sm:$0xff]
  %v1792 = vld [vmem:[%s1787 + $0x20] sm:$0xff]
  %v1793 = vld [vmem:[%s1787 + $0x28] sm:$0xff]
  %v1794 = vld [vmem:[%s1787 + $0x30] sm:$0xff]
  %v1795 = vld [vmem:[%s1787 + $0x38] sm:$0xff]
  %v1796 = vld [vmem:[%s1787 + $0x40] sm:$0xff]
  %v1797 = vld [vmem:[%s1787 + $0x48] sm:$0xff]
  %v1798 = vld [vmem:[%s1787 + $0x50] sm:$0xff]
  %v1799 = vld [vmem:[%s1787 + $0x58] sm:$0xff]
  %v1800 = vld [vmem:[%s1787 + $0x60] sm:$0xff]
  %v1801 = vld [vmem:[%s1787 + $0x68] sm:$0xff]
  %v1802 = vld [vmem:[%s1787 + $0x70] sm:$0xff]
  %v1803 = vld [vmem:[%s1787 + $0x78] sm:$0xff]
  %v1804 = vld [vmem:[%s1787 + $0x80] sm:$0xff]
  %v1805 = vld [vmem:[%s1787 + $0x88] sm:$0xff]
  %v1806 = vld [vmem:[%s1787 + $0x90] sm:$0xff]
  %v1807 = vld [vmem:[%s1787 + $0x98] sm:$0xff]
  %v1808 = vld [vmem:[%s1787 + $0xa0] sm:$0xff]
  %v1809 = vld [vmem:[%s1787 + $0xa8] sm:$0xff]
  %v1810 = vld [vmem:[%s1787 + $0xb0] sm:$0xff]
  %v1811 = vld [vmem:[%s1787 + $0xb8] sm:$0xff]
  %v1812 = vld [vmem:[%s1787 + $0xc0] sm:$0xff]
  %v1813 = vld [vmem:[%s1787 + $0xc8] sm:$0xff]
  %v1814 = vld [vmem:[%s1787 + $0xd0] sm:$0xff]
  %v1815 = vld [vmem:[%s1787 + $0xd8] sm:$0xff]
  %v1816 = vld [vmem:[%s1787 + $0xe0] sm:$0xff]
  %v1817 = vld [vmem:[%s1787 + $0xe8] sm:$0xff]
  %v1818 = vld [vmem:[%s1787 + $0xf0] sm:$0xff]
  %v1819 = vld [vmem:[%s1787 + $0xf8] sm:$0xff]
  %v1820 = vld [vmem:[%s1787 + $0x100] sm:$0xff]
  %v1821 = vld [vmem:[%s1787 + $0x108] sm:$0xff]
  %v1822 = vld [vmem:[%s1787 + $0x110] sm:$0xff]
  %v1823 = vld [vmem:[%s1787 + $0x118] sm:$0xff]
  %v1824 = vld [vmem:[%s1787 + $0x120] sm:$0xff]
  %v1825 = vld [vmem:[%s1787 + $0x128] sm:$0xff]
  %v1826 = vld [vmem:[%s1787 + $0x130] sm:$0xff]
  %v1827 = vld [vmem:[%s1787 + $0x138] sm:$0xff]
  %v1828 = vld [vmem:[%s1787 + $0x140] sm:$0xff]
  %v1829 = vld [vmem:[%s1787 + $0x148] sm:$0xff]
  %v1830 = vld [vmem:[%s1787 + $0x150] sm:$0xff]
  %v1831 = vld [vmem:[%s1787 + $0x158] sm:$0xff]
  %v1832 = vld [vmem:[%s1787 + $0x160] sm:$0xff]
  %v1833 = vld [vmem:[%s1787 + $0x168] sm:$0xff]
  %v1834 = vld [vmem:[%s1787 + $0x170] sm:$0xff]
  %v1835 = vld [vmem:[%s1787 + $0x178] sm:$0xff]
  %s1836 = scalar_lea.vmem %s3, 3
  %v1837 = vld [vmem:[%s1836] sm:$0x7]
  %s1838 = scalar_lea.vmem %s4, 1
  %v1839 = vld [vmem:[%s1838] sm:$0x1]
  %v1840 = vld [vmem:[#allocation2] sm:$0xff]
  %v1841 = vld [vmem:[#allocation2 + $0x8] sm:$0xff]
  %v1842 = vld [vmem:[#allocation2 + $0x10] sm:$0xff]
  %v1843 = vld [vmem:[#allocation2 + $0x18] sm:$0xff]
  %v1844 = vld [vmem:[#allocation2 + $0x20] sm:$0xff]
  %v1845 = vld [vmem:[#allocation2 + $0x28] sm:$0xff]
  %v1846 = vld [vmem:[#allocation2 + $0x30] sm:$0xff]
  %v1847 = vld [vmem:[#allocation2 + $0x38] sm:$0xff]
  %v1849 = vlaneseq
  %v1850 = vshrl.u32 %v1849, 7
  %v1851 = vsub.s32 0, %v1850
  %v1852 = vrot.slane %v1837, %v1851
  %v1853 = vlaneseq
  %v1854 = vshrl.u32 %v1853, 7
  %v1855 = vsub.s32 1, %v1854
  %v1856 = vrot.slane %v1837, %v1855
  %v1857 = vlaneseq
  %v1858 = vshrl.u32 %v1857, 7
  %v1859 = vsub.s32 2, %v1858
  %v1860 = vrot.slane %v1837, %v1859
  %1864 = vmatprep.subr.mxu0 %v1740
  %1865 = vmatpush1.msra.mxu0 %v1739
  %1866 = vmatprep.subr.mxu0 %v1743
  %1867 = vmatpush1.msra.mxu0 %v1742
  %1868 = vmatprep.subr.mxu0 %v1746
  %1869 = vmatpush1.msra.mxu0 %v1745
  %1870 = vmatprep.subr.mxu0 %v1749
  %1871 = vmatpush1.msra.mxu0 %v1748
  %1872 = vmatprep.subr.mxu0 %v1752
  %1873 = vmatpush1.msra.mxu0 %v1751
  %1874 = vmatprep.subr.mxu0 %v1755
  %1875 = vmatpush1.msra.mxu0 %v1754
  %1876 = vmatprep.subr.mxu0 %v1758
  %1877 = vmatpush1.msra.mxu0 %v1757
  %1878 = vmatprep.subr.mxu0 %v1761
  %1879 = vmatpush1.msra.mxu0 %v1760
  %1880 = vmatprep.subr.mxu0 %v1764
  %1881 = vmatpush1.msra.mxu0 %v1763
  %1882 = vmatprep.subr.mxu0 %v1767
  %1883 = vmatpush1.msra.mxu0 %v1766
  %1884 = vmatprep.subr.mxu0 %v1770
  %1885 = vmatpush1.msra.mxu0 %v1769
  %1886 = vmatprep.subr.mxu0 %v1773
  %1887 = vmatpush1.msra.mxu0 %v1772
  %1888 = vmatprep.subr.mxu0 %v1776
  %1889 = vmatpush1.msra.mxu0 %v1775
  %1890 = vmatprep.subr.mxu0 %v1779
  %1891 = vmatpush1.msra.mxu0 %v1778
  %1892 = vmatprep.subr.mxu0 %v1782
  %1893 = vmatpush1.msra.mxu0 %v1781
  %1894 = vmatprep.subr.mxu0 %v1785
  %1895 = vmatpush1.msra.mxu0 %v1784
  %1896 = vmatprep.subr.mxu0 0.0
  %1897 = vmatpush1.msra.mxu0 0.0
  %1898 = vmatprep.subr.mxu0 0.0
  %1899 = vmatpush1.msra.mxu0 0.0
  %1900 = vmatprep.subr.mxu0 0.0
  %1901 = vmatpush1.msra.mxu0 0.0
  %1902 = vmatprep.subr.mxu0 0.0
  %1903 = vmatpush1.msra.mxu0 0.0
  %1904 = vmatprep.subr.mxu0 0.0
  %1905 = vmatpush1.msra.mxu0 0.0
  %1906 = vmatprep.subr.mxu0 0.0
  %1907 = vmatpush1.msra.mxu0 0.0
  %1908 = vmatprep.subr.mxu0 0.0
  %1909 = vmatpush1.msra.mxu0 0.0
  %1910 = vmatprep.subr.mxu0 0.0
  %1911 = vmatpush1.msra.mxu0 0.0
  %1912 = vmatprep.subr.mxu0 0.0
  %1913 = vmatpush1.msra.mxu0 0.0
  %1914 = vmatprep.subr.mxu0 0.0
  %1915 = vmatpush1.msra.mxu0 0.0
  %1916 = vmatprep.subr.mxu0 0.0
  %1917 = vmatpush1.msra.mxu0 0.0
  %1918 = vmatprep.subr.mxu0 0.0
  %1919 = vmatpush1.msra.mxu0 0.0
  %1920 = vmatprep.subr.mxu0 0.0
  %1921 = vmatpush1.msra.mxu0 0.0
  %1922 = vmatprep.subr.mxu0 0.0
  %1923 = vmatpush1.msra.mxu0 0.0
  %1924 = vmatprep.subr.mxu0 0.0
  %1925 = vmatpush1.msra.mxu0 0.0
  %1926 = vmatprep.subr.mxu0 0.0
  %1927 = vmatpush1.msra.mxu0 0.0
  %1928 = vmatprep.mubr.f32.mxu0 0.0
  %1929 = vmatmul.mubr.f32.gmra.mrb[0].mxu0 %v1840
  %v1930 = vpop.f32.mrb[0].mxu0
  %v1931 = vadd.f32 %v1852, %v1930
  %v1932 = vpop.f32.mrb[0].mxu0
  %v1933 = vadd.f32 %v1856, %v1932
  %1934 = vmatprep.mubr.f32.mxu0 0.0
  %1935 = vmatmul.mubr.f32.gmra.mrb[0].mxu0 %v1841
  %v1936 = vpop.f32.mrb[0].mxu0
  %v1937 = vadd.f32 %v1852, %v1936
  %v1938 = vpop.f32.mrb[0].mxu0
  %v1939 = vadd.f32 %v1856, %v1938
  %1940 = vmatprep.mubr.f32.mxu0 0.0
  %1941 = vmatmul.mubr.f32.gmra.mrb[0].mxu0 %v1842
  %v1942 = vpop.f32.mrb[0].mxu0
  %v1943 = vadd.f32 %v1852, %v1942
  %v1944 = vpop.f32.mrb[0].mxu0
  %v1945 = vadd.f32 %v1856, %v1944
  %1946 = vmatprep.mubr.f32.mxu0 0.0
  %1947 = vmatmul.mubr.f32.gmra.mrb[0].mxu0 %v1843
  %v1948 = vpop.f32.mrb[0].mxu0
  %v1949 = vadd.f32 %v1852, %v1948
  %v1950 = vpop.f32.mrb[0].mxu0
  %v1951 = vadd.f32 %v1856, %v1950
  %1952 = vmatprep.mubr.f32.mxu0 0.0
  %1953 = vmatmul.mubr.f32.gmra.mrb[0].mxu0 %v1844
  %v1954 = vpop.f32.mrb[0].mxu0
  %v1955 = vadd.f32 %v1852, %v1954
  %v1956 = vpop.f32.mrb[0].mxu0
  %v1957 = vadd.f32 %v1856, %v1956
  %1958 = vmatprep.mubr.f32.mxu0 0.0
  %1959 = vmatmul.mubr.f32.gmra.mrb[0].mxu0 %v1845
  %v1960 = vpop.f32.mrb[0].mxu0
  %v1961 = vadd.f32 %v1852, %v1960
  %v1962 = vpop.f32.mrb[0].mxu0
  %v1963 = vadd.f32 %v1856, %v1962
  %1964 = vmatprep.mubr.f32.mxu0 0.0
  %1965 = vmatmul.mubr.f32.gmra.mrb[0].mxu0 %v1846
  %v1966 = vpop.f32.mrb[0].mxu0
  %v1967 = vadd.f32 %v1852, %v1966
  %v1968 = vpop.f32.mrb[0].mxu0
  %v1969 = vadd.f32 %v1856, %v1968
  %1970 = vmatprep.mubr.f32.mxu0 0.0
  %1971 = vmatmul.mubr.f32.gmra.mrb[0].mxu0 %v1847
  %v1972 = vpop.f32.mrb[0].mxu0
  %v1973 = vadd.f32 %v1852, %v1972
  %v1974 = vpop.f32.mrb[0].mxu0
  %v1975 = vadd.f32 %v1856, %v1974
  %1976 = vdwg.mxu0
  %1977 = vmatprep.subr.mxu0 0.0
  %1978 = vmatpush1.msra.mxu0 %v1741
  %1979 = vmatprep.subr.mxu0 0.0
  %1980 = vmatpush1.msra.mxu0 %v1744
  %1981 = vmatprep.subr.mxu0 0.0
  %1982 = vmatpush1.msra.mxu0 %v1747
  %1983 = vmatprep.subr.mxu0 0.0
  %1984 = vmatpush1.msra.mxu0 %v1750
  %1985 = vmatprep.subr.mxu0 0.0
  %1986 = vmatpush1.msra.mxu0 %v1753
  %1987 = vmatprep.subr.mxu0 0.0
  %1988 = vmatpush1.msra.mxu0 %v1756
  %1989 = vmatprep.subr.mxu0 0.0
  %1990 = vmatpush1.msra.mxu0 %v1759
  %1991 = vmatprep.subr.mxu0 0.0
  %1992 = vmatpush1.msra.mxu0 %v1762
  %1993 = vmatprep.subr.mxu0 0.0
  %1994 = vmatpush1.msra.mxu0 %v1765
  %1995 = vmatprep.subr.mxu0 0.0
  %1996 = vmatpush1.msra.mxu0 %v1768
  %1997 = vmatprep.subr.mxu0 0.0
  %1998 = vmatpush1.msra.mxu0 %v1771
  %1999 = vmatprep.subr.mxu0 0.0
  %2000 = vmatpush1.msra.mxu0 %v1774
  %2001 = vmatprep.subr.mxu0 0.0
  %2002 = vmatpush1.msra.mxu0 %v1777
  %2003 = vmatprep.subr.mxu0 0.0
  %2004 = vmatpush1.msra.mxu0 %v1780
  %2005 = vmatprep.subr.mxu0 0.0
  %2006 = vmatpush1.msra.mxu0 %v1783
  %2007 = vmatprep.subr.mxu0 0.0
  %2008 = vmatpush1.msra.mxu0 %v1786
  %2009 = vmatprep.subr.mxu0 0.0
  %2010 = vmatpush1.msra.mxu0 0.0
  %2011 = vmatprep.subr.mxu0 0.0
  %2012 = vmatpush1.msra.mxu0 0.0
  %2013 = vmatprep.subr.mxu0 0.0
  %2014 = vmatpush1.msra.mxu0 0.0
  %2015 = vmatprep.subr.mxu0 0.0
  %2016 = vmatpush1.msra.mxu0 0.0
  %2017 = vmatprep.subr.mxu0 0.0
  %2018 = vmatpush1.msra.mxu0 0.0
  %2019 = vmatprep.subr.mxu0 0.0
  %2020 = vmatpush1.msra.mxu0 0.0
  %2021 = vmatprep.subr.mxu0 0.0
  %2022 = vmatpush1.msra.mxu0 0.0
  %2023 = vmatprep.subr.mxu0 0.0
  %2024 = vmatpush1.msra.mxu0 0.0
  %2025 = vmatprep.subr.mxu0 0.0
  %2026 = vmatpush1.msra.mxu0 0.0
  %2027 = vmatprep.subr.mxu0 0.0
  %2028 = vmatpush1.msra.mxu0 0.0
  %2029 = vmatprep.subr.mxu0 0.0
  %2030 = vmatpush1.msra.mxu0 0.0
  %2031 = vmatprep.subr.mxu0 0.0
  %2032 = vmatpush1.msra.mxu0 0.0
  %2033 = vmatprep.subr.mxu0 0.0
  %2034 = vmatpush1.msra.mxu0 0.0
  %2035 = vmatprep.subr.mxu0 0.0
  %2036 = vmatpush1.msra.mxu0 0.0
  %2037 = vmatprep.subr.mxu0 0.0
  %2038 = vmatpush1.msra.mxu0 0.0
  %2039 = vmatprep.subr.mxu0 0.0
  %2040 = vmatpush1.msra.mxu0 0.0
  %2041 = vmatprep.mubr.f32.mxu0 0.0
  %2042 = vmatmul.mubr.f32.gmra.mrb[0].mxu0 %v1840
  %v2043 = vpop.f32.mrb[0].mxu0
  %v2044 = vadd.f32 %v1860, %v2043
  %v2045 = vpop.f32.mrb[0].mxu0
  %2046 = vmatprep.mubr.f32.mxu0 0.0
  %2047 = vmatmul.mubr.f32.gmra.mrb[0].mxu0 %v1841
  %v2048 = vpop.f32.mrb[0].mxu0
  %v2049 = vadd.f32 %v1860, %v2048
  %v2050 = vpop.f32.mrb[0].mxu0
  %2051 = vmatprep.mubr.f32.mxu0 0.0
  %2052 = vmatmul.mubr.f32.gmra.mrb[0].mxu0 %v1842
  %v2053 = vpop.f32.mrb[0].mxu0
  %v2054 = vadd.f32 %v1860, %v2053
  %v2055 = vpop.f32.mrb[0].mxu0
  %2056 = vmatprep.mubr.f32.mxu0 0.0
  %2057 = vmatmul.mubr.f32.gmra.mrb[0].mxu0 %v1843
  %v2058 = vpop.f32.mrb[0].mxu0
  %v2059 = vadd.f32 %v1860, %v2058
  %v2060 = vpop.f32.mrb[0].mxu0
  %2061 = vmatprep.mubr.f32.mxu0 0.0
  %2062 = vmatmul.mubr.f32.gmra.mrb[0].mxu0 %v1844
  %v2063 = vpop.f32.mrb[0].mxu0
  %v2064 = vadd.f32 %v1860, %v2063
  %v2065 = vpop.f32.mrb[0].mxu0
  %2066 = vmatprep.mubr.f32.mxu0 0.0
  %2067 = vmatmul.mubr.f32.gmra.mrb[0].mxu0 %v1845
  %v2068 = vpop.f32.mrb[0].mxu0
  %v2069 = vadd.f32 %v1860, %v2068
  %v2070 = vpop.f32.mrb[0].mxu0
  %2071 = vmatprep.mubr.f32.mxu0 0.0
  %2072 = vmatmul.mubr.f32.gmra.mrb[0].mxu0 %v1846
  %v2073 = vpop.f32.mrb[0].mxu0
  %v2074 = vadd.f32 %v1860, %v2073
  %v2075 = vpop.f32.mrb[0].mxu0
  %2076 = vmatprep.mubr.f32.mxu0 0.0
  %2077 = vmatmul.mubr.f32.gmra.mrb[0].mxu0 %v1847
  %v2078 = vpop.f32.mrb[0].mxu0
  %v2079 = vadd.f32 %v1860, %v2078
  %v2080 = vpop.f32.mrb[0].mxu0
  %2081 = vdwg.mxu0
  %2082 = vst [vmem:[#allocation3] sm:$0xff] %v1931
  %2083 = vst [vmem:[#allocation3 + $0x8] sm:$0xff] %v1933
  %2084 = vst [vmem:[#allocation3 + $0x10] sm:$0xff] %v2044
  %2085 = vst [vmem:[#allocation3 + $0x18] sm:$0xff] %v1937
  %2086 = vst [vmem:[#allocation3 + $0x20] sm:$0xff] %v1939
  %2087 = vst [vmem:[#allocation3 + $0x28] sm:$0xff] %v2049
  %2088 = vst [vmem:[#allocation3 + $0x30] sm:$0xff] %v1943
  %2089 = vst [vmem:[#allocation3 + $0x38] sm:$0xff] %v1945
  %2090 = vst [vmem:[#allocation3 + $0x40] sm:$0xff] %v2054
  %2091 = vst [vmem:[#allocation3 + $0x48] sm:$0xff] %v1949
  %2092 = vst [vmem:[#allocation3 + $0x50] sm:$0xff] %v1951
  %2093 = vst [vmem:[#allocation3 + $0x58] sm:$0xff] %v2059
  %2094 = vst [vmem:[#allocation3 + $0x60] sm:$0xff] %v1955
  %2095 = vst [vmem:[#allocation3 + $0x68] sm:$0xff] %v1957
  %2096 = vst [vmem:[#allocation3 + $0x70] sm:$0xff] %v2064
  %2097 = vst [vmem:[#allocation3 + $0x78] sm:$0xff] %v1961
  %2098 = vst [vmem:[#allocation3 + $0x80] sm:$0xff] %v1963
  %2099 = vst [vmem:[#allocation3 + $0x88] sm:$0xff] %v2069
  %2100 = vst [vmem:[#allocation3 + $0x90] sm:$0xff] %v1967
  %2101 = vst [vmem:[#allocation3 + $0x98] sm:$0xff] %v1969
  %2102 = vst [vmem:[#allocation3 + $0xa0] sm:$0xff] %v2074
  %2103 = vst [vmem:[#allocation3 + $0xa8] sm:$0xff] %v1973
  %2104 = vst [vmem:[#allocation3 + $0xb0] sm:$0xff] %v1975
  %2105 = vst [vmem:[#allocation3 + $0xb8] sm:$0xff] %v2079
  %v2106 = vld [vmem:[#allocation3] sm:$0xff]
  %v2107 = vld [vmem:[#allocation3 + $0x8] sm:$0xff]
  %v2108 = vld [vmem:[#allocation3 + $0x10] sm:$0xff]
  %2109 = vmatprep.subr.mxu0 %v1789
  %2110 = vmatpush1.msra.mxu0 %v1788
  %2111 = vmatprep.subr.mxu0 %v1792
  %2112 = vmatpush1.msra.mxu0 %v1791
  %2113 = vmatprep.subr.mxu0 %v1795
  %2114 = vmatpush1.msra.mxu0 %v1794
  %2115 = vmatprep.subr.mxu0 %v1798
  %2116 = vmatpush1.msra.mxu0 %v1797
  %2117 = vmatprep.subr.mxu0 %v1801
  %2118 = vmatpush1.msra.mxu0 %v1800
  %2119 = vmatprep.subr.mxu0 %v1804
  %2120 = vmatpush1.msra.mxu0 %v1803
  %2121 = vmatprep.subr.mxu0 %v1807
  %2122 = vmatpush1.msra.mxu0 %v1806
  %2123 = vmatprep.subr.mxu0 %v1810
  %2124 = vmatpush1.msra.mxu0 %v1809
  %2125 = vmatprep.subr.mxu0 %v1813
  %2126 = vmatpush1.msra.mxu0 %v1812
  %2127 = vmatprep.subr.mxu0 %v1816
  %2128 = vmatpush1.msra.mxu0 %v1815
  %2129 = vmatprep.subr.mxu0 %v1819
  %2130 = vmatpush1.msra.mxu0 %v1818
  %2131 = vmatprep.subr.mxu0 %v1822
  %2132 = vmatpush1.msra.mxu0 %v1821
  %2133 = vmatprep.subr.mxu0 %v1825
  %2134 = vmatpush1.msra.mxu0 %v1824
  %2135 = vmatprep.subr.mxu0 %v1828
  %2136 = vmatpush1.msra.mxu0 %v1827
  %2137 = vmatprep.subr.mxu0 %v1831
  %2138 = vmatpush1.msra.mxu0 %v1830
  %2139 = vmatprep.subr.mxu0 %v1834
  %2140 = vmatpush1.msra.mxu0 %v1833
  %2141 = vmatprep.subr.mxu0 0.0
  %2142 = vmatpush1.msra.mxu0 0.0
  %2143 = vmatprep.subr.mxu0 0.0
  %2144 = vmatpush1.msra.mxu0 0.0
  %2145 = vmatprep.subr.mxu0 0.0
  %2146 = vmatpush1.msra.mxu0 0.0
  %2147 = vmatprep.subr.mxu0 0.0
  %2148 = vmatpush1.msra.mxu0 0.0
  %2149 = vmatprep.subr.mxu0 0.0
  %2150 = vmatpush1.msra.mxu0 0.0
  %2151 = vmatprep.subr.mxu0 0.0
  %2152 = vmatpush1.msra.mxu0 0.0
  %2153 = vmatprep.subr.mxu0 0.0
  %2154 = vmatpush1.msra.mxu0 0.0
  %2155 = vmatprep.subr.mxu0 0.0
  %2156 = vmatpush1.msra.mxu0 0.0
  %2157 = vmatprep.subr.mxu0 0.0
  %2158 = vmatpush1.msra.mxu0 0.0
  %2159 = vmatprep.subr.mxu0 0.0
  %2160 = vmatpush1.msra.mxu0 0.0
  %2161 = vmatprep.subr.mxu0 0.0
  %2162 = vmatpush1.msra.mxu0 0.0
  %2163 = vmatprep.subr.mxu0 0.0
  %2164 = vmatpush1.msra.mxu0 0.0
  %2165 = vmatprep.subr.mxu0 0.0
  %2166 = vmatpush1.msra.mxu0 0.0
  %2167 = vmatprep.subr.mxu0 0.0
  %2168 = vmatpush1.msra.mxu0 0.0
  %2169 = vmatprep.subr.mxu0 0.0
  %2170 = vmatpush1.msra.mxu0 0.0
  %2171 = vmatprep.subr.mxu0 0.0
  %2172 = vmatpush1.msra.mxu0 0.0
  %2173 = vmatprep.mubr.f32.mxu0 0.0
  %2174 = vmatmul.mubr.f32.gmra.mrb[0].mxu0 0.0
  %v2175 = vpop.f32.mrb[0].mxu0
  %v2176 = vadd.f32 0.0, %v2175
  %v2177 = vpop.f32.mrb[0].mxu0
  %v2178 = vadd.f32 0.0, %v2177
  %2179 = vdwg.mxu0
  %2180 = vmatprep.subr.mxu0 0.0
  %2181 = vmatpush1.msra.mxu0 %v1790
  %2182 = vmatprep.subr.mxu0 0.0
  %2183 = vmatpush1.msra.mxu0 %v1793
  %2184 = vmatprep.subr.mxu0 0.0
  %2185 = vmatpush1.msra.mxu0 %v1796
  %2186 = vmatprep.subr.mxu0 0.0
  %2187 = vmatpush1.msra.mxu0 %v1799
  %2188 = vmatprep.subr.mxu0 0.0
  %2189 = vmatpush1.msra.mxu0 %v1802
  %2190 = vmatprep.subr.mxu0 0.0
  %2191 = vmatpush1.msra.mxu0 %v1805
  %2192 = vmatprep.subr.mxu0 0.0
  %2193 = vmatpush1.msra.mxu0 %v1808
  %2194 = vmatprep.subr.mxu0 0.0
  %2195 = vmatpush1.msra.mxu0 %v1811
  %2196 = vmatprep.subr.mxu0 0.0
  %2197 = vmatpush1.msra.mxu0 %v1814
  %2198 = vmatprep.subr.mxu0 0.0
  %2199 = vmatpush1.msra.mxu0 %v1817
  %2200 = vmatprep.subr.mxu0 0.0
  %2201 = vmatpush1.msra.mxu0 %v1820
  %2202 = vmatprep.subr.mxu0 0.0
  %2203 = vmatpush1.msra.mxu0 %v1823
  %2204 = vmatprep.subr.mxu0 0.0
  %2205 = vmatpush1.msra.mxu0 %v1826
  %2206 = vmatprep.subr.mxu0 0.0
  %2207 = vmatpush1.msra.mxu0 %v1829
  %2208 = vmatprep.subr.mxu0 0.0
  %2209 = vmatpush1.msra.mxu0 %v1832
  %2210 = vmatprep.subr.mxu0 0.0
  %2211 = vmatpush1.msra.mxu0 %v1835
  %2212 = vmatprep.subr.mxu0 0.0
  %2213 = vmatpush1.msra.mxu0 0.0
  %2214 = vmatprep.subr.mxu0 0.0
  %2215 = vmatpush1.msra.mxu0 0.0
  %2216 = vmatprep.subr.mxu0 0.0
  %2217 = vmatpush1.msra.mxu0 0.0
  %2218 = vmatprep.subr.mxu0 0.0
  %2219 = vmatpush1.msra.mxu0 0.0
  %2220 = vmatprep.subr.mxu0 0.0
  %2221 = vmatpush1.msra.mxu0 0.0
  %2222 = vmatprep.subr.mxu0 0.0
  %2223 = vmatpush1.msra.mxu0 0.0
  %2224 = vmatprep.subr.mxu0 0.0
  %2225 = vmatpush1.msra.mxu0 0.0
  %2226 = vmatprep.subr.mxu0 0.0
  %2227 = vmatpush1.msra.mxu0 0.0
  %2228 = vmatprep.subr.mxu0 0.0
  %2229 = vmatpush1.msra.mxu0 0.0
  %2230 = vmatprep.subr.mxu0 0.0
  %2231 = vmatpush1.msra.mxu0 0.0
  %2232 = vmatprep.subr.mxu0 0.0
  %2233 = vmatpush1.msra.mxu0 0.0
  %2234 = vmatprep.subr.mxu0 0.0
  %2235 = vmatpush1.msra.mxu0 0.0
  %2236 = vmatprep.subr.mxu0 0.0
  %2237 = vmatpush1.msra.mxu0 0.0
  %2238 = vmatprep.subr.mxu0 0.0
  %2239 = vmatpush1.msra.mxu0 0.0
  %2240 = vmatprep.subr.mxu0 0.0
  %2241 = vmatpush1.msra.mxu0 0.0
  %2242 = vmatprep.subr.mxu0 0.0
  %2243 = vmatpush1.msra.mxu0 0.0
  %2244 = vmatprep.mubr.f32.mxu0 0.0
  %2245 = vmatmul.mubr.f32.gmra.mrb[0].mxu0 0.0
  %v2246 = vpop.f32.mrb[0].mxu0
  %v2247 = vadd.f32 0.0, %v2246
  %v2248 = vpop.f32.mrb[0].mxu0
  %2249 = vdwg.mxu0
  %v2250 = vadd.f32 %v2106, %v2176
  %v2251 = vadd.f32 %v2107, %v2178
  %v2252 = vxor.u32 %v2250, 2147483648
  %v2253 = vxor.u32 %v2251, 2147483648
  %v2254 = vmul.f32 %v2252, 1.442695
  %v2255 = vpow.pop %v2254
  %v2256 = vmul.f32 %v2253, 1.442695
  %v2257 = vpow.pop %v2256
  %v2258 = vadd.f32 %v2255, 1.0
  %v2259 = vadd.f32 %v2257, 1.0
  %v2260 = vrcp.pop %v2258
  %v2261 = vmul.f32 1.0, %v2260
  %v2262 = vrcp.pop %v2259
  %v2263 = vmul.f32 1.0, %v2262
  %v2265 = vlaneseq
  %v2266 = vshrl.u32 %v2265, 7
  %v2267 = vsub.s32 0, %v2266
  %v2268 = vrot.slane %v1839, %v2267
  %v2270 = vadd.f32 %v2247, %v2268
  %v2271 = vmul.f32 %v2261, %v2270
  %v2272 = vadd.f32 %v2108, %v2271
  %v2273 = vtanh.pop %v2272
  %v2274 = vsub.f32 0.0, %v2273
  %v2275 = vmul.f32 %v2263, %v2274
  %v2276 = vadd.f32 %v2273, %v2275
  %2277 = vst [vmem:[#allocation2] sm:$0xff] %v2276
  %v2278 = vld [vmem:[%s562] sm:$0xff]
  %v2279 = vld [vmem:[%s562 + $0x8] sm:$0xff]
  %v2280 = vld [vmem:[%s562 + $0x10] sm:$0xff]
  %2281 = vmatprep.subr.mxu0 %v1789
  %2282 = vmatpush1.msra.mxu0 %v1788
  %2283 = vmatprep.subr.mxu0 %v1792
  %2284 = vmatpush1.msra.mxu0 %v1791
  %2285 = vmatprep.subr.mxu0 %v1795
  %2286 = vmatpush1.msra.mxu0 %v1794
  %2287 = vmatprep.subr.mxu0 %v1798
  %2288 = vmatpush1.msra.mxu0 %v1797
  %2289 = vmatprep.subr.mxu0 %v1801
  %2290 = vmatpush1.msra.mxu0 %v1800
  %2291 = vmatprep.subr.mxu0 %v1804
  %2292 = vmatpush1.msra.mxu0 %v1803
  %2293 = vmatprep.subr.mxu0 %v1807
  %2294 = vmatpush1.msra.mxu0 %v1806
  %2295 = vmatprep.subr.mxu0 %v1810
  %2296 = vmatpush1.msra.mxu0 %v1809
  %2297 = vmatprep.subr.mxu0 %v1813
  %2298 = vmatpush1.msra.mxu0 %v1812
  %2299 = vmatprep.subr.mxu0 %v1816
  %2300 = vmatpush1.msra.mxu0 %v1815
  %2301 = vmatprep.subr.mxu0 %v1819
  %2302 = vmatpush1.msra.mxu0 %v1818
  %2303 = vmatprep.subr.mxu0 %v1822
  %2304 = vmatpush1.msra.mxu0 %v1821
  %2305 = vmatprep.subr.mxu0 %v1825
  %2306 = vmatpush1.msra.mxu0 %v1824
  %2307 = vmatprep.subr.mxu0 %v1828
  %2308 = vmatpush1.msra.mxu0 %v1827
  %2309 = vmatprep.subr.mxu0 %v1831
  %2310 = vmatpush1.msra.mxu0 %v1830
  %2311 = vmatprep.subr.mxu0 %v1834
  %2312 = vmatpush1.msra.mxu0 %v1833
  %2313 = vmatprep.subr.mxu0 0.0
  %2314 = vmatpush1.msra.mxu0 0.0
  %2315 = vmatprep.subr.mxu0 0.0
  %2316 = vmatpush1.msra.mxu0 0.0
  %2317 = vmatprep.subr.mxu0 0.0
  %2318 = vmatpush1.msra.mxu0 0.0
  %2319 = vmatprep.subr.mxu0 0.0
  %2320 = vmatpush1.msra.mxu0 0.0
  %2321 = vmatprep.subr.mxu0 0.0
  %2322 = vmatpush1.msra.mxu0 0.0
  %2323 = vmatprep.subr.mxu0 0.0
  %2324 = vmatpush1.msra.mxu0 0.0
  %2325 = vmatprep.subr.mxu0 0.0
  %2326 = vmatpush1.msra.mxu0 0.0
  %2327 = vmatprep.subr.mxu0 0.0
  %2328 = vmatpush1.msra.mxu0 0.0
  %2329 = vmatprep.subr.mxu0 0.0
  %2330 = vmatpush1.msra.mxu0 0.0
  %2331 = vmatprep.subr.mxu0 0.0
  %2332 = vmatpush1.msra.mxu0 0.0
  %2333 = vmatprep.subr.mxu0 0.0
  %2334 = vmatpush1.msra.mxu0 0.0
  %2335 = vmatprep.subr.mxu0 0.0
  %2336 = vmatpush1.msra.mxu0 0.0
  %2337 = vmatprep.subr.mxu0 0.0
  %2338 = vmatpush1.msra.mxu0 0.0
  %2339 = vmatprep.subr.mxu0 0.0
  %2340 = vmatpush1.msra.mxu0 0.0
  %2341 = vmatprep.subr.mxu0 0.0
  %2342 = vmatpush1.msra.mxu0 0.0
  %2343 = vmatprep.subr.mxu0 0.0
  %2344 = vmatpush1.msra.mxu0 0.0
  %2345 = vmatprep.mubr.f32.mxu0 0.0
  %2346 = vmatmul.mubr.f32.gmra.mrb[0].mxu0 %v2276
  %v2347 = vpop.f32.mrb[0].mxu0
  %v2348 = vadd.f32 0.0, %v2347
  %v2349 = vpop.f32.mrb[0].mxu0
  %v2350 = vadd.f32 0.0, %v2349
  %2351 = vdwg.mxu0
  %2352 = vmatprep.subr.mxu0 0.0
  %2353 = vmatpush1.msra.mxu0 %v1790
  %2354 = vmatprep.subr.mxu0 0.0
  %2355 = vmatpush1.msra.mxu0 %v1793
  %2356 = vmatprep.subr.mxu0 0.0
  %2357 = vmatpush1.msra.mxu0 %v1796
  %2358 = vmatprep.subr.mxu0 0.0
  %2359 = vmatpush1.msra.mxu0 %v1799
  %2360 = vmatprep.subr.mxu0 0.0
  %2361 = vmatpush1.msra.mxu0 %v1802
  %2362 = vmatprep.subr.mxu0 0.0
  %2363 = vmatpush1.msra.mxu0 %v1805
  %2364 = vmatprep.subr.mxu0 0.0
  %2365 = vmatpush1.msra.mxu0 %v1808
  %2366 = vmatprep.subr.mxu0 0.0
  %2367 = vmatpush1.msra.mxu0 %v1811
  %2368 = vmatprep.subr.mxu0 0.0
  %2369 = vmatpush1.msra.mxu0 %v1814
  %2370 = vmatprep.subr.mxu0 0.0
  %2371 = vmatpush1.msra.mxu0 %v1817
  %2372 = vmatprep.subr.mxu0 0.0
  %2373 = vmatpush1.msra.mxu0 %v1820
  %2374 = vmatprep.subr.mxu0 0.0
  %2375 = vmatpush1.msra.mxu0 %v1823
  %2376 = vmatprep.subr.mxu0 0.0
  %2377 = vmatpush1.msra.mxu0 %v1826
  %2378 = vmatprep.subr.mxu0 0.0
  %2379 = vmatpush1.msra.mxu0 %v1829
  %2380 = vmatprep.subr.mxu0 0.0
  %2381 = vmatpush1.msra.mxu0 %v1832
  %2382 = vmatprep.subr.mxu0 0.0
  %2383 = vmatpush1.msra.mxu0 %v1835
  %2384 = vmatprep.subr.mxu0 0.0
  %2385 = vmatpush1.msra.mxu0 0.0
  %2386 = vmatprep.subr.mxu0 0.0
  %2387 = vmatpush1.msra.mxu0 0.0
  %2388 = vmatprep.subr.mxu0 0.0
  %2389 = vmatpush1.msra.mxu0 0.0
  %2390 = vmatprep.subr.mxu0 0.0
  %2391 = vmatpush1.msra.mxu0 0.0
  %2392 = vmatprep.subr.mxu0 0.0
  %2393 = vmatpush1.msra.mxu0 0.0
  %2394 = vmatprep.subr.mxu0 0.0
  %2395 = vmatpush1.msra.mxu0 0.0
  %2396 = vmatprep.subr.mxu0 0.0
  %2397 = vmatpush1.msra.mxu0 0.0
  %2398 = vmatprep.subr.mxu0 0.0
  %2399 = vmatpush1.msra.mxu0 0.0
  %2400 = vmatprep.subr.mxu0 0.0
  %2401 = vmatpush1.msra.mxu0 0.0
  %2402 = vmatprep.subr.mxu0 0.0
  %2403 = vmatpush1.msra.mxu0 0.0
  %2404 = vmatprep.subr.mxu0 0.0
  %2405 = vmatpush1.msra.mxu0 0.0
  %2406 = vmatprep.subr.mxu0 0.0
  %2407 = vmatpush1.msra.mxu0 0.0
  %2408 = vmatprep.subr.mxu0 0.0
  %2409 = vmatpush1.msra.mxu0 0.0
  %2410 = vmatprep.subr.mxu0 0.0
  %2411 = vmatpush1.msra.mxu0 0.0
  %2412 = vmatprep.subr.mxu0 0.0
  %2413 = vmatpush1.msra.mxu0 0.0
  %2414 = vmatprep.subr.mxu0 0.0
  %2415 = vmatpush1.msra.mxu0 0.0
  %2416 = vmatprep.mubr.f32.mxu0 0.0
  %2417 = vmatmul.mubr.f32.gmra.mrb[0].mxu0 %v2276
  %v2418 = vpop.f32.mrb[0].mxu0
  %v2419 = vadd.f32 0.0, %v2418
  %v2420 = vpop.f32.mrb[0].mxu0
  %2421 = vdwg.mxu0
  %v2422 = vadd.f32 %v2278, %v2348
  %v2423 = vadd.f32 %v2279, %v2350
  %v2424 = vxor.u32 %v2422, 2147483648
  %v2425 = vxor.u32 %v2423, 2147483648
  %v2426 = vmul.f32 %v2424, 1.442695
  %v2427 = vpow.pop %v2426
  %v2428 = vmul.f32 %v2425, 1.442695
  %v2429 = vpow.pop %v2428
  %v2430 = vadd.f32 %v2427, 1.0
  %v2431 = vadd.f32 %v2429, 1.0
  %v2432 = vrcp.pop %v2430
  %v2433 = vmul.f32 1.0, %v2432
  %v2434 = vrcp.pop %v2431
  %v2435 = vmul.f32 1.0, %v2434
  %v2436 = vadd.f32 %v2419, %v2268
  %v2437 = vmul.f32 %v2433, %v2436
  %v2438 = vadd.f32 %v2280, %v2437
  %v2439 = vtanh.pop %v2438
  %v2440 = vsub.f32 %v2276, %v2439
  %v2441 = vmul.f32 %v2435, %v2440
  %v2442 = vadd.f32 %v2439, %v2441
  %2443 = vst [vmem:[%s728] sm:$0xff] %v2442
  %v2444 = vld [vmem:[%s730] sm:$0xff]
  %v2445 = vld [vmem:[%s730 + $0x8] sm:$0xff]
  %v2446 = vld [vmem:[%s730 + $0x10] sm:$0xff]
  %2447 = vmatprep.subr.mxu0 %v1789
  %2448 = vmatpush1.msra.mxu0 %v1788
  %2449 = vmatprep.subr.mxu0 %v1792
  %2450 = vmatpush1.msra.mxu0 %v1791
  %2451 = vmatprep.subr.mxu0 %v1795
  %2452 = vmatpush1.msra.mxu0 %v1794
  %2453 = vmatprep.subr.mxu0 %v1798
  %2454 = vmatpush1.msra.mxu0 %v1797
  %2455 = vmatprep.subr.mxu0 %v1801
  %2456 = vmatpush1.msra.mxu0 %v1800
  %2457 = vmatprep.subr.mxu0 %v1804
  %2458 = vmatpush1.msra.mxu0 %v1803
  %2459 = vmatprep.subr.mxu0 %v1807
  %2460 = vmatpush1.msra.mxu0 %v1806
  %2461 = vmatprep.subr.mxu0 %v1810
  %2462 = vmatpush1.msra.mxu0 %v1809
  %2463 = vmatprep.subr.mxu0 %v1813
  %2464 = vmatpush1.msra.mxu0 %v1812
  %2465 = vmatprep.subr.mxu0 %v1816
  %2466 = vmatpush1.msra.mxu0 %v1815
  %2467 = vmatprep.subr.mxu0 %v1819
  %2468 = vmatpush1.msra.mxu0 %v1818
  %2469 = vmatprep.subr.mxu0 %v1822
  %2470 = vmatpush1.msra.mxu0 %v1821
  %2471 = vmatprep.subr.mxu0 %v1825
  %2472 = vmatpush1.msra.mxu0 %v1824
  %2473 = vmatprep.subr.mxu0 %v1828
  %2474 = vmatpush1.msra.mxu0 %v1827
  %2475 = vmatprep.subr.mxu0 %v1831
  %2476 = vmatpush1.msra.mxu0 %v1830
  %2477 = vmatprep.subr.mxu0 %v1834
  %2478 = vmatpush1.msra.mxu0 %v1833
  %2479 = vmatprep.subr.mxu0 0.0
  %2480 = vmatpush1.msra.mxu0 0.0
  %2481 = vmatprep.subr.mxu0 0.0
  %2482 = vmatpush1.msra.mxu0 0.0
  %2483 = vmatprep.subr.mxu0 0.0
  %2484 = vmatpush1.msra.mxu0 0.0
  %2485 = vmatprep.subr.mxu0 0.0
  %2486 = vmatpush1.msra.mxu0 0.0
  %2487 = vmatprep.subr.mxu0 0.0
  %2488 = vmatpush1.msra.mxu0 0.0
  %2489 = vmatprep.subr.mxu0 0.0
  %2490 = vmatpush1.msra.mxu0 0.0
  %2491 = vmatprep.subr.mxu0 0.0
  %2492 = vmatpush1.msra.mxu0 0.0
  %2493 = vmatprep.subr.mxu0 0.0
  %2494 = vmatpush1.msra.mxu0 0.0
  %2495 = vmatprep.subr.mxu0 0.0
  %2496 = vmatpush1.msra.mxu0 0.0
  %2497 = vmatprep.subr.mxu0 0.0
  %2498 = vmatpush1.msra.mxu0 0.0
  %2499 = vmatprep.subr.mxu0 0.0
  %2500 = vmatpush1.msra.mxu0 0.0
  %2501 = vmatprep.subr.mxu0 0.0
  %2502 = vmatpush1.msra.mxu0 0.0
  %2503 = vmatprep.subr.mxu0 0.0
  %2504 = vmatpush1.msra.mxu0 0.0
  %2505 = vmatprep.subr.mxu0 0.0
  %2506 = vmatpush1.msra.mxu0 0.0
  %2507 = vmatprep.subr.mxu0 0.0
  %2508 = vmatpush1.msra.mxu0 0.0
  %2509 = vmatprep.subr.mxu0 0.0
  %2510 = vmatpush1.msra.mxu0 0.0
  %2511 = vmatprep.mubr.f32.mxu0 0.0
  %2512 = vmatmul.mubr.f32.gmra.mrb[0].mxu0 %v2442
  %v2513 = vpop.f32.mrb[0].mxu0
  %v2514 = vadd.f32 0.0, %v2513
  %v2515 = vpop.f32.mrb[0].mxu0
  %v2516 = vadd.f32 0.0, %v2515
  %2517 = vdwg.mxu0
  %2518 = vmatprep.subr.mxu0 0.0
  %2519 = vmatpush1.msra.mxu0 %v1790
  %2520 = vmatprep.subr.mxu0 0.0
  %2521 = vmatpush1.msra.mxu0 %v1793
  %2522 = vmatprep.subr.mxu0 0.0
  %2523 = vmatpush1.msra.mxu0 %v1796
  %2524 = vmatprep.subr.mxu0 0.0
  %2525 = vmatpush1.msra.mxu0 %v1799
  %2526 = vmatprep.subr.mxu0 0.0
  %2527 = vmatpush1.msra.mxu0 %v1802
  %2528 = vmatprep.subr.mxu0 0.0
  %2529 = vmatpush1.msra.mxu0 %v1805
  %2530 = vmatprep.subr.mxu0 0.0
  %2531 = vmatpush1.msra.mxu0 %v1808
  %2532 = vmatprep.subr.mxu0 0.0
  %2533 = vmatpush1.msra.mxu0 %v1811
  %2534 = vmatprep.subr.mxu0 0.0
  %2535 = vmatpush1.msra.mxu0 %v1814
  %2536 = vmatprep.subr.mxu0 0.0
  %2537 = vmatpush1.msra.mxu0 %v1817
  %2538 = vmatprep.subr.mxu0 0.0
  %2539 = vmatpush1.msra.mxu0 %v1820
  %2540 = vmatprep.subr.mxu0 0.0
  %2541 = vmatpush1.msra.mxu0 %v1823
  %2542 = vmatprep.subr.mxu0 0.0
  %2543 = vmatpush1.msra.mxu0 %v1826
  %2544 = vmatprep.subr.mxu0 0.0
  %2545 = vmatpush1.msra.mxu0 %v1829
  %2546 = vmatprep.subr.mxu0 0.0
  %2547 = vmatpush1.msra.mxu0 %v1832
  %2548 = vmatprep.subr.mxu0 0.0
  %2549 = vmatpush1.msra.mxu0 %v1835
  %2550 = vmatprep.subr.mxu0 0.0
  %2551 = vmatpush1.msra.mxu0 0.0
  %2552 = vmatprep.subr.mxu0 0.0
  %2553 = vmatpush1.msra.mxu0 0.0
  %2554 = vmatprep.subr.mxu0 0.0
  %2555 = vmatpush1.msra.mxu0 0.0
  %2556 = vmatprep.subr.mxu0 0.0
  %2557 = vmatpush1.msra.mxu0 0.0
  %2558 = vmatprep.subr.mxu0 0.0
  %2559 = vmatpush1.msra.mxu0 0.0
  %2560 = vmatprep.subr.mxu0 0.0
  %2561 = vmatpush1.msra.mxu0 0.0
  %2562 = vmatprep.subr.mxu0 0.0
  %2563 = vmatpush1.msra.mxu0 0.0
  %2564 = vmatprep.subr.mxu0 0.0
  %2565 = vmatpush1.msra.mxu0 0.0
  %2566 = vmatprep.subr.mxu0 0.0
  %2567 = vmatpush1.msra.mxu0 0.0
  %2568 = vmatprep.subr.mxu0 0.0
  %2569 = vmatpush1.msra.mxu0 0.0
  %2570 = vmatprep.subr.mxu0 0.0
  %2571 = vmatpush1.msra.mxu0 0.0
  %2572 = vmatprep.subr.mxu0 0.0
  %2573 = vmatpush1.msra.mxu0 0.0
  %2574 = vmatprep.subr.mxu0 0.0
  %2575 = vmatpush1.msra.mxu0 0.0
  %2576 = vmatprep.subr.mxu0 0.0
  %2577 = vmatpush1.msra.mxu0 0.0
  %2578 = vmatprep.subr.mxu0 0.0
  %2579 = vmatpush1.msra.mxu0 0.0
  %2580 = vmatprep.subr.mxu0 0.0
  %2581 = vmatpush1.msra.mxu0 0.0
  %2582 = vmatprep.mubr.f32.mxu0 0.0
  %2583 = vmatmul.mubr.f32.gmra.mrb[0].mxu0 %v2442
  %v2584 = vpop.f32.mrb[0].mxu0
  %v2585 = vadd.f32 0.0, %v2584
  %v2586 = vpop.f32.mrb[0].mxu0
  %2587 = vdwg.mxu0
  %v2588 = vadd.f32 %v2444, %v2514
  %v2589 = vadd.f32 %v2445, %v2516
  %v2590 = vxor.u32 %v2588, 2147483648
  %v2591 = vxor.u32 %v2589, 2147483648
  %v2592 = vmul.f32 %v2590, 1.442695
  %v2593 = vpow.pop %v2592
  %v2594 = vmul.f32 %v2591, 1.442695
  %v2595 = vpow.pop %v2594
  %v2596 = vadd.f32 %v2593, 1.0
  %v2597 = vadd.f32 %v2595, 1.0
  %v2598 = vrcp.pop %v2596
  %v2599 = vmul.f32 1.0, %v2598
  %v2600 = vrcp.pop %v2597
  %v2601 = vmul.f32 1.0, %v2600
  %v2602 = vadd.f32 %v2585, %v2268
  %v2603 = vmul.f32 %v2599, %v2602
  %v2604 = vadd.f32 %v2446, %v2603
  %v2605 = vtanh.pop %v2604
  %v2606 = vsub.f32 %v2442, %v2605
  %v2607 = vmul.f32 %v2601, %v2606
  %v2608 = vadd.f32 %v2605, %v2607
  %2609 = vst [vmem:[%s896] sm:$0xff] %v2608
  %v2610 = vld [vmem:[%s898] sm:$0xff]
  %v2611 = vld [vmem:[%s898 + $0x8] sm:$0xff]
  %v2612 = vld [vmem:[%s898 + $0x10] sm:$0xff]
  %2613 = vmatprep.subr.mxu0 %v1789
  %2614 = vmatpush1.msra.mxu0 %v1788
  %2615 = vmatprep.subr.mxu0 %v1792
  %2616 = vmatpush1.msra.mxu0 %v1791
  %2617 = vmatprep.subr.mxu0 %v1795
  %2618 = vmatpush1.msra.mxu0 %v1794
  %2619 = vmatprep.subr.mxu0 %v1798
  %2620 = vmatpush1.msra.mxu0 %v1797
  %2621 = vmatprep.subr.mxu0 %v1801
  %2622 = vmatpush1.msra.mxu0 %v1800
  %2623 = vmatprep.subr.mxu0 %v1804
  %2624 = vmatpush1.msra.mxu0 %v1803
  %2625 = vmatprep.subr.mxu0 %v1807
  %2626 = vmatpush1.msra.mxu0 %v1806
  %2627 = vmatprep.subr.mxu0 %v1810
  %2628 = vmatpush1.msra.mxu0 %v1809
  %2629 = vmatprep.subr.mxu0 %v1813
  %2630 = vmatpush1.msra.mxu0 %v1812
  %2631 = vmatprep.subr.mxu0 %v1816
  %2632 = vmatpush1.msra.mxu0 %v1815
  %2633 = vmatprep.subr.mxu0 %v1819
  %2634 = vmatpush1.msra.mxu0 %v1818
  %2635 = vmatprep.subr.mxu0 %v1822
  %2636 = vmatpush1.msra.mxu0 %v1821
  %2637 = vmatprep.subr.mxu0 %v1825
  %2638 = vmatpush1.msra.mxu0 %v1824
  %2639 = vmatprep.subr.mxu0 %v1828
  %2640 = vmatpush1.msra.mxu0 %v1827
  %2641 = vmatprep.subr.mxu0 %v1831
  %2642 = vmatpush1.msra.mxu0 %v1830
  %2643 = vmatprep.subr.mxu0 %v1834
  %2644 = vmatpush1.msra.mxu0 %v1833
  %2645 = vmatprep.subr.mxu0 0.0
  %2646 = vmatpush1.msra.mxu0 0.0
  %2647 = vmatprep.subr.mxu0 0.0
  %2648 = vmatpush1.msra.mxu0 0.0
  %2649 = vmatprep.subr.mxu0 0.0
  %2650 = vmatpush1.msra.mxu0 0.0
  %2651 = vmatprep.subr.mxu0 0.0
  %2652 = vmatpush1.msra.mxu0 0.0
  %2653 = vmatprep.subr.mxu0 0.0
  %2654 = vmatpush1.msra.mxu0 0.0
  %2655 = vmatprep.subr.mxu0 0.0
  %2656 = vmatpush1.msra.mxu0 0.0
  %2657 = vmatprep.subr.mxu0 0.0
  %2658 = vmatpush1.msra.mxu0 0.0
  %2659 = vmatprep.subr.mxu0 0.0
  %2660 = vmatpush1.msra.mxu0 0.0
  %2661 = vmatprep.subr.mxu0 0.0
  %2662 = vmatpush1.msra.mxu0 0.0
  %2663 = vmatprep.subr.mxu0 0.0
  %2664 = vmatpush1.msra.mxu0 0.0
  %2665 = vmatprep.subr.mxu0 0.0
  %2666 = vmatpush1.msra.mxu0 0.0
  %2667 = vmatprep.subr.mxu0 0.0
  %2668 = vmatpush1.msra.mxu0 0.0
  %2669 = vmatprep.subr.mxu0 0.0
  %2670 = vmatpush1.msra.mxu0 0.0
  %2671 = vmatprep.subr.mxu0 0.0
  %2672 = vmatpush1.msra.mxu0 0.0
  %2673 = vmatprep.subr.mxu0 0.0
  %2674 = vmatpush1.msra.mxu0 0.0
  %2675 = vmatprep.subr.mxu0 0.0
  %2676 = vmatpush1.msra.mxu0 0.0
  %2677 = vmatprep.mubr.f32.mxu0 0.0
  %2678 = vmatmul.mubr.f32.gmra.mrb[0].mxu0 %v2608
  %v2679 = vpop.f32.mrb[0].mxu0
  %v2680 = vadd.f32 0.0, %v2679
  %v2681 = vpop.f32.mrb[0].mxu0
  %v2682 = vadd.f32 0.0, %v2681
  %2683 = vdwg.mxu0
  %2684 = vmatprep.subr.mxu0 0.0
  %2685 = vmatpush1.msra.mxu0 %v1790
  %2686 = vmatprep.subr.mxu0 0.0
  %2687 = vmatpush1.msra.mxu0 %v1793
  %2688 = vmatprep.subr.mxu0 0.0
  %2689 = vmatpush1.msra.mxu0 %v1796
  %2690 = vmatprep.subr.mxu0 0.0
  %2691 = vmatpush1.msra.mxu0 %v1799
  %2692 = vmatprep.subr.mxu0 0.0
  %2693 = vmatpush1.msra.mxu0 %v1802
  %2694 = vmatprep.subr.mxu0 0.0
  %2695 = vmatpush1.msra.mxu0 %v1805
  %2696 = vmatprep.subr.mxu0 0.0
  %2697 = vmatpush1.msra.mxu0 %v1808
  %2698 = vmatprep.subr.mxu0 0.0
  %2699 = vmatpush1.msra.mxu0 %v1811
  %2700 = vmatprep.subr.mxu0 0.0
  %2701 = vmatpush1.msra.mxu0 %v1814
  %2702 = vmatprep.subr.mxu0 0.0
  %2703 = vmatpush1.msra.mxu0 %v1817
  %2704 = vmatprep.subr.mxu0 0.0
  %2705 = vmatpush1.msra.mxu0 %v1820
  %2706 = vmatprep.subr.mxu0 0.0
  %2707 = vmatpush1.msra.mxu0 %v1823
  %2708 = vmatprep.subr.mxu0 0.0
  %2709 = vmatpush1.msra.mxu0 %v1826
  %2710 = vmatprep.subr.mxu0 0.0
  %2711 = vmatpush1.msra.mxu0 %v1829
  %2712 = vmatprep.subr.mxu0 0.0
  %2713 = vmatpush1.msra.mxu0 %v1832
  %2714 = vmatprep.subr.mxu0 0.0
  %2715 = vmatpush1.msra.mxu0 %v1835
  %2716 = vmatprep.subr.mxu0 0.0
  %2717 = vmatpush1.msra.mxu0 0.0
  %2718 = vmatprep.subr.mxu0 0.0
  %2719 = vmatpush1.msra.mxu0 0.0
  %2720 = vmatprep.subr.mxu0 0.0
  %2721 = vmatpush1.msra.mxu0 0.0
  %2722 = vmatprep.subr.mxu0 0.0
  %2723 = vmatpush1.msra.mxu0 0.0
  %2724 = vmatprep.subr.mxu0 0.0
  %2725 = vmatpush1.msra.mxu0 0.0
  %2726 = vmatprep.subr.mxu0 0.0
  %2727 = vmatpush1.msra.mxu0 0.0
  %2728 = vmatprep.subr.mxu0 0.0
  %2729 = vmatpush1.msra.mxu0 0.0
  %2730 = vmatprep.subr.mxu0 0.0
  %2731 = vmatpush1.msra.mxu0 0.0
  %2732 = vmatprep.subr.mxu0 0.0
  %2733 = vmatpush1.msra.mxu0 0.0
  %2734 = vmatprep.subr.mxu0 0.0
  %2735 = vmatpush1.msra.mxu0 0.0
  %2736 = vmatprep.subr.mxu0 0.0
  %2737 = vmatpush1.msra.mxu0 0.0
  %2738 = vmatprep.subr.mxu0 0.0
  %2739 = vmatpush1.msra.mxu0 0.0
  %2740 = vmatprep.subr.mxu0 0.0
  %2741 = vmatpush1.msra.mxu0 0.0
  %2742 = vmatprep.subr.mxu0 0.0
  %2743 = vmatpush1.msra.mxu0 0.0
  %2744 = vmatprep.subr.mxu0 0.0
  %2745 = vmatpush1.msra.mxu0 0.0
  %2746 = vmatprep.subr.mxu0 0.0
  %2747 = vmatpush1.msra.mxu0 0.0
  %2748 = vmatprep.mubr.f32.mxu0 0.0
  %2749 = vmatmul.mubr.f32.gmra.mrb[0].mxu0 %v2608
  %v2750 = vpop.f32.mrb[0].mxu0
  %v2751 = vadd.f32 0.0, %v2750
  %v2752 = vpop.f32.mrb[0].mxu0
  %2753 = vdwg.mxu0
  %v2754 = vadd.f32 %v2610, %v2680
  %v2755 = vadd.f32 %v2611, %v2682
  %v2756 = vxor.u32 %v2754, 2147483648
  %v2757 = vxor.u32 %v2755, 2147483648
  %v2758 = vmul.f32 %v2756, 1.442695
  %v2759 = vpow.pop %v2758
  %v2760 = vmul.f32 %v2757, 1.442695
  %v2761 = vpow.pop %v2760
  %v2762 = vadd.f32 %v2759, 1.0
  %v2763 = vadd.f32 %v2761, 1.0
  %v2764 = vrcp.pop %v2762
  %v2765 = vmul.f32 1.0, %v2764
  %v2766 = vrcp.pop %v2763
  %v2767 = vmul.f32 1.0, %v2766
  %v2768 = vadd.f32 %v2751, %v2268
  %v2769 = vmul.f32 %v2765, %v2768
  %v2770 = vadd.f32 %v2612, %v2769
  %v2771 = vtanh.pop %v2770
  %v2772 = vsub.f32 %v2608, %v2771
  %v2773 = vmul.f32 %v2767, %v2772
  %v2774 = vadd.f32 %v2771, %v2773
  %2775 = vst [vmem:[%s1064] sm:$0xff] %v2774
  %v2776 = vld [vmem:[%s1066] sm:$0xff]
  %v2777 = vld [vmem:[%s1066 + $0x8] sm:$0xff]
  %v2778 = vld [vmem:[%s1066 + $0x10] sm:$0xff]
  %2779 = vmatprep.subr.mxu0 %v1789
  %2780 = vmatpush1.msra.mxu0 %v1788
  %2781 = vmatprep.subr.mxu0 %v1792
  %2782 = vmatpush1.msra.mxu0 %v1791
  %2783 = vmatprep.subr.mxu0 %v1795
  %2784 = vmatpush1.msra.mxu0 %v1794
  %2785 = vmatprep.subr.mxu0 %v1798
  %2786 = vmatpush1.msra.mxu0 %v1797
  %2787 = vmatprep.subr.mxu0 %v1801
  %2788 = vmatpush1.msra.mxu0 %v1800
  %2789 = vmatprep.subr.mxu0 %v1804
  %2790 = vmatpush1.msra.mxu0 %v1803
  %2791 = vmatprep.subr.mxu0 %v1807
  %2792 = vmatpush1.msra.mxu0 %v1806
  %2793 = vmatprep.subr.mxu0 %v1810
  %2794 = vmatpush1.msra.mxu0 %v1809
  %2795 = vmatprep.subr.mxu0 %v1813
  %2796 = vmatpush1.msra.mxu0 %v1812
  %2797 = vmatprep.subr.mxu0 %v1816
  %2798 = vmatpush1.msra.mxu0 %v1815
  %2799 = vmatprep.subr.mxu0 %v1819
  %2800 = vmatpush1.msra.mxu0 %v1818
  %2801 = vmatprep.subr.mxu0 %v1822
  %2802 = vmatpush1.msra.mxu0 %v1821
  %2803 = vmatprep.subr.mxu0 %v1825
  %2804 = vmatpush1.msra.mxu0 %v1824
  %2805 = vmatprep.subr.mxu0 %v1828
  %2806 = vmatpush1.msra.mxu0 %v1827
  %2807 = vmatprep.subr.mxu0 %v1831
  %2808 = vmatpush1.msra.mxu0 %v1830
  %2809 = vmatprep.subr.mxu0 %v1834
  %2810 = vmatpush1.msra.mxu0 %v1833
  %2811 = vmatprep.subr.mxu0 0.0
  %2812 = vmatpush1.msra.mxu0 0.0
  %2813 = vmatprep.subr.mxu0 0.0
  %2814 = vmatpush1.msra.mxu0 0.0
  %2815 = vmatprep.subr.mxu0 0.0
  %2816 = vmatpush1.msra.mxu0 0.0
  %2817 = vmatprep.subr.mxu0 0.0
  %2818 = vmatpush1.msra.mxu0 0.0
  %2819 = vmatprep.subr.mxu0 0.0
  %2820 = vmatpush1.msra.mxu0 0.0
  %2821 = vmatprep.subr.mxu0 0.0
  %2822 = vmatpush1.msra.mxu0 0.0
  %2823 = vmatprep.subr.mxu0 0.0
  %2824 = vmatpush1.msra.mxu0 0.0
  %2825 = vmatprep.subr.mxu0 0.0
  %2826 = vmatpush1.msra.mxu0 0.0
  %2827 = vmatprep.subr.mxu0 0.0
  %2828 = vmatpush1.msra.mxu0 0.0
  %2829 = vmatprep.subr.mxu0 0.0
  %2830 = vmatpush1.msra.mxu0 0.0
  %2831 = vmatprep.subr.mxu0 0.0
  %2832 = vmatpush1.msra.mxu0 0.0
  %2833 = vmatprep.subr.mxu0 0.0
  %2834 = vmatpush1.msra.mxu0 0.0
  %2835 = vmatprep.subr.mxu0 0.0
  %2836 = vmatpush1.msra.mxu0 0.0
  %2837 = vmatprep.subr.mxu0 0.0
  %2838 = vmatpush1.msra.mxu0 0.0
  %2839 = vmatprep.subr.mxu0 0.0
  %2840 = vmatpush1.msra.mxu0 0.0
  %2841 = vmatprep.subr.mxu0 0.0
  %2842 = vmatpush1.msra.mxu0 0.0
  %2843 = vmatprep.mubr.f32.mxu0 0.0
  %2844 = vmatmul.mubr.f32.gmra.mrb[0].mxu0 %v2774
  %v2845 = vpop.f32.mrb[0].mxu0
  %v2846 = vadd.f32 0.0, %v2845
  %v2847 = vpop.f32.mrb[0].mxu0
  %v2848 = vadd.f32 0.0, %v2847
  %2849 = vdwg.mxu0
  %2850 = vmatprep.subr.mxu0 0.0
  %2851 = vmatpush1.msra.mxu0 %v1790
  %2852 = vmatprep.subr.mxu0 0.0
  %2853 = vmatpush1.msra.mxu0 %v1793
  %2854 = vmatprep.subr.mxu0 0.0
  %2855 = vmatpush1.msra.mxu0 %v1796
  %2856 = vmatprep.subr.mxu0 0.0
  %2857 = vmatpush1.msra.mxu0 %v1799
  %2858 = vmatprep.subr.mxu0 0.0
  %2859 = vmatpush1.msra.mxu0 %v1802
  %2860 = vmatprep.subr.mxu0 0.0
  %2861 = vmatpush1.msra.mxu0 %v1805
  %2862 = vmatprep.subr.mxu0 0.0
  %2863 = vmatpush1.msra.mxu0 %v1808
  %2864 = vmatprep.subr.mxu0 0.0
  %2865 = vmatpush1.msra.mxu0 %v1811
  %2866 = vmatprep.subr.mxu0 0.0
  %2867 = vmatpush1.msra.mxu0 %v1814
  %2868 = vmatprep.subr.mxu0 0.0
  %2869 = vmatpush1.msra.mxu0 %v1817
  %2870 = vmatprep.subr.mxu0 0.0
  %2871 = vmatpush1.msra.mxu0 %v1820
  %2872 = vmatprep.subr.mxu0 0.0
  %2873 = vmatpush1.msra.mxu0 %v1823
  %2874 = vmatprep.subr.mxu0 0.0
  %2875 = vmatpush1.msra.mxu0 %v1826
  %2876 = vmatprep.subr.mxu0 0.0
  %2877 = vmatpush1.msra.mxu0 %v1829
  %2878 = vmatprep.subr.mxu0 0.0
  %2879 = vmatpush1.msra.mxu0 %v1832
  %2880 = vmatprep.subr.mxu0 0.0
  %2881 = vmatpush1.msra.mxu0 %v1835
  %2882 = vmatprep.subr.mxu0 0.0
  %2883 = vmatpush1.msra.mxu0 0.0
  %2884 = vmatprep.subr.mxu0 0.0
  %2885 = vmatpush1.msra.mxu0 0.0
  %2886 = vmatprep.subr.mxu0 0.0
  %2887 = vmatpush1.msra.mxu0 0.0
  %2888 = vmatprep.subr.mxu0 0.0
  %2889 = vmatpush1.msra.mxu0 0.0
  %2890 = vmatprep.subr.mxu0 0.0
  %2891 = vmatpush1.msra.mxu0 0.0
  %2892 = vmatprep.subr.mxu0 0.0
  %2893 = vmatpush1.msra.mxu0 0.0
  %2894 = vmatprep.subr.mxu0 0.0
  %2895 = vmatpush1.msra.mxu0 0.0
  %2896 = vmatprep.subr.mxu0 0.0
  %2897 = vmatpush1.msra.mxu0 0.0
  %2898 = vmatprep.subr.mxu0 0.0
  %2899 = vmatpush1.msra.mxu0 0.0
  %2900 = vmatprep.subr.mxu0 0.0
  %2901 = vmatpush1.msra.mxu0 0.0
  %2902 = vmatprep.subr.mxu0 0.0
  %2903 = vmatpush1.msra.mxu0 0.0
  %2904 = vmatprep.subr.mxu0 0.0
  %2905 = vmatpush1.msra.mxu0 0.0
  %2906 = vmatprep.subr.mxu0 0.0
  %2907 = vmatpush1.msra.mxu0 0.0
  %2908 = vmatprep.subr.mxu0 0.0
  %2909 = vmatpush1.msra.mxu0 0.0
  %2910 = vmatprep.subr.mxu0 0.0
  %2911 = vmatpush1.msra.mxu0 0.0
  %2912 = vmatprep.subr.mxu0 0.0
  %2913 = vmatpush1.msra.mxu0 0.0
  %2914 = vmatprep.mubr.f32.mxu0 0.0
  %2915 = vmatmul.mubr.f32.gmra.mrb[0].mxu0 %v2774
  %v2916 = vpop.f32.mrb[0].mxu0
  %v2917 = vadd.f32 0.0, %v2916
  %v2918 = vpop.f32.mrb[0].mxu0
  %2919 = vdwg.mxu0
  %v2920 = vadd.f32 %v2776, %v2846
  %v2921 = vadd.f32 %v2777, %v2848
  %v2922 = vxor.u32 %v2920, 2147483648
  %v2923 = vxor.u32 %v2921, 2147483648
  %v2924 = vmul.f32 %v2922, 1.442695
  %v2925 = vpow.pop %v2924
  %v2926 = vmul.f32 %v2923, 1.442695
  %v2927 = vpow.pop %v2926
  %v2928 = vadd.f32 %v2925, 1.0
  %v2929 = vadd.f32 %v2927, 1.0
  %v2930 = vrcp.pop %v2928
  %v2931 = vmul.f32 1.0, %v2930
  %v2932 = vrcp.pop %v2929
  %v2933 = vmul.f32 1.0, %v2932
  %v2934 = vadd.f32 %v2917, %v2268
  %v2935 = vmul.f32 %v2931, %v2934
  %v2936 = vadd.f32 %v2778, %v2935
  %v2937 = vtanh.pop %v2936
  %v2938 = vsub.f32 %v2774, %v2937
  %v2939 = vmul.f32 %v2933, %v2938
  %v2940 = vadd.f32 %v2937, %v2939
  %2941 = vst [vmem:[%s1232] sm:$0xff] %v2940
  %v2942 = vld [vmem:[%s1234] sm:$0xff]
  %v2943 = vld [vmem:[%s1234 + $0x8] sm:$0xff]
  %v2944 = vld [vmem:[%s1234 + $0x10] sm:$0xff]
  %2945 = vmatprep.subr.mxu0 %v1789
  %2946 = vmatpush1.msra.mxu0 %v1788
  %2947 = vmatprep.subr.mxu0 %v1792
  %2948 = vmatpush1.msra.mxu0 %v1791
  %2949 = vmatprep.subr.mxu0 %v1795
  %2950 = vmatpush1.msra.mxu0 %v1794
  %2951 = vmatprep.subr.mxu0 %v1798
  %2952 = vmatpush1.msra.mxu0 %v1797
  %2953 = vmatprep.subr.mxu0 %v1801
  %2954 = vmatpush1.msra.mxu0 %v1800
  %2955 = vmatprep.subr.mxu0 %v1804
  %2956 = vmatpush1.msra.mxu0 %v1803
  %2957 = vmatprep.subr.mxu0 %v1807
  %2958 = vmatpush1.msra.mxu0 %v1806
  %2959 = vmatprep.subr.mxu0 %v1810
  %2960 = vmatpush1.msra.mxu0 %v1809
  %2961 = vmatprep.subr.mxu0 %v1813
  %2962 = vmatpush1.msra.mxu0 %v1812
  %2963 = vmatprep.subr.mxu0 %v1816
  %2964 = vmatpush1.msra.mxu0 %v1815
  %2965 = vmatprep.subr.mxu0 %v1819
  %2966 = vmatpush1.msra.mxu0 %v1818
  %2967 = vmatprep.subr.mxu0 %v1822
  %2968 = vmatpush1.msra.mxu0 %v1821
  %2969 = vmatprep.subr.mxu0 %v1825
  %2970 = vmatpush1.msra.mxu0 %v1824
  %2971 = vmatprep.subr.mxu0 %v1828
  %2972 = vmatpush1.msra.mxu0 %v1827
  %2973 = vmatprep.subr.mxu0 %v1831
  %2974 = vmatpush1.msra.mxu0 %v1830
  %2975 = vmatprep.subr.mxu0 %v1834
  %2976 = vmatpush1.msra.mxu0 %v1833
  %2977 = vmatprep.subr.mxu0 0.0
  %2978 = vmatpush1.msra.mxu0 0.0
  %2979 = vmatprep.subr.mxu0 0.0
  %2980 = vmatpush1.msra.mxu0 0.0
  %2981 = vmatprep.subr.mxu0 0.0
  %2982 = vmatpush1.msra.mxu0 0.0
  %2983 = vmatprep.subr.mxu0 0.0
  %2984 = vmatpush1.msra.mxu0 0.0
  %2985 = vmatprep.subr.mxu0 0.0
  %2986 = vmatpush1.msra.mxu0 0.0
  %2987 = vmatprep.subr.mxu0 0.0
  %2988 = vmatpush1.msra.mxu0 0.0
  %2989 = vmatprep.subr.mxu0 0.0
  %2990 = vmatpush1.msra.mxu0 0.0
  %2991 = vmatprep.subr.mxu0 0.0
  %2992 = vmatpush1.msra.mxu0 0.0
  %2993 = vmatprep.subr.mxu0 0.0
  %2994 = vmatpush1.msra.mxu0 0.0
  %2995 = vmatprep.subr.mxu0 0.0
  %2996 = vmatpush1.msra.mxu0 0.0
  %2997 = vmatprep.subr.mxu0 0.0
  %2998 = vmatpush1.msra.mxu0 0.0
  %2999 = vmatprep.subr.mxu0 0.0
  %3000 = vmatpush1.msra.mxu0 0.0
  %3001 = vmatprep.subr.mxu0 0.0
  %3002 = vmatpush1.msra.mxu0 0.0
  %3003 = vmatprep.subr.mxu0 0.0
  %3004 = vmatpush1.msra.mxu0 0.0
  %3005 = vmatprep.subr.mxu0 0.0
  %3006 = vmatpush1.msra.mxu0 0.0
  %3007 = vmatprep.subr.mxu0 0.0
  %3008 = vmatpush1.msra.mxu0 0.0
  %3009 = vmatprep.mubr.f32.mxu0 0.0
  %3010 = vmatmul.mubr.f32.gmra.mrb[0].mxu0 %v2940
  %v3011 = vpop.f32.mrb[0].mxu0
  %v3012 = vadd.f32 0.0, %v3011
  %v3013 = vpop.f32.mrb[0].mxu0
  %v3014 = vadd.f32 0.0, %v3013
  %3015 = vdwg.mxu0
  %3016 = vmatprep.subr.mxu0 0.0
  %3017 = vmatpush1.msra.mxu0 %v1790
  %3018 = vmatprep.subr.mxu0 0.0
  %3019 = vmatpush1.msra.mxu0 %v1793
  %3020 = vmatprep.subr.mxu0 0.0
  %3021 = vmatpush1.msra.mxu0 %v1796
  %3022 = vmatprep.subr.mxu0 0.0
  %3023 = vmatpush1.msra.mxu0 %v1799
  %3024 = vmatprep.subr.mxu0 0.0
  %3025 = vmatpush1.msra.mxu0 %v1802
  %3026 = vmatprep.subr.mxu0 0.0
  %3027 = vmatpush1.msra.mxu0 %v1805
  %3028 = vmatprep.subr.mxu0 0.0
  %3029 = vmatpush1.msra.mxu0 %v1808
  %3030 = vmatprep.subr.mxu0 0.0
  %3031 = vmatpush1.msra.mxu0 %v1811
  %3032 = vmatprep.subr.mxu0 0.0
  %3033 = vmatpush1.msra.mxu0 %v1814
  %3034 = vmatprep.subr.mxu0 0.0
  %3035 = vmatpush1.msra.mxu0 %v1817
  %3036 = vmatprep.subr.mxu0 0.0
  %3037 = vmatpush1.msra.mxu0 %v1820
  %3038 = vmatprep.subr.mxu0 0.0
  %3039 = vmatpush1.msra.mxu0 %v1823
  %3040 = vmatprep.subr.mxu0 0.0
  %3041 = vmatpush1.msra.mxu0 %v1826
  %3042 = vmatprep.subr.mxu0 0.0
  %3043 = vmatpush1.msra.mxu0 %v1829
  %3044 = vmatprep.subr.mxu0 0.0
  %3045 = vmatpush1.msra.mxu0 %v1832
  %3046 = vmatprep.subr.mxu0 0.0
  %3047 = vmatpush1.msra.mxu0 %v1835
  %3048 = vmatprep.subr.mxu0 0.0
  %3049 = vmatpush1.msra.mxu0 0.0
  %3050 = vmatprep.subr.mxu0 0.0
  %3051 = vmatpush1.msra.mxu0 0.0
  %3052 = vmatprep.subr.mxu0 0.0
  %3053 = vmatpush1.msra.mxu0 0.0
  %3054 = vmatprep.subr.mxu0 0.0
  %3055 = vmatpush1.msra.mxu0 0.0
  %3056 = vmatprep.subr.mxu0 0.0
  %3057 = vmatpush1.msra.mxu0 0.0
  %3058 = vmatprep.subr.mxu0 0.0
  %3059 = vmatpush1.msra.mxu0 0.0
  %3060 = vmatprep.subr.mxu0 0.0
  %3061 = vmatpush1.msra.mxu0 0.0
  %3062 = vmatprep.subr.mxu0 0.0
  %3063 = vmatpush1.msra.mxu0 0.0
  %3064 = vmatprep.subr.mxu0 0.0
  %3065 = vmatpush1.msra.mxu0 0.0
  %3066 = vmatprep.subr.mxu0 0.0
  %3067 = vmatpush1.msra.mxu0 0.0
  %3068 = vmatprep.subr.mxu0 0.0
  %3069 = vmatpush1.msra.mxu0 0.0
  %3070 = vmatprep.subr.mxu0 0.0
  %3071 = vmatpush1.msra.mxu0 0.0
  %3072 = vmatprep.subr.mxu0 0.0
  %3073 = vmatpush1.msra.mxu0 0.0
  %3074 = vmatprep.subr.mxu0 0.0
  %3075 = vmatpush1.msra.mxu0 0.0
  %3076 = vmatprep.subr.mxu0 0.0
  %3077 = vmatpush1.msra.mxu0 0.0
  %3078 = vmatprep.subr.mxu0 0.0
  %3079 = vmatpush1.msra.mxu0 0.0
  %3080 = vmatprep.mubr.f32.mxu0 0.0
  %3081 = vmatmul.mubr.f32.gmra.mrb[0].mxu0 %v2940
  %v3082 = vpop.f32.mrb[0].mxu0
  %v3083 = vadd.f32 0.0, %v3082
  %v3084 = vpop.f32.mrb[0].mxu0
  %3085 = vdwg.mxu0
  %v3086 = vadd.f32 %v2942, %v3012
  %v3087 = vadd.f32 %v2943, %v3014
  %v3088 = vxor.u32 %v3086, 2147483648
  %v3089 = vxor.u32 %v3087, 2147483648
  %v3090 = vmul.f32 %v3088, 1.442695
  %v3091 = vpow.pop %v3090
  %v3092 = vmul.f32 %v3089, 1.442695
  %v3093 = vpow.pop %v3092
  %v3094 = vadd.f32 %v3091, 1.0
  %v3095 = vadd.f32 %v3093, 1.0
  %v3096 = vrcp.pop %v3094
  %v3097 = vmul.f32 1.0, %v3096
  %v3098 = vrcp.pop %v3095
  %v3099 = vmul.f32 1.0, %v3098
  %v3100 = vadd.f32 %v3083, %v2268
  %v3101 = vmul.f32 %v3097, %v3100
  %v3102 = vadd.f32 %v2944, %v3101
  %v3103 = vtanh.pop %v3102
  %v3104 = vsub.f32 %v2940, %v3103
  %v3105 = vmul.f32 %v3099, %v3104
  %v3106 = vadd.f32 %v3103, %v3105
  %3107 = vst [vmem:[%s1400] sm:$0xff] %v3106
  %v3108 = vld [vmem:[%s1402] sm:$0xff]
  %v3109 = vld [vmem:[%s1402 + $0x8] sm:$0xff]
  %v3110 = vld [vmem:[%s1402 + $0x10] sm:$0xff]
  %3111 = vmatprep.subr.mxu0 %v1789
  %3112 = vmatpush1.msra.mxu0 %v1788
  %3113 = vmatprep.subr.mxu0 %v1792
  %3114 = vmatpush1.msra.mxu0 %v1791
  %3115 = vmatprep.subr.mxu0 %v1795
  %3116 = vmatpush1.msra.mxu0 %v1794
  %3117 = vmatprep.subr.mxu0 %v1798
  %3118 = vmatpush1.msra.mxu0 %v1797
  %3119 = vmatprep.subr.mxu0 %v1801
  %3120 = vmatpush1.msra.mxu0 %v1800
  %3121 = vmatprep.subr.mxu0 %v1804
  %3122 = vmatpush1.msra.mxu0 %v1803
  %3123 = vmatprep.subr.mxu0 %v1807
  %3124 = vmatpush1.msra.mxu0 %v1806
  %3125 = vmatprep.subr.mxu0 %v1810
  %3126 = vmatpush1.msra.mxu0 %v1809
  %3127 = vmatprep.subr.mxu0 %v1813
  %3128 = vmatpush1.msra.mxu0 %v1812
  %3129 = vmatprep.subr.mxu0 %v1816
  %3130 = vmatpush1.msra.mxu0 %v1815
  %3131 = vmatprep.subr.mxu0 %v1819
  %3132 = vmatpush1.msra.mxu0 %v1818
  %3133 = vmatprep.subr.mxu0 %v1822
  %3134 = vmatpush1.msra.mxu0 %v1821
  %3135 = vmatprep.subr.mxu0 %v1825
  %3136 = vmatpush1.msra.mxu0 %v1824
  %3137 = vmatprep.subr.mxu0 %v1828
  %3138 = vmatpush1.msra.mxu0 %v1827
  %3139 = vmatprep.subr.mxu0 %v1831
  %3140 = vmatpush1.msra.mxu0 %v1830
  %3141 = vmatprep.subr.mxu0 %v1834
  %3142 = vmatpush1.msra.mxu0 %v1833
  %3143 = vmatprep.subr.mxu0 0.0
  %3144 = vmatpush1.msra.mxu0 0.0
  %3145 = vmatprep.subr.mxu0 0.0
  %3146 = vmatpush1.msra.mxu0 0.0
  %3147 = vmatprep.subr.mxu0 0.0
  %3148 = vmatpush1.msra.mxu0 0.0
  %3149 = vmatprep.subr.mxu0 0.0
  %3150 = vmatpush1.msra.mxu0 0.0
  %3151 = vmatprep.subr.mxu0 0.0
  %3152 = vmatpush1.msra.mxu0 0.0
  %3153 = vmatprep.subr.mxu0 0.0
  %3154 = vmatpush1.msra.mxu0 0.0
  %3155 = vmatprep.subr.mxu0 0.0
  %3156 = vmatpush1.msra.mxu0 0.0
  %3157 = vmatprep.subr.mxu0 0.0
  %3158 = vmatpush1.msra.mxu0 0.0
  %3159 = vmatprep.subr.mxu0 0.0
  %3160 = vmatpush1.msra.mxu0 0.0
  %3161 = vmatprep.subr.mxu0 0.0
  %3162 = vmatpush1.msra.mxu0 0.0
  %3163 = vmatprep.subr.mxu0 0.0
  %3164 = vmatpush1.msra.mxu0 0.0
  %3165 = vmatprep.subr.mxu0 0.0
  %3166 = vmatpush1.msra.mxu0 0.0
  %3167 = vmatprep.subr.mxu0 0.0
  %3168 = vmatpush1.msra.mxu0 0.0
  %3169 = vmatprep.subr.mxu0 0.0
  %3170 = vmatpush1.msra.mxu0 0.0
  %3171 = vmatprep.subr.mxu0 0.0
  %3172 = vmatpush1.msra.mxu0 0.0
  %3173 = vmatprep.subr.mxu0 0.0
  %3174 = vmatpush1.msra.mxu0 0.0
  %3175 = vmatprep.mubr.f32.mxu0 0.0
  %3176 = vmatmul.mubr.f32.gmra.mrb[0].mxu0 %v3106
  %v3177 = vpop.f32.mrb[0].mxu0
  %v3178 = vadd.f32 0.0, %v3177
  %v3179 = vpop.f32.mrb[0].mxu0
  %v3180 = vadd.f32 0.0, %v3179
  %3181 = vdwg.mxu0
  %3182 = vmatprep.subr.mxu0 0.0
  %3183 = vmatpush1.msra.mxu0 %v1790
  %3184 = vmatprep.subr.mxu0 0.0
  %3185 = vmatpush1.msra.mxu0 %v1793
  %3186 = vmatprep.subr.mxu0 0.0
  %3187 = vmatpush1.msra.mxu0 %v1796
  %3188 = vmatprep.subr.mxu0 0.0
  %3189 = vmatpush1.msra.mxu0 %v1799
  %3190 = vmatprep.subr.mxu0 0.0
  %3191 = vmatpush1.msra.mxu0 %v1802
  %3192 = vmatprep.subr.mxu0 0.0
  %3193 = vmatpush1.msra.mxu0 %v1805
  %3194 = vmatprep.subr.mxu0 0.0
  %3195 = vmatpush1.msra.mxu0 %v1808
  %3196 = vmatprep.subr.mxu0 0.0
  %3197 = vmatpush1.msra.mxu0 %v1811
  %3198 = vmatprep.subr.mxu0 0.0
  %3199 = vmatpush1.msra.mxu0 %v1814
  %3200 = vmatprep.subr.mxu0 0.0
  %3201 = vmatpush1.msra.mxu0 %v1817
  %3202 = vmatprep.subr.mxu0 0.0
  %3203 = vmatpush1.msra.mxu0 %v1820
  %3204 = vmatprep.subr.mxu0 0.0
  %3205 = vmatpush1.msra.mxu0 %v1823
  %3206 = vmatprep.subr.mxu0 0.0
  %3207 = vmatpush1.msra.mxu0 %v1826
  %3208 = vmatprep.subr.mxu0 0.0
  %3209 = vmatpush1.msra.mxu0 %v1829
  %3210 = vmatprep.subr.mxu0 0.0
  %3211 = vmatpush1.msra.mxu0 %v1832
  %3212 = vmatprep.subr.mxu0 0.0
  %3213 = vmatpush1.msra.mxu0 %v1835
  %3214 = vmatprep.subr.mxu0 0.0
  %3215 = vmatpush1.msra.mxu0 0.0
  %3216 = vmatprep.subr.mxu0 0.0
  %3217 = vmatpush1.msra.mxu0 0.0
  %3218 = vmatprep.subr.mxu0 0.0
  %3219 = vmatpush1.msra.mxu0 0.0
  %3220 = vmatprep.subr.mxu0 0.0
  %3221 = vmatpush1.msra.mxu0 0.0
  %3222 = vmatprep.subr.mxu0 0.0
  %3223 = vmatpush1.msra.mxu0 0.0
  %3224 = vmatprep.subr.mxu0 0.0
  %3225 = vmatpush1.msra.mxu0 0.0
  %3226 = vmatprep.subr.mxu0 0.0
  %3227 = vmatpush1.msra.mxu0 0.0
  %3228 = vmatprep.subr.mxu0 0.0
  %3229 = vmatpush1.msra.mxu0 0.0
  %3230 = vmatprep.subr.mxu0 0.0
  %3231 = vmatpush1.msra.mxu0 0.0
  %3232 = vmatprep.subr.mxu0 0.0
  %3233 = vmatpush1.msra.mxu0 0.0
  %3234 = vmatprep.subr.mxu0 0.0
  %3235 = vmatpush1.msra.mxu0 0.0
  %3236 = vmatprep.subr.mxu0 0.0
  %3237 = vmatpush1.msra.mxu0 0.0
  %3238 = vmatprep.subr.mxu0 0.0
  %3239 = vmatpush1.msra.mxu0 0.0
  %3240 = vmatprep.subr.mxu0 0.0
  %3241 = vmatpush1.msra.mxu0 0.0
  %3242 = vmatprep.subr.mxu0 0.0
  %3243 = vmatpush1.msra.mxu0 0.0
  %3244 = vmatprep.subr.mxu0 0.0
  %3245 = vmatpush1.msra.mxu0 0.0
  %3246 = vmatprep.mubr.f32.mxu0 0.0
  %3247 = vmatmul.mubr.f32.gmra.mrb[0].mxu0 %v3106
  %v3248 = vpop.f32.mrb[0].mxu0
  %v3249 = vadd.f32 0.0, %v3248
  %v3250 = vpop.f32.mrb[0].mxu0
  %3251 = vdwg.mxu0
  %v3252 = vadd.f32 %v3108, %v3178
  %v3253 = vadd.f32 %v3109, %v3180
  %v3254 = vxor.u32 %v3252, 2147483648
  %v3255 = vxor.u32 %v3253, 2147483648
  %v3256 = vmul.f32 %v3254, 1.442695
  %v3257 = vpow.pop %v3256
  %v3258 = vmul.f32 %v3255, 1.442695
  %v3259 = vpow.pop %v3258
  %v3260 = vadd.f32 %v3257, 1.0
  %v3261 = vadd.f32 %v3259, 1.0
  %v3262 = vrcp.pop %v3260
  %v3263 = vmul.f32 1.0, %v3262
  %v3264 = vrcp.pop %v3261
  %v3265 = vmul.f32 1.0, %v3264
  %v3266 = vadd.f32 %v3249, %v2268
  %v3267 = vmul.f32 %v3263, %v3266
  %v3268 = vadd.f32 %v3110, %v3267
  %v3269 = vtanh.pop %v3268
  %v3270 = vsub.f32 %v3106, %v3269
  %v3271 = vmul.f32 %v3265, %v3270
  %v3272 = vadd.f32 %v3269, %v3271
  %3273 = vst [vmem:[%s1568] sm:$0xff] %v3272
  %v3274 = vld [vmem:[%s1570] sm:$0xff]
  %v3275 = vld [vmem:[%s1570 + $0x8] sm:$0xff]
  %v3276 = vld [vmem:[%s1570 + $0x10] sm:$0xff]
  %3277 = vmatprep.subr.mxu0 %v1789
  %3278 = vmatpush1.msra.mxu0 %v1788
  %3279 = vmatprep.subr.mxu0 %v1792
  %3280 = vmatpush1.msra.mxu0 %v1791
  %3281 = vmatprep.subr.mxu0 %v1795
  %3282 = vmatpush1.msra.mxu0 %v1794
  %3283 = vmatprep.subr.mxu0 %v1798
  %3284 = vmatpush1.msra.mxu0 %v1797
  %3285 = vmatprep.subr.mxu0 %v1801
  %3286 = vmatpush1.msra.mxu0 %v1800
  %3287 = vmatprep.subr.mxu0 %v1804
  %3288 = vmatpush1.msra.mxu0 %v1803
  %3289 = vmatprep.subr.mxu0 %v1807
  %3290 = vmatpush1.msra.mxu0 %v1806
  %3291 = vmatprep.subr.mxu0 %v1810
  %3292 = vmatpush1.msra.mxu0 %v1809
  %3293 = vmatprep.subr.mxu0 %v1813
  %3294 = vmatpush1.msra.mxu0 %v1812
  %3295 = vmatprep.subr.mxu0 %v1816
  %3296 = vmatpush1.msra.mxu0 %v1815
  %3297 = vmatprep.subr.mxu0 %v1819
  %3298 = vmatpush1.msra.mxu0 %v1818
  %3299 = vmatprep.subr.mxu0 %v1822
  %3300 = vmatpush1.msra.mxu0 %v1821
  %3301 = vmatprep.subr.mxu0 %v1825
  %3302 = vmatpush1.msra.mxu0 %v1824
  %3303 = vmatprep.subr.mxu0 %v1828
  %3304 = vmatpush1.msra.mxu0 %v1827
  %3305 = vmatprep.subr.mxu0 %v1831
  %3306 = vmatpush1.msra.mxu0 %v1830
  %3307 = vmatprep.subr.mxu0 %v1834
  %3308 = vmatpush1.msra.mxu0 %v1833
  %3309 = vmatprep.subr.mxu0 0.0
  %3310 = vmatpush1.msra.mxu0 0.0
  %3311 = vmatprep.subr.mxu0 0.0
  %3312 = vmatpush1.msra.mxu0 0.0
  %3313 = vmatprep.subr.mxu0 0.0
  %3314 = vmatpush1.msra.mxu0 0.0
  %3315 = vmatprep.subr.mxu0 0.0
  %3316 = vmatpush1.msra.mxu0 0.0
  %3317 = vmatprep.subr.mxu0 0.0
  %3318 = vmatpush1.msra.mxu0 0.0
  %3319 = vmatprep.subr.mxu0 0.0
  %3320 = vmatpush1.msra.mxu0 0.0
  %3321 = vmatprep.subr.mxu0 0.0
  %3322 = vmatpush1.msra.mxu0 0.0
  %3323 = vmatprep.subr.mxu0 0.0
  %3324 = vmatpush1.msra.mxu0 0.0
  %3325 = vmatprep.subr.mxu0 0.0
  %3326 = vmatpush1.msra.mxu0 0.0
  %3327 = vmatprep.subr.mxu0 0.0
  %3328 = vmatpush1.msra.mxu0 0.0
  %3329 = vmatprep.subr.mxu0 0.0
  %3330 = vmatpush1.msra.mxu0 0.0
  %3331 = vmatprep.subr.mxu0 0.0
  %3332 = vmatpush1.msra.mxu0 0.0
  %3333 = vmatprep.subr.mxu0 0.0
  %3334 = vmatpush1.msra.mxu0 0.0
  %3335 = vmatprep.subr.mxu0 0.0
  %3336 = vmatpush1.msra.mxu0 0.0
  %3337 = vmatprep.subr.mxu0 0.0
  %3338 = vmatpush1.msra.mxu0 0.0
  %3339 = vmatprep.subr.mxu0 0.0
  %3340 = vmatpush1.msra.mxu0 0.0
  %3341 = vmatprep.mubr.f32.mxu0 0.0
  %3342 = vmatmul.mubr.f32.gmra.mrb[0].mxu0 %v3272
  %v3343 = vpop.f32.mrb[0].mxu0
  %v3344 = vadd.f32 0.0, %v3343
  %v3345 = vpop.f32.mrb[0].mxu0
  %v3346 = vadd.f32 0.0, %v3345
  %3347 = vdwg.mxu0
  %3348 = vmatprep.subr.mxu0 0.0
  %3349 = vmatpush1.msra.mxu0 %v1790
  %3350 = vmatprep.subr.mxu0 0.0
  %3351 = vmatpush1.msra.mxu0 %v1793
  %3352 = vmatprep.subr.mxu0 0.0
  %3353 = vmatpush1.msra.mxu0 %v1796
  %3354 = vmatprep.subr.mxu0 0.0
  %3355 = vmatpush1.msra.mxu0 %v1799
  %3356 = vmatprep.subr.mxu0 0.0
  %3357 = vmatpush1.msra.mxu0 %v1802
  %3358 = vmatprep.subr.mxu0 0.0
  %3359 = vmatpush1.msra.mxu0 %v1805
  %3360 = vmatprep.subr.mxu0 0.0
  %3361 = vmatpush1.msra.mxu0 %v1808
  %3362 = vmatprep.subr.mxu0 0.0
  %3363 = vmatpush1.msra.mxu0 %v1811
  %3364 = vmatprep.subr.mxu0 0.0
  %3365 = vmatpush1.msra.mxu0 %v1814
  %3366 = vmatprep.subr.mxu0 0.0
  %3367 = vmatpush1.msra.mxu0 %v1817
  %3368 = vmatprep.subr.mxu0 0.0
  %3369 = vmatpush1.msra.mxu0 %v1820
  %3370 = vmatprep.subr.mxu0 0.0
  %3371 = vmatpush1.msra.mxu0 %v1823
  %3372 = vmatprep.subr.mxu0 0.0
  %3373 = vmatpush1.msra.mxu0 %v1826
  %3374 = vmatprep.subr.mxu0 0.0
  %3375 = vmatpush1.msra.mxu0 %v1829
  %3376 = vmatprep.subr.mxu0 0.0
  %3377 = vmatpush1.msra.mxu0 %v1832
  %3378 = vmatprep.subr.mxu0 0.0
  %3379 = vmatpush1.msra.mxu0 %v1835
  %3380 = vmatprep.subr.mxu0 0.0
  %3381 = vmatpush1.msra.mxu0 0.0
  %3382 = vmatprep.subr.mxu0 0.0
  %3383 = vmatpush1.msra.mxu0 0.0
  %3384 = vmatprep.subr.mxu0 0.0
  %3385 = vmatpush1.msra.mxu0 0.0
  %3386 = vmatprep.subr.mxu0 0.0
  %3387 = vmatpush1.msra.mxu0 0.0
  %3388 = vmatprep.subr.mxu0 0.0
  %3389 = vmatpush1.msra.mxu0 0.0
  %3390 = vmatprep.subr.mxu0 0.0
  %3391 = vmatpush1.msra.mxu0 0.0
  %3392 = vmatprep.subr.mxu0 0.0
  %3393 = vmatpush1.msra.mxu0 0.0
  %3394 = vmatprep.subr.mxu0 0.0
  %3395 = vmatpush1.msra.mxu0 0.0
  %3396 = vmatprep.subr.mxu0 0.0
  %3397 = vmatpush1.msra.mxu0 0.0
  %3398 = vmatprep.subr.mxu0 0.0
  %3399 = vmatpush1.msra.mxu0 0.0
  %3400 = vmatprep.subr.mxu0 0.0
  %3401 = vmatpush1.msra.mxu0 0.0
  %3402 = vmatprep.subr.mxu0 0.0
  %3403 = vmatpush1.msra.mxu0 0.0
  %3404 = vmatprep.subr.mxu0 0.0
  %3405 = vmatpush1.msra.mxu0 0.0
  %3406 = vmatprep.subr.mxu0 0.0
  %3407 = vmatpush1.msra.mxu0 0.0
  %3408 = vmatprep.subr.mxu0 0.0
  %3409 = vmatpush1.msra.mxu0 0.0
  %3410 = vmatprep.subr.mxu0 0.0
  %3411 = vmatpush1.msra.mxu0 0.0
  %3412 = vmatprep.mubr.f32.mxu0 0.0
  %3413 = vmatmul.mubr.f32.gmra.mrb[0].mxu0 %v3272
  %v3414 = vpop.f32.mrb[0].mxu0
  %v3415 = vadd.f32 0.0, %v3414
  %v3416 = vpop.f32.mrb[0].mxu0
  %3417 = vdwg.mxu0
  %v3418 = vadd.f32 %v3274, %v3344
  %v3419 = vadd.f32 %v3275, %v3346
  %v3420 = vxor.u32 %v3418, 2147483648
  %v3421 = vxor.u32 %v3419, 2147483648
  %v3422 = vmul.f32 %v3420, 1.442695
  %v3423 = vpow.pop %v3422
  %v3424 = vmul.f32 %v3421, 1.442695
  %v3425 = vpow.pop %v3424
  %v3426 = vadd.f32 %v3423, 1.0
  %v3427 = vadd.f32 %v3425, 1.0
  %v3428 = vrcp.pop %v3426
  %v3429 = vmul.f32 1.0, %v3428
  %v3430 = vrcp.pop %v3427
  %v3431 = vmul.f32 1.0, %v3430
  %v3432 = vadd.f32 %v3415, %v2268
  %v3433 = vmul.f32 %v3429, %v3432
  %v3434 = vadd.f32 %v3276, %v3433
  %v3435 = vtanh.pop %v3434
  %v3436 = vsub.f32 %v3272, %v3435
  %v3437 = vmul.f32 %v3431, %v3436
  %v3438 = vadd.f32 %v3435, %v3437
  %3439 = vst [vmem:[%s1736] sm:$0xff] %v3438
  %s3440 = scalar_lea.vmem %s1, 768
  %v3441 = vld [vmem:[%s3440] sm:$0xff]
  %v3442 = vld [vmem:[%s3440 + $0x8] sm:$0xff]
  %v3443 = vld [vmem:[%s3440 + $0x10] sm:$0xff]
  %v3444 = vld [vmem:[%s3440 + $0x18] sm:$0xff]
  %v3445 = vld [vmem:[%s3440 + $0x20] sm:$0xff]
  %v3446 = vld [vmem:[%s3440 + $0x28] sm:$0xff]
  %v3447 = vld [vmem:[%s3440 + $0x30] sm:$0xff]
  %v3448 = vld [vmem:[%s3440 + $0x38] sm:$0xff]
  %v3449 = vld [vmem:[%s3440 + $0x40] sm:$0xff]
  %v3450 = vld [vmem:[%s3440 + $0x48] sm:$0xff]
  %v3451 = vld [vmem:[%s3440 + $0x50] sm:$0xff]
  %v3452 = vld [vmem:[%s3440 + $0x58] sm:$0xff]
  %v3453 = vld [vmem:[%s3440 + $0x60] sm:$0xff]
  %v3454 = vld [vmem:[%s3440 + $0x68] sm:$0xff]
  %v3455 = vld [vmem:[%s3440 + $0x70] sm:$0xff]
  %v3456 = vld [vmem:[%s3440 + $0x78] sm:$0xff]
  %v3457 = vld [vmem:[%s3440 + $0x80] sm:$0xff]
  %v3458 = vld [vmem:[%s3440 + $0x88] sm:$0xff]
  %v3459 = vld [vmem:[%s3440 + $0x90] sm:$0xff]
  %v3460 = vld [vmem:[%s3440 + $0x98] sm:$0xff]
  %v3461 = vld [vmem:[%s3440 + $0xa0] sm:$0xff]
  %v3462 = vld [vmem:[%s3440 + $0xa8] sm:$0xff]
  %v3463 = vld [vmem:[%s3440 + $0xb0] sm:$0xff]
  %v3464 = vld [vmem:[%s3440 + $0xb8] sm:$0xff]
  %v3465 = vld [vmem:[%s3440 + $0xc0] sm:$0xff]
  %v3466 = vld [vmem:[%s3440 + $0xc8] sm:$0xff]
  %v3467 = vld [vmem:[%s3440 + $0xd0] sm:$0xff]
  %v3468 = vld [vmem:[%s3440 + $0xd8] sm:$0xff]
  %v3469 = vld [vmem:[%s3440 + $0xe0] sm:$0xff]
  %v3470 = vld [vmem:[%s3440 + $0xe8] sm:$0xff]
  %v3471 = vld [vmem:[%s3440 + $0xf0] sm:$0xff]
  %v3472 = vld [vmem:[%s3440 + $0xf8] sm:$0xff]
  %v3473 = vld [vmem:[%s3440 + $0x100] sm:$0xff]
  %v3474 = vld [vmem:[%s3440 + $0x108] sm:$0xff]
  %v3475 = vld [vmem:[%s3440 + $0x110] sm:$0xff]
  %v3476 = vld [vmem:[%s3440 + $0x118] sm:$0xff]
  %v3477 = vld [vmem:[%s3440 + $0x120] sm:$0xff]
  %v3478 = vld [vmem:[%s3440 + $0x128] sm:$0xff]
  %v3479 = vld [vmem:[%s3440 + $0x130] sm:$0xff]
  %v3480 = vld [vmem:[%s3440 + $0x138] sm:$0xff]
  %v3481 = vld [vmem:[%s3440 + $0x140] sm:$0xff]
  %v3482 = vld [vmem:[%s3440 + $0x148] sm:$0xff]
  %v3483 = vld [vmem:[%s3440 + $0x150] sm:$0xff]
  %v3484 = vld [vmem:[%s3440 + $0x158] sm:$0xff]
  %v3485 = vld [vmem:[%s3440 + $0x160] sm:$0xff]
  %v3486 = vld [vmem:[%s3440 + $0x168] sm:$0xff]
  %v3487 = vld [vmem:[%s3440 + $0x170] sm:$0xff]
  %v3488 = vld [vmem:[%s3440 + $0x178] sm:$0xff]
  %s3489 = scalar_lea.vmem %s2, 768
  %v3490 = vld [vmem:[%s3489] sm:$0xff]
  %v3491 = vld [vmem:[%s3489 + $0x8] sm:$0xff]
  %v3492 = vld [vmem:[%s3489 + $0x10] sm:$0xff]
  %v3493 = vld [vmem:[%s3489 + $0x18] sm:$0xff]
  %v3494 = vld [vmem:[%s3489 + $0x20] sm:$0xff]
  %v3495 = vld [vmem:[%s3489 + $0x28] sm:$0xff]
  %v3496 = vld [vmem:[%s3489 + $0x30] sm:$0xff]
  %v3497 = vld [vmem:[%s3489 + $0x38] sm:$0xff]
  %v3498 = vld [vmem:[%s3489 + $0x40] sm:$0xff]
  %v3499 = vld [vmem:[%s3489 + $0x48] sm:$0xff]
  %v3500 = vld [vmem:[%s3489 + $0x50] sm:$0xff]
  %v3501 = vld [vmem:[%s3489 + $0x58] sm:$0xff]
  %v3502 = vld [vmem:[%s3489 + $0x60] sm:$0xff]
  %v3503 = vld [vmem:[%s3489 + $0x68] sm:$0xff]
  %v3504 = vld [vmem:[%s3489 + $0x70] sm:$0xff]
  %v3505 = vld [vmem:[%s3489 + $0x78] sm:$0xff]
  %v3506 = vld [vmem:[%s3489 + $0x80] sm:$0xff]
  %v3507 = vld [vmem:[%s3489 + $0x88] sm:$0xff]
  %v3508 = vld [vmem:[%s3489 + $0x90] sm:$0xff]
  %v3509 = vld [vmem:[%s3489 + $0x98] sm:$0xff]
  %v3510 = vld [vmem:[%s3489 + $0xa0] sm:$0xff]
  %v3511 = vld [vmem:[%s3489 + $0xa8] sm:$0xff]
  %v3512 = vld [vmem:[%s3489 + $0xb0] sm:$0xff]
  %v3513 = vld [vmem:[%s3489 + $0xb8] sm:$0xff]
  %v3514 = vld [vmem:[%s3489 + $0xc0] sm:$0xff]
  %v3515 = vld [vmem:[%s3489 + $0xc8] sm:$0xff]
  %v3516 = vld [vmem:[%s3489 + $0xd0] sm:$0xff]
  %v3517 = vld [vmem:[%s3489 + $0xd8] sm:$0xff]
  %v3518 = vld [vmem:[%s3489 + $0xe0] sm:$0xff]
  %v3519 = vld [vmem:[%s3489 + $0xe8] sm:$0xff]
  %v3520 = vld [vmem:[%s3489 + $0xf0] sm:$0xff]
  %v3521 = vld [vmem:[%s3489 + $0xf8] sm:$0xff]
  %v3522 = vld [vmem:[%s3489 + $0x100] sm:$0xff]
  %v3523 = vld [vmem:[%s3489 + $0x108] sm:$0xff]
  %v3524 = vld [vmem:[%s3489 + $0x110] sm:$0xff]
  %v3525 = vld [vmem:[%s3489 + $0x118] sm:$0xff]
  %v3526 = vld [vmem:[%s3489 + $0x120] sm:$0xff]
  %v3527 = vld [vmem:[%s3489 + $0x128] sm:$0xff]
  %v3528 = vld [vmem:[%s3489 + $0x130] sm:$0xff]
  %v3529 = vld [vmem:[%s3489 + $0x138] sm:$0xff]
  %v3530 = vld [vmem:[%s3489 + $0x140] sm:$0xff]
  %v3531 = vld [vmem:[%s3489 + $0x148] sm:$0xff]
  %v3532 = vld [vmem:[%s3489 + $0x150] sm:$0xff]
  %v3533 = vld [vmem:[%s3489 + $0x158] sm:$0xff]
  %v3534 = vld [vmem:[%s3489 + $0x160] sm:$0xff]
  %v3535 = vld [vmem:[%s3489 + $0x168] sm:$0xff]
  %v3536 = vld [vmem:[%s3489 + $0x170] sm:$0xff]
  %v3537 = vld [vmem:[%s3489 + $0x178] sm:$0xff]
  %s3538 = scalar_lea.vmem %s3, 6
  %v3539 = vld [vmem:[%s3538] sm:$0x7]
  %s3540 = scalar_lea.vmem %s4, 2
  %v3541 = vld [vmem:[%s3540] sm:$0x1]
  %v3542 = vld [vmem:[#allocation2] sm:$0xff]
  %v3543 = vld [vmem:[#allocation2 + $0x8] sm:$0xff]
  %v3544 = vld [vmem:[#allocation2 + $0x10] sm:$0xff]
  %v3545 = vld [vmem:[#allocation2 + $0x18] sm:$0xff]
  %v3546 = vld [vmem:[#allocation2 + $0x20] sm:$0xff]
  %v3547 = vld [vmem:[#allocation2 + $0x28] sm:$0xff]
  %v3548 = vld [vmem:[#allocation2 + $0x30] sm:$0xff]
  %v3549 = vld [vmem:[#allocation2 + $0x38] sm:$0xff]
  %v3551 = vlaneseq
  %v3552 = vshrl.u32 %v3551, 7
  %v3553 = vsub.s32 0, %v3552
  %v3554 = vrot.slane %v3539, %v3553
  %v3555 = vlaneseq
  %v3556 = vshrl.u32 %v3555, 7
  %v3557 = vsub.s32 1, %v3556
  %v3558 = vrot.slane %v3539, %v3557
  %v3559 = vlaneseq
  %v3560 = vshrl.u32 %v3559, 7
  %v3561 = vsub.s32 2, %v3560
  %v3562 = vrot.slane %v3539, %v3561
  %3566 = vmatprep.subr.mxu0 %v3442
  %3567 = vmatpush1.msra.mxu0 %v3441
  %3568 = vmatprep.subr.mxu0 %v3445
  %3569 = vmatpush1.msra.mxu0 %v3444
  %3570 = vmatprep.subr.mxu0 %v3448
  %3571 = vmatpush1.msra.mxu0 %v3447
  %3572 = vmatprep.subr.mxu0 %v3451
  %3573 = vmatpush1.msra.mxu0 %v3450
  %3574 = vmatprep.subr.mxu0 %v3454
  %3575 = vmatpush1.msra.mxu0 %v3453
  %3576 = vmatprep.subr.mxu0 %v3457
  %3577 = vmatpush1.msra.mxu0 %v3456
  %3578 = vmatprep.subr.mxu0 %v3460
  %3579 = vmatpush1.msra.mxu0 %v3459
  %3580 = vmatprep.subr.mxu0 %v3463
  %3581 = vmatpush1.msra.mxu0 %v3462
  %3582 = vmatprep.subr.mxu0 %v3466
  %3583 = vmatpush1.msra.mxu0 %v3465
  %3584 = vmatprep.subr.mxu0 %v3469
  %3585 = vmatpush1.msra.mxu0 %v3468
  %3586 = vmatprep.subr.mxu0 %v3472
  %3587 = vmatpush1.msra.mxu0 %v3471
  %3588 = vmatprep.subr.mxu0 %v3475
  %3589 = vmatpush1.msra.mxu0 %v3474
  %3590 = vmatprep.subr.mxu0 %v3478
  %3591 = vmatpush1.msra.mxu0 %v3477
  %3592 = vmatprep.subr.mxu0 %v3481
  %3593 = vmatpush1.msra.mxu0 %v3480
  %3594 = vmatprep.subr.mxu0 %v3484
  %3595 = vmatpush1.msra.mxu0 %v3483
  %3596 = vmatprep.subr.mxu0 %v3487
  %3597 = vmatpush1.msra.mxu0 %v3486
  %3598 = vmatprep.subr.mxu0 0.0
  %3599 = vmatpush1.msra.mxu0 0.0
  %3600 = vmatprep.subr.mxu0 0.0
  %3601 = vmatpush1.msra.mxu0 0.0
  %3602 = vmatprep.subr.mxu0 0.0
  %3603 = vmatpush1.msra.mxu0 0.0
  %3604 = vmatprep.subr.mxu0 0.0
  %3605 = vmatpush1.msra.mxu0 0.0
  %3606 = vmatprep.subr.mxu0 0.0
  %3607 = vmatpush1.msra.mxu0 0.0
  %3608 = vmatprep.subr.mxu0 0.0
  %3609 = vmatpush1.msra.mxu0 0.0
  %3610 = vmatprep.subr.mxu0 0.0
  %3611 = vmatpush1.msra.mxu0 0.0
  %3612 = vmatprep.subr.mxu0 0.0
  %3613 = vmatpush1.msra.mxu0 0.0
  %3614 = vmatprep.subr.mxu0 0.0
  %3615 = vmatpush1.msra.mxu0 0.0
  %3616 = vmatprep.subr.mxu0 0.0
  %3617 = vmatpush1.msra.mxu0 0.0
  %3618 = vmatprep.subr.mxu0 0.0
  %3619 = vmatpush1.msra.mxu0 0.0
  %3620 = vmatprep.subr.mxu0 0.0
  %3621 = vmatpush1.msra.mxu0 0.0
  %3622 = vmatprep.subr.mxu0 0.0
  %3623 = vmatpush1.msra.mxu0 0.0
  %3624 = vmatprep.subr.mxu0 0.0
  %3625 = vmatpush1.msra.mxu0 0.0
  %3626 = vmatprep.subr.mxu0 0.0
  %3627 = vmatpush1.msra.mxu0 0.0
  %3628 = vmatprep.subr.mxu0 0.0
  %3629 = vmatpush1.msra.mxu0 0.0
  %3630 = vmatprep.mubr.f32.mxu0 0.0
  %3631 = vmatmul.mubr.f32.gmra.mrb[0].mxu0 %v3542
  %v3632 = vpop.f32.mrb[0].mxu0
  %v3633 = vadd.f32 %v3554, %v3632
  %v3634 = vpop.f32.mrb[0].mxu0
  %v3635 = vadd.f32 %v3558, %v3634
  %3636 = vmatprep.mubr.f32.mxu0 0.0
  %3637 = vmatmul.mubr.f32.gmra.mrb[0].mxu0 %v3543
  %v3638 = vpop.f32.mrb[0].mxu0
  %v3639 = vadd.f32 %v3554, %v3638
  %v3640 = vpop.f32.mrb[0].mxu0
  %v3641 = vadd.f32 %v3558, %v3640
  %3642 = vmatprep.mubr.f32.mxu0 0.0
  %3643 = vmatmul.mubr.f32.gmra.mrb[0].mxu0 %v3544
  %v3644 = vpop.f32.mrb[0].mxu0
  %v3645 = vadd.f32 %v3554, %v3644
  %v3646 = vpop.f32.mrb[0].mxu0
  %v3647 = vadd.f32 %v3558, %v3646
  %3648 = vmatprep.mubr.f32.mxu0 0.0
  %3649 = vmatmul.mubr.f32.gmra.mrb[0].mxu0 %v3545
  %v3650 = vpop.f32.mrb[0].mxu0
  %v3651 = vadd.f32 %v3554, %v3650
  %v3652 = vpop.f32.mrb[0].mxu0
  %v3653 = vadd.f32 %v3558, %v3652
  %3654 = vmatprep.mubr.f32.mxu0 0.0
  %3655 = vmatmul.mubr.f32.gmra.mrb[0].mxu0 %v3546
  %v3656 = vpop.f32.mrb[0].mxu0
  %v3657 = vadd.f32 %v3554, %v3656
  %v3658 = vpop.f32.mrb[0].mxu0
  %v3659 = vadd.f32 %v3558, %v3658
  %3660 = vmatprep.mubr.f32.mxu0 0.0
  %3661 = vmatmul.mubr.f32.gmra.mrb[0].mxu0 %v3547
  %v3662 = vpop.f32.mrb[0].mxu0
  %v3663 = vadd.f32 %v3554, %v3662
  %v3664 = vpop.f32.mrb[0].mxu0
  %v3665 = vadd.f32 %v3558, %v3664
  %3666 = vmatprep.mubr.f32.mxu0 0.0
  %3667 = vmatmul.mubr.f32.gmra.mrb[0].mxu0 %v3548
  %v3668 = vpop.f32.mrb[0].mxu0
  %v3669 = vadd.f32 %v3554, %v3668
  %v3670 = vpop.f32.mrb[0].mxu0
  %v3671 = vadd.f32 %v3558, %v3670
  %3672 = vmatprep.mubr.f32.mxu0 0.0
  %3673 = vmatmul.mubr.f32.gmra.mrb[0].mxu0 %v3549
  %v3674 = vpop.f32.mrb[0].mxu0
  %v3675 = vadd.f32 %v3554, %v3674
  %v3676 = vpop.f32.mrb[0].mxu0
  %v3677 = vadd.f32 %v3558, %v3676
  %3678 = vdwg.mxu0
  %3679 = vmatprep.subr.mxu0 0.0
  %3680 = vmatpush1.msra.mxu0 %v3443
  %3681 = vmatprep.subr.mxu0 0.0
  %3682 = vmatpush1.msra.mxu0 %v3446
  %3683 = vmatprep.subr.mxu0 0.0
  %3684 = vmatpush1.msra.mxu0 %v3449
  %3685 = vmatprep.subr.mxu0 0.0
  %3686 = vmatpush1.msra.mxu0 %v3452
  %3687 = vmatprep.subr.mxu0 0.0
  %3688 = vmatpush1.msra.mxu0 %v3455
  %3689 = vmatprep.subr.mxu0 0.0
  %3690 = vmatpush1.msra.mxu0 %v3458
  %3691 = vmatprep.subr.mxu0 0.0
  %3692 = vmatpush1.msra.mxu0 %v3461
  %3693 = vmatprep.subr.mxu0 0.0
  %3694 = vmatpush1.msra.mxu0 %v3464
  %3695 = vmatprep.subr.mxu0 0.0
  %3696 = vmatpush1.msra.mxu0 %v3467
  %3697 = vmatprep.subr.mxu0 0.0
  %3698 = vmatpush1.msra.mxu0 %v3470
  %3699 = vmatprep.subr.mxu0 0.0
  %3700 = vmatpush1.msra.mxu0 %v3473
  %3701 = vmatprep.subr.mxu0 0.0
  %3702 = vmatpush1.msra.mxu0 %v3476
  %3703 = vmatprep.subr.mxu0 0.0
  %3704 = vmatpush1.msra.mxu0 %v3479
  %3705 = vmatprep.subr.mxu0 0.0
  %3706 = vmatpush1.msra.mxu0 %v3482
  %3707 = vmatprep.subr.mxu0 0.0
  %3708 = vmatpush1.msra.mxu0 %v3485
  %3709 = vmatprep.subr.mxu0 0.0
  %3710 = vmatpush1.msra.mxu0 %v3488
  %3711 = vmatprep.subr.mxu0 0.0
  %3712 = vmatpush1.msra.mxu0 0.0
  %3713 = vmatprep.subr.mxu0 0.0
  %3714 = vmatpush1.msra.mxu0 0.0
  %3715 = vmatprep.subr.mxu0 0.0
  %3716 = vmatpush1.msra.mxu0 0.0
  %3717 = vmatprep.subr.mxu0 0.0
  %3718 = vmatpush1.msra.mxu0 0.0
  %3719 = vmatprep.subr.mxu0 0.0
  %3720 = vmatpush1.msra.mxu0 0.0
  %3721 = vmatprep.subr.mxu0 0.0
  %3722 = vmatpush1.msra.mxu0 0.0
  %3723 = vmatprep.subr.mxu0 0.0
  %3724 = vmatpush1.msra.mxu0 0.0
  %3725 = vmatprep.subr.mxu0 0.0
  %3726 = vmatpush1.msra.mxu0 0.0
  %3727 = vmatprep.subr.mxu0 0.0
  %3728 = vmatpush1.msra.mxu0 0.0
  %3729 = vmatprep.subr.mxu0 0.0
  %3730 = vmatpush1.msra.mxu0 0.0
  %3731 = vmatprep.subr.mxu0 0.0
  %3732 = vmatpush1.msra.mxu0 0.0
  %3733 = vmatprep.subr.mxu0 0.0
  %3734 = vmatpush1.msra.mxu0 0.0
  %3735 = vmatprep.subr.mxu0 0.0
  %3736 = vmatpush1.msra.mxu0 0.0
  %3737 = vmatprep.subr.mxu0 0.0
  %3738 = vmatpush1.msra.mxu0 0.0
  %3739 = vmatprep.subr.mxu0 0.0
  %3740 = vmatpush1.msra.mxu0 0.0
  %3741 = vmatprep.subr.mxu0 0.0
  %3742 = vmatpush1.msra.mxu0 0.0
  %3743 = vmatprep.mubr.f32.mxu0 0.0
  %3744 = vmatmul.mubr.f32.gmra.mrb[0].mxu0 %v3542
  %v3745 = vpop.f32.mrb[0].mxu0
  %v3746 = vadd.f32 %v3562, %v3745
  %v3747 = vpop.f32.mrb[0].mxu0
  %3748 = vmatprep.mubr.f32.mxu0 0.0
  %3749 = vmatmul.mubr.f32.gmra.mrb[0].mxu0 %v3543
  %v3750 = vpop.f32.mrb[0].mxu0
  %v3751 = vadd.f32 %v3562, %v3750
  %v3752 = vpop.f32.mrb[0].mxu0
  %3753 = vmatprep.mubr.f32.mxu0 0.0
  %3754 = vmatmul.mubr.f32.gmra.mrb[0].mxu0 %v3544
  %v3755 = vpop.f32.mrb[0].mxu0
  %v3756 = vadd.f32 %v3562, %v3755
  %v3757 = vpop.f32.mrb[0].mxu0
  %3758 = vmatprep.mubr.f32.mxu0 0.0
  %3759 = vmatmul.mubr.f32.gmra.mrb[0].mxu0 %v3545
  %v3760 = vpop.f32.mrb[0].mxu0
  %v3761 = vadd.f32 %v3562, %v3760
  %v3762 = vpop.f32.mrb[0].mxu0
  %3763 = vmatprep.mubr.f32.mxu0 0.0
  %3764 = vmatmul.mubr.f32.gmra.mrb[0].mxu0 %v3546
  %v3765 = vpop.f32.mrb[0].mxu0
  %v3766 = vadd.f32 %v3562, %v3765
  %v3767 = vpop.f32.mrb[0].mxu0
  %3768 = vmatprep.mubr.f32.mxu0 0.0
  %3769 = vmatmul.mubr.f32.gmra.mrb[0].mxu0 %v3547
  %v3770 = vpop.f32.mrb[0].mxu0
  %v3771 = vadd.f32 %v3562, %v3770
  %v3772 = vpop.f32.mrb[0].mxu0
  %3773 = vmatprep.mubr.f32.mxu0 0.0
  %3774 = vmatmul.mubr.f32.gmra.mrb[0].mxu0 %v3548
  %v3775 = vpop.f32.mrb[0].mxu0
  %v3776 = vadd.f32 %v3562, %v3775
  %v3777 = vpop.f32.mrb[0].mxu0
  %3778 = vmatprep.mubr.f32.mxu0 0.0
  %3779 = vmatmul.mubr.f32.gmra.mrb[0].mxu0 %v3549
  %v3780 = vpop.f32.mrb[0].mxu0
  %v3781 = vadd.f32 %v3562, %v3780
  %v3782 = vpop.f32.mrb[0].mxu0
  %3783 = vdwg.mxu0
  %3784 = vst [vmem:[#allocation3] sm:$0xff] %v3633
  %3785 = vst [vmem:[#allocation3 + $0x8] sm:$0xff] %v3635
  %3786 = vst [vmem:[#allocation3 + $0x10] sm:$0xff] %v3746
  %3787 = vst [vmem:[#allocation3 + $0x18] sm:$0xff] %v3639
  %3788 = vst [vmem:[#allocation3 + $0x20] sm:$0xff] %v3641
  %3789 = vst [vmem:[#allocation3 + $0x28] sm:$0xff] %v3751
  %3790 = vst [vmem:[#allocation3 + $0x30] sm:$0xff] %v3645
  %3791 = vst [vmem:[#allocation3 + $0x38] sm:$0xff] %v3647
  %3792 = vst [vmem:[#allocation3 + $0x40] sm:$0xff] %v3756
  %3793 = vst [vmem:[#allocation3 + $0x48] sm:$0xff] %v3651
  %3794 = vst [vmem:[#allocation3 + $0x50] sm:$0xff] %v3653
  %3795 = vst [vmem:[#allocation3 + $0x58] sm:$0xff] %v3761
  %3796 = vst [vmem:[#allocation3 + $0x60] sm:$0xff] %v3657
  %3797 = vst [vmem:[#allocation3 + $0x68] sm:$0xff] %v3659
  %3798 = vst [vmem:[#allocation3 + $0x70] sm:$0xff] %v3766
  %3799 = vst [vmem:[#allocation3 + $0x78] sm:$0xff] %v3663
  %3800 = vst [vmem:[#allocation3 + $0x80] sm:$0xff] %v3665
  %3801 = vst [vmem:[#allocation3 + $0x88] sm:$0xff] %v3771
  %3802 = vst [vmem:[#allocation3 + $0x90] sm:$0xff] %v3669
  %3803 = vst [vmem:[#allocation3 + $0x98] sm:$0xff] %v3671
  %3804 = vst [vmem:[#allocation3 + $0xa0] sm:$0xff] %v3776
  %3805 = vst [vmem:[#allocation3 + $0xa8] sm:$0xff] %v3675
  %3806 = vst [vmem:[#allocation3 + $0xb0] sm:$0xff] %v3677
  %3807 = vst [vmem:[#allocation3 + $0xb8] sm:$0xff] %v3781
  %v3808 = vld [vmem:[#allocation3] sm:$0xff]
  %v3809 = vld [vmem:[#allocation3 + $0x8] sm:$0xff]
  %v3810 = vld [vmem:[#allocation3 + $0x10] sm:$0xff]
  %3811 = vmatprep.subr.mxu0 %v3491
  %3812 = vmatpush1.msra.mxu0 %v3490
  %3813 = vmatprep.subr.mxu0 %v3494
  %3814 = vmatpush1.msra.mxu0 %v3493
  %3815 = vmatprep.subr.mxu0 %v3497
  %3816 = vmatpush1.msra.mxu0 %v3496
  %3817 = vmatprep.subr.mxu0 %v3500
  %3818 = vmatpush1.msra.mxu0 %v3499
  %3819 = vmatprep.subr.mxu0 %v3503
  %3820 = vmatpush1.msra.mxu0 %v3502
  %3821 = vmatprep.subr.mxu0 %v3506
  %3822 = vmatpush1.msra.mxu0 %v3505
  %3823 = vmatprep.subr.mxu0 %v3509
  %3824 = vmatpush1.msra.mxu0 %v3508
  %3825 = vmatprep.subr.mxu0 %v3512
  %3826 = vmatpush1.msra.mxu0 %v3511
  %3827 = vmatprep.subr.mxu0 %v3515
  %3828 = vmatpush1.msra.mxu0 %v3514
  %3829 = vmatprep.subr.mxu0 %v3518
  %3830 = vmatpush1.msra.mxu0 %v3517
  %3831 = vmatprep.subr.mxu0 %v3521
  %3832 = vmatpush1.msra.mxu0 %v3520
  %3833 = vmatprep.subr.mxu0 %v3524
  %3834 = vmatpush1.msra.mxu0 %v3523
  %3835 = vmatprep.subr.mxu0 %v3527
  %3836 = vmatpush1.msra.mxu0 %v3526
  %3837 = vmatprep.subr.mxu0 %v3530
  %3838 = vmatpush1.msra.mxu0 %v3529
  %3839 = vmatprep.subr.mxu0 %v3533
  %3840 = vmatpush1.msra.mxu0 %v3532
  %3841 = vmatprep.subr.mxu0 %v3536
  %3842 = vmatpush1.msra.mxu0 %v3535
  %3843 = vmatprep.subr.mxu0 0.0
  %3844 = vmatpush1.msra.mxu0 0.0
  %3845 = vmatprep.subr.mxu0 0.0
  %3846 = vmatpush1.msra.mxu0 0.0
  %3847 = vmatprep.subr.mxu0 0.0
  %3848 = vmatpush1.msra.mxu0 0.0
  %3849 = vmatprep.subr.mxu0 0.0
  %3850 = vmatpush1.msra.mxu0 0.0
  %3851 = vmatprep.subr.mxu0 0.0
  %3852 = vmatpush1.msra.mxu0 0.0
  %3853 = vmatprep.subr.mxu0 0.0
  %3854 = vmatpush1.msra.mxu0 0.0
  %3855 = vmatprep.subr.mxu0 0.0
  %3856 = vmatpush1.msra.mxu0 0.0
  %3857 = vmatprep.subr.mxu0 0.0
  %3858 = vmatpush1.msra.mxu0 0.0
  %3859 = vmatprep.subr.mxu0 0.0
  %3860 = vmatpush1.msra.mxu0 0.0
  %3861 = vmatprep.subr.mxu0 0.0
  %3862 = vmatpush1.msra.mxu0 0.0
  %3863 = vmatprep.subr.mxu0 0.0
  %3864 = vmatpush1.msra.mxu0 0.0
  %3865 = vmatprep.subr.mxu0 0.0
  %3866 = vmatpush1.msra.mxu0 0.0
  %3867 = vmatprep.subr.mxu0 0.0
  %3868 = vmatpush1.msra.mxu0 0.0
  %3869 = vmatprep.subr.mxu0 0.0
  %3870 = vmatpush1.msra.mxu0 0.0
  %3871 = vmatprep.subr.mxu0 0.0
  %3872 = vmatpush1.msra.mxu0 0.0
  %3873 = vmatprep.subr.mxu0 0.0
  %3874 = vmatpush1.msra.mxu0 0.0
  %3875 = vmatprep.mubr.f32.mxu0 0.0
  %3876 = vmatmul.mubr.f32.gmra.mrb[0].mxu0 0.0
  %v3877 = vpop.f32.mrb[0].mxu0
  %v3878 = vadd.f32 0.0, %v3877
  %v3879 = vpop.f32.mrb[0].mxu0
  %v3880 = vadd.f32 0.0, %v3879
  %3881 = vdwg.mxu0
  %3882 = vmatprep.subr.mxu0 0.0
  %3883 = vmatpush1.msra.mxu0 %v3492
  %3884 = vmatprep.subr.mxu0 0.0
  %3885 = vmatpush1.msra.mxu0 %v3495
  %3886 = vmatprep.subr.mxu0 0.0
  %3887 = vmatpush1.msra.mxu0 %v3498
  %3888 = vmatprep.subr.mxu0 0.0
  %3889 = vmatpush1.msra.mxu0 %v3501
  %3890 = vmatprep.subr.mxu0 0.0
  %3891 = vmatpush1.msra.mxu0 %v3504
  %3892 = vmatprep.subr.mxu0 0.0
  %3893 = vmatpush1.msra.mxu0 %v3507
  %3894 = vmatprep.subr.mxu0 0.0
  %3895 = vmatpush1.msra.mxu0 %v3510
  %3896 = vmatprep.subr.mxu0 0.0
  %3897 = vmatpush1.msra.mxu0 %v3513
  %3898 = vmatprep.subr.mxu0 0.0
  %3899 = vmatpush1.msra.mxu0 %v3516
  %3900 = vmatprep.subr.mxu0 0.0
  %3901 = vmatpush1.msra.mxu0 %v3519
  %3902 = vmatprep.subr.mxu0 0.0
  %3903 = vmatpush1.msra.mxu0 %v3522
  %3904 = vmatprep.subr.mxu0 0.0
  %3905 = vmatpush1.msra.mxu0 %v3525
  %3906 = vmatprep.subr.mxu0 0.0
  %3907 = vmatpush1.msra.mxu0 %v3528
  %3908 = vmatprep.subr.mxu0 0.0
  %3909 = vmatpush1.msra.mxu0 %v3531
  %3910 = vmatprep.subr.mxu0 0.0
  %3911 = vmatpush1.msra.mxu0 %v3534
  %3912 = vmatprep.subr.mxu0 0.0
  %3913 = vmatpush1.msra.mxu0 %v3537
  %3914 = vmatprep.subr.mxu0 0.0
  %3915 = vmatpush1.msra.mxu0 0.0
  %3916 = vmatprep.subr.mxu0 0.0
  %3917 = vmatpush1.msra.mxu0 0.0
  %3918 = vmatprep.subr.mxu0 0.0
  %3919 = vmatpush1.msra.mxu0 0.0
  %3920 = vmatprep.subr.mxu0 0.0
  %3921 = vmatpush1.msra.mxu0 0.0
  %3922 = vmatprep.subr.mxu0 0.0
  %3923 = vmatpush1.msra.mxu0 0.0
  %3924 = vmatprep.subr.mxu0 0.0
  %3925 = vmatpush1.msra.mxu0 0.0
  %3926 = vmatprep.subr.mxu0 0.0
  %3927 = vmatpush1.msra.mxu0 0.0
  %3928 = vmatprep.subr.mxu0 0.0
  %3929 = vmatpush1.msra.mxu0 0.0
  %3930 = vmatprep.subr.mxu0 0.0
  %3931 = vmatpush1.msra.mxu0 0.0
  %3932 = vmatprep.subr.mxu0 0.0
  %3933 = vmatpush1.msra.mxu0 0.0
  %3934 = vmatprep.subr.mxu0 0.0
  %3935 = vmatpush1.msra.mxu0 0.0
  %3936 = vmatprep.subr.mxu0 0.0
  %3937 = vmatpush1.msra.mxu0 0.0
  %3938 = vmatprep.subr.mxu0 0.0
  %3939 = vmatpush1.msra.mxu0 0.0
  %3940 = vmatprep.subr.mxu0 0.0
  %3941 = vmatpush1.msra.mxu0 0.0
  %3942 = vmatprep.subr.mxu0 0.0
  %3943 = vmatpush1.msra.mxu0 0.0
  %3944 = vmatprep.subr.mxu0 0.0
  %3945 = vmatpush1.msra.mxu0 0.0
  %3946 = vmatprep.mubr.f32.mxu0 0.0
  %3947 = vmatmul.mubr.f32.gmra.mrb[0].mxu0 0.0
  %v3948 = vpop.f32.mrb[0].mxu0
  %v3949 = vadd.f32 0.0, %v3948
  %v3950 = vpop.f32.mrb[0].mxu0
  %3951 = vdwg.mxu0
  %v3952 = vadd.f32 %v3808, %v3878
  %v3953 = vadd.f32 %v3809, %v3880
  %v3954 = vxor.u32 %v3952, 2147483648
  %v3955 = vxor.u32 %v3953, 2147483648
  %v3956 = vmul.f32 %v3954, 1.442695
  %v3957 = vpow.pop %v3956
  %v3958 = vmul.f32 %v3955, 1.442695
  %v3959 = vpow.pop %v3958
  %v3960 = vadd.f32 %v3957, 1.0
  %v3961 = vadd.f32 %v3959, 1.0
  %v3962 = vrcp.pop %v3960
  %v3963 = vmul.f32 1.0, %v3962
  %v3964 = vrcp.pop %v3961
  %v3965 = vmul.f32 1.0, %v3964
  %v3967 = vlaneseq
  %v3968 = vshrl.u32 %v3967, 7
  %v3969 = vsub.s32 0, %v3968
  %v3970 = vrot.slane %v3541, %v3969
  %v3972 = vadd.f32 %v3949, %v3970
  %v3973 = vmul.f32 %v3963, %v3972
  %v3974 = vadd.f32 %v3810, %v3973
  %v3975 = vtanh.pop %v3974
  %v3976 = vsub.f32 0.0, %v3975
  %v3977 = vmul.f32 %v3965, %v3976
  %v3978 = vadd.f32 %v3975, %v3977
  %v3979 = vld [vmem:[%s562] sm:$0xff]
  %v3980 = vld [vmem:[%s562 + $0x8] sm:$0xff]
  %v3981 = vld [vmem:[%s562 + $0x10] sm:$0xff]
  %3982 = vmatprep.subr.mxu0 %v3491
  %3983 = vmatpush1.msra.mxu0 %v3490
  %3984 = vmatprep.subr.mxu0 %v3494
  %3985 = vmatpush1.msra.mxu0 %v3493
  %3986 = vmatprep.subr.mxu0 %v3497
  %3987 = vmatpush1.msra.mxu0 %v3496
  %3988 = vmatprep.subr.mxu0 %v3500
  %3989 = vmatpush1.msra.mxu0 %v3499
  %3990 = vmatprep.subr.mxu0 %v3503
  %3991 = vmatpush1.msra.mxu0 %v3502
  %3992 = vmatprep.subr.mxu0 %v3506
  %3993 = vmatpush1.msra.mxu0 %v3505
  %3994 = vmatprep.subr.mxu0 %v3509
  %3995 = vmatpush1.msra.mxu0 %v3508
  %3996 = vmatprep.subr.mxu0 %v3512
  %3997 = vmatpush1.msra.mxu0 %v3511
  %3998 = vmatprep.subr.mxu0 %v3515
  %3999 = vmatpush1.msra.mxu0 %v3514
  %4000 = vmatprep.subr.mxu0 %v3518
  %4001 = vmatpush1.msra.mxu0 %v3517
  %4002 = vmatprep.subr.mxu0 %v3521
  %4003 = vmatpush1.msra.mxu0 %v3520
  %4004 = vmatprep.subr.mxu0 %v3524
  %4005 = vmatpush1.msra.mxu0 %v3523
  %4006 = vmatprep.subr.mxu0 %v3527
  %4007 = vmatpush1.msra.mxu0 %v3526
  %4008 = vmatprep.subr.mxu0 %v3530
  %4009 = vmatpush1.msra.mxu0 %v3529
  %4010 = vmatprep.subr.mxu0 %v3533
  %4011 = vmatpush1.msra.mxu0 %v3532
  %4012 = vmatprep.subr.mxu0 %v3536
  %4013 = vmatpush1.msra.mxu0 %v3535
  %4014 = vmatprep.subr.mxu0 0.0
  %4015 = vmatpush1.msra.mxu0 0.0
  %4016 = vmatprep.subr.mxu0 0.0
  %4017 = vmatpush1.msra.mxu0 0.0
  %4018 = vmatprep.subr.mxu0 0.0
  %4019 = vmatpush1.msra.mxu0 0.0
  %4020 = vmatprep.subr.mxu0 0.0
  %4021 = vmatpush1.msra.mxu0 0.0
  %4022 = vmatprep.subr.mxu0 0.0
  %4023 = vmatpush1.msra.mxu0 0.0
  %4024 = vmatprep.subr.mxu0 0.0
  %4025 = vmatpush1.msra.mxu0 0.0
  %4026 = vmatprep.subr.mxu0 0.0
  %4027 = vmatpush1.msra.mxu0 0.0
  %4028 = vmatprep.subr.mxu0 0.0
  %4029 = vmatpush1.msra.mxu0 0.0
  %4030 = vmatprep.subr.mxu0 0.0
  %4031 = vmatpush1.msra.mxu0 0.0
  %4032 = vmatprep.subr.mxu0 0.0
  %4033 = vmatpush1.msra.mxu0 0.0
  %4034 = vmatprep.subr.mxu0 0.0
  %4035 = vmatpush1.msra.mxu0 0.0
  %4036 = vmatprep.subr.mxu0 0.0
  %4037 = vmatpush1.msra.mxu0 0.0
  %4038 = vmatprep.subr.mxu0 0.0
  %4039 = vmatpush1.msra.mxu0 0.0
  %4040 = vmatprep.subr.mxu0 0.0
  %4041 = vmatpush1.msra.mxu0 0.0
  %4042 = vmatprep.subr.mxu0 0.0
  %4043 = vmatpush1.msra.mxu0 0.0
  %4044 = vmatprep.subr.mxu0 0.0
  %4045 = vmatpush1.msra.mxu0 0.0
  %4046 = vmatprep.mubr.f32.mxu0 0.0
  %4047 = vmatmul.mubr.f32.gmra.mrb[0].mxu0 %v3978
  %v4048 = vpop.f32.mrb[0].mxu0
  %v4049 = vadd.f32 0.0, %v4048
  %v4050 = vpop.f32.mrb[0].mxu0
  %v4051 = vadd.f32 0.0, %v4050
  %4052 = vdwg.mxu0
  %4053 = vmatprep.subr.mxu0 0.0
  %4054 = vmatpush1.msra.mxu0 %v3492
  %4055 = vmatprep.subr.mxu0 0.0
  %4056 = vmatpush1.msra.mxu0 %v3495
  %4057 = vmatprep.subr.mxu0 0.0
  %4058 = vmatpush1.msra.mxu0 %v3498
  %4059 = vmatprep.subr.mxu0 0.0
  %4060 = vmatpush1.msra.mxu0 %v3501
  %4061 = vmatprep.subr.mxu0 0.0
  %4062 = vmatpush1.msra.mxu0 %v3504
  %4063 = vmatprep.subr.mxu0 0.0
  %4064 = vmatpush1.msra.mxu0 %v3507
  %4065 = vmatprep.subr.mxu0 0.0
  %4066 = vmatpush1.msra.mxu0 %v3510
  %4067 = vmatprep.subr.mxu0 0.0
  %4068 = vmatpush1.msra.mxu0 %v3513
  %4069 = vmatprep.subr.mxu0 0.0
  %4070 = vmatpush1.msra.mxu0 %v3516
  %4071 = vmatprep.subr.mxu0 0.0
  %4072 = vmatpush1.msra.mxu0 %v3519
  %4073 = vmatprep.subr.mxu0 0.0
  %4074 = vmatpush1.msra.mxu0 %v3522
  %4075 = vmatprep.subr.mxu0 0.0
  %4076 = vmatpush1.msra.mxu0 %v3525
  %4077 = vmatprep.subr.mxu0 0.0
  %4078 = vmatpush1.msra.mxu0 %v3528
  %4079 = vmatprep.subr.mxu0 0.0
  %4080 = vmatpush1.msra.mxu0 %v3531
  %4081 = vmatprep.subr.mxu0 0.0
  %4082 = vmatpush1.msra.mxu0 %v3534
  %4083 = vmatprep.subr.mxu0 0.0
  %4084 = vmatpush1.msra.mxu0 %v3537
  %4085 = vmatprep.subr.mxu0 0.0
  %4086 = vmatpush1.msra.mxu0 0.0
  %4087 = vmatprep.subr.mxu0 0.0
  %4088 = vmatpush1.msra.mxu0 0.0
  %4089 = vmatprep.subr.mxu0 0.0
  %4090 = vmatpush1.msra.mxu0 0.0
  %4091 = vmatprep.subr.mxu0 0.0
  %4092 = vmatpush1.msra.mxu0 0.0
  %4093 = vmatprep.subr.mxu0 0.0
  %4094 = vmatpush1.msra.mxu0 0.0
  %4095 = vmatprep.subr.mxu0 0.0
  %4096 = vmatpush1.msra.mxu0 0.0
  %4097 = vmatprep.subr.mxu0 0.0
  %4098 = vmatpush1.msra.mxu0 0.0
  %4099 = vmatprep.subr.mxu0 0.0
  %4100 = vmatpush1.msra.mxu0 0.0
  %4101 = vmatprep.subr.mxu0 0.0
  %4102 = vmatpush1.msra.mxu0 0.0
  %4103 = vmatprep.subr.mxu0 0.0
  %4104 = vmatpush1.msra.mxu0 0.0
  %4105 = vmatprep.subr.mxu0 0.0
  %4106 = vmatpush1.msra.mxu0 0.0
  %4107 = vmatprep.subr.mxu0 0.0
  %4108 = vmatpush1.msra.mxu0 0.0
  %4109 = vmatprep.subr.mxu0 0.0
  %4110 = vmatpush1.msra.mxu0 0.0
  %4111 = vmatprep.subr.mxu0 0.0
  %4112 = vmatpush1.msra.mxu0 0.0
  %4113 = vmatprep.subr.mxu0 0.0
  %4114 = vmatpush1.msra.mxu0 0.0
  %4115 = vmatprep.subr.mxu0 0.0
  %4116 = vmatpush1.msra.mxu0 0.0
  %4117 = vmatprep.mubr.f32.mxu0 0.0
  %4118 = vmatmul.mubr.f32.gmra.mrb[0].mxu0 %v3978
  %v4119 = vpop.f32.mrb[0].mxu0
  %v4120 = vadd.f32 0.0, %v4119
  %v4121 = vpop.f32.mrb[0].mxu0
  %4122 = vdwg.mxu0
  %v4123 = vadd.f32 %v3979, %v4049
  %v4124 = vadd.f32 %v3980, %v4051
  %v4125 = vxor.u32 %v4123, 2147483648
  %v4126 = vxor.u32 %v4124, 2147483648
  %v4127 = vmul.f32 %v4125, 1.442695
  %v4128 = vpow.pop %v4127
  %v4129 = vmul.f32 %v4126, 1.442695
  %v4130 = vpow.pop %v4129
  %v4131 = vadd.f32 %v4128, 1.0
  %v4132 = vadd.f32 %v4130, 1.0
  %v4133 = vrcp.pop %v4131
  %v4134 = vmul.f32 1.0, %v4133
  %v4135 = vrcp.pop %v4132
  %v4136 = vmul.f32 1.0, %v4135
  %v4137 = vadd.f32 %v4120, %v3970
  %v4138 = vmul.f32 %v4134, %v4137
  %v4139 = vadd.f32 %v3981, %v4138
  %v4140 = vtanh.pop %v4139
  %v4141 = vsub.f32 %v3978, %v4140
  %v4142 = vmul.f32 %v4136, %v4141
  %v4143 = vadd.f32 %v4140, %v4142
  %v4144 = vld [vmem:[%s730] sm:$0xff]
  %v4145 = vld [vmem:[%s730 + $0x8] sm:$0xff]
  %v4146 = vld [vmem:[%s730 + $0x10] sm:$0xff]
  %4147 = vmatprep.subr.mxu0 %v3491
  %4148 = vmatpush1.msra.mxu0 %v3490
  %4149 = vmatprep.subr.mxu0 %v3494
  %4150 = vmatpush1.msra.mxu0 %v3493
  %4151 = vmatprep.subr.mxu0 %v3497
  %4152 = vmatpush1.msra.mxu0 %v3496
  %4153 = vmatprep.subr.mxu0 %v3500
  %4154 = vmatpush1.msra.mxu0 %v3499
  %4155 = vmatprep.subr.mxu0 %v3503
  %4156 = vmatpush1.msra.mxu0 %v3502
  %4157 = vmatprep.subr.mxu0 %v3506
  %4158 = vmatpush1.msra.mxu0 %v3505
  %4159 = vmatprep.subr.mxu0 %v3509
  %4160 = vmatpush1.msra.mxu0 %v3508
  %4161 = vmatprep.subr.mxu0 %v3512
  %4162 = vmatpush1.msra.mxu0 %v3511
  %4163 = vmatprep.subr.mxu0 %v3515
  %4164 = vmatpush1.msra.mxu0 %v3514
  %4165 = vmatprep.subr.mxu0 %v3518
  %4166 = vmatpush1.msra.mxu0 %v3517
  %4167 = vmatprep.subr.mxu0 %v3521
  %4168 = vmatpush1.msra.mxu0 %v3520
  %4169 = vmatprep.subr.mxu0 %v3524
  %4170 = vmatpush1.msra.mxu0 %v3523
  %4171 = vmatprep.subr.mxu0 %v3527
  %4172 = vmatpush1.msra.mxu0 %v3526
  %4173 = vmatprep.subr.mxu0 %v3530
  %4174 = vmatpush1.msra.mxu0 %v3529
  %4175 = vmatprep.subr.mxu0 %v3533
  %4176 = vmatpush1.msra.mxu0 %v3532
  %4177 = vmatprep.subr.mxu0 %v3536
  %4178 = vmatpush1.msra.mxu0 %v3535
  %4179 = vmatprep.subr.mxu0 0.0
  %4180 = vmatpush1.msra.mxu0 0.0
  %4181 = vmatprep.subr.mxu0 0.0
  %4182 = vmatpush1.msra.mxu0 0.0
  %4183 = vmatprep.subr.mxu0 0.0
  %4184 = vmatpush1.msra.mxu0 0.0
  %4185 = vmatprep.subr.mxu0 0.0
  %4186 = vmatpush1.msra.mxu0 0.0
  %4187 = vmatprep.subr.mxu0 0.0
  %4188 = vmatpush1.msra.mxu0 0.0
  %4189 = vmatprep.subr.mxu0 0.0
  %4190 = vmatpush1.msra.mxu0 0.0
  %4191 = vmatprep.subr.mxu0 0.0
  %4192 = vmatpush1.msra.mxu0 0.0
  %4193 = vmatprep.subr.mxu0 0.0
  %4194 = vmatpush1.msra.mxu0 0.0
  %4195 = vmatprep.subr.mxu0 0.0
  %4196 = vmatpush1.msra.mxu0 0.0
  %4197 = vmatprep.subr.mxu0 0.0
  %4198 = vmatpush1.msra.mxu0 0.0
  %4199 = vmatprep.subr.mxu0 0.0
  %4200 = vmatpush1.msra.mxu0 0.0
  %4201 = vmatprep.subr.mxu0 0.0
  %4202 = vmatpush1.msra.mxu0 0.0
  %4203 = vmatprep.subr.mxu0 0.0
  %4204 = vmatpush1.msra.mxu0 0.0
  %4205 = vmatprep.subr.mxu0 0.0
  %4206 = vmatpush1.msra.mxu0 0.0
  %4207 = vmatprep.subr.mxu0 0.0
  %4208 = vmatpush1.msra.mxu0 0.0
  %4209 = vmatprep.subr.mxu0 0.0
  %4210 = vmatpush1.msra.mxu0 0.0
  %4211 = vmatprep.mubr.f32.mxu0 0.0
  %4212 = vmatmul.mubr.f32.gmra.mrb[0].mxu0 %v4143
  %v4213 = vpop.f32.mrb[0].mxu0
  %v4214 = vadd.f32 0.0, %v4213
  %v4215 = vpop.f32.mrb[0].mxu0
  %v4216 = vadd.f32 0.0, %v4215
  %4217 = vdwg.mxu0
  %4218 = vmatprep.subr.mxu0 0.0
  %4219 = vmatpush1.msra.mxu0 %v3492
  %4220 = vmatprep.subr.mxu0 0.0
  %4221 = vmatpush1.msra.mxu0 %v3495
  %4222 = vmatprep.subr.mxu0 0.0
  %4223 = vmatpush1.msra.mxu0 %v3498
  %4224 = vmatprep.subr.mxu0 0.0
  %4225 = vmatpush1.msra.mxu0 %v3501
  %4226 = vmatprep.subr.mxu0 0.0
  %4227 = vmatpush1.msra.mxu0 %v3504
  %4228 = vmatprep.subr.mxu0 0.0
  %4229 = vmatpush1.msra.mxu0 %v3507
  %4230 = vmatprep.subr.mxu0 0.0
  %4231 = vmatpush1.msra.mxu0 %v3510
  %4232 = vmatprep.subr.mxu0 0.0
  %4233 = vmatpush1.msra.mxu0 %v3513
  %4234 = vmatprep.subr.mxu0 0.0
  %4235 = vmatpush1.msra.mxu0 %v3516
  %4236 = vmatprep.subr.mxu0 0.0
  %4237 = vmatpush1.msra.mxu0 %v3519
  %4238 = vmatprep.subr.mxu0 0.0
  %4239 = vmatpush1.msra.mxu0 %v3522
  %4240 = vmatprep.subr.mxu0 0.0
  %4241 = vmatpush1.msra.mxu0 %v3525
  %4242 = vmatprep.subr.mxu0 0.0
  %4243 = vmatpush1.msra.mxu0 %v3528
  %4244 = vmatprep.subr.mxu0 0.0
  %4245 = vmatpush1.msra.mxu0 %v3531
  %4246 = vmatprep.subr.mxu0 0.0
  %4247 = vmatpush1.msra.mxu0 %v3534
  %4248 = vmatprep.subr.mxu0 0.0
  %4249 = vmatpush1.msra.mxu0 %v3537
  %4250 = vmatprep.subr.mxu0 0.0
  %4251 = vmatpush1.msra.mxu0 0.0
  %4252 = vmatprep.subr.mxu0 0.0
  %4253 = vmatpush1.msra.mxu0 0.0
  %4254 = vmatprep.subr.mxu0 0.0
  %4255 = vmatpush1.msra.mxu0 0.0
  %4256 = vmatprep.subr.mxu0 0.0
  %4257 = vmatpush1.msra.mxu0 0.0
  %4258 = vmatprep.subr.mxu0 0.0
  %4259 = vmatpush1.msra.mxu0 0.0
  %4260 = vmatprep.subr.mxu0 0.0
  %4261 = vmatpush1.msra.mxu0 0.0
  %4262 = vmatprep.subr.mxu0 0.0
  %4263 = vmatpush1.msra.mxu0 0.0
  %4264 = vmatprep.subr.mxu0 0.0
  %4265 = vmatpush1.msra.mxu0 0.0
  %4266 = vmatprep.subr.mxu0 0.0
  %4267 = vmatpush1.msra.mxu0 0.0
  %4268 = vmatprep.subr.mxu0 0.0
  %4269 = vmatpush1.msra.mxu0 0.0
  %4270 = vmatprep.subr.mxu0 0.0
  %4271 = vmatpush1.msra.mxu0 0.0
  %4272 = vmatprep.subr.mxu0 0.0
  %4273 = vmatpush1.msra.mxu0 0.0
  %4274 = vmatprep.subr.mxu0 0.0
  %4275 = vmatpush1.msra.mxu0 0.0
  %4276 = vmatprep.subr.mxu0 0.0
  %4277 = vmatpush1.msra.mxu0 0.0
  %4278 = vmatprep.subr.mxu0 0.0
  %4279 = vmatpush1.msra.mxu0 0.0
  %4280 = vmatprep.subr.mxu0 0.0
  %4281 = vmatpush1.msra.mxu0 0.0
  %4282 = vmatprep.mubr.f32.mxu0 0.0
  %4283 = vmatmul.mubr.f32.gmra.mrb[0].mxu0 %v4143
  %v4284 = vpop.f32.mrb[0].mxu0
  %v4285 = vadd.f32 0.0, %v4284
  %v4286 = vpop.f32.mrb[0].mxu0
  %4287 = vdwg.mxu0
  %v4288 = vadd.f32 %v4144, %v4214
  %v4289 = vadd.f32 %v4145, %v4216
  %v4290 = vxor.u32 %v4288, 2147483648
  %v4291 = vxor.u32 %v4289, 2147483648
  %v4292 = vmul.f32 %v4290, 1.442695
  %v4293 = vpow.pop %v4292
  %v4294 = vmul.f32 %v4291, 1.442695
  %v4295 = vpow.pop %v4294
  %v4296 = vadd.f32 %v4293, 1.0
  %v4297 = vadd.f32 %v4295, 1.0
  %v4298 = vrcp.pop %v4296
  %v4299 = vmul.f32 1.0, %v4298
  %v4300 = vrcp.pop %v4297
  %v4301 = vmul.f32 1.0, %v4300
  %v4302 = vadd.f32 %v4285, %v3970
  %v4303 = vmul.f32 %v4299, %v4302
  %v4304 = vadd.f32 %v4146, %v4303
  %v4305 = vtanh.pop %v4304
  %v4306 = vsub.f32 %v4143, %v4305
  %v4307 = vmul.f32 %v4301, %v4306
  %v4308 = vadd.f32 %v4305, %v4307
  %v4309 = vld [vmem:[%s898] sm:$0xff]
  %v4310 = vld [vmem:[%s898 + $0x8] sm:$0xff]
  %v4311 = vld [vmem:[%s898 + $0x10] sm:$0xff]
  %4312 = vmatprep.subr.mxu0 %v3491
  %4313 = vmatpush1.msra.mxu0 %v3490
  %4314 = vmatprep.subr.mxu0 %v3494
  %4315 = vmatpush1.msra.mxu0 %v3493
  %4316 = vmatprep.subr.mxu0 %v3497
  %4317 = vmatpush1.msra.mxu0 %v3496
  %4318 = vmatprep.subr.mxu0 %v3500
  %4319 = vmatpush1.msra.mxu0 %v3499
  %4320 = vmatprep.subr.mxu0 %v3503
  %4321 = vmatpush1.msra.mxu0 %v3502
  %4322 = vmatprep.subr.mxu0 %v3506
  %4323 = vmatpush1.msra.mxu0 %v3505
  %4324 = vmatprep.subr.mxu0 %v3509
  %4325 = vmatpush1.msra.mxu0 %v3508
  %4326 = vmatprep.subr.mxu0 %v3512
  %4327 = vmatpush1.msra.mxu0 %v3511
  %4328 = vmatprep.subr.mxu0 %v3515
  %4329 = vmatpush1.msra.mxu0 %v3514
  %4330 = vmatprep.subr.mxu0 %v3518
  %4331 = vmatpush1.msra.mxu0 %v3517
  %4332 = vmatprep.subr.mxu0 %v3521
  %4333 = vmatpush1.msra.mxu0 %v3520
  %4334 = vmatprep.subr.mxu0 %v3524
  %4335 = vmatpush1.msra.mxu0 %v3523
  %4336 = vmatprep.subr.mxu0 %v3527
  %4337 = vmatpush1.msra.mxu0 %v3526
  %4338 = vmatprep.subr.mxu0 %v3530
  %4339 = vmatpush1.msra.mxu0 %v3529
  %4340 = vmatprep.subr.mxu0 %v3533
  %4341 = vmatpush1.msra.mxu0 %v3532
  %4342 = vmatprep.subr.mxu0 %v3536
  %4343 = vmatpush1.msra.mxu0 %v3535
  %4344 = vmatprep.subr.mxu0 0.0
  %4345 = vmatpush1.msra.mxu0 0.0
  %4346 = vmatprep.subr.mxu0 0.0
  %4347 = vmatpush1.msra.mxu0 0.0
  %4348 = vmatprep.subr.mxu0 0.0
  %4349 = vmatpush1.msra.mxu0 0.0
  %4350 = vmatprep.subr.mxu0 0.0
  %4351 = vmatpush1.msra.mxu0 0.0
  %4352 = vmatprep.subr.mxu0 0.0
  %4353 = vmatpush1.msra.mxu0 0.0
  %4354 = vmatprep.subr.mxu0 0.0
  %4355 = vmatpush1.msra.mxu0 0.0
  %4356 = vmatprep.subr.mxu0 0.0
  %4357 = vmatpush1.msra.mxu0 0.0
  %4358 = vmatprep.subr.mxu0 0.0
  %4359 = vmatpush1.msra.mxu0 0.0
  %4360 = vmatprep.subr.mxu0 0.0
  %4361 = vmatpush1.msra.mxu0 0.0
  %4362 = vmatprep.subr.mxu0 0.0
  %4363 = vmatpush1.msra.mxu0 0.0
  %4364 = vmatprep.subr.mxu0 0.0
  %4365 = vmatpush1.msra.mxu0 0.0
  %4366 = vmatprep.subr.mxu0 0.0
  %4367 = vmatpush1.msra.mxu0 0.0
  %4368 = vmatprep.subr.mxu0 0.0
  %4369 = vmatpush1.msra.mxu0 0.0
  %4370 = vmatprep.subr.mxu0 0.0
  %4371 = vmatpush1.msra.mxu0 0.0
  %4372 = vmatprep.subr.mxu0 0.0
  %4373 = vmatpush1.msra.mxu0 0.0
  %4374 = vmatprep.subr.mxu0 0.0
  %4375 = vmatpush1.msra.mxu0 0.0
  %4376 = vmatprep.mubr.f32.mxu0 0.0
  %4377 = vmatmul.mubr.f32.gmra.mrb[0].mxu0 %v4308
  %v4378 = vpop.f32.mrb[0].mxu0
  %v4379 = vadd.f32 0.0, %v4378
  %v4380 = vpop.f32.mrb[0].mxu0
  %v4381 = vadd.f32 0.0, %v4380
  %4382 = vdwg.mxu0
  %4383 = vmatprep.subr.mxu0 0.0
  %4384 = vmatpush1.msra.mxu0 %v3492
  %4385 = vmatprep.subr.mxu0 0.0
  %4386 = vmatpush1.msra.mxu0 %v3495
  %4387 = vmatprep.subr.mxu0 0.0
  %4388 = vmatpush1.msra.mxu0 %v3498
  %4389 = vmatprep.subr.mxu0 0.0
  %4390 = vmatpush1.msra.mxu0 %v3501
  %4391 = vmatprep.subr.mxu0 0.0
  %4392 = vmatpush1.msra.mxu0 %v3504
  %4393 = vmatprep.subr.mxu0 0.0
  %4394 = vmatpush1.msra.mxu0 %v3507
  %4395 = vmatprep.subr.mxu0 0.0
  %4396 = vmatpush1.msra.mxu0 %v3510
  %4397 = vmatprep.subr.mxu0 0.0
  %4398 = vmatpush1.msra.mxu0 %v3513
  %4399 = vmatprep.subr.mxu0 0.0
  %4400 = vmatpush1.msra.mxu0 %v3516
  %4401 = vmatprep.subr.mxu0 0.0
  %4402 = vmatpush1.msra.mxu0 %v3519
  %4403 = vmatprep.subr.mxu0 0.0
  %4404 = vmatpush1.msra.mxu0 %v3522
  %4405 = vmatprep.subr.mxu0 0.0
  %4406 = vmatpush1.msra.mxu0 %v3525
  %4407 = vmatprep.subr.mxu0 0.0
  %4408 = vmatpush1.msra.mxu0 %v3528
  %4409 = vmatprep.subr.mxu0 0.0
  %4410 = vmatpush1.msra.mxu0 %v3531
  %4411 = vmatprep.subr.mxu0 0.0
  %4412 = vmatpush1.msra.mxu0 %v3534
  %4413 = vmatprep.subr.mxu0 0.0
  %4414 = vmatpush1.msra.mxu0 %v3537
  %4415 = vmatprep.subr.mxu0 0.0
  %4416 = vmatpush1.msra.mxu0 0.0
  %4417 = vmatprep.subr.mxu0 0.0
  %4418 = vmatpush1.msra.mxu0 0.0
  %4419 = vmatprep.subr.mxu0 0.0
  %4420 = vmatpush1.msra.mxu0 0.0
  %4421 = vmatprep.subr.mxu0 0.0
  %4422 = vmatpush1.msra.mxu0 0.0
  %4423 = vmatprep.subr.mxu0 0.0
  %4424 = vmatpush1.msra.mxu0 0.0
  %4425 = vmatprep.subr.mxu0 0.0
  %4426 = vmatpush1.msra.mxu0 0.0
  %4427 = vmatprep.subr.mxu0 0.0
  %4428 = vmatpush1.msra.mxu0 0.0
  %4429 = vmatprep.subr.mxu0 0.0
  %4430 = vmatpush1.msra.mxu0 0.0
  %4431 = vmatprep.subr.mxu0 0.0
  %4432 = vmatpush1.msra.mxu0 0.0
  %4433 = vmatprep.subr.mxu0 0.0
  %4434 = vmatpush1.msra.mxu0 0.0
  %4435 = vmatprep.subr.mxu0 0.0
  %4436 = vmatpush1.msra.mxu0 0.0
  %4437 = vmatprep.subr.mxu0 0.0
  %4438 = vmatpush1.msra.mxu0 0.0
  %4439 = vmatprep.subr.mxu0 0.0
  %4440 = vmatpush1.msra.mxu0 0.0
  %4441 = vmatprep.subr.mxu0 0.0
  %4442 = vmatpush1.msra.mxu0 0.0
  %4443 = vmatprep.subr.mxu0 0.0
  %4444 = vmatpush1.msra.mxu0 0.0
  %4445 = vmatprep.subr.mxu0 0.0
  %4446 = vmatpush1.msra.mxu0 0.0
  %4447 = vmatprep.mubr.f32.mxu0 0.0
  %4448 = vmatmul.mubr.f32.gmra.mrb[0].mxu0 %v4308
  %v4449 = vpop.f32.mrb[0].mxu0
  %v4450 = vadd.f32 0.0, %v4449
  %v4451 = vpop.f32.mrb[0].mxu0
  %4452 = vdwg.mxu0
  %v4453 = vadd.f32 %v4309, %v4379
  %v4454 = vadd.f32 %v4310, %v4381
  %v4455 = vxor.u32 %v4453, 2147483648
  %v4456 = vxor.u32 %v4454, 2147483648
  %v4457 = vmul.f32 %v4455, 1.442695
  %v4458 = vpow.pop %v4457
  %v4459 = vmul.f32 %v4456, 1.442695
  %v4460 = vpow.pop %v4459
  %v4461 = vadd.f32 %v4458, 1.0
  %v4462 = vadd.f32 %v4460, 1.0
  %v4463 = vrcp.pop %v4461
  %v4464 = vmul.f32 1.0, %v4463
  %v4465 = vrcp.pop %v4462
  %v4466 = vmul.f32 1.0, %v4465
  %v4467 = vadd.f32 %v4450, %v3970
  %v4468 = vmul.f32 %v4464, %v4467
  %v4469 = vadd.f32 %v4311, %v4468
  %v4470 = vtanh.pop %v4469
  %v4471 = vsub.f32 %v4308, %v4470
  %v4472 = vmul.f32 %v4466, %v4471
  %v4473 = vadd.f32 %v4470, %v4472
  %v4474 = vld [vmem:[%s1066] sm:$0xff]
  %v4475 = vld [vmem:[%s1066 + $0x8] sm:$0xff]
  %v4476 = vld [vmem:[%s1066 + $0x10] sm:$0xff]
  %4477 = vmatprep.subr.mxu0 %v3491
  %4478 = vmatpush1.msra.mxu0 %v3490
  %4479 = vmatprep.subr.mxu0 %v3494
  %4480 = vmatpush1.msra.mxu0 %v3493
  %4481 = vmatprep.subr.mxu0 %v3497
  %4482 = vmatpush1.msra.mxu0 %v3496
  %4483 = vmatprep.subr.mxu0 %v3500
  %4484 = vmatpush1.msra.mxu0 %v3499
  %4485 = vmatprep.subr.mxu0 %v3503
  %4486 = vmatpush1.msra.mxu0 %v3502
  %4487 = vmatprep.subr.mxu0 %v3506
  %4488 = vmatpush1.msra.mxu0 %v3505
  %4489 = vmatprep.subr.mxu0 %v3509
  %4490 = vmatpush1.msra.mxu0 %v3508
  %4491 = vmatprep.subr.mxu0 %v3512
  %4492 = vmatpush1.msra.mxu0 %v3511
  %4493 = vmatprep.subr.mxu0 %v3515
  %4494 = vmatpush1.msra.mxu0 %v3514
  %4495 = vmatprep.subr.mxu0 %v3518
  %4496 = vmatpush1.msra.mxu0 %v3517
  %4497 = vmatprep.subr.mxu0 %v3521
  %4498 = vmatpush1.msra.mxu0 %v3520
  %4499 = vmatprep.subr.mxu0 %v3524
  %4500 = vmatpush1.msra.mxu0 %v3523
  %4501 = vmatprep.subr.mxu0 %v3527
  %4502 = vmatpush1.msra.mxu0 %v3526
  %4503 = vmatprep.subr.mxu0 %v3530
  %4504 = vmatpush1.msra.mxu0 %v3529
  %4505 = vmatprep.subr.mxu0 %v3533
  %4506 = vmatpush1.msra.mxu0 %v3532
  %4507 = vmatprep.subr.mxu0 %v3536
  %4508 = vmatpush1.msra.mxu0 %v3535
  %4509 = vmatprep.subr.mxu0 0.0
  %4510 = vmatpush1.msra.mxu0 0.0
  %4511 = vmatprep.subr.mxu0 0.0
  %4512 = vmatpush1.msra.mxu0 0.0
  %4513 = vmatprep.subr.mxu0 0.0
  %4514 = vmatpush1.msra.mxu0 0.0
  %4515 = vmatprep.subr.mxu0 0.0
  %4516 = vmatpush1.msra.mxu0 0.0
  %4517 = vmatprep.subr.mxu0 0.0
  %4518 = vmatpush1.msra.mxu0 0.0
  %4519 = vmatprep.subr.mxu0 0.0
  %4520 = vmatpush1.msra.mxu0 0.0
  %4521 = vmatprep.subr.mxu0 0.0
  %4522 = vmatpush1.msra.mxu0 0.0
  %4523 = vmatprep.subr.mxu0 0.0
  %4524 = vmatpush1.msra.mxu0 0.0
  %4525 = vmatprep.subr.mxu0 0.0
  %4526 = vmatpush1.msra.mxu0 0.0
  %4527 = vmatprep.subr.mxu0 0.0
  %4528 = vmatpush1.msra.mxu0 0.0
  %4529 = vmatprep.subr.mxu0 0.0
  %4530 = vmatpush1.msra.mxu0 0.0
  %4531 = vmatprep.subr.mxu0 0.0
  %4532 = vmatpush1.msra.mxu0 0.0
  %4533 = vmatprep.subr.mxu0 0.0
  %4534 = vmatpush1.msra.mxu0 0.0
  %4535 = vmatprep.subr.mxu0 0.0
  %4536 = vmatpush1.msra.mxu0 0.0
  %4537 = vmatprep.subr.mxu0 0.0
  %4538 = vmatpush1.msra.mxu0 0.0
  %4539 = vmatprep.subr.mxu0 0.0
  %4540 = vmatpush1.msra.mxu0 0.0
  %4541 = vmatprep.mubr.f32.mxu0 0.0
  %4542 = vmatmul.mubr.f32.gmra.mrb[0].mxu0 %v4473
  %v4543 = vpop.f32.mrb[0].mxu0
  %v4544 = vadd.f32 0.0, %v4543
  %v4545 = vpop.f32.mrb[0].mxu0
  %v4546 = vadd.f32 0.0, %v4545
  %4547 = vdwg.mxu0
  %4548 = vmatprep.subr.mxu0 0.0
  %4549 = vmatpush1.msra.mxu0 %v3492
  %4550 = vmatprep.subr.mxu0 0.0
  %4551 = vmatpush1.msra.mxu0 %v3495
  %4552 = vmatprep.subr.mxu0 0.0
  %4553 = vmatpush1.msra.mxu0 %v3498
  %4554 = vmatprep.subr.mxu0 0.0
  %4555 = vmatpush1.msra.mxu0 %v3501
  %4556 = vmatprep.subr.mxu0 0.0
  %4557 = vmatpush1.msra.mxu0 %v3504
  %4558 = vmatprep.subr.mxu0 0.0
  %4559 = vmatpush1.msra.mxu0 %v3507
  %4560 = vmatprep.subr.mxu0 0.0
  %4561 = vmatpush1.msra.mxu0 %v3510
  %4562 = vmatprep.subr.mxu0 0.0
  %4563 = vmatpush1.msra.mxu0 %v3513
  %4564 = vmatprep.subr.mxu0 0.0
  %4565 = vmatpush1.msra.mxu0 %v3516
  %4566 = vmatprep.subr.mxu0 0.0
  %4567 = vmatpush1.msra.mxu0 %v3519
  %4568 = vmatprep.subr.mxu0 0.0
  %4569 = vmatpush1.msra.mxu0 %v3522
  %4570 = vmatprep.subr.mxu0 0.0
  %4571 = vmatpush1.msra.mxu0 %v3525
  %4572 = vmatprep.subr.mxu0 0.0
  %4573 = vmatpush1.msra.mxu0 %v3528
  %4574 = vmatprep.subr.mxu0 0.0
  %4575 = vmatpush1.msra.mxu0 %v3531
  %4576 = vmatprep.subr.mxu0 0.0
  %4577 = vmatpush1.msra.mxu0 %v3534
  %4578 = vmatprep.subr.mxu0 0.0
  %4579 = vmatpush1.msra.mxu0 %v3537
  %4580 = vmatprep.subr.mxu0 0.0
  %4581 = vmatpush1.msra.mxu0 0.0
  %4582 = vmatprep.subr.mxu0 0.0
  %4583 = vmatpush1.msra.mxu0 0.0
  %4584 = vmatprep.subr.mxu0 0.0
  %4585 = vmatpush1.msra.mxu0 0.0
  %4586 = vmatprep.subr.mxu0 0.0
  %4587 = vmatpush1.msra.mxu0 0.0
  %4588 = vmatprep.subr.mxu0 0.0
  %4589 = vmatpush1.msra.mxu0 0.0
  %4590 = vmatprep.subr.mxu0 0.0
  %4591 = vmatpush1.msra.mxu0 0.0
  %4592 = vmatprep.subr.mxu0 0.0
  %4593 = vmatpush1.msra.mxu0 0.0
  %4594 = vmatprep.subr.mxu0 0.0
  %4595 = vmatpush1.msra.mxu0 0.0
  %4596 = vmatprep.subr.mxu0 0.0
  %4597 = vmatpush1.msra.mxu0 0.0
  %4598 = vmatprep.subr.mxu0 0.0
  %4599 = vmatpush1.msra.mxu0 0.0
  %4600 = vmatprep.subr.mxu0 0.0
  %4601 = vmatpush1.msra.mxu0 0.0
  %4602 = vmatprep.subr.mxu0 0.0
  %4603 = vmatpush1.msra.mxu0 0.0
  %4604 = vmatprep.subr.mxu0 0.0
  %4605 = vmatpush1.msra.mxu0 0.0
  %4606 = vmatprep.subr.mxu0 0.0
  %4607 = vmatpush1.msra.mxu0 0.0
  %4608 = vmatprep.subr.mxu0 0.0
  %4609 = vmatpush1.msra.mxu0 0.0
  %4610 = vmatprep.subr.mxu0 0.0
  %4611 = vmatpush1.msra.mxu0 0.0
  %4612 = vmatprep.mubr.f32.mxu0 0.0
  %4613 = vmatmul.mubr.f32.gmra.mrb[0].mxu0 %v4473
  %v4614 = vpop.f32.mrb[0].mxu0
  %v4615 = vadd.f32 0.0, %v4614
  %v4616 = vpop.f32.mrb[0].mxu0
  %4617 = vdwg.mxu0
  %v4618 = vadd.f32 %v4474, %v4544
  %v4619 = vadd.f32 %v4475, %v4546
  %v4620 = vxor.u32 %v4618, 2147483648
  %v4621 = vxor.u32 %v4619, 2147483648
  %v4622 = vmul.f32 %v4620, 1.442695
  %v4623 = vpow.pop %v4622
  %v4624 = vmul.f32 %v4621, 1.442695
  %v4625 = vpow.pop %v4624
  %v4626 = vadd.f32 %v4623, 1.0
  %v4627 = vadd.f32 %v4625, 1.0
  %v4628 = vrcp.pop %v4626
  %v4629 = vmul.f32 1.0, %v4628
  %v4630 = vrcp.pop %v4627
  %v4631 = vmul.f32 1.0, %v4630
  %v4632 = vadd.f32 %v4615, %v3970
  %v4633 = vmul.f32 %v4629, %v4632
  %v4634 = vadd.f32 %v4476, %v4633
  %v4635 = vtanh.pop %v4634
  %v4636 = vsub.f32 %v4473, %v4635
  %v4637 = vmul.f32 %v4631, %v4636
  %v4638 = vadd.f32 %v4635, %v4637
  %v4639 = vld [vmem:[%s1234] sm:$0xff]
  %v4640 = vld [vmem:[%s1234 + $0x8] sm:$0xff]
  %v4641 = vld [vmem:[%s1234 + $0x10] sm:$0xff]
  %4642 = vmatprep.subr.mxu0 %v3491
  %4643 = vmatpush1.msra.mxu0 %v3490
  %4644 = vmatprep.subr.mxu0 %v3494
  %4645 = vmatpush1.msra.mxu0 %v3493
  %4646 = vmatprep.subr.mxu0 %v3497
  %4647 = vmatpush1.msra.mxu0 %v3496
  %4648 = vmatprep.subr.mxu0 %v3500
  %4649 = vmatpush1.msra.mxu0 %v3499
  %4650 = vmatprep.subr.mxu0 %v3503
  %4651 = vmatpush1.msra.mxu0 %v3502
  %4652 = vmatprep.subr.mxu0 %v3506
  %4653 = vmatpush1.msra.mxu0 %v3505
  %4654 = vmatprep.subr.mxu0 %v3509
  %4655 = vmatpush1.msra.mxu0 %v3508
  %4656 = vmatprep.subr.mxu0 %v3512
  %4657 = vmatpush1.msra.mxu0 %v3511
  %4658 = vmatprep.subr.mxu0 %v3515
  %4659 = vmatpush1.msra.mxu0 %v3514
  %4660 = vmatprep.subr.mxu0 %v3518
  %4661 = vmatpush1.msra.mxu0 %v3517
  %4662 = vmatprep.subr.mxu0 %v3521
  %4663 = vmatpush1.msra.mxu0 %v3520
  %4664 = vmatprep.subr.mxu0 %v3524
  %4665 = vmatpush1.msra.mxu0 %v3523
  %4666 = vmatprep.subr.mxu0 %v3527
  %4667 = vmatpush1.msra.mxu0 %v3526
  %4668 = vmatprep.subr.mxu0 %v3530
  %4669 = vmatpush1.msra.mxu0 %v3529
  %4670 = vmatprep.subr.mxu0 %v3533
  %4671 = vmatpush1.msra.mxu0 %v3532
  %4672 = vmatprep.subr.mxu0 %v3536
  %4673 = vmatpush1.msra.mxu0 %v3535
  %4674 = vmatprep.subr.mxu0 0.0
  %4675 = vmatpush1.msra.mxu0 0.0
  %4676 = vmatprep.subr.mxu0 0.0
  %4677 = vmatpush1.msra.mxu0 0.0
  %4678 = vmatprep.subr.mxu0 0.0
  %4679 = vmatpush1.msra.mxu0 0.0
  %4680 = vmatprep.subr.mxu0 0.0
  %4681 = vmatpush1.msra.mxu0 0.0
  %4682 = vmatprep.subr.mxu0 0.0
  %4683 = vmatpush1.msra.mxu0 0.0
  %4684 = vmatprep.subr.mxu0 0.0
  %4685 = vmatpush1.msra.mxu0 0.0
  %4686 = vmatprep.subr.mxu0 0.0
  %4687 = vmatpush1.msra.mxu0 0.0
  %4688 = vmatprep.subr.mxu0 0.0
  %4689 = vmatpush1.msra.mxu0 0.0
  %4690 = vmatprep.subr.mxu0 0.0
  %4691 = vmatpush1.msra.mxu0 0.0
  %4692 = vmatprep.subr.mxu0 0.0
  %4693 = vmatpush1.msra.mxu0 0.0
  %4694 = vmatprep.subr.mxu0 0.0
  %4695 = vmatpush1.msra.mxu0 0.0
  %4696 = vmatprep.subr.mxu0 0.0
  %4697 = vmatpush1.msra.mxu0 0.0
  %4698 = vmatprep.subr.mxu0 0.0
  %4699 = vmatpush1.msra.mxu0 0.0
  %4700 = vmatprep.subr.mxu0 0.0
  %4701 = vmatpush1.msra.mxu0 0.0
  %4702 = vmatprep.subr.mxu0 0.0
  %4703 = vmatpush1.msra.mxu0 0.0
  %4704 = vmatprep.subr.mxu0 0.0
  %4705 = vmatpush1.msra.mxu0 0.0
  %4706 = vmatprep.mubr.f32.mxu0 0.0
  %4707 = vmatmul.mubr.f32.gmra.mrb[0].mxu0 %v4638
  %v4708 = vpop.f32.mrb[0].mxu0
  %v4709 = vadd.f32 0.0, %v4708
  %v4710 = vpop.f32.mrb[0].mxu0
  %v4711 = vadd.f32 0.0, %v4710
  %4712 = vdwg.mxu0
  %4713 = vmatprep.subr.mxu0 0.0
  %4714 = vmatpush1.msra.mxu0 %v3492
  %4715 = vmatprep.subr.mxu0 0.0
  %4716 = vmatpush1.msra.mxu0 %v3495
  %4717 = vmatprep.subr.mxu0 0.0
  %4718 = vmatpush1.msra.mxu0 %v3498
  %4719 = vmatprep.subr.mxu0 0.0
  %4720 = vmatpush1.msra.mxu0 %v3501
  %4721 = vmatprep.subr.mxu0 0.0
  %4722 = vmatpush1.msra.mxu0 %v3504
  %4723 = vmatprep.subr.mxu0 0.0
  %4724 = vmatpush1.msra.mxu0 %v3507
  %4725 = vmatprep.subr.mxu0 0.0
  %4726 = vmatpush1.msra.mxu0 %v3510
  %4727 = vmatprep.subr.mxu0 0.0
  %4728 = vmatpush1.msra.mxu0 %v3513
  %4729 = vmatprep.subr.mxu0 0.0
  %4730 = vmatpush1.msra.mxu0 %v3516
  %4731 = vmatprep.subr.mxu0 0.0
  %4732 = vmatpush1.msra.mxu0 %v3519
  %4733 = vmatprep.subr.mxu0 0.0
  %4734 = vmatpush1.msra.mxu0 %v3522
  %4735 = vmatprep.subr.mxu0 0.0
  %4736 = vmatpush1.msra.mxu0 %v3525
  %4737 = vmatprep.subr.mxu0 0.0
  %4738 = vmatpush1.msra.mxu0 %v3528
  %4739 = vmatprep.subr.mxu0 0.0
  %4740 = vmatpush1.msra.mxu0 %v3531
  %4741 = vmatprep.subr.mxu0 0.0
  %4742 = vmatpush1.msra.mxu0 %v3534
  %4743 = vmatprep.subr.mxu0 0.0
  %4744 = vmatpush1.msra.mxu0 %v3537
  %4745 = vmatprep.subr.mxu0 0.0
  %4746 = vmatpush1.msra.mxu0 0.0
  %4747 = vmatprep.subr.mxu0 0.0
  %4748 = vmatpush1.msra.mxu0 0.0
  %4749 = vmatprep.subr.mxu0 0.0
  %4750 = vmatpush1.msra.mxu0 0.0
  %4751 = vmatprep.subr.mxu0 0.0
  %4752 = vmatpush1.msra.mxu0 0.0
  %4753 = vmatprep.subr.mxu0 0.0
  %4754 = vmatpush1.msra.mxu0 0.0
  %4755 = vmatprep.subr.mxu0 0.0
  %4756 = vmatpush1.msra.mxu0 0.0
  %4757 = vmatprep.subr.mxu0 0.0
  %4758 = vmatpush1.msra.mxu0 0.0
  %4759 = vmatprep.subr.mxu0 0.0
  %4760 = vmatpush1.msra.mxu0 0.0
  %4761 = vmatprep.subr.mxu0 0.0
  %4762 = vmatpush1.msra.mxu0 0.0
  %4763 = vmatprep.subr.mxu0 0.0
  %4764 = vmatpush1.msra.mxu0 0.0
  %4765 = vmatprep.subr.mxu0 0.0
  %4766 = vmatpush1.msra.mxu0 0.0
  %4767 = vmatprep.subr.mxu0 0.0
  %4768 = vmatpush1.msra.mxu0 0.0
  %4769 = vmatprep.subr.mxu0 0.0
  %4770 = vmatpush1.msra.mxu0 0.0
  %4771 = vmatprep.subr.mxu0 0.0
  %4772 = vmatpush1.msra.mxu0 0.0
  %4773 = vmatprep.subr.mxu0 0.0
  %4774 = vmatpush1.msra.mxu0 0.0
  %4775 = vmatprep.subr.mxu0 0.0
  %4776 = vmatpush1.msra.mxu0 0.0
  %4777 = vmatprep.mubr.f32.mxu0 0.0
  %4778 = vmatmul.mubr.f32.gmra.mrb[0].mxu0 %v4638
  %v4779 = vpop.f32.mrb[0].mxu0
  %v4780 = vadd.f32 0.0, %v4779
  %v4781 = vpop.f32.mrb[0].mxu0
  %4782 = vdwg.mxu0
  %v4783 = vadd.f32 %v4639, %v4709
  %v4784 = vadd.f32 %v4640, %v4711
  %v4785 = vxor.u32 %v4783, 2147483648
  %v4786 = vxor.u32 %v4784, 2147483648
  %v4787 = vmul.f32 %v4785, 1.442695
  %v4788 = vpow.pop %v4787
  %v4789 = vmul.f32 %v4786, 1.442695
  %v4790 = vpow.pop %v4789
  %v4791 = vadd.f32 %v4788, 1.0
  %v4792 = vadd.f32 %v4790, 1.0
  %v4793 = vrcp.pop %v4791
  %v4794 = vmul.f32 1.0, %v4793
  %v4795 = vrcp.pop %v4792
  %v4796 = vmul.f32 1.0, %v4795
  %v4797 = vadd.f32 %v4780, %v3970
  %v4798 = vmul.f32 %v4794, %v4797
  %v4799 = vadd.f32 %v4641, %v4798
  %v4800 = vtanh.pop %v4799
  %v4801 = vsub.f32 %v4638, %v4800
  %v4802 = vmul.f32 %v4796, %v4801
  %v4803 = vadd.f32 %v4800, %v4802
  %v4804 = vld [vmem:[%s1402] sm:$0xff]
  %v4805 = vld [vmem:[%s1402 + $0x8] sm:$0xff]
  %v4806 = vld [vmem:[%s1402 + $0x10] sm:$0xff]
  %4807 = vmatprep.subr.mxu0 %v3491
  %4808 = vmatpush1.msra.mxu0 %v3490
  %4809 = vmatprep.subr.mxu0 %v3494
  %4810 = vmatpush1.msra.mxu0 %v3493
  %4811 = vmatprep.subr.mxu0 %v3497
  %4812 = vmatpush1.msra.mxu0 %v3496
  %4813 = vmatprep.subr.mxu0 %v3500
  %4814 = vmatpush1.msra.mxu0 %v3499
  %4815 = vmatprep.subr.mxu0 %v3503
  %4816 = vmatpush1.msra.mxu0 %v3502
  %4817 = vmatprep.subr.mxu0 %v3506
  %4818 = vmatpush1.msra.mxu0 %v3505
  %4819 = vmatprep.subr.mxu0 %v3509
  %4820 = vmatpush1.msra.mxu0 %v3508
  %4821 = vmatprep.subr.mxu0 %v3512
  %4822 = vmatpush1.msra.mxu0 %v3511
  %4823 = vmatprep.subr.mxu0 %v3515
  %4824 = vmatpush1.msra.mxu0 %v3514
  %4825 = vmatprep.subr.mxu0 %v3518
  %4826 = vmatpush1.msra.mxu0 %v3517
  %4827 = vmatprep.subr.mxu0 %v3521
  %4828 = vmatpush1.msra.mxu0 %v3520
  %4829 = vmatprep.subr.mxu0 %v3524
  %4830 = vmatpush1.msra.mxu0 %v3523
  %4831 = vmatprep.subr.mxu0 %v3527
  %4832 = vmatpush1.msra.mxu0 %v3526
  %4833 = vmatprep.subr.mxu0 %v3530
  %4834 = vmatpush1.msra.mxu0 %v3529
  %4835 = vmatprep.subr.mxu0 %v3533
  %4836 = vmatpush1.msra.mxu0 %v3532
  %4837 = vmatprep.subr.mxu0 %v3536
  %4838 = vmatpush1.msra.mxu0 %v3535
  %4839 = vmatprep.subr.mxu0 0.0
  %4840 = vmatpush1.msra.mxu0 0.0
  %4841 = vmatprep.subr.mxu0 0.0
  %4842 = vmatpush1.msra.mxu0 0.0
  %4843 = vmatprep.subr.mxu0 0.0
  %4844 = vmatpush1.msra.mxu0 0.0
  %4845 = vmatprep.subr.mxu0 0.0
  %4846 = vmatpush1.msra.mxu0 0.0
  %4847 = vmatprep.subr.mxu0 0.0
  %4848 = vmatpush1.msra.mxu0 0.0
  %4849 = vmatprep.subr.mxu0 0.0
  %4850 = vmatpush1.msra.mxu0 0.0
  %4851 = vmatprep.subr.mxu0 0.0
  %4852 = vmatpush1.msra.mxu0 0.0
  %4853 = vmatprep.subr.mxu0 0.0
  %4854 = vmatpush1.msra.mxu0 0.0
  %4855 = vmatprep.subr.mxu0 0.0
  %4856 = vmatpush1.msra.mxu0 0.0
  %4857 = vmatprep.subr.mxu0 0.0
  %4858 = vmatpush1.msra.mxu0 0.0
  %4859 = vmatprep.subr.mxu0 0.0
  %4860 = vmatpush1.msra.mxu0 0.0
  %4861 = vmatprep.subr.mxu0 0.0
  %4862 = vmatpush1.msra.mxu0 0.0
  %4863 = vmatprep.subr.mxu0 0.0
  %4864 = vmatpush1.msra.mxu0 0.0
  %4865 = vmatprep.subr.mxu0 0.0
  %4866 = vmatpush1.msra.mxu0 0.0
  %4867 = vmatprep.subr.mxu0 0.0
  %4868 = vmatpush1.msra.mxu0 0.0
  %4869 = vmatprep.subr.mxu0 0.0
  %4870 = vmatpush1.msra.mxu0 0.0
  %4871 = vmatprep.mubr.f32.mxu0 0.0
  %4872 = vmatmul.mubr.f32.gmra.mrb[0].mxu0 %v4803
  %v4873 = vpop.f32.mrb[0].mxu0
  %v4874 = vadd.f32 0.0, %v4873
  %v4875 = vpop.f32.mrb[0].mxu0
  %v4876 = vadd.f32 0.0, %v4875
  %4877 = vdwg.mxu0
  %4878 = vmatprep.subr.mxu0 0.0
  %4879 = vmatpush1.msra.mxu0 %v3492
  %4880 = vmatprep.subr.mxu0 0.0
  %4881 = vmatpush1.msra.mxu0 %v3495
  %4882 = vmatprep.subr.mxu0 0.0
  %4883 = vmatpush1.msra.mxu0 %v3498
  %4884 = vmatprep.subr.mxu0 0.0
  %4885 = vmatpush1.msra.mxu0 %v3501
  %4886 = vmatprep.subr.mxu0 0.0
  %4887 = vmatpush1.msra.mxu0 %v3504
  %4888 = vmatprep.subr.mxu0 0.0
  %4889 = vmatpush1.msra.mxu0 %v3507
  %4890 = vmatprep.subr.mxu0 0.0
  %4891 = vmatpush1.msra.mxu0 %v3510
  %4892 = vmatprep.subr.mxu0 0.0
  %4893 = vmatpush1.msra.mxu0 %v3513
  %4894 = vmatprep.subr.mxu0 0.0
  %4895 = vmatpush1.msra.mxu0 %v3516
  %4896 = vmatprep.subr.mxu0 0.0
  %4897 = vmatpush1.msra.mxu0 %v3519
  %4898 = vmatprep.subr.mxu0 0.0
  %4899 = vmatpush1.msra.mxu0 %v3522
  %4900 = vmatprep.subr.mxu0 0.0
  %4901 = vmatpush1.msra.mxu0 %v3525
  %4902 = vmatprep.subr.mxu0 0.0
  %4903 = vmatpush1.msra.mxu0 %v3528
  %4904 = vmatprep.subr.mxu0 0.0
  %4905 = vmatpush1.msra.mxu0 %v3531
  %4906 = vmatprep.subr.mxu0 0.0
  %4907 = vmatpush1.msra.mxu0 %v3534
  %4908 = vmatprep.subr.mxu0 0.0
  %4909 = vmatpush1.msra.mxu0 %v3537
  %4910 = vmatprep.subr.mxu0 0.0
  %4911 = vmatpush1.msra.mxu0 0.0
  %4912 = vmatprep.subr.mxu0 0.0
  %4913 = vmatpush1.msra.mxu0 0.0
  %4914 = vmatprep.subr.mxu0 0.0
  %4915 = vmatpush1.msra.mxu0 0.0
  %4916 = vmatprep.subr.mxu0 0.0
  %4917 = vmatpush1.msra.mxu0 0.0
  %4918 = vmatprep.subr.mxu0 0.0
  %4919 = vmatpush1.msra.mxu0 0.0
  %4920 = vmatprep.subr.mxu0 0.0
  %4921 = vmatpush1.msra.mxu0 0.0
  %4922 = vmatprep.subr.mxu0 0.0
  %4923 = vmatpush1.msra.mxu0 0.0
  %4924 = vmatprep.subr.mxu0 0.0
  %4925 = vmatpush1.msra.mxu0 0.0
  %4926 = vmatprep.subr.mxu0 0.0
  %4927 = vmatpush1.msra.mxu0 0.0
  %4928 = vmatprep.subr.mxu0 0.0
  %4929 = vmatpush1.msra.mxu0 0.0
  %4930 = vmatprep.subr.mxu0 0.0
  %4931 = vmatpush1.msra.mxu0 0.0
  %4932 = vmatprep.subr.mxu0 0.0
  %4933 = vmatpush1.msra.mxu0 0.0
  %4934 = vmatprep.subr.mxu0 0.0
  %4935 = vmatpush1.msra.mxu0 0.0
  %4936 = vmatprep.subr.mxu0 0.0
  %4937 = vmatpush1.msra.mxu0 0.0
  %4938 = vmatprep.subr.mxu0 0.0
  %4939 = vmatpush1.msra.mxu0 0.0
  %4940 = vmatprep.subr.mxu0 0.0
  %4941 = vmatpush1.msra.mxu0 0.0
  %4942 = vmatprep.mubr.f32.mxu0 0.0
  %4943 = vmatmul.mubr.f32.gmra.mrb[0].mxu0 %v4803
  %v4944 = vpop.f32.mrb[0].mxu0
  %v4945 = vadd.f32 0.0, %v4944
  %v4946 = vpop.f32.mrb[0].mxu0
  %4947 = vdwg.mxu0
  %v4948 = vadd.f32 %v4804, %v4874
  %v4949 = vadd.f32 %v4805, %v4876
  %v4950 = vxor.u32 %v4948, 2147483648
  %v4951 = vxor.u32 %v4949, 2147483648
  %v4952 = vmul.f32 %v4950, 1.442695
  %v4953 = vpow.pop %v4952
  %v4954 = vmul.f32 %v4951, 1.442695
  %v4955 = vpow.pop %v4954
  %v4956 = vadd.f32 %v4953, 1.0
  %v4957 = vadd.f32 %v4955, 1.0
  %v4958 = vrcp.pop %v4956
  %v4959 = vmul.f32 1.0, %v4958
  %v4960 = vrcp.pop %v4957
  %v4961 = vmul.f32 1.0, %v4960
  %v4962 = vadd.f32 %v4945, %v3970
  %v4963 = vmul.f32 %v4959, %v4962
  %v4964 = vadd.f32 %v4806, %v4963
  %v4965 = vtanh.pop %v4964
  %v4966 = vsub.f32 %v4803, %v4965
  %v4967 = vmul.f32 %v4961, %v4966
  %v4968 = vadd.f32 %v4965, %v4967
  %v4969 = vld [vmem:[%s1570] sm:$0xff]
  %v4970 = vld [vmem:[%s1570 + $0x8] sm:$0xff]
  %v4971 = vld [vmem:[%s1570 + $0x10] sm:$0xff]
  %4972 = vmatprep.subr.mxu0 %v3491
  %4973 = vmatpush1.msra.mxu0 %v3490
  %4974 = vmatprep.subr.mxu0 %v3494
  %4975 = vmatpush1.msra.mxu0 %v3493
  %4976 = vmatprep.subr.mxu0 %v3497
  %4977 = vmatpush1.msra.mxu0 %v3496
  %4978 = vmatprep.subr.mxu0 %v3500
  %4979 = vmatpush1.msra.mxu0 %v3499
  %4980 = vmatprep.subr.mxu0 %v3503
  %4981 = vmatpush1.msra.mxu0 %v3502
  %4982 = vmatprep.subr.mxu0 %v3506
  %4983 = vmatpush1.msra.mxu0 %v3505
  %4984 = vmatprep.subr.mxu0 %v3509
  %4985 = vmatpush1.msra.mxu0 %v3508
  %4986 = vmatprep.subr.mxu0 %v3512
  %4987 = vmatpush1.msra.mxu0 %v3511
  %4988 = vmatprep.subr.mxu0 %v3515
  %4989 = vmatpush1.msra.mxu0 %v3514
  %4990 = vmatprep.subr.mxu0 %v3518
  %4991 = vmatpush1.msra.mxu0 %v3517
  %4992 = vmatprep.subr.mxu0 %v3521
  %4993 = vmatpush1.msra.mxu0 %v3520
  %4994 = vmatprep.subr.mxu0 %v3524
  %4995 = vmatpush1.msra.mxu0 %v3523
  %4996 = vmatprep.subr.mxu0 %v3527
  %4997 = vmatpush1.msra.mxu0 %v3526
  %4998 = vmatprep.subr.mxu0 %v3530
  %4999 = vmatpush1.msra.mxu0 %v3529
  %5000 = vmatprep.subr.mxu0 %v3533
  %5001 = vmatpush1.msra.mxu0 %v3532
  %5002 = vmatprep.subr.mxu0 %v3536
  %5003 = vmatpush1.msra.mxu0 %v3535
  %5004 = vmatprep.subr.mxu0 0.0
  %5005 = vmatpush1.msra.mxu0 0.0
  %5006 = vmatprep.subr.mxu0 0.0
  %5007 = vmatpush1.msra.mxu0 0.0
  %5008 = vmatprep.subr.mxu0 0.0
  %5009 = vmatpush1.msra.mxu0 0.0
  %5010 = vmatprep.subr.mxu0 0.0
  %5011 = vmatpush1.msra.mxu0 0.0
  %5012 = vmatprep.subr.mxu0 0.0
  %5013 = vmatpush1.msra.mxu0 0.0
  %5014 = vmatprep.subr.mxu0 0.0
  %5015 = vmatpush1.msra.mxu0 0.0
  %5016 = vmatprep.subr.mxu0 0.0
  %5017 = vmatpush1.msra.mxu0 0.0
  %5018 = vmatprep.subr.mxu0 0.0
  %5019 = vmatpush1.msra.mxu0 0.0
  %5020 = vmatprep.subr.mxu0 0.0
  %5021 = vmatpush1.msra.mxu0 0.0
  %5022 = vmatprep.subr.mxu0 0.0
  %5023 = vmatpush1.msra.mxu0 0.0
  %5024 = vmatprep.subr.mxu0 0.0
  %5025 = vmatpush1.msra.mxu0 0.0
  %5026 = vmatprep.subr.mxu0 0.0
  %5027 = vmatpush1.msra.mxu0 0.0
  %5028 = vmatprep.subr.mxu0 0.0
  %5029 = vmatpush1.msra.mxu0 0.0
  %5030 = vmatprep.subr.mxu0 0.0
  %5031 = vmatpush1.msra.mxu0 0.0
  %5032 = vmatprep.subr.mxu0 0.0
  %5033 = vmatpush1.msra.mxu0 0.0
  %5034 = vmatprep.subr.mxu0 0.0
  %5035 = vmatpush1.msra.mxu0 0.0
  %5036 = vmatprep.mubr.f32.mxu0 0.0
  %5037 = vmatmul.mubr.f32.gmra.mrb[0].mxu0 %v4968
  %v5038 = vpop.f32.mrb[0].mxu0
  %v5039 = vadd.f32 0.0, %v5038
  %v5040 = vpop.f32.mrb[0].mxu0
  %v5041 = vadd.f32 0.0, %v5040
  %5042 = vdwg.mxu0
  %5043 = vmatprep.subr.mxu0 0.0
  %5044 = vmatpush1.msra.mxu0 %v3492
  %5045 = vmatprep.subr.mxu0 0.0
  %5046 = vmatpush1.msra.mxu0 %v3495
  %5047 = vmatprep.subr.mxu0 0.0
  %5048 = vmatpush1.msra.mxu0 %v3498
  %5049 = vmatprep.subr.mxu0 0.0
  %5050 = vmatpush1.msra.mxu0 %v3501
  %5051 = vmatprep.subr.mxu0 0.0
  %5052 = vmatpush1.msra.mxu0 %v3504
  %5053 = vmatprep.subr.mxu0 0.0
  %5054 = vmatpush1.msra.mxu0 %v3507
  %5055 = vmatprep.subr.mxu0 0.0
  %5056 = vmatpush1.msra.mxu0 %v3510
  %5057 = vmatprep.subr.mxu0 0.0
  %5058 = vmatpush1.msra.mxu0 %v3513
  %5059 = vmatprep.subr.mxu0 0.0
  %5060 = vmatpush1.msra.mxu0 %v3516
  %5061 = vmatprep.subr.mxu0 0.0
  %5062 = vmatpush1.msra.mxu0 %v3519
  %5063 = vmatprep.subr.mxu0 0.0
  %5064 = vmatpush1.msra.mxu0 %v3522
  %5065 = vmatprep.subr.mxu0 0.0
  %5066 = vmatpush1.msra.mxu0 %v3525
  %5067 = vmatprep.subr.mxu0 0.0
  %5068 = vmatpush1.msra.mxu0 %v3528
  %5069 = vmatprep.subr.mxu0 0.0
  %5070 = vmatpush1.msra.mxu0 %v3531
  %5071 = vmatprep.subr.mxu0 0.0
  %5072 = vmatpush1.msra.mxu0 %v3534
  %5073 = vmatprep.subr.mxu0 0.0
  %5074 = vmatpush1.msra.mxu0 %v3537
  %5075 = vmatprep.subr.mxu0 0.0
  %5076 = vmatpush1.msra.mxu0 0.0
  %5077 = vmatprep.subr.mxu0 0.0
  %5078 = vmatpush1.msra.mxu0 0.0
  %5079 = vmatprep.subr.mxu0 0.0
  %5080 = vmatpush1.msra.mxu0 0.0
  %5081 = vmatprep.subr.mxu0 0.0
  %5082 = vmatpush1.msra.mxu0 0.0
  %5083 = vmatprep.subr.mxu0 0.0
  %5084 = vmatpush1.msra.mxu0 0.0
  %5085 = vmatprep.subr.mxu0 0.0
  %5086 = vmatpush1.msra.mxu0 0.0
  %5087 = vmatprep.subr.mxu0 0.0
  %5088 = vmatpush1.msra.mxu0 0.0
  %5089 = vmatprep.subr.mxu0 0.0
  %5090 = vmatpush1.msra.mxu0 0.0
  %5091 = vmatprep.subr.mxu0 0.0
  %5092 = vmatpush1.msra.mxu0 0.0
  %5093 = vmatprep.subr.mxu0 0.0
  %5094 = vmatpush1.msra.mxu0 0.0
  %5095 = vmatprep.subr.mxu0 0.0
  %5096 = vmatpush1.msra.mxu0 0.0
  %5097 = vmatprep.subr.mxu0 0.0
  %5098 = vmatpush1.msra.mxu0 0.0
  %5099 = vmatprep.subr.mxu0 0.0
  %5100 = vmatpush1.msra.mxu0 0.0
  %5101 = vmatprep.subr.mxu0 0.0
  %5102 = vmatpush1.msra.mxu0 0.0
  %5103 = vmatprep.subr.mxu0 0.0
  %5104 = vmatpush1.msra.mxu0 0.0
  %5105 = vmatprep.subr.mxu0 0.0
  %5106 = vmatpush1.msra.mxu0 0.0
  %5107 = vmatprep.mubr.f32.mxu0 0.0
  %5108 = vmatmul.mubr.f32.gmra.mrb[0].mxu0 %v4968
  %v5109 = vpop.f32.mrb[0].mxu0
  %v5110 = vadd.f32 0.0, %v5109
  %v5111 = vpop.f32.mrb[0].mxu0
  %5112 = vdwg.mxu0
  %v5113 = vadd.f32 %v4969, %v5039
  %v5114 = vadd.f32 %v4970, %v5041
  %v5115 = vxor.u32 %v5113, 2147483648
  %v5116 = vxor.u32 %v5114, 2147483648
  %v5117 = vmul.f32 %v5115, 1.442695
  %v5118 = vpow.pop %v5117
  %v5119 = vmul.f32 %v5116, 1.442695
  %v5120 = vpow.pop %v5119
  %v5121 = vadd.f32 %v5118, 1.0
  %v5122 = vadd.f32 %v5120, 1.0
  %v5123 = vrcp.pop %v5121
  %v5124 = vmul.f32 1.0, %v5123
  %v5125 = vrcp.pop %v5122
  %v5126 = vmul.f32 1.0, %v5125
  %v5127 = vadd.f32 %v5110, %v3970
  %v5128 = vmul.f32 %v5124, %v5127
  %v5129 = vadd.f32 %v4971, %v5128
  %v5130 = vtanh.pop %v5129
  %v5131 = vsub.f32 %v4968, %v5130
  %v5132 = vmul.f32 %v5126, %v5131
  %v5133 = vadd.f32 %v5130, %v5132
  %v5134 = vld [vmem:[%s5] sm:$0xff]
  %v5135 = vld [vmem:[%s5 + $0x8] sm:$0xff]
  %v5136 = vld [vmem:[%s5 + $0x10] sm:$0xff]
  %v5137 = vld [vmem:[%s5 + $0x18] sm:$0xff]
  %v5138 = vld [vmem:[%s5 + $0x20] sm:$0xff]
  %v5139 = vld [vmem:[%s5 + $0x28] sm:$0xff]
  %v5140 = vld [vmem:[%s5 + $0x30] sm:$0xff]
  %v5141 = vld [vmem:[%s5 + $0x38] sm:$0xff]
  %v5142 = vld [vmem:[%s5 + $0x40] sm:$0xff]
  %v5143 = vld [vmem:[%s5 + $0x48] sm:$0xff]
  %v5144 = vld [vmem:[%s5 + $0x50] sm:$0xff]
  %v5145 = vld [vmem:[%s5 + $0x58] sm:$0xff]
  %v5146 = vld [vmem:[%s5 + $0x60] sm:$0xff]
  %v5147 = vld [vmem:[%s5 + $0x68] sm:$0xff]
  %v5148 = vld [vmem:[%s5 + $0x70] sm:$0xff]
  %v5149 = vld [vmem:[%s5 + $0x78] sm:$0xff]
  %v5150 = vld [vmem:[%s6] sm:$0x1]
  %v5152 = vlaneseq
  %v5153 = vshrl.u32 %v5152, 7
  %v5154 = vsub.s32 0, %v5153
  %v5155 = vrot.slane %v5150, %v5154
  %5157 = vmatprep.subr.mxu0 0.0
  %5158 = vmatpush1.msra.mxu0 %v5134
  %5159 = vmatprep.subr.mxu0 0.0
  %5160 = vmatpush1.msra.mxu0 %v5135
  %5161 = vmatprep.subr.mxu0 0.0
  %5162 = vmatpush1.msra.mxu0 %v5136
  %5163 = vmatprep.subr.mxu0 0.0
  %5164 = vmatpush1.msra.mxu0 %v5137
  %5165 = vmatprep.subr.mxu0 0.0
  %5166 = vmatpush1.msra.mxu0 %v5138
  %5167 = vmatprep.subr.mxu0 0.0
  %5168 = vmatpush1.msra.mxu0 %v5139
  %5169 = vmatprep.subr.mxu0 0.0
  %5170 = vmatpush1.msra.mxu0 %v5140
  %5171 = vmatprep.subr.mxu0 0.0
  %5172 = vmatpush1.msra.mxu0 %v5141
  %5173 = vmatprep.subr.mxu0 0.0
  %5174 = vmatpush1.msra.mxu0 %v5142
  %5175 = vmatprep.subr.mxu0 0.0
  %5176 = vmatpush1.msra.mxu0 %v5143
  %5177 = vmatprep.subr.mxu0 0.0
  %5178 = vmatpush1.msra.mxu0 %v5144
  %5179 = vmatprep.subr.mxu0 0.0
  %5180 = vmatpush1.msra.mxu0 %v5145
  %5181 = vmatprep.subr.mxu0 0.0
  %5182 = vmatpush1.msra.mxu0 %v5146
  %5183 = vmatprep.subr.mxu0 0.0
  %5184 = vmatpush1.msra.mxu0 %v5147
  %5185 = vmatprep.subr.mxu0 0.0
  %5186 = vmatpush1.msra.mxu0 %v5148
  %5187 = vmatprep.subr.mxu0 0.0
  %5188 = vmatpush1.msra.mxu0 %v5149
  %5189 = vmatprep.subr.mxu0 0.0
  %5190 = vmatpush1.msra.mxu0 0.0
  %5191 = vmatprep.subr.mxu0 0.0
  %5192 = vmatpush1.msra.mxu0 0.0
  %5193 = vmatprep.subr.mxu0 0.0
  %5194 = vmatpush1.msra.mxu0 0.0
  %5195 = vmatprep.subr.mxu0 0.0
  %5196 = vmatpush1.msra.mxu0 0.0
  %5197 = vmatprep.subr.mxu0 0.0
  %5198 = vmatpush1.msra.mxu0 0.0
  %5199 = vmatprep.subr.mxu0 0.0
  %5200 = vmatpush1.msra.mxu0 0.0
  %5201 = vmatprep.subr.mxu0 0.0
  %5202 = vmatpush1.msra.mxu0 0.0
  %5203 = vmatprep.subr.mxu0 0.0
  %5204 = vmatpush1.msra.mxu0 0.0
  %5205 = vmatprep.subr.mxu0 0.0
  %5206 = vmatpush1.msra.mxu0 0.0
  %5207 = vmatprep.subr.mxu0 0.0
  %5208 = vmatpush1.msra.mxu0 0.0
  %5209 = vmatprep.subr.mxu0 0.0
  %5210 = vmatpush1.msra.mxu0 0.0
  %5211 = vmatprep.subr.mxu0 0.0
  %5212 = vmatpush1.msra.mxu0 0.0
  %5213 = vmatprep.subr.mxu0 0.0
  %5214 = vmatpush1.msra.mxu0 0.0
  %5215 = vmatprep.subr.mxu0 0.0
  %5216 = vmatpush1.msra.mxu0 0.0
  %5217 = vmatprep.subr.mxu0 0.0
  %5218 = vmatpush1.msra.mxu0 0.0
  %5219 = vmatprep.subr.mxu0 0.0
  %5220 = vmatpush1.msra.mxu0 0.0
  %5221 = vmatprep.mubr.f32.mxu0 0.0
  %5222 = vmatmul.mubr.f32.gmra.mrb[0].mxu0 %v5133
  %v5223 = vpop.f32.mrb[0].mxu0
  %v5224 = vadd.f32 %v5155, %v5223
  %v5225 = vpop.f32.mrb[0].mxu0
  %5226 = vdwg.mxu0
  %5227 = vst [vmem:[%s7] sm:$0xff] %v5224
  // Predicated region
  $region30: #{gru_model_forward.1} parent=0 // pred_check
    _
  $region31: #{gru_model_forward.1} parent=0 // pred_check_branch
    %5229 = sbr.rel (0) target = $region33
  $region32: #{gru_model_forward.1} parent=0 // pred_region
    _
  $region33: #{gru_model_forward.1} parent=0 // pred_fallthru
    _
  // Predicated region
  $region34: #{gru_model_forward.1} parent=0 // pred_check
    _
  $region35: #{gru_model_forward.1} parent=0 // pred_check_branch
    %5231 = sbr.rel (0) target = $region37
  $region36: #{gru_model_forward.1} parent=0 // pred_region
    _
  $region37: #{gru_model_forward.1} parent=0 // pred_fallthru
    _

</llo_original>
